<compile_context>
chip_gen: v6e
topology: v6e:2x2x1
jax: 0.10.0
libtpu: 0.0.40
codegen_flags: <defaults>
</compile_context>

<pallas_src>
import functools

import jax
import jax.numpy as jnp
from jax.experimental import pallas as pl
from jax.experimental.pallas import tpu as pltpu


def _residual_block_kernel(x_ref, w1_ref, g1_ref, b1_ref, w2_ref, g2_ref, b2_ref,
                           o_ref, pad_ref, col_ref, *, dilation, eps):
    # x_ref  : (1, H, W, C)        one batch element, channels-last, f32
    # w*_ref : (9*C, C)            conv weights, rows ordered (kh, kw, cin), bf16
    # g*/b*  : (1, C)              InstanceNorm affine params, f32
    # o_ref  : (1, H, W, C)        output block
    # pad_ref: (H+2d, W+2d, C)     bf16 zero-bordered halo buffer (VMEM scratch)
    # col_ref: (H, W, 9*C)         bf16 im2col buffer (VMEM scratch)
    d = dilation
    _, hh, ww, cc = x_ref.shape
    hw = hh * ww
    inv_hw = 1.0 / float(hw)

    # ---- Zero only the halo border strips; the interior is overwritten below.
    # Re-done every grid step so it stays correct when the batch axis is split
    # across TensorCores (each core has its own scratch instance).
    pad_ref[0:d, :, :] = jnp.zeros((d, ww + 2 * d, cc), pad_ref.dtype)
    pad_ref[hh + d:hh + 2 * d, :, :] = jnp.zeros((d, ww + 2 * d, cc), pad_ref.dtype)
    pad_ref[d:d + hh, 0:d, :] = jnp.zeros((hh, d, cc), pad_ref.dtype)
    pad_ref[d:d + hh, ww + d:ww + 2 * d, :] = jnp.zeros((hh, d, cc), pad_ref.dtype)

    # Residual path stays f32; conv operands are bf16 (cast once, on the fill).
    x_f32 = x_ref[0].astype(jnp.float32)                       # (H, W, C)
    pad_ref[d:d + hh, d:d + ww, :] = x_f32.astype(jnp.bfloat16)

    def im2col_conv(w_ref):
        # Scatter the 9 dilated taps into the bf16 im2col scratch, then contract
        # all of them in ONE MXU matmul with K = 9*C (f32 accumulation).
        for ky in range(3):
            for kx in range(3):
                t = ky * 3 + kx
                col_ref[:, :, t * cc:(t + 1) * cc] = pad_ref[
                    ky * d:ky * d + hh, kx * d:kx * d + ww, :]
        col = col_ref[...].reshape(hw, 9 * cc)                  # bf16, lane dim 9*C
        return jnp.dot(col, w_ref[...],
                       preferred_element_type=jnp.float32)      # (HW, C) f32

    def instance_norm(z, g_ref, b_ref):
        # Single-pass per-channel stats over the full H*W extent: biased
        # variance via E[z^2] - mean^2 (f32, clamped at 0), eps inside rsqrt —
        # matches torch.nn.InstanceNorm2d(affine=True).
        s = jnp.sum(z, axis=0, keepdims=True)
        s2 = jnp.sum(z * z, axis=0, keepdims=True)
        mean = s * inv_hw
        var = jnp.maximum(s2 * inv_hw - mean * mean, 0.0)
        return (z - mean) * jax.lax.rsqrt(var + eps) * g_ref[...] + b_ref[...]

    # conv1 -> IN1 -> relu
    y = jnp.maximum(instance_norm(im2col_conv(w1_ref), g1_ref, b1_ref), 0.0)

    # conv2 -> IN2   (reuse the halo scratch; its zero border is untouched)
    pad_ref[d:d + hh, d:d + ww, :] = y.reshape(hh, ww, cc).astype(jnp.bfloat16)
    y = instance_norm(im2col_conv(w2_ref), g2_ref, b2_ref)

    # residual add + relu  (f32 skip path)
    out = jnp.maximum(x_f32.reshape(hw, cc) + y, 0.0)
    o_ref[...] = out.reshape(1, hh, ww, cc).astype(o_ref.dtype)


def _vmem_limit_bytes(h, w, c, d):
    """Derive a VMEM budget from the actual footprint (cap < v7x's 64 MiB)."""
    io_block = h * w * c * 4                      # one f32 NHWC image block
    halo = (h + 2 * d) * (w + 2 * d) * c * 2      # bf16 halo scratch
    col = h * w * 9 * c * 2                       # bf16 im2col scratch
    params = 2 * 9 * c * c * 2 + 4 * c * 4        # bf16 weights + f32 affine
    need = 2 * (2 * io_block) + halo + col + 2 * params   # dbl-buffered I/O + scratch
    budget = int(need * 2) + (4 << 20)            # 2x margin + compiler scratch slack
    return max(32 << 20, min(budget, 48 << 20))


def residual_block(x, w1, g1, b1, w2, g2, b2, *, dilation=1, eps=1e-5):
    """Pallas forward of ResidualBlock (3x3 convs, bias=False, groups=1).

    x            : (N, C, H, W)  NCHW, like PyTorch
    w1, w2       : (C, C, 3, 3)  PyTorch OIHW conv weights
    g1,b1,g2,b2  : (C,)          InstanceNorm2d affine weight / bias
    """
    n, c, h, w = x.shape
    assert w1.shape == (c, c, 3, 3) and w2.shape == (c, c, 3, 3)
    d = int(dilation)

    # Layout plumbing (cheap, wrapper-side): NCHW -> NHWC puts channels on the
    # lane axis / MXU contraction dim.  OIHW -> (kh, kw, cin, cout) -> (9*C, C)
    # so the whole 3x3 stencil is a single K=9*C contraction; cast bf16.
    # NOTE: C >= 128 (ideally 256) in the real model keeps the MXU output width
    # filled and the stores lane-dense; the tiny C here is only a shape test.
    x_nhwc = jnp.transpose(x, (0, 2, 3, 1))
    w1_t = jnp.transpose(w1, (2, 3, 1, 0)).reshape(9 * c, c).astype(jnp.bfloat16)
    w2_t = jnp.transpose(w2, (2, 3, 1, 0)).reshape(9 * c, c).astype(jnp.bfloat16)
    g1_r = g1.reshape(1, c).astype(jnp.float32)
    b1_r = b1.reshape(1, c).astype(jnp.float32)
    g2_r = g2.reshape(1, c).astype(jnp.float32)
    b2_r = b2.reshape(1, c).astype(jnp.float32)

    kernel = functools.partial(_residual_block_kernel, dilation=d, eps=float(eps))

    img_map = lambda i: (i, 0, 0, 0)
    w_map = lambda i: (0, 0)
    v_map = lambda i: (0, 0)

    out_nhwc = pl.pallas_call(
        kernel,
        out_shape=jax.ShapeDtypeStruct((n, h, w, c), x.dtype),
        grid_spec=pltpu.PrefetchScalarGridSpec(
            num_scalar_prefetch=0,
            grid=(n,),
            in_specs=[
                pl.BlockSpec((1, h, w, c), img_map),
                pl.BlockSpec((9 * c, c), w_map),
                pl.BlockSpec((1, c), v_map),
                pl.BlockSpec((1, c), v_map),
                pl.BlockSpec((9 * c, c), w_map),
                pl.BlockSpec((1, c), v_map),
                pl.BlockSpec((1, c), v_map),
            ],
            out_specs=pl.BlockSpec((1, h, w, c), img_map),
            scratch_shapes=[
                pltpu.VMEM((h + 2 * d, w + 2 * d, c), jnp.bfloat16),  # halo buffer
                pltpu.VMEM((h, w, 9 * c), jnp.bfloat16),              # im2col buffer
            ],
        ),
        compiler_params=pltpu.CompilerParams(
            # Batch axis is independent -> shard across v7x's two TensorCores.
            dimension_semantics=("parallel",),
            vmem_limit_bytes=_vmem_limit_bytes(h, w, c, d),
        ),
    )(x_nhwc, w1_t, g1_r, b1_r, w2_t, g2_r, b2_r)

    return jnp.transpose(out_nhwc, (0, 3, 1, 2))


def _reference_residual_block(x, w1, g1, b1, w2, g2, b2, *, dilation=1, eps=1e-5):
    """Independent XLA reference of the PyTorch module (bf16 conv operands with
    f32 accumulation, mirroring the kernel's mixed precision)."""
    d = dilation

    def conv(z, wt):
        return jax.lax.conv_general_dilated(
            z.astype(jnp.bfloat16), wt.astype(jnp.bfloat16),
            window_strides=(1, 1),
            padding=[(d, d), (d, d)],
            rhs_dilation=(d, d),
            dimension_numbers=("NCHW", "OIHW", "NCHW"),
            feature_group_count=1,
            preferred_element_type=jnp.float32,
        )

    def inorm(z, g, b):
        mean = jnp.mean(z, axis=(2, 3), keepdims=True)
        var = jnp.mean((z - mean) ** 2, axis=(2, 3), keepdims=True)
        zn = (z - mean) * jax.lax.rsqrt(var + eps)
        return zn * g.reshape(1, -1, 1, 1) + b.reshape(1, -1, 1, 1)

    y = jax.nn.relu(inorm(conv(x, w1), g1, b1))
    y = inorm(conv(y, w2), g2, b2)
    return jax.nn.relu(x + y)


if __name__ == "__main__":
    n, c, h, w = 2, 4, 16, 16
    dilation = 1

    key = jax.random.PRNGKey(0)
    kx, kw1, kw2, kg1, kb1, kg2, kb2 = jax.random.split(key, 7)
    x = jax.random.normal(kx, (n, c, h, w), dtype=jnp.float32)
    # Random (non-identity) parameters so off-center conv taps and the affine
    # instance-norm terms are genuinely exercised by the check.
    w1 = 0.2 * jax.random.normal(kw1, (c, c, 3, 3), dtype=jnp.float32)
    w2 = 0.2 * jax.random.normal(kw2, (c, c, 3, 3), dtype=jnp.float32)
    g1 = 1.0 + 0.1 * jax.random.normal(kg1, (c,), dtype=jnp.float32)
    b1 = 0.1 * jax.random.normal(kb1, (c,), dtype=jnp.float32)
    g2 = 1.0 + 0.1 * jax.random.normal(kg2, (c,), dtype=jnp.float32)
    b2 = 0.1 * jax.random.normal(kb2, (c,), dtype=jnp.float32)

    out = residual_block(x, w1, g1, b1, w2, g2, b2, dilation=dilation)
    out = jax.block_until_ready(out)

    ref = _reference_residual_block(x, w1, g1, b1, w2, g2, b2, dilation=dilation)
    ref = jax.block_until_ready(ref)

    assert out.shape == x.shape
    max_err = float(jnp.max(jnp.abs(out - ref)))
    assert max_err < 5e-3, f"ResidualBlock mismatch vs XLA reference: {max_err}"

    print("KERNEL_OK")
</pallas_src>

<mosaic_0001>
module attributes {stable_mosaic.version = 11 : i64} {
  func.func @_residual_block_kernel(%arg0: i32, %arg1: memref<1x16x16x4xf32, #tpu.memory_space<vmem>>, %arg2: memref<36x4xbf16, #tpu.memory_space<vmem>>, %arg3: memref<1x4xf32, #tpu.memory_space<vmem>>, %arg4: memref<1x4xf32, #tpu.memory_space<vmem>>, %arg5: memref<36x4xbf16, #tpu.memory_space<vmem>>, %arg6: memref<1x4xf32, #tpu.memory_space<vmem>>, %arg7: memref<1x4xf32, #tpu.memory_space<vmem>>, %arg8: memref<1x16x16x4xf32, #tpu.memory_space<vmem>>, %arg9: memref<18x18x4xbf16, #tpu.memory_space<vmem>>, %arg10: memref<16x16x36xbf16, #tpu.memory_space<vmem>>) attributes {dimension_semantics = [#tpu.dimension_semantics<parallel>], iteration_bounds = array<i64: 2>, scalar_prefetch = 0 : i64, scratch_operands = 2 : i64, tpu.core_type = #tpu.core_type<tc>, window_params = [{transform_indices = @transform_0, window_bounds = array<i64: 1, 16, 16, 4>}, {pipeline_mode = #tpu.pipeline_mode<synchronous>, transform_indices = @transform_1, window_bounds = array<i64: 36, 4>}, {pipeline_mode = #tpu.pipeline_mode<synchronous>, transform_indices = @transform_2, window_bounds = array<i64: 1, 4>}, {pipeline_mode = #tpu.pipeline_mode<synchronous>, transform_indices = @transform_3, window_bounds = array<i64: 1, 4>}, {pipeline_mode = #tpu.pipeline_mode<synchronous>, transform_indices = @transform_4, window_bounds = array<i64: 36, 4>}, {pipeline_mode = #tpu.pipeline_mode<synchronous>, transform_indices = @transform_5, window_bounds = array<i64: 1, 4>}, {pipeline_mode = #tpu.pipeline_mode<synchronous>, transform_indices = @transform_6, window_bounds = array<i64: 1, 4>}, {transform_indices = @transform_7, window_bounds = array<i64: 1, 16, 16, 4>}]} {
    %cst = arith.constant 0.000000e+00 : bf16
    %0 = vector.broadcast %cst : bf16 to vector<1x18x4xbf16>
    %c0 = arith.constant 0 : index
    %c0_0 = arith.constant 0 : index
    %c0_1 = arith.constant 0 : index
    %1 = vector.load %arg9[%c0, %c0_0, %c0_1] : memref<18x18x4xbf16, #tpu.memory_space<vmem>>, vector<1x18x4xbf16>
    tpu.vector_store %arg9[%c0, %c0_0, %c0_1], %0 {strides = array<i32>} : memref<18x18x4xbf16, #tpu.memory_space<vmem>>, vector<1x18x4xbf16>,
    %cst_2 = arith.constant 0.000000e+00 : bf16
    %2 = vector.broadcast %cst_2 : bf16 to vector<1x18x4xbf16>
    %c17 = arith.constant 17 : index
    %c0_3 = arith.constant 0 : index
    %c0_4 = arith.constant 0 : index
    %3 = vector.load %arg9[%c17, %c0_3, %c0_4] : memref<18x18x4xbf16, #tpu.memory_space<vmem>>, vector<1x18x4xbf16>
    tpu.vector_store %arg9[%c17, %c0_3, %c0_4], %2 {strides = array<i32>} : memref<18x18x4xbf16, #tpu.memory_space<vmem>>, vector<1x18x4xbf16>,
    %cst_5 = arith.constant 0.000000e+00 : bf16
    %4 = vector.broadcast %cst_5 : bf16 to vector<16x1x4xbf16>
    %c1 = arith.constant 1 : index
    %c0_6 = arith.constant 0 : index
    %c0_7 = arith.constant 0 : index
    %5 = vector.load %arg9[%c1, %c0_6, %c0_7] : memref<18x18x4xbf16, #tpu.memory_space<vmem>>, vector<16x1x4xbf16>
    tpu.vector_store %arg9[%c1, %c0_6, %c0_7], %4 {strides = array<i32>} : memref<18x18x4xbf16, #tpu.memory_space<vmem>>, vector<16x1x4xbf16>,
    %cst_8 = arith.constant 0.000000e+00 : bf16
    %6 = vector.broadcast %cst_8 : bf16 to vector<16x1x4xbf16>
    %c1_9 = arith.constant 1 : index
    %c17_10 = arith.constant 17 : index
    %c0_11 = arith.constant 0 : index
    %7 = vector.load %arg9[%c1_9, %c17_10, %c0_11] : memref<18x18x4xbf16, #tpu.memory_space<vmem>>, vector<16x1x4xbf16>
    tpu.vector_store %arg9[%c1_9, %c17_10, %c0_11], %6 {strides = array<i32>} : memref<18x18x4xbf16, #tpu.memory_space<vmem>>, vector<16x1x4xbf16>,
    %c0_12 = arith.constant 0 : index
    %c0_13 = arith.constant 0 : index
    %c0_14 = arith.constant 0 : index
    %c0_15 = arith.constant 0 : index
    %8 = vector.load %arg1[%c0_12, %c0_13, %c0_14, %c0_15] : memref<1x16x16x4xf32, #tpu.memory_space<vmem>>, vector<1x16x16x4xf32>
    %9 = vector.shape_cast %8 : vector<1x16x16x4xf32> to vector<16x16x4xf32>
    %10 = arith.truncf %9 : vector<16x16x4xf32> to vector<16x16x4xbf16>
    %c1_16 = arith.constant 1 : index
    %c1_17 = arith.constant 1 : index
    %c0_18 = arith.constant 0 : index
    %11 = vector.load %arg9[%c1_16, %c1_17, %c0_18] : memref<18x18x4xbf16, #tpu.memory_space<vmem>>, vector<16x16x4xbf16>
    tpu.vector_store %arg9[%c1_16, %c1_17, %c0_18], %10 {strides = array<i32>} : memref<18x18x4xbf16, #tpu.memory_space<vmem>>, vector<16x16x4xbf16>,
    %c0_19 = arith.constant 0 : index
    %c0_20 = arith.constant 0 : index
    %c0_21 = arith.constant 0 : index
    %12 = vector.load %arg9[%c0_19, %c0_20, %c0_21] : memref<18x18x4xbf16, #tpu.memory_space<vmem>>, vector<16x16x4xbf16>
    %c0_22 = arith.constant 0 : index
    %c0_23 = arith.constant 0 : index
    %c0_24 = arith.constant 0 : index
    %13 = vector.load %arg10[%c0_22, %c0_23, %c0_24] : memref<16x16x36xbf16, #tpu.memory_space<vmem>>, vector<16x16x4xbf16>
    tpu.vector_store %arg10[%c0_22, %c0_23, %c0_24], %12 {strides = array<i32>} : memref<16x16x36xbf16, #tpu.memory_space<vmem>>, vector<16x16x4xbf16>,
    %c0_25 = arith.constant 0 : index
    %c1_26 = arith.constant 1 : index
    %c0_27 = arith.constant 0 : index
    %14 = vector.load %arg9[%c0_25, %c1_26, %c0_27] : memref<18x18x4xbf16, #tpu.memory_space<vmem>>, vector<16x16x4xbf16>
    %c0_28 = arith.constant 0 : index
    %c0_29 = arith.constant 0 : index
    %c4 = arith.constant 4 : index
    %15 = vector.load %arg10[%c0_28, %c0_29, %c4] : memref<16x16x36xbf16, #tpu.memory_space<vmem>>, vector<16x16x4xbf16>
    tpu.vector_store %arg10[%c0_28, %c0_29, %c4], %14 {strides = array<i32>} : memref<16x16x36xbf16, #tpu.memory_space<vmem>>, vector<16x16x4xbf16>,
    %c0_30 = arith.constant 0 : index
    %c2 = arith.constant 2 : index
    %c0_31 = arith.constant 0 : index
    %16 = vector.load %arg9[%c0_30, %c2, %c0_31] : memref<18x18x4xbf16, #tpu.memory_space<vmem>>, vector<16x16x4xbf16>
    %c0_32 = arith.constant 0 : index
    %c0_33 = arith.constant 0 : index
    %c8 = arith.constant 8 : index
    %17 = vector.load %arg10[%c0_32, %c0_33, %c8] : memref<16x16x36xbf16, #tpu.memory_space<vmem>>, vector<16x16x4xbf16>
    tpu.vector_store %arg10[%c0_32, %c0_33, %c8], %16 {strides = array<i32>} : memref<16x16x36xbf16, #tpu.memory_space<vmem>>, vector<16x16x4xbf16>,
    %c1_34 = arith.constant 1 : index
    %c0_35 = arith.constant 0 : index
    %c0_36 = arith.constant 0 : index
    %18 = vector.load %arg9[%c1_34, %c0_35, %c0_36] : memref<18x18x4xbf16, #tpu.memory_space<vmem>>, vector<16x16x4xbf16>
    %c0_37 = arith.constant 0 : index
    %c0_38 = arith.constant 0 : index
    %c12 = arith.constant 12 : index
    %19 = vector.load %arg10[%c0_37, %c0_38, %c12] : memref<16x16x36xbf16, #tpu.memory_space<vmem>>, vector<16x16x4xbf16>
    tpu.vector_store %arg10[%c0_37, %c0_38, %c12], %18 {strides = array<i32>} : memref<16x16x36xbf16, #tpu.memory_space<vmem>>, vector<16x16x4xbf16>,
    %c1_39 = arith.constant 1 : index
    %c1_40 = arith.constant 1 : index
    %c0_41 = arith.constant 0 : index
    %20 = vector.load %arg9[%c1_39, %c1_40, %c0_41] : memref<18x18x4xbf16, #tpu.memory_space<vmem>>, vector<16x16x4xbf16>
    %c0_42 = arith.constant 0 : index
    %c0_43 = arith.constant 0 : index
    %c16 = arith.constant 16 : index
    %21 = vector.load %arg10[%c0_42, %c0_43, %c16] : memref<16x16x36xbf16, #tpu.memory_space<vmem>>, vector<16x16x4xbf16>
    tpu.vector_store %arg10[%c0_42, %c0_43, %c16], %20 {strides = array<i32>} : memref<16x16x36xbf16, #tpu.memory_space<vmem>>, vector<16x16x4xbf16>,
    %c1_44 = arith.constant 1 : index
    %c2_45 = arith.constant 2 : index
    %c0_46 = arith.constant 0 : index
    %22 = vector.load %arg9[%c1_44, %c2_45, %c0_46] : memref<18x18x4xbf16, #tpu.memory_space<vmem>>, vector<16x16x4xbf16>
    %c0_47 = arith.constant 0 : index
    %c0_48 = arith.constant 0 : index
    %c20 = arith.constant 20 : index
    %23 = vector.load %arg10[%c0_47, %c0_48, %c20] : memref<16x16x36xbf16, #tpu.memory_space<vmem>>, vector<16x16x4xbf16>
    tpu.vector_store %arg10[%c0_47, %c0_48, %c20], %22 {strides = array<i32>} : memref<16x16x36xbf16, #tpu.memory_space<vmem>>, vector<16x16x4xbf16>,
    %c2_49 = arith.constant 2 : index
    %c0_50 = arith.constant 0 : index
    %c0_51 = arith.constant 0 : index
    %24 = vector.load %arg9[%c2_49, %c0_50, %c0_51] : memref<18x18x4xbf16, #tpu.memory_space<vmem>>, vector<16x16x4xbf16>
    %c0_52 = arith.constant 0 : index
    %c0_53 = arith.constant 0 : index
    %c24 = arith.constant 24 : index
    %25 = vector.load %arg10[%c0_52, %c0_53, %c24] : memref<16x16x36xbf16, #tpu.memory_space<vmem>>, vector<16x16x4xbf16>
    tpu.vector_store %arg10[%c0_52, %c0_53, %c24], %24 {strides = array<i32>} : memref<16x16x36xbf16, #tpu.memory_space<vmem>>, vector<16x16x4xbf16>,
    %c2_54 = arith.constant 2 : index
    %c1_55 = arith.constant 1 : index
    %c0_56 = arith.constant 0 : index
    %26 = vector.load %arg9[%c2_54, %c1_55, %c0_56] : memref<18x18x4xbf16, #tpu.memory_space<vmem>>, vector<16x16x4xbf16>
    %c0_57 = arith.constant 0 : index
    %c0_58 = arith.constant 0 : index
    %c28 = arith.constant 28 : index
    %27 = vector.load %arg10[%c0_57, %c0_58, %c28] : memref<16x16x36xbf16, #tpu.memory_space<vmem>>, vector<16x16x4xbf16>
    tpu.vector_store %arg10[%c0_57, %c0_58, %c28], %26 {strides = array<i32>} : memref<16x16x36xbf16, #tpu.memory_space<vmem>>, vector<16x16x4xbf16>,
    %c2_59 = arith.constant 2 : index
    %c2_60 = arith.constant 2 : index
    %c0_61 = arith.constant 0 : index
    %28 = vector.load %arg9[%c2_59, %c2_60, %c0_61] : memref<18x18x4xbf16, #tpu.memory_space<vmem>>, vector<16x16x4xbf16>
    %c0_62 = arith.constant 0 : index
    %c0_63 = arith.constant 0 : index
    %c32 = arith.constant 32 : index
    %29 = vector.load %arg10[%c0_62, %c0_63, %c32] : memref<16x16x36xbf16, #tpu.memory_space<vmem>>, vector<16x16x4xbf16>
    tpu.vector_store %arg10[%c0_62, %c0_63, %c32], %28 {strides = array<i32>} : memref<16x16x36xbf16, #tpu.memory_space<vmem>>, vector<16x16x4xbf16>,
    %c0_64 = arith.constant 0 : index
    %c0_65 = arith.constant 0 : index
    %c0_66 = arith.constant 0 : index
    %30 = vector.load %arg10[%c0_64, %c0_65, %c0_66] : memref<16x16x36xbf16, #tpu.memory_space<vmem>>, vector<16x16x36xbf16>
    %31 = vector.shape_cast %30 : vector<16x16x36xbf16> to vector<256x36xbf16>
    %c0_67 = arith.constant 0 : index
    %c0_68 = arith.constant 0 : index
    %32 = vector.load %arg2[%c0_67, %c0_68] : memref<36x4xbf16, #tpu.memory_space<vmem>>, vector<36x4xbf16>
    %cst_69 = arith.constant dense<0.000000e+00> : vector<256x4xf32>
    %33 = tpu.matmul %31, %32, %cst_69 {dimension_numbers = #tpu.dot_dimension_numbers<[1], [0], [0], [1], [0, 0, 1, 1], [], []>} : vector<256x36xbf16>, vector<36x4xbf16>, vector<256x4xf32> -> vector<256x4xf32>
    %cst_70 = arith.constant dense<0.000000e+00> : vector<4xf32>
    %34 = vector.multi_reduction <add>, %33, %cst_70 [0] : vector<256x4xf32> to vector<4xf32>
    %35 = vector.shape_cast %34 : vector<4xf32> to vector<1x4xf32>
    %36 = arith.mulf %33, %33 : vector<256x4xf32>
    %cst_71 = arith.constant dense<0.000000e+00> : vector<4xf32>
    %37 = vector.multi_reduction <add>, %36, %cst_71 [0] : vector<256x4xf32> to vector<4xf32>
    %38 = vector.shape_cast %37 : vector<4xf32> to vector<1x4xf32>
    %cst_72 = arith.constant 3.906250e-03 : f32
    %39 = vector.broadcast %cst_72 : f32 to vector<1x4xf32>
    %40 = arith.mulf %35, %39 : vector<1x4xf32>
    %cst_73 = arith.constant 3.906250e-03 : f32
    %41 = vector.broadcast %cst_73 : f32 to vector<1x4xf32>
    %42 = arith.mulf %38, %41 : vector<1x4xf32>
    %43 = arith.mulf %40, %40 : vector<1x4xf32>
    %44 = arith.subf %42, %43 : vector<1x4xf32>
    %cst_74 = arith.constant 0.000000e+00 : f32
    %45 = vector.broadcast %cst_74 : f32 to vector<1x4xf32>
    %46 = arith.maximumf %44, %45 : vector<1x4xf32>
    %47 = vector.broadcast %40 : vector<1x4xf32> to vector<256x4xf32>
    %48 = arith.subf %33, %47 : vector<256x4xf32>
    %cst_75 = arith.constant 9.99999974E-6 : f32
    %49 = vector.broadcast %cst_75 : f32 to vector<1x4xf32>
    %50 = arith.addf %46, %49 : vector<1x4xf32>
    %51 = math.rsqrt %50 : vector<1x4xf32>
    %52 = vector.broadcast %51 : vector<1x4xf32> to vector<256x4xf32>
    %53 = arith.mulf %48, %52 : vector<256x4xf32>
    %c0_76 = arith.constant 0 : index
    %c0_77 = arith.constant 0 : index
    %54 = vector.load %arg3[%c0_76, %c0_77] : memref<1x4xf32, #tpu.memory_space<vmem>>, vector<1x4xf32>
    %55 = vector.broadcast %54 : vector<1x4xf32> to vector<256x4xf32>
    %56 = arith.mulf %53, %55 : vector<256x4xf32>
    %c0_78 = arith.constant 0 : index
    %c0_79 = arith.constant 0 : index
    %57 = vector.load %arg4[%c0_78, %c0_79] : memref<1x4xf32, #tpu.memory_space<vmem>>, vector<1x4xf32>
    %58 = vector.broadcast %57 : vector<1x4xf32> to vector<256x4xf32>
    %59 = arith.addf %56, %58 : vector<256x4xf32>
    %cst_80 = arith.constant 0.000000e+00 : f32
    %60 = vector.broadcast %cst_80 : f32 to vector<256x4xf32>
    %61 = arith.maximumf %59, %60 : vector<256x4xf32>
    %62 = vector.shape_cast %61 : vector<256x4xf32> to vector<16x16x4xf32>
    %63 = arith.truncf %62 : vector<16x16x4xf32> to vector<16x16x4xbf16>
    %c1_81 = arith.constant 1 : index
    %c1_82 = arith.constant 1 : index
    %c0_83 = arith.constant 0 : index
    %64 = vector.load %arg9[%c1_81, %c1_82, %c0_83] : memref<18x18x4xbf16, #tpu.memory_space<vmem>>, vector<16x16x4xbf16>
    tpu.vector_store %arg9[%c1_81, %c1_82, %c0_83], %63 {strides = array<i32>} : memref<18x18x4xbf16, #tpu.memory_space<vmem>>, vector<16x16x4xbf16>,
    %c0_84 = arith.constant 0 : index
    %c0_85 = arith.constant 0 : index
    %c0_86 = arith.constant 0 : index
    %65 = vector.load %arg9[%c0_84, %c0_85, %c0_86] : memref<18x18x4xbf16, #tpu.memory_space<vmem>>, vector<16x16x4xbf16>
    %c0_87 = arith.constant 0 : index
    %c0_88 = arith.constant 0 : index
    %c0_89 = arith.constant 0 : index
    %66 = vector.load %arg10[%c0_87, %c0_88, %c0_89] : memref<16x16x36xbf16, #tpu.memory_space<vmem>>, vector<16x16x4xbf16>
    tpu.vector_store %arg10[%c0_87, %c0_88, %c0_89], %65 {strides = array<i32>} : memref<16x16x36xbf16, #tpu.memory_space<vmem>>, vector<16x16x4xbf16>,
    %c0_90 = arith.constant 0 : index
    %c1_91 = arith.constant 1 : index
    %c0_92 = arith.constant 0 : index
    %67 = vector.load %arg9[%c0_90, %c1_91, %c0_92] : memref<18x18x4xbf16, #tpu.memory_space<vmem>>, vector<16x16x4xbf16>
    %c0_93 = arith.constant 0 : index
    %c0_94 = arith.constant 0 : index
    %c4_95 = arith.constant 4 : index
    %68 = vector.load %arg10[%c0_93, %c0_94, %c4_95] : memref<16x16x36xbf16, #tpu.memory_space<vmem>>, vector<16x16x4xbf16>
    tpu.vector_store %arg10[%c0_93, %c0_94, %c4_95], %67 {strides = array<i32>} : memref<16x16x36xbf16, #tpu.memory_space<vmem>>, vector<16x16x4xbf16>,
    %c0_96 = arith.constant 0 : index
    %c2_97 = arith.constant 2 : index
    %c0_98 = arith.constant 0 : index
    %69 = vector.load %arg9[%c0_96, %c2_97, %c0_98] : memref<18x18x4xbf16, #tpu.memory_space<vmem>>, vector<16x16x4xbf16>
    %c0_99 = arith.constant 0 : index
    %c0_100 = arith.constant 0 : index
    %c8_101 = arith.constant 8 : index
    %70 = vector.load %arg10[%c0_99, %c0_100, %c8_101] : memref<16x16x36xbf16, #tpu.memory_space<vmem>>, vector<16x16x4xbf16>
    tpu.vector_store %arg10[%c0_99, %c0_100, %c8_101], %69 {strides = array<i32>} : memref<16x16x36xbf16, #tpu.memory_space<vmem>>, vector<16x16x4xbf16>,
    %c1_102 = arith.constant 1 : index
    %c0_103 = arith.constant 0 : index
    %c0_104 = arith.constant 0 : index
    %71 = vector.load %arg9[%c1_102, %c0_103, %c0_104] : memref<18x18x4xbf16, #tpu.memory_space<vmem>>, vector<16x16x4xbf16>
    %c0_105 = arith.constant 0 : index
    %c0_106 = arith.constant 0 : index
    %c12_107 = arith.constant 12 : index
    %72 = vector.load %arg10[%c0_105, %c0_106, %c12_107] : memref<16x16x36xbf16, #tpu.memory_space<vmem>>, vector<16x16x4xbf16>
    tpu.vector_store %arg10[%c0_105, %c0_106, %c12_107], %71 {strides = array<i32>} : memref<16x16x36xbf16, #tpu.memory_space<vmem>>, vector<16x16x4xbf16>,
    %c1_108 = arith.constant 1 : index
    %c1_109 = arith.constant 1 : index
    %c0_110 = arith.constant 0 : index
    %73 = vector.load %arg9[%c1_108, %c1_109, %c0_110] : memref<18x18x4xbf16, #tpu.memory_space<vmem>>, vector<16x16x4xbf16>
    %c0_111 = arith.constant 0 : index
    %c0_112 = arith.constant 0 : index
    %c16_113 = arith.constant 16 : index
    %74 = vector.load %arg10[%c0_111, %c0_112, %c16_113] : memref<16x16x36xbf16, #tpu.memory_space<vmem>>, vector<16x16x4xbf16>
    tpu.vector_store %arg10[%c0_111, %c0_112, %c16_113], %73 {strides = array<i32>} : memref<16x16x36xbf16, #tpu.memory_space<vmem>>, vector<16x16x4xbf16>,
    %c1_114 = arith.constant 1 : index
    %c2_115 = arith.constant 2 : index
    %c0_116 = arith.constant 0 : index
    %75 = vector.load %arg9[%c1_114, %c2_115, %c0_116] : memref<18x18x4xbf16, #tpu.memory_space<vmem>>, vector<16x16x4xbf16>
    %c0_117 = arith.constant 0 : index
    %c0_118 = arith.constant 0 : index
    %c20_119 = arith.constant 20 : index
    %76 = vector.load %arg10[%c0_117, %c0_118, %c20_119] : memref<16x16x36xbf16, #tpu.memory_space<vmem>>, vector<16x16x4xbf16>
    tpu.vector_store %arg10[%c0_117, %c0_118, %c20_119], %75 {strides = array<i32>} : memref<16x16x36xbf16, #tpu.memory_space<vmem>>, vector<16x16x4xbf16>,
    %c2_120 = arith.constant 2 : index
    %c0_121 = arith.constant 0 : index
    %c0_122 = arith.constant 0 : index
    %77 = vector.load %arg9[%c2_120, %c0_121, %c0_122] : memref<18x18x4xbf16, #tpu.memory_space<vmem>>, vector<16x16x4xbf16>
    %c0_123 = arith.constant 0 : index
    %c0_124 = arith.constant 0 : index
    %c24_125 = arith.constant 24 : index
    %78 = vector.load %arg10[%c0_123, %c0_124, %c24_125] : memref<16x16x36xbf16, #tpu.memory_space<vmem>>, vector<16x16x4xbf16>
    tpu.vector_store %arg10[%c0_123, %c0_124, %c24_125], %77 {strides = array<i32>} : memref<16x16x36xbf16, #tpu.memory_space<vmem>>, vector<16x16x4xbf16>,
    %c2_126 = arith.constant 2 : index
    %c1_127 = arith.constant 1 : index
    %c0_128 = arith.constant 0 : index
    %79 = vector.load %arg9[%c2_126, %c1_127, %c0_128] : memref<18x18x4xbf16, #tpu.memory_space<vmem>>, vector<16x16x4xbf16>
    %c0_129 = arith.constant 0 : index
    %c0_130 = arith.constant 0 : index
    %c28_131 = arith.constant 28 : index
    %80 = vector.load %arg10[%c0_129, %c0_130, %c28_131] : memref<16x16x36xbf16, #tpu.memory_space<vmem>>, vector<16x16x4xbf16>
    tpu.vector_store %arg10[%c0_129, %c0_130, %c28_131], %79 {strides = array<i32>} : memref<16x16x36xbf16, #tpu.memory_space<vmem>>, vector<16x16x4xbf16>,
    %c2_132 = arith.constant 2 : index
    %c2_133 = arith.constant 2 : index
    %c0_134 = arith.constant 0 : index
    %81 = vector.load %arg9[%c2_132, %c2_133, %c0_134] : memref<18x18x4xbf16, #tpu.memory_space<vmem>>, vector<16x16x4xbf16>
    %c0_135 = arith.constant 0 : index
    %c0_136 = arith.constant 0 : index
    %c32_137 = arith.constant 32 : index
    %82 = vector.load %arg10[%c0_135, %c0_136, %c32_137] : memref<16x16x36xbf16, #tpu.memory_space<vmem>>, vector<16x16x4xbf16>
    tpu.vector_store %arg10[%c0_135, %c0_136, %c32_137], %81 {strides = array<i32>} : memref<16x16x36xbf16, #tpu.memory_space<vmem>>, vector<16x16x4xbf16>,
    %c0_138 = arith.constant 0 : index
    %c0_139 = arith.constant 0 : index
    %c0_140 = arith.constant 0 : index
    %83 = vector.load %arg10[%c0_138, %c0_139, %c0_140] : memref<16x16x36xbf16, #tpu.memory_space<vmem>>, vector<16x16x36xbf16>
    %84 = vector.shape_cast %83 : vector<16x16x36xbf16> to vector<256x36xbf16>
    %c0_141 = arith.constant 0 : index
    %c0_142 = arith.constant 0 : index
    %85 = vector.load %arg5[%c0_141, %c0_142] : memref<36x4xbf16, #tpu.memory_space<vmem>>, vector<36x4xbf16>
    %cst_143 = arith.constant dense<0.000000e+00> : vector<256x4xf32>
    %86 = tpu.matmul %84, %85, %cst_143 {dimension_numbers = #tpu.dot_dimension_numbers<[1], [0], [0], [1], [0, 0, 1, 1], [], []>} : vector<256x36xbf16>, vector<36x4xbf16>, vector<256x4xf32> -> vector<256x4xf32>
    %cst_144 = arith.constant dense<0.000000e+00> : vector<4xf32>
    %87 = vector.multi_reduction <add>, %86, %cst_144 [0] : vector<256x4xf32> to vector<4xf32>
    %88 = vector.shape_cast %87 : vector<4xf32> to vector<1x4xf32>
    %89 = arith.mulf %86, %86 : vector<256x4xf32>
    %cst_145 = arith.constant dense<0.000000e+00> : vector<4xf32>
    %90 = vector.multi_reduction <add>, %89, %cst_145 [0] : vector<256x4xf32> to vector<4xf32>
    %91 = vector.shape_cast %90 : vector<4xf32> to vector<1x4xf32>
    %cst_146 = arith.constant 3.906250e-03 : f32
    %92 = vector.broadcast %cst_146 : f32 to vector<1x4xf32>
    %93 = arith.mulf %88, %92 : vector<1x4xf32>
    %cst_147 = arith.constant 3.906250e-03 : f32
    %94 = vector.broadcast %cst_147 : f32 to vector<1x4xf32>
    %95 = arith.mulf %91, %94 : vector<1x4xf32>
    %96 = arith.mulf %93, %93 : vector<1x4xf32>
    %97 = arith.subf %95, %96 : vector<1x4xf32>
    %cst_148 = arith.constant 0.000000e+00 : f32
    %98 = vector.broadcast %cst_148 : f32 to vector<1x4xf32>
    %99 = arith.maximumf %97, %98 : vector<1x4xf32>
    %100 = vector.broadcast %93 : vector<1x4xf32> to vector<256x4xf32>
    %101 = arith.subf %86, %100 : vector<256x4xf32>
    %cst_149 = arith.constant 9.99999974E-6 : f32
    %102 = vector.broadcast %cst_149 : f32 to vector<1x4xf32>
    %103 = arith.addf %99, %102 : vector<1x4xf32>
    %104 = math.rsqrt %103 : vector<1x4xf32>
    %105 = vector.broadcast %104 : vector<1x4xf32> to vector<256x4xf32>
    %106 = arith.mulf %101, %105 : vector<256x4xf32>
    %c0_150 = arith.constant 0 : index
    %c0_151 = arith.constant 0 : index
    %107 = vector.load %arg6[%c0_150, %c0_151] : memref<1x4xf32, #tpu.memory_space<vmem>>, vector<1x4xf32>
    %108 = vector.broadcast %107 : vector<1x4xf32> to vector<256x4xf32>
    %109 = arith.mulf %106, %108 : vector<256x4xf32>
    %c0_152 = arith.constant 0 : index
    %c0_153 = arith.constant 0 : index
    %110 = vector.load %arg7[%c0_152, %c0_153] : memref<1x4xf32, #tpu.memory_space<vmem>>, vector<1x4xf32>
    %111 = vector.broadcast %110 : vector<1x4xf32> to vector<256x4xf32>
    %112 = arith.addf %109, %111 : vector<256x4xf32>
    %113 = vector.shape_cast %9 : vector<16x16x4xf32> to vector<256x4xf32>
    %114 = arith.addf %113, %112 : vector<256x4xf32>
    %cst_154 = arith.constant 0.000000e+00 : f32
    %115 = vector.broadcast %cst_154 : f32 to vector<256x4xf32>
    %116 = arith.maximumf %114, %115 : vector<256x4xf32>
    %117 = vector.shape_cast %116 : vector<256x4xf32> to vector<1x16x16x4xf32>
    %c0_155 = arith.constant 0 : index
    %c0_156 = arith.constant 0 : index
    %c0_157 = arith.constant 0 : index
    %c0_158 = arith.constant 0 : index
    %118 = vector.load %arg8[%c0_155, %c0_156, %c0_157, %c0_158] : memref<1x16x16x4xf32, #tpu.memory_space<vmem>>, vector<1x16x16x4xf32>
    tpu.vector_store %arg8[%c0_155, %c0_156, %c0_157, %c0_158], %117 {strides = array<i32>} : memref<1x16x16x4xf32, #tpu.memory_space<vmem>>, vector<1x16x16x4xf32>,
    return
  }
  func.func @transform_0(%arg0: i32) -> (i32, i32, i32, i32) {
    %c0_i32 = arith.constant 0 : i32
    %c0_i32_0 = arith.constant 0 : i32
    %c0_i32_1 = arith.constant 0 : i32
    %c0_i32_2 = arith.constant 0 : i32
    return %arg0, %c0_i32, %c0_i32_0, %c0_i32_1 : i32, i32, i32, i32
  }
  func.func @transform_1(%arg0: i32) -> (i32, i32) {
    %c0_i32 = arith.constant 0 : i32
    %c0_i32_0 = arith.constant 0 : i32
    %c0_i32_1 = arith.constant 0 : i32
    return %c0_i32, %c0_i32_0 : i32, i32
  }
  func.func @transform_2(%arg0: i32) -> (i32, i32) {
    %c0_i32 = arith.constant 0 : i32
    %c0_i32_0 = arith.constant 0 : i32
    %c0_i32_1 = arith.constant 0 : i32
    return %c0_i32, %c0_i32_0 : i32, i32
  }
  func.func @transform_3(%arg0: i32) -> (i32, i32) {
    %c0_i32 = arith.constant 0 : i32
    %c0_i32_0 = arith.constant 0 : i32
    %c0_i32_1 = arith.constant 0 : i32
    return %c0_i32, %c0_i32_0 : i32, i32
  }
  func.func @transform_4(%arg0: i32) -> (i32, i32) {
    %c0_i32 = arith.constant 0 : i32
    %c0_i32_0 = arith.constant 0 : i32
    %c0_i32_1 = arith.constant 0 : i32
    return %c0_i32, %c0_i32_0 : i32, i32
  }
  func.func @transform_5(%arg0: i32) -> (i32, i32) {
    %c0_i32 = arith.constant 0 : i32
    %c0_i32_0 = arith.constant 0 : i32
    %c0_i32_1 = arith.constant 0 : i32
    return %c0_i32, %c0_i32_0 : i32, i32
  }
  func.func @transform_6(%arg0: i32) -> (i32, i32) {
    %c0_i32 = arith.constant 0 : i32
    %c0_i32_0 = arith.constant 0 : i32
    %c0_i32_1 = arith.constant 0 : i32
    return %c0_i32, %c0_i32_0 : i32, i32
  }
  func.func @transform_7(%arg0: i32) -> (i32, i32, i32, i32) {
    %c0_i32 = arith.constant 0 : i32
    %c0_i32_0 = arith.constant 0 : i32
    %c0_i32_1 = arith.constant 0 : i32
    %c0_i32_2 = arith.constant 0 : i32
    return %arg0, %c0_i32, %c0_i32_0, %c0_i32_1 : i32, i32, i32, i32
  }
}

</mosaic_0001>

<llo_original>
// kernel: tpu_custom_call.1
$region0: #{tpu_custom_call.1}
  #allocation0 [shape = 'u32[]', space=smem, size = 0x4, offset = 0x4, fixed_abs, tag = 'smem constant byte address 0x4 - core index']
  #allocation1 [shape = 'u32[144,128]{1,0:T(1,128)}', space=vmem, size = 0x12000, scoped, tag = 'internal scratch']
  #allocation2 [shape = 'bf16[18,18,4]{2,1,0:T(8,128)(2,1)}', space=vmem, size = 0x1b000, scoped, tag = 'scratch operand']
  #allocation3 [shape = 'bf16[16,16,36]{2,1,0:T(8,128)(2,1)}', space=vmem, size = 0x10000, scoped, tag = 'scratch operand']
  %s0 = inlined_call_operand.vmem [shape: f32[2,16,16,4], index: 0, kind: input, shape index: {}]
  %s1 = inlined_call_operand.vmem [shape: bf16[36,4], index: 1, kind: input, shape index: {}]
  %s2 = inlined_call_operand.vmem [shape: f32[1,4], index: 2, kind: input, shape index: {}]
  %s3 = inlined_call_operand.vmem [shape: f32[1,4], index: 3, kind: input, shape index: {}]
  %s4 = inlined_call_operand.vmem [shape: bf16[36,4], index: 4, kind: input, shape index: {}]
  %s5 = inlined_call_operand.vmem [shape: f32[1,4], index: 5, kind: input, shape index: {}]
  %s6 = inlined_call_operand.vmem [shape: f32[1,4], index: 6, kind: input, shape index: {}]
  %s7 = inlined_call_operand.vmem [shape: f32[2,16,16,4], index: 7, kind: output, shape index: {}]
  %s8 = sld [smem:[#allocation0]]
  $region61: #{tpu_custom_call.1} parent=0
    _
  %s10 = ssub.s32 1, %s8
  %s11 = scalar_select 0, %s10, %s8
  loop: start=0, step=1, limit=4
  $region2: #{tpu_custom_call.1} parent=0 // loop_pre_header
    _
  $region3: #{tpu_custom_call.1} parent=0 // loop_header
    %s13 = sphi 0, %s17
    %p14 = scmp.ge.s32.totalorder %s13, 4
    %s23 = sphi 0, %s25
    %s26 = sphi 0, %s23
    %s27 = sphi 0, %s26
    %s43 = sphi 0, %s27
    %s47 = sphi 0, %s47
    %s49 = sphi 0, %s47
    %s50 = sphi 0, %s49
    %s64 = sphi 0, %s50
    %s68 = sphi 0, %s68
    %s70 = sphi 0, %s68
    %s71 = sphi 0, %s70
    %s85 = sphi 0, %s71
    %s89 = sphi 0, %s89
    %s91 = sphi 0, %s89
    %s92 = sphi 0, %s91
    %s106 = sphi 0, %s92
    %s110 = sphi 0, %s110
    %s112 = sphi 0, %s110
    %s113 = sphi 0, %s112
    %s127 = sphi 0, %s113
    %s131 = sphi 0, %s131
    %s133 = sphi 0, %s131
    %s134 = sphi 0, %s133
    %s148 = sphi 0, %s134
    %s152 = sphi 0, %s152
    %s154 = sphi 0, %s152
    %s155 = sphi 0, %s154
    %s169 = sphi 0, %s155
    %s175 = sphi 0, %s177
    %s178 = sphi 0, %s175
    %s179 = sphi 0, %s178
    %s195 = sphi 0, %s179
  $region4: #{tpu_custom_call.1} parent=0 // loop_header_branch
    %16 = sbr.rel (%p14) target = $region8
  $region5: #{tpu_custom_call.1} parent=0 // loop_body
    %s18 = ssub.s32 %s13, 1
    %s19 = ssub.s32 %s13, 2
    %s20 = sadd.s32 %s13, 1
    %s21 = ssub.s32 %s13, %s20
    %p22 = scmp.eq.s32.totalorder %s21, 0
    %s24 = sadd.s32 %s23, 1
    %s25 = scalar_select %p22, %s23, %s24
    %p28 = pneg %p22
    %p29 = scmp.eq.s32.totalorder %s13, 1
    %p30 = por %p28, %p29
    %p31 = scmp.ne.s32.totalorder %s23, %s26
    %p32 = scmp.eq.s32.totalorder %s13, 0
    %p33 = por %p31, %p32
    %p34 = scmp.ne.s32.totalorder %s23, %s26
    %p35 = scmp.eq.s32.totalorder %s18, 1
    %p36 = por %p34, %p35
    %p37 = scmp.ne.s32.totalorder %s26, %s27
    %p38 = scmp.eq.s32.totalorder %s18, 0
    %p39 = por %p37, %p38
    %p40 = scmp.ne.s32.totalorder %s26, %s27
    %p41 = scmp.eq.s32.totalorder %s19, 1
    %p42 = por %p40, %p41
    %p44 = scmp.ne.s32.totalorder %s27, %s43
    %p45 = scmp.eq.s32.totalorder %s19, 0
    %p46 = por %p44, %p45
    %s48 = sadd.s32 %s47, 1
    %p51 = scmp.eq.s32.totalorder %s13, 1
    %p52 = scmp.ne.s32.totalorder %s47, %s49
    %p53 = scmp.eq.s32.totalorder %s13, 0
    %p54 = por %p52, %p53
    %p55 = scmp.ne.s32.totalorder %s47, %s49
    %p56 = scmp.eq.s32.totalorder %s18, 1
    %p57 = por %p55, %p56
    %p58 = scmp.ne.s32.totalorder %s49, %s50
    %p59 = scmp.eq.s32.totalorder %s18, 0
    %p60 = por %p58, %p59
    %p61 = scmp.ne.s32.totalorder %s49, %s50
    %p62 = scmp.eq.s32.totalorder %s19, 1
    %p63 = por %p61, %p62
    %p65 = scmp.ne.s32.totalorder %s50, %s64
    %p66 = scmp.eq.s32.totalorder %s19, 0
    %p67 = por %p65, %p66
    %s69 = sadd.s32 %s68, 1
    %p72 = scmp.eq.s32.totalorder %s13, 1
    %p73 = scmp.ne.s32.totalorder %s68, %s70
    %p74 = scmp.eq.s32.totalorder %s13, 0
    %p75 = por %p73, %p74
    %p76 = scmp.ne.s32.totalorder %s68, %s70
    %p77 = scmp.eq.s32.totalorder %s18, 1
    %p78 = por %p76, %p77
    %p79 = scmp.ne.s32.totalorder %s70, %s71
    %p80 = scmp.eq.s32.totalorder %s18, 0
    %p81 = por %p79, %p80
    %p82 = scmp.ne.s32.totalorder %s70, %s71
    %p83 = scmp.eq.s32.totalorder %s19, 1
    %p84 = por %p82, %p83
    %p86 = scmp.ne.s32.totalorder %s71, %s85
    %p87 = scmp.eq.s32.totalorder %s19, 0
    %p88 = por %p86, %p87
    %s90 = sadd.s32 %s89, 1
    %p93 = scmp.eq.s32.totalorder %s13, 1
    %p94 = scmp.ne.s32.totalorder %s89, %s91
    %p95 = scmp.eq.s32.totalorder %s13, 0
    %p96 = por %p94, %p95
    %p97 = scmp.ne.s32.totalorder %s89, %s91
    %p98 = scmp.eq.s32.totalorder %s18, 1
    %p99 = por %p97, %p98
    %p100 = scmp.ne.s32.totalorder %s91, %s92
    %p101 = scmp.eq.s32.totalorder %s18, 0
    %p102 = por %p100, %p101
    %p103 = scmp.ne.s32.totalorder %s91, %s92
    %p104 = scmp.eq.s32.totalorder %s19, 1
    %p105 = por %p103, %p104
    %p107 = scmp.ne.s32.totalorder %s92, %s106
    %p108 = scmp.eq.s32.totalorder %s19, 0
    %p109 = por %p107, %p108
    %s111 = sadd.s32 %s110, 1
    %p114 = scmp.eq.s32.totalorder %s13, 1
    %p115 = scmp.ne.s32.totalorder %s110, %s112
    %p116 = scmp.eq.s32.totalorder %s13, 0
    %p117 = por %p115, %p116
    %p118 = scmp.ne.s32.totalorder %s110, %s112
    %p119 = scmp.eq.s32.totalorder %s18, 1
    %p120 = por %p118, %p119
    %p121 = scmp.ne.s32.totalorder %s112, %s113
    %p122 = scmp.eq.s32.totalorder %s18, 0
    %p123 = por %p121, %p122
    %p124 = scmp.ne.s32.totalorder %s112, %s113
    %p125 = scmp.eq.s32.totalorder %s19, 1
    %p126 = por %p124, %p125
    %p128 = scmp.ne.s32.totalorder %s113, %s127
    %p129 = scmp.eq.s32.totalorder %s19, 0
    %p130 = por %p128, %p129
    %s132 = sadd.s32 %s131, 1
    %p135 = scmp.eq.s32.totalorder %s13, 1
    %p136 = scmp.ne.s32.totalorder %s131, %s133
    %p137 = scmp.eq.s32.totalorder %s13, 0
    %p138 = por %p136, %p137
    %p139 = scmp.ne.s32.totalorder %s131, %s133
    %p140 = scmp.eq.s32.totalorder %s18, 1
    %p141 = por %p139, %p140
    %p142 = scmp.ne.s32.totalorder %s133, %s134
    %p143 = scmp.eq.s32.totalorder %s18, 0
    %p144 = por %p142, %p143
    %p145 = scmp.ne.s32.totalorder %s133, %s134
    %p146 = scmp.eq.s32.totalorder %s19, 1
    %p147 = por %p145, %p146
    %p149 = scmp.ne.s32.totalorder %s134, %s148
    %p150 = scmp.eq.s32.totalorder %s19, 0
    %p151 = por %p149, %p150
    %s153 = sadd.s32 %s152, 1
    %p156 = scmp.eq.s32.totalorder %s13, 1
    %p157 = scmp.ne.s32.totalorder %s152, %s154
    %p158 = scmp.eq.s32.totalorder %s13, 0
    %p159 = por %p157, %p158
    %p160 = scmp.ne.s32.totalorder %s152, %s154
    %p161 = scmp.eq.s32.totalorder %s18, 1
    %p162 = por %p160, %p161
    %p163 = scmp.ne.s32.totalorder %s154, %s155
    %p164 = scmp.eq.s32.totalorder %s18, 0
    %p165 = por %p163, %p164
    %p166 = scmp.ne.s32.totalorder %s154, %s155
    %p167 = scmp.eq.s32.totalorder %s19, 1
    %p168 = por %p166, %p167
    %p170 = scmp.ne.s32.totalorder %s155, %s169
    %p171 = scmp.eq.s32.totalorder %s19, 0
    %p172 = por %p170, %p171
    %s173 = ssub.s32 %s13, %s20
    %p174 = scmp.eq.s32.totalorder %s173, 0
    %s176 = sadd.s32 %s175, 1
    %s177 = scalar_select %p174, %s175, %s176
    %p180 = pneg %p174
    %p181 = scmp.eq.s32.totalorder %s13, 1
    %p182 = por %p180, %p181
    %p183 = scmp.ne.s32.totalorder %s175, %s178
    %p184 = scmp.eq.s32.totalorder %s13, 0
    %p185 = por %p183, %p184
    %p186 = scmp.ne.s32.totalorder %s175, %s178
    %p187 = scmp.eq.s32.totalorder %s18, 1
    %p188 = por %p186, %p187
    %p189 = scmp.ne.s32.totalorder %s178, %s179
    %p190 = scmp.eq.s32.totalorder %s18, 0
    %p191 = por %p189, %p190
    %p192 = scmp.ne.s32.totalorder %s178, %s179
    %p193 = scmp.eq.s32.totalorder %s19, 1
    %p194 = por %p192, %p193
    %p196 = scmp.ne.s32.totalorder %s179, %s195
    %p197 = scmp.eq.s32.totalorder %s19, 0
    %p198 = por %p196, %p197
    %p199 = scmp.le.s32.totalorder 1, %s13
    %p200 = scmp.lt.s32.totalorder %s13, 3
    %p201 = pnand %p199, %p200
    %p202 = pneg %p201
    // Predicated region
    $region9: #{tpu_custom_call.1} parent=5 // pred_check
      _
    $region10: #{tpu_custom_call.1} parent=5 // pred_check_branch
      %204 = sbr.rel (%p201) target = $region12
    $region11: #{tpu_custom_call.1} parent=5 // pred_region
      %s205 = ssub.s32 %s13, 1
      // Predicated region
      $region13: #{tpu_custom_call.1} parent=11 // pred_check
        %p206 = pneg %p60
      $region14: #{tpu_custom_call.1} parent=11 // pred_check_branch
        %208 = sbr.rel (%p206) target = $region16
      $region15: #{tpu_custom_call.1} parent=11 // pred_region
        _
      $region16: #{tpu_custom_call.1} parent=11 // pred_fallthru
        _
      // Predicated region
      $region17: #{tpu_custom_call.1} parent=11 // pred_check
        %p209 = pneg %p81
      $region18: #{tpu_custom_call.1} parent=11 // pred_check_branch
        %211 = sbr.rel (%p209) target = $region20
      $region19: #{tpu_custom_call.1} parent=11 // pred_region
        _
      $region20: #{tpu_custom_call.1} parent=11 // pred_fallthru
        _
      // Predicated region
      $region21: #{tpu_custom_call.1} parent=11 // pred_check
        %p212 = pneg %p102
      $region22: #{tpu_custom_call.1} parent=11 // pred_check_branch
        %214 = sbr.rel (%p212) target = $region24
      $region23: #{tpu_custom_call.1} parent=11 // pred_region
        _
      $region24: #{tpu_custom_call.1} parent=11 // pred_fallthru
        _
      // Predicated region
      $region25: #{tpu_custom_call.1} parent=11 // pred_check
        %p215 = pneg %p123
      $region26: #{tpu_custom_call.1} parent=11 // pred_check_branch
        %217 = sbr.rel (%p215) target = $region28
      $region27: #{tpu_custom_call.1} parent=11 // pred_region
        _
      $region28: #{tpu_custom_call.1} parent=11 // pred_fallthru
        _
      // Predicated region
      $region29: #{tpu_custom_call.1} parent=11 // pred_check
        %p218 = pneg %p144
      $region30: #{tpu_custom_call.1} parent=11 // pred_check_branch
        %220 = sbr.rel (%p218) target = $region32
      $region31: #{tpu_custom_call.1} parent=11 // pred_region
        _
      $region32: #{tpu_custom_call.1} parent=11 // pred_fallthru
        _
      // Predicated region
      $region33: #{tpu_custom_call.1} parent=11 // pred_check
        %p221 = pneg %p165
      $region34: #{tpu_custom_call.1} parent=11 // pred_check_branch
        %223 = sbr.rel (%p221) target = $region36
      $region35: #{tpu_custom_call.1} parent=11 // pred_region
        _
      $region36: #{tpu_custom_call.1} parent=11 // pred_fallthru
        _
    $region12: #{tpu_custom_call.1} parent=5 // pred_fallthru
      _
    %p224 = scmp.lt.s32.totalorder %s13, 2
    // Predicated region
    $region37: #{tpu_custom_call.1} parent=5 // pred_check
      %p225 = pneg %p224
    $region38: #{tpu_custom_call.1} parent=5 // pred_check_branch
      %227 = sbr.rel (%p225) target = $region40
    $region39: #{tpu_custom_call.1} parent=5 // pred_region
      // Predicated region
      $region41: #{tpu_custom_call.1} parent=39 // pred_check
        %p228 = pneg %p33
      $region42: #{tpu_custom_call.1} parent=39 // pred_check_branch
        %230 = sbr.rel (%p228) target = $region44
      $region43: #{tpu_custom_call.1} parent=39 // pred_region
        %p231 = scmp.lt.s32.totalorder %s13, 1
        %s232 = scalar_select %p231, %s13, 1
        %s233 = smul.addr %s232, 32
        %s234 = smul.addr %s233, 8
        %s235 = scalar_lea.vmem %s0, %s234
      $region44: #{tpu_custom_call.1} parent=39 // pred_fallthru
        _
    $region40: #{tpu_custom_call.1} parent=5 // pred_fallthru
      _
    %p236 = scmp.le.s32.totalorder 1, %s13
    %p237 = scmp.lt.s32.totalorder %s13, 3
    %p238 = pnand %p236, %p237
    %p239 = pneg %p238
    // Predicated region
    $region45: #{tpu_custom_call.1} parent=5 // pred_check
      _
    $region46: #{tpu_custom_call.1} parent=5 // pred_check_branch
      %241 = sbr.rel (%p238) target = $region48
    $region47: #{tpu_custom_call.1} parent=5 // pred_region
      %s242 = ssub.s32 %s13, 1
      %p243 = scmp.lt.s32.totalorder %s18, 1
      %s244 = scalar_select %p243, %s18, 1
      %s245 = smul.addr %s244, 32
      %s246 = smul.addr %s245, 8
      %s247 = scalar_lea.vmem %s0, %s246
      %p248 = pneg %p39
      %p249 = pneg %p36
      %p250 = pneg %p60
      %p251 = pneg %p57
      %p252 = pneg %p81
      %p253 = pneg %p78
      %p254 = pneg %p102
      %p255 = pneg %p99
      %p256 = pneg %p123
      %p257 = pneg %p120
      %p258 = pneg %p144
      %p259 = pneg %p141
      %p260 = pneg %p165
      %p261 = pneg %p162
      %p262 = pneg %p191
      %p263 = pneg %p188
      %p264 = scmp.lt.s32.totalorder %s18, 1
      %s265 = scalar_select %p264, %s18, 1
      %s266 = smul.addr %s265, 32
      %s267 = smul.addr %s266, 8
      %s268 = scalar_lea.vmem %s7, %s267
      %p269 = scmp.lt.s32.totalorder %s18, 1
      %s270 = scalar_select %p269, %s18, 1
      %s271 = smul.addr %s270, 32
      %s272 = smul.addr %s271, 8
      %s273 = scalar_lea.vmem %s0, %s272
      %p274 = scmp.lt.s32.totalorder %s18, 1
      %s275 = scalar_select %p274, %s18, 1
      %s276 = smul.addr %s275, 32
      %s277 = smul.addr %s276, 8
      %s278 = scalar_lea.vmem %s7, %s277
      %vm280 = vcmask 27648
      %281 = vst.msk [vmem:[#allocation2] sm:$0xf] %vm280, 0
      %282 = vst.msk [vmem:[#allocation2 + $0x4] sm:$0xf] %vm280, 0
      %vm283 = vcmask 24576
      %284 = vst.msk [vmem:[#allocation2 + $0x8] sm:$0x1] %vm283, 0
      %s285 = scalar_lea.vmem [#allocation2], 204
      %286 = vst.msk [vmem:[%s285] sm:$0xf] %vm280, 0
      %287 = vst.msk [vmem:[%s285 + $0x4] sm:$0xf] %vm280, 0
      %288 = vst.msk [vmem:[%s285 + $0x8] sm:$0x1] %vm283, 0
      %s289 = scalar_lea.vmem [#allocation2], 12
      %vm290 = vcmask 24576
      %vm291 = vsmask.f32 256
      %vm292 = vmand %vm290, %vm291
      %v293 = vld [vmem:[%s289] sm:$0x1]
      %v294 = vsel %vm292, 0, %v293
      %295 = vst [vmem:[%s289] sm:$0x1] %v294
      %v296 = vld [vmem:[%s289 + $0xc] sm:$0x1]
      %v297 = vsel %vm292, 0, %v296
      %298 = vst [vmem:[%s289 + $0xc] sm:$0x1] %v297
      %v299 = vld [vmem:[%s289 + $0x18] sm:$0x1]
      %v300 = vsel %vm292, 0, %v299
      %301 = vst [vmem:[%s289 + $0x18] sm:$0x1] %v300
      %v302 = vld [vmem:[%s289 + $0x24] sm:$0x1]
      %v303 = vsel %vm292, 0, %v302
      %304 = vst [vmem:[%s289 + $0x24] sm:$0x1] %v303
      %v305 = vld [vmem:[%s289 + $0x30] sm:$0x1]
      %v306 = vsel %vm292, 0, %v305
      %307 = vst [vmem:[%s289 + $0x30] sm:$0x1] %v306
      %v308 = vld [vmem:[%s289 + $0x3c] sm:$0x1]
      %v309 = vsel %vm292, 0, %v308
      %310 = vst [vmem:[%s289 + $0x3c] sm:$0x1] %v309
      %v311 = vld [vmem:[%s289 + $0x48] sm:$0x1]
      %v312 = vsel %vm292, 0, %v311
      %313 = vst [vmem:[%s289 + $0x48] sm:$0x1] %v312
      %v314 = vld [vmem:[%s289 + $0x54] sm:$0x1]
      %v315 = vsel %vm292, 0, %v314
      %316 = vst [vmem:[%s289 + $0x54] sm:$0x1] %v315
      %v317 = vld [vmem:[%s289 + $0x60] sm:$0x1]
      %v318 = vsel %vm292, 0, %v317
      %319 = vst [vmem:[%s289 + $0x60] sm:$0x1] %v318
      %v320 = vld [vmem:[%s289 + $0x6c] sm:$0x1]
      %v321 = vsel %vm292, 0, %v320
      %322 = vst [vmem:[%s289 + $0x6c] sm:$0x1] %v321
      %v323 = vld [vmem:[%s289 + $0x78] sm:$0x1]
      %v324 = vsel %vm292, 0, %v323
      %325 = vst [vmem:[%s289 + $0x78] sm:$0x1] %v324
      %v326 = vld [vmem:[%s289 + $0x84] sm:$0x1]
      %v327 = vsel %vm292, 0, %v326
      %328 = vst [vmem:[%s289 + $0x84] sm:$0x1] %v327
      %v329 = vld [vmem:[%s289 + $0x90] sm:$0x1]
      %v330 = vsel %vm292, 0, %v329
      %331 = vst [vmem:[%s289 + $0x90] sm:$0x1] %v330
      %v332 = vld [vmem:[%s289 + $0x9c] sm:$0x1]
      %v333 = vsel %vm292, 0, %v332
      %334 = vst [vmem:[%s289 + $0x9c] sm:$0x1] %v333
      %v335 = vld [vmem:[%s289 + $0xa8] sm:$0x1]
      %v336 = vsel %vm292, 0, %v335
      %337 = vst [vmem:[%s289 + $0xa8] sm:$0x1] %v336
      %v338 = vld [vmem:[%s289 + $0xb4] sm:$0x1]
      %v339 = vsel %vm292, 0, %v338
      %340 = vst [vmem:[%s289 + $0xb4] sm:$0x1] %v339
      %vm341 = vsmask.f32 7938
      %vm342 = vmand %vm290, %vm341
      %v343 = vld [vmem:[%s289 + $0x8] sm:$0x1]
      %v344 = vsel %vm342, 0, %v343
      %345 = vst [vmem:[%s289 + $0x8] sm:$0x1] %v344
      %v346 = vld [vmem:[%s289 + $0x14] sm:$0x1]
      %v347 = vsel %vm342, 0, %v346
      %348 = vst [vmem:[%s289 + $0x14] sm:$0x1] %v347
      %v349 = vld [vmem:[%s289 + $0x20] sm:$0x1]
      %v350 = vsel %vm342, 0, %v349
      %351 = vst [vmem:[%s289 + $0x20] sm:$0x1] %v350
      %v352 = vld [vmem:[%s289 + $0x2c] sm:$0x1]
      %v353 = vsel %vm342, 0, %v352
      %354 = vst [vmem:[%s289 + $0x2c] sm:$0x1] %v353
      %v355 = vld [vmem:[%s289 + $0x38] sm:$0x1]
      %v356 = vsel %vm342, 0, %v355
      %357 = vst [vmem:[%s289 + $0x38] sm:$0x1] %v356
      %v358 = vld [vmem:[%s289 + $0x44] sm:$0x1]
      %v359 = vsel %vm342, 0, %v358
      %360 = vst [vmem:[%s289 + $0x44] sm:$0x1] %v359
      %v361 = vld [vmem:[%s289 + $0x50] sm:$0x1]
      %v362 = vsel %vm342, 0, %v361
      %363 = vst [vmem:[%s289 + $0x50] sm:$0x1] %v362
      %v364 = vld [vmem:[%s289 + $0x5c] sm:$0x1]
      %v365 = vsel %vm342, 0, %v364
      %366 = vst [vmem:[%s289 + $0x5c] sm:$0x1] %v365
      %v367 = vld [vmem:[%s289 + $0x68] sm:$0x1]
      %v368 = vsel %vm342, 0, %v367
      %369 = vst [vmem:[%s289 + $0x68] sm:$0x1] %v368
      %v370 = vld [vmem:[%s289 + $0x74] sm:$0x1]
      %v371 = vsel %vm342, 0, %v370
      %372 = vst [vmem:[%s289 + $0x74] sm:$0x1] %v371
      %v373 = vld [vmem:[%s289 + $0x80] sm:$0x1]
      %v374 = vsel %vm342, 0, %v373
      %375 = vst [vmem:[%s289 + $0x80] sm:$0x1] %v374
      %v376 = vld [vmem:[%s289 + $0x8c] sm:$0x1]
      %v377 = vsel %vm342, 0, %v376
      %378 = vst [vmem:[%s289 + $0x8c] sm:$0x1] %v377
      %v379 = vld [vmem:[%s289 + $0x98] sm:$0x1]
      %v380 = vsel %vm342, 0, %v379
      %381 = vst [vmem:[%s289 + $0x98] sm:$0x1] %v380
      %v382 = vld [vmem:[%s289 + $0xa4] sm:$0x1]
      %v383 = vsel %vm342, 0, %v382
      %384 = vst [vmem:[%s289 + $0xa4] sm:$0x1] %v383
      %v385 = vld [vmem:[%s289 + $0xb0] sm:$0x1]
      %v386 = vsel %vm342, 0, %v385
      %387 = vst [vmem:[%s289 + $0xb0] sm:$0x1] %v386
      %v388 = vld [vmem:[%s289 + $0xbc] sm:$0x1]
      %v389 = vsel %vm342, 0, %v388
      %390 = vst [vmem:[%s289 + $0xbc] sm:$0x1] %v389
      %v391 = vld [vmem:[%s273] sm:$0xff]
      %v392 = vld [vmem:[%s273 + $0x8] sm:$0xff]
      %v393 = vld [vmem:[%s273 + $0x10] sm:$0xff]
      %v394 = vld [vmem:[%s273 + $0x18] sm:$0xff]
      %v395 = vld [vmem:[%s273 + $0x20] sm:$0xff]
      %v396 = vld [vmem:[%s273 + $0x28] sm:$0xff]
      %v397 = vld [vmem:[%s273 + $0x30] sm:$0xff]
      %v398 = vld [vmem:[%s273 + $0x38] sm:$0xff]
      %v399 = vld [vmem:[%s273 + $0x40] sm:$0xff]
      %v400 = vld [vmem:[%s273 + $0x48] sm:$0xff]
      %v401 = vld [vmem:[%s273 + $0x50] sm:$0xff]
      %v402 = vld [vmem:[%s273 + $0x58] sm:$0xff]
      %v403 = vld [vmem:[%s273 + $0x60] sm:$0xff]
      %v404 = vld [vmem:[%s273 + $0x68] sm:$0xff]
      %v405 = vld [vmem:[%s273 + $0x70] sm:$0xff]
      %v406 = vld [vmem:[%s273 + $0x78] sm:$0xff]
      %v407 = vld [vmem:[%s273 + $0x80] sm:$0xff]
      %v408 = vld [vmem:[%s273 + $0x88] sm:$0xff]
      %v409 = vld [vmem:[%s273 + $0x90] sm:$0xff]
      %v410 = vld [vmem:[%s273 + $0x98] sm:$0xff]
      %v411 = vld [vmem:[%s273 + $0xa0] sm:$0xff]
      %v412 = vld [vmem:[%s273 + $0xa8] sm:$0xff]
      %v413 = vld [vmem:[%s273 + $0xb0] sm:$0xff]
      %v414 = vld [vmem:[%s273 + $0xb8] sm:$0xff]
      %v415 = vld [vmem:[%s273 + $0xc0] sm:$0xff]
      %v416 = vld [vmem:[%s273 + $0xc8] sm:$0xff]
      %v417 = vld [vmem:[%s273 + $0xd0] sm:$0xff]
      %v418 = vld [vmem:[%s273 + $0xd8] sm:$0xff]
      %v419 = vld [vmem:[%s273 + $0xe0] sm:$0xff]
      %v420 = vld [vmem:[%s273 + $0xe8] sm:$0xff]
      %v421 = vld [vmem:[%s273 + $0xf0] sm:$0xff]
      %v422 = vld [vmem:[%s273 + $0xf8] sm:$0xff]
      %v423 = vpack.c.bf16 %v392, %v391
      %v424 = vpack.c.bf16 %v394, %v393
      %v425 = vpack.c.bf16 %v396, %v395
      %v426 = vpack.c.bf16 %v398, %v397
      %v427 = vpack.c.bf16 %v400, %v399
      %v428 = vpack.c.bf16 %v402, %v401
      %v429 = vpack.c.bf16 %v404, %v403
      %v430 = vpack.c.bf16 %v406, %v405
      %v431 = vpack.c.bf16 %v408, %v407
      %v432 = vpack.c.bf16 %v410, %v409
      %v433 = vpack.c.bf16 %v412, %v411
      %v434 = vpack.c.bf16 %v414, %v413
      %v435 = vpack.c.bf16 %v416, %v415
      %v436 = vpack.c.bf16 %v418, %v417
      %v437 = vpack.c.bf16 %v420, %v419
      %v438 = vpack.c.bf16 %v422, %v421
      %v455 = vunpack.c.l.b16 %v423
      %v456 = vunpack.c.h.b16 %v423
      %v457 = vunpack.c.l.b16 %v424
      %v458 = vunpack.c.h.b16 %v424
      %v459 = vunpack.c.l.b16 %v425
      %v460 = vunpack.c.h.b16 %v425
      %v461 = vunpack.c.l.b16 %v426
      %v462 = vunpack.c.h.b16 %v426
      %v463 = vunpack.c.l.b16 %v427
      %v464 = vunpack.c.h.b16 %v427
      %v465 = vunpack.c.l.b16 %v428
      %v466 = vunpack.c.h.b16 %v428
      %v467 = vunpack.c.l.b16 %v429
      %v468 = vunpack.c.h.b16 %v429
      %v469 = vunpack.c.l.b16 %v430
      %v470 = vunpack.c.h.b16 %v430
      %v471 = vunpack.c.l.b16 %v431
      %v472 = vunpack.c.h.b16 %v431
      %v473 = vunpack.c.l.b16 %v432
      %v474 = vunpack.c.h.b16 %v432
      %v475 = vunpack.c.l.b16 %v433
      %v476 = vunpack.c.h.b16 %v433
      %v477 = vunpack.c.l.b16 %v434
      %v478 = vunpack.c.h.b16 %v434
      %v479 = vunpack.c.l.b16 %v435
      %v480 = vunpack.c.h.b16 %v435
      %v481 = vunpack.c.l.b16 %v436
      %v482 = vunpack.c.h.b16 %v436
      %v483 = vunpack.c.l.b16 %v437
      %v484 = vunpack.c.h.b16 %v437
      %v485 = vunpack.c.l.b16 %v438
      %v486 = vunpack.c.h.b16 %v438
      %v487 = vpack.c.b16 %v455, %v455
      %v488 = vpack.c.b16 %v456, %v456
      %v489 = vpack.c.b16 %v457, %v457
      %v490 = vpack.c.b16 %v458, %v458
      %v491 = vpack.c.b16 %v459, %v459
      %v492 = vpack.c.b16 %v460, %v460
      %v493 = vpack.c.b16 %v461, %v461
      %v494 = vpack.c.b16 %v462, %v462
      %v495 = vpack.c.b16 %v463, %v463
      %v496 = vpack.c.b16 %v464, %v464
      %v497 = vpack.c.b16 %v465, %v465
      %v498 = vpack.c.b16 %v466, %v466
      %v499 = vpack.c.b16 %v467, %v467
      %v500 = vpack.c.b16 %v468, %v468
      %v501 = vpack.c.b16 %v469, %v469
      %v502 = vpack.c.b16 %v470, %v470
      %v503 = vpack.c.b16 %v471, %v471
      %v504 = vpack.c.b16 %v472, %v472
      %v505 = vpack.c.b16 %v473, %v473
      %v506 = vpack.c.b16 %v474, %v474
      %v507 = vpack.c.b16 %v475, %v475
      %v508 = vpack.c.b16 %v476, %v476
      %v509 = vpack.c.b16 %v477, %v477
      %v510 = vpack.c.b16 %v478, %v478
      %v511 = vpack.c.b16 %v479, %v479
      %v512 = vpack.c.b16 %v480, %v480
      %v513 = vpack.c.b16 %v481, %v481
      %v514 = vpack.c.b16 %v482, %v482
      %v515 = vpack.c.b16 %v483, %v483
      %v516 = vpack.c.b16 %v484, %v484
      %v517 = vpack.c.b16 %v485, %v485
      %v518 = vpack.c.b16 %v486, %v486
      %vm519 = vsmask.f32 4368
      %vm520 = vmor %vm291, %vm519
      %v522 = vshrl.u32 %v487, 16
      %v524 = vrot.slane %v522, 7
      %v525 = vshll.u32 %v487, 16
      %v527 = vor.u32 %v524, %v525
      %v528 = vrot.slane %v524, 4
      %v530 = vshrl.u32 %v488, 16
      %v532 = vrot.slane %v530, 7
      %v533 = vshll.u32 %v488, 16
      %v535 = vor.u32 %v532, %v533
      %v536 = vsel %vm520, %v528, %v535
      %v537 = vrot.slane %v532, 4
      %v539 = vshrl.u32 %v489, 16
      %v541 = vrot.slane %v539, 7
      %v542 = vshll.u32 %v489, 16
      %v544 = vor.u32 %v541, %v542
      %v545 = vrot.slane %v541, 4
      %v547 = vshrl.u32 %v490, 16
      %v549 = vrot.slane %v547, 7
      %v550 = vshll.u32 %v490, 16
      %v552 = vor.u32 %v549, %v550
      %v553 = vsel %vm520, %v545, %v552
      %v554 = vrot.slane %v549, 4
      %v556 = vshrl.u32 %v491, 16
      %v558 = vrot.slane %v556, 7
      %v559 = vshll.u32 %v491, 16
      %v561 = vor.u32 %v558, %v559
      %v562 = vrot.slane %v558, 4
      %v564 = vshrl.u32 %v492, 16
      %v566 = vrot.slane %v564, 7
      %v567 = vshll.u32 %v492, 16
      %v569 = vor.u32 %v566, %v567
      %v570 = vsel %vm520, %v562, %v569
      %v571 = vrot.slane %v566, 4
      %v573 = vshrl.u32 %v493, 16
      %v575 = vrot.slane %v573, 7
      %v576 = vshll.u32 %v493, 16
      %v578 = vor.u32 %v575, %v576
      %v579 = vrot.slane %v575, 4
      %v581 = vshrl.u32 %v494, 16
      %v583 = vrot.slane %v581, 7
      %v584 = vshll.u32 %v494, 16
      %v586 = vor.u32 %v583, %v584
      %v587 = vsel %vm520, %v579, %v586
      %v588 = vrot.slane %v583, 4
      %v590 = vshrl.u32 %v495, 16
      %v592 = vrot.slane %v590, 7
      %v593 = vshll.u32 %v495, 16
      %v595 = vor.u32 %v592, %v593
      %v596 = vrot.slane %v592, 4
      %v598 = vshrl.u32 %v496, 16
      %v600 = vrot.slane %v598, 7
      %v601 = vshll.u32 %v496, 16
      %v603 = vor.u32 %v600, %v601
      %v604 = vsel %vm520, %v596, %v603
      %v605 = vrot.slane %v600, 4
      %v607 = vshrl.u32 %v497, 16
      %v609 = vrot.slane %v607, 7
      %v610 = vshll.u32 %v497, 16
      %v612 = vor.u32 %v609, %v610
      %v613 = vrot.slane %v609, 4
      %v615 = vshrl.u32 %v498, 16
      %v617 = vrot.slane %v615, 7
      %v618 = vshll.u32 %v498, 16
      %v620 = vor.u32 %v617, %v618
      %v621 = vsel %vm520, %v613, %v620
      %v622 = vrot.slane %v617, 4
      %v624 = vshrl.u32 %v499, 16
      %v626 = vrot.slane %v624, 7
      %v627 = vshll.u32 %v499, 16
      %v629 = vor.u32 %v626, %v627
      %v630 = vrot.slane %v626, 4
      %v632 = vshrl.u32 %v500, 16
      %v634 = vrot.slane %v632, 7
      %v635 = vshll.u32 %v500, 16
      %v637 = vor.u32 %v634, %v635
      %v638 = vsel %vm520, %v630, %v637
      %v639 = vrot.slane %v634, 4
      %v641 = vshrl.u32 %v501, 16
      %v643 = vrot.slane %v641, 7
      %v644 = vshll.u32 %v501, 16
      %v646 = vor.u32 %v643, %v644
      %v647 = vrot.slane %v643, 4
      %v649 = vshrl.u32 %v502, 16
      %v651 = vrot.slane %v649, 7
      %v652 = vshll.u32 %v502, 16
      %v654 = vor.u32 %v651, %v652
      %v655 = vsel %vm520, %v647, %v654
      %v656 = vrot.slane %v651, 4
      %v658 = vshrl.u32 %v503, 16
      %v660 = vrot.slane %v658, 7
      %v661 = vshll.u32 %v503, 16
      %v663 = vor.u32 %v660, %v661
      %v664 = vrot.slane %v660, 4
      %v666 = vshrl.u32 %v504, 16
      %v668 = vrot.slane %v666, 7
      %v669 = vshll.u32 %v504, 16
      %v671 = vor.u32 %v668, %v669
      %v672 = vsel %vm520, %v664, %v671
      %v673 = vrot.slane %v668, 4
      %v675 = vshrl.u32 %v505, 16
      %v677 = vrot.slane %v675, 7
      %v678 = vshll.u32 %v505, 16
      %v680 = vor.u32 %v677, %v678
      %v681 = vrot.slane %v677, 4
      %v683 = vshrl.u32 %v506, 16
      %v685 = vrot.slane %v683, 7
      %v686 = vshll.u32 %v506, 16
      %v688 = vor.u32 %v685, %v686
      %v689 = vsel %vm520, %v681, %v688
      %v690 = vrot.slane %v685, 4
      %v692 = vshrl.u32 %v507, 16
      %v694 = vrot.slane %v692, 7
      %v695 = vshll.u32 %v507, 16
      %v697 = vor.u32 %v694, %v695
      %v698 = vrot.slane %v694, 4
      %v700 = vshrl.u32 %v508, 16
      %v702 = vrot.slane %v700, 7
      %v703 = vshll.u32 %v508, 16
      %v705 = vor.u32 %v702, %v703
      %v706 = vsel %vm520, %v698, %v705
      %v707 = vrot.slane %v702, 4
      %v709 = vshrl.u32 %v509, 16
      %v711 = vrot.slane %v709, 7
      %v712 = vshll.u32 %v509, 16
      %v714 = vor.u32 %v711, %v712
      %v715 = vrot.slane %v711, 4
      %v717 = vshrl.u32 %v510, 16
      %v719 = vrot.slane %v717, 7
      %v720 = vshll.u32 %v510, 16
      %v722 = vor.u32 %v719, %v720
      %v723 = vsel %vm520, %v715, %v722
      %v724 = vrot.slane %v719, 4
      %v726 = vshrl.u32 %v511, 16
      %v728 = vrot.slane %v726, 7
      %v729 = vshll.u32 %v511, 16
      %v731 = vor.u32 %v728, %v729
      %v732 = vrot.slane %v728, 4
      %v734 = vshrl.u32 %v512, 16
      %v736 = vrot.slane %v734, 7
      %v737 = vshll.u32 %v512, 16
      %v739 = vor.u32 %v736, %v737
      %v740 = vsel %vm520, %v732, %v739
      %v741 = vrot.slane %v736, 4
      %v743 = vshrl.u32 %v513, 16
      %v745 = vrot.slane %v743, 7
      %v746 = vshll.u32 %v513, 16
      %v748 = vor.u32 %v745, %v746
      %v749 = vrot.slane %v745, 4
      %v751 = vshrl.u32 %v514, 16
      %v753 = vrot.slane %v751, 7
      %v754 = vshll.u32 %v514, 16
      %v756 = vor.u32 %v753, %v754
      %v757 = vsel %vm520, %v749, %v756
      %v758 = vrot.slane %v753, 4
      %v760 = vshrl.u32 %v515, 16
      %v762 = vrot.slane %v760, 7
      %v763 = vshll.u32 %v515, 16
      %v765 = vor.u32 %v762, %v763
      %v766 = vrot.slane %v762, 4
      %v768 = vshrl.u32 %v516, 16
      %v770 = vrot.slane %v768, 7
      %v771 = vshll.u32 %v516, 16
      %v773 = vor.u32 %v770, %v771
      %v774 = vsel %vm520, %v766, %v773
      %v775 = vrot.slane %v770, 4
      %v777 = vshrl.u32 %v517, 16
      %v779 = vrot.slane %v777, 7
      %v780 = vshll.u32 %v517, 16
      %v782 = vor.u32 %v779, %v780
      %v783 = vrot.slane %v779, 4
      %v785 = vshrl.u32 %v518, 16
      %v787 = vrot.slane %v785, 7
      %v788 = vshll.u32 %v518, 16
      %v790 = vor.u32 %v787, %v788
      %v791 = vsel %vm520, %v783, %v790
      %v792 = vrot.slane %v787, 4
      %vm841 = vcmask 27648
      %vm842 = vmand %vm841, %vm341
      %v843 = vld [vmem:[%s289] sm:$0xf]
      %v844 = vsel %vm842, %v527, %v843
      %845 = vst [vmem:[%s289] sm:$0xf] %v844
      %846 = vst.msk [vmem:[%s289 + $0x4] sm:$0xf] %vm280, %v536
      %v847 = vld [vmem:[%s289 + $0x8] sm:$0x1]
      %v848 = vsel %vm292, %v537, %v847
      %849 = vst [vmem:[%s289 + $0x8] sm:$0x1] %v848
      %v850 = vld [vmem:[%s289 + $0xc] sm:$0xf]
      %v851 = vsel %vm842, %v544, %v850
      %852 = vst [vmem:[%s289 + $0xc] sm:$0xf] %v851
      %853 = vst.msk [vmem:[%s289 + $0x10] sm:$0xf] %vm280, %v553
      %v854 = vld [vmem:[%s289 + $0x14] sm:$0x1]
      %v855 = vsel %vm292, %v554, %v854
      %856 = vst [vmem:[%s289 + $0x14] sm:$0x1] %v855
      %v857 = vld [vmem:[%s289 + $0x18] sm:$0xf]
      %v858 = vsel %vm842, %v561, %v857
      %859 = vst [vmem:[%s289 + $0x18] sm:$0xf] %v858
      %860 = vst.msk [vmem:[%s289 + $0x1c] sm:$0xf] %vm280, %v570
      %v861 = vld [vmem:[%s289 + $0x20] sm:$0x1]
      %v862 = vsel %vm292, %v571, %v861
      %863 = vst [vmem:[%s289 + $0x20] sm:$0x1] %v862
      %v864 = vld [vmem:[%s289 + $0x24] sm:$0xf]
      %v865 = vsel %vm842, %v578, %v864
      %866 = vst [vmem:[%s289 + $0x24] sm:$0xf] %v865
      %867 = vst.msk [vmem:[%s289 + $0x28] sm:$0xf] %vm280, %v587
      %v868 = vld [vmem:[%s289 + $0x2c] sm:$0x1]
      %v869 = vsel %vm292, %v588, %v868
      %870 = vst [vmem:[%s289 + $0x2c] sm:$0x1] %v869
      %v871 = vld [vmem:[%s289 + $0x30] sm:$0xf]
      %v872 = vsel %vm842, %v595, %v871
      %873 = vst [vmem:[%s289 + $0x30] sm:$0xf] %v872
      %874 = vst.msk [vmem:[%s289 + $0x34] sm:$0xf] %vm280, %v604
      %v875 = vld [vmem:[%s289 + $0x38] sm:$0x1]
      %v876 = vsel %vm292, %v605, %v875
      %877 = vst [vmem:[%s289 + $0x38] sm:$0x1] %v876
      %v878 = vld [vmem:[%s289 + $0x3c] sm:$0xf]
      %v879 = vsel %vm842, %v612, %v878
      %880 = vst [vmem:[%s289 + $0x3c] sm:$0xf] %v879
      %881 = vst.msk [vmem:[%s289 + $0x40] sm:$0xf] %vm280, %v621
      %v882 = vld [vmem:[%s289 + $0x44] sm:$0x1]
      %v883 = vsel %vm292, %v622, %v882
      %884 = vst [vmem:[%s289 + $0x44] sm:$0x1] %v883
      %v885 = vld [vmem:[%s289 + $0x48] sm:$0xf]
      %v886 = vsel %vm842, %v629, %v885
      %887 = vst [vmem:[%s289 + $0x48] sm:$0xf] %v886
      %888 = vst.msk [vmem:[%s289 + $0x4c] sm:$0xf] %vm280, %v638
      %v889 = vld [vmem:[%s289 + $0x50] sm:$0x1]
      %v890 = vsel %vm292, %v639, %v889
      %891 = vst [vmem:[%s289 + $0x50] sm:$0x1] %v890
      %v892 = vld [vmem:[%s289 + $0x54] sm:$0xf]
      %v893 = vsel %vm842, %v646, %v892
      %894 = vst [vmem:[%s289 + $0x54] sm:$0xf] %v893
      %895 = vst.msk [vmem:[%s289 + $0x58] sm:$0xf] %vm280, %v655
      %v896 = vld [vmem:[%s289 + $0x5c] sm:$0x1]
      %v897 = vsel %vm292, %v656, %v896
      %898 = vst [vmem:[%s289 + $0x5c] sm:$0x1] %v897
      %v899 = vld [vmem:[%s289 + $0x60] sm:$0xf]
      %v900 = vsel %vm842, %v663, %v899
      %901 = vst [vmem:[%s289 + $0x60] sm:$0xf] %v900
      %902 = vst.msk [vmem:[%s289 + $0x64] sm:$0xf] %vm280, %v672
      %v903 = vld [vmem:[%s289 + $0x68] sm:$0x1]
      %v904 = vsel %vm292, %v673, %v903
      %905 = vst [vmem:[%s289 + $0x68] sm:$0x1] %v904
      %v906 = vld [vmem:[%s289 + $0x6c] sm:$0xf]
      %v907 = vsel %vm842, %v680, %v906
      %908 = vst [vmem:[%s289 + $0x6c] sm:$0xf] %v907
      %909 = vst.msk [vmem:[%s289 + $0x70] sm:$0xf] %vm280, %v689
      %v910 = vld [vmem:[%s289 + $0x74] sm:$0x1]
      %v911 = vsel %vm292, %v690, %v910
      %912 = vst [vmem:[%s289 + $0x74] sm:$0x1] %v911
      %v913 = vld [vmem:[%s289 + $0x78] sm:$0xf]
      %v914 = vsel %vm842, %v697, %v913
      %915 = vst [vmem:[%s289 + $0x78] sm:$0xf] %v914
      %916 = vst.msk [vmem:[%s289 + $0x7c] sm:$0xf] %vm280, %v706
      %v917 = vld [vmem:[%s289 + $0x80] sm:$0x1]
      %v918 = vsel %vm292, %v707, %v917
      %919 = vst [vmem:[%s289 + $0x80] sm:$0x1] %v918
      %v920 = vld [vmem:[%s289 + $0x84] sm:$0xf]
      %v921 = vsel %vm842, %v714, %v920
      %922 = vst [vmem:[%s289 + $0x84] sm:$0xf] %v921
      %923 = vst.msk [vmem:[%s289 + $0x88] sm:$0xf] %vm280, %v723
      %v924 = vld [vmem:[%s289 + $0x8c] sm:$0x1]
      %v925 = vsel %vm292, %v724, %v924
      %926 = vst [vmem:[%s289 + $0x8c] sm:$0x1] %v925
      %v927 = vld [vmem:[%s289 + $0x90] sm:$0xf]
      %v928 = vsel %vm842, %v731, %v927
      %929 = vst [vmem:[%s289 + $0x90] sm:$0xf] %v928
      %930 = vst.msk [vmem:[%s289 + $0x94] sm:$0xf] %vm280, %v740
      %v931 = vld [vmem:[%s289 + $0x98] sm:$0x1]
      %v932 = vsel %vm292, %v741, %v931
      %933 = vst [vmem:[%s289 + $0x98] sm:$0x1] %v932
      %v934 = vld [vmem:[%s289 + $0x9c] sm:$0xf]
      %v935 = vsel %vm842, %v748, %v934
      %936 = vst [vmem:[%s289 + $0x9c] sm:$0xf] %v935
      %937 = vst.msk [vmem:[%s289 + $0xa0] sm:$0xf] %vm280, %v757
      %v938 = vld [vmem:[%s289 + $0xa4] sm:$0x1]
      %v939 = vsel %vm292, %v758, %v938
      %940 = vst [vmem:[%s289 + $0xa4] sm:$0x1] %v939
      %v941 = vld [vmem:[%s289 + $0xa8] sm:$0xf]
      %v942 = vsel %vm842, %v765, %v941
      %943 = vst [vmem:[%s289 + $0xa8] sm:$0xf] %v942
      %944 = vst.msk [vmem:[%s289 + $0xac] sm:$0xf] %vm280, %v774
      %v945 = vld [vmem:[%s289 + $0xb0] sm:$0x1]
      %v946 = vsel %vm292, %v775, %v945
      %947 = vst [vmem:[%s289 + $0xb0] sm:$0x1] %v946
      %v948 = vld [vmem:[%s289 + $0xb4] sm:$0xf]
      %v949 = vsel %vm842, %v782, %v948
      %950 = vst [vmem:[%s289 + $0xb4] sm:$0xf] %v949
      %951 = vst.msk [vmem:[%s289 + $0xb8] sm:$0xf] %vm280, %v791
      %v952 = vld [vmem:[%s289 + $0xbc] sm:$0x1]
      %v953 = vsel %vm292, %v792, %v952
      %954 = vst [vmem:[%s289 + $0xbc] sm:$0x1] %v953
      %v955 = vld [vmem:[#allocation2] sm:$0xf]
      %v956 = vld [vmem:[#allocation2 + $0x4] sm:$0xf]
      %v957 = vld [vmem:[#allocation2 + $0xc] sm:$0xf]
      %v958 = vld [vmem:[#allocation2 + $0x10] sm:$0xf]
      %v959 = vld [vmem:[#allocation2 + $0x18] sm:$0xf]
      %v960 = vld [vmem:[#allocation2 + $0x1c] sm:$0xf]
      %v961 = vld [vmem:[#allocation2 + $0x24] sm:$0xf]
      %v962 = vld [vmem:[#allocation2 + $0x28] sm:$0xf]
      %v963 = vld [vmem:[#allocation2 + $0x30] sm:$0xf]
      %v964 = vld [vmem:[#allocation2 + $0x34] sm:$0xf]
      %v965 = vld [vmem:[#allocation2 + $0x3c] sm:$0xf]
      %v966 = vld [vmem:[#allocation2 + $0x40] sm:$0xf]
      %v967 = vld [vmem:[#allocation2 + $0x48] sm:$0xf]
      %v968 = vld [vmem:[#allocation2 + $0x4c] sm:$0xf]
      %v969 = vld [vmem:[#allocation2 + $0x54] sm:$0xf]
      %v970 = vld [vmem:[#allocation2 + $0x58] sm:$0xf]
      %v971 = vld [vmem:[#allocation2 + $0x60] sm:$0xf]
      %v972 = vld [vmem:[#allocation2 + $0x64] sm:$0xf]
      %v973 = vld [vmem:[#allocation2 + $0x6c] sm:$0xf]
      %v974 = vld [vmem:[#allocation2 + $0x70] sm:$0xf]
      %v975 = vld [vmem:[#allocation2 + $0x78] sm:$0xf]
      %v976 = vld [vmem:[#allocation2 + $0x7c] sm:$0xf]
      %v977 = vld [vmem:[#allocation2 + $0x84] sm:$0xf]
      %v978 = vld [vmem:[#allocation2 + $0x88] sm:$0xf]
      %v979 = vld [vmem:[#allocation2 + $0x90] sm:$0xf]
      %v980 = vld [vmem:[#allocation2 + $0x94] sm:$0xf]
      %v981 = vld [vmem:[#allocation2 + $0x9c] sm:$0xf]
      %v982 = vld [vmem:[#allocation2 + $0xa0] sm:$0xf]
      %v983 = vld [vmem:[#allocation2 + $0xa8] sm:$0xf]
      %v984 = vld [vmem:[#allocation2 + $0xac] sm:$0xf]
      %v985 = vld [vmem:[#allocation2 + $0xb4] sm:$0xf]
      %v986 = vld [vmem:[#allocation2 + $0xb8] sm:$0xf]
      %987 = vst.msk [vmem:[#allocation3] sm:$0xf] %vm280, %v955
      %988 = vst.msk [vmem:[#allocation3 + $0x4] sm:$0xf] %vm280, %v956
      %989 = vst.msk [vmem:[#allocation3 + $0x8] sm:$0xf] %vm280, %v957
      %990 = vst.msk [vmem:[#allocation3 + $0xc] sm:$0xf] %vm280, %v958
      %991 = vst.msk [vmem:[#allocation3 + $0x10] sm:$0xf] %vm280, %v959
      %992 = vst.msk [vmem:[#allocation3 + $0x14] sm:$0xf] %vm280, %v960
      %993 = vst.msk [vmem:[#allocation3 + $0x18] sm:$0xf] %vm280, %v961
      %994 = vst.msk [vmem:[#allocation3 + $0x1c] sm:$0xf] %vm280, %v962
      %995 = vst.msk [vmem:[#allocation3 + $0x20] sm:$0xf] %vm280, %v963
      %996 = vst.msk [vmem:[#allocation3 + $0x24] sm:$0xf] %vm280, %v964
      %997 = vst.msk [vmem:[#allocation3 + $0x28] sm:$0xf] %vm280, %v965
      %998 = vst.msk [vmem:[#allocation3 + $0x2c] sm:$0xf] %vm280, %v966
      %999 = vst.msk [vmem:[#allocation3 + $0x30] sm:$0xf] %vm280, %v967
      %1000 = vst.msk [vmem:[#allocation3 + $0x34] sm:$0xf] %vm280, %v968
      %1001 = vst.msk [vmem:[#allocation3 + $0x38] sm:$0xf] %vm280, %v969
      %1002 = vst.msk [vmem:[#allocation3 + $0x3c] sm:$0xf] %vm280, %v970
      %1003 = vst.msk [vmem:[#allocation3 + $0x40] sm:$0xf] %vm280, %v971
      %1004 = vst.msk [vmem:[#allocation3 + $0x44] sm:$0xf] %vm280, %v972
      %1005 = vst.msk [vmem:[#allocation3 + $0x48] sm:$0xf] %vm280, %v973
      %1006 = vst.msk [vmem:[#allocation3 + $0x4c] sm:$0xf] %vm280, %v974
      %1007 = vst.msk [vmem:[#allocation3 + $0x50] sm:$0xf] %vm280, %v975
      %1008 = vst.msk [vmem:[#allocation3 + $0x54] sm:$0xf] %vm280, %v976
      %1009 = vst.msk [vmem:[#allocation3 + $0x58] sm:$0xf] %vm280, %v977
      %1010 = vst.msk [vmem:[#allocation3 + $0x5c] sm:$0xf] %vm280, %v978
      %1011 = vst.msk [vmem:[#allocation3 + $0x60] sm:$0xf] %vm280, %v979
      %1012 = vst.msk [vmem:[#allocation3 + $0x64] sm:$0xf] %vm280, %v980
      %1013 = vst.msk [vmem:[#allocation3 + $0x68] sm:$0xf] %vm280, %v981
      %1014 = vst.msk [vmem:[#allocation3 + $0x6c] sm:$0xf] %vm280, %v982
      %1015 = vst.msk [vmem:[#allocation3 + $0x70] sm:$0xf] %vm280, %v983
      %1016 = vst.msk [vmem:[#allocation3 + $0x74] sm:$0xf] %vm280, %v984
      %1017 = vst.msk [vmem:[#allocation3 + $0x78] sm:$0xf] %vm280, %v985
      %1018 = vst.msk [vmem:[#allocation3 + $0x7c] sm:$0xf] %vm280, %v986
      %v1019 = vld [vmem:[#allocation2] sm:$0xf]
      %v1020 = vld [vmem:[#allocation2 + $0x4] sm:$0xf]
      %v1021 = vld [vmem:[#allocation2 + $0x8] sm:$0x1]
      %v1022 = vld [vmem:[#allocation2 + $0xc] sm:$0xf]
      %v1023 = vld [vmem:[#allocation2 + $0x10] sm:$0xf]
      %v1024 = vld [vmem:[#allocation2 + $0x14] sm:$0x1]
      %v1025 = vld [vmem:[#allocation2 + $0x18] sm:$0xf]
      %v1026 = vld [vmem:[#allocation2 + $0x1c] sm:$0xf]
      %v1027 = vld [vmem:[#allocation2 + $0x20] sm:$0x1]
      %v1028 = vld [vmem:[#allocation2 + $0x24] sm:$0xf]
      %v1029 = vld [vmem:[#allocation2 + $0x28] sm:$0xf]
      %v1030 = vld [vmem:[#allocation2 + $0x2c] sm:$0x1]
      %v1031 = vld [vmem:[#allocation2 + $0x30] sm:$0xf]
      %v1032 = vld [vmem:[#allocation2 + $0x34] sm:$0xf]
      %v1033 = vld [vmem:[#allocation2 + $0x38] sm:$0x1]
      %v1034 = vld [vmem:[#allocation2 + $0x3c] sm:$0xf]
      %v1035 = vld [vmem:[#allocation2 + $0x40] sm:$0xf]
      %v1036 = vld [vmem:[#allocation2 + $0x44] sm:$0x1]
      %v1037 = vld [vmem:[#allocation2 + $0x48] sm:$0xf]
      %v1038 = vld [vmem:[#allocation2 + $0x4c] sm:$0xf]
      %v1039 = vld [vmem:[#allocation2 + $0x50] sm:$0x1]
      %v1040 = vld [vmem:[#allocation2 + $0x54] sm:$0xf]
      %v1041 = vld [vmem:[#allocation2 + $0x58] sm:$0xf]
      %v1042 = vld [vmem:[#allocation2 + $0x5c] sm:$0x1]
      %v1043 = vld [vmem:[#allocation2 + $0x60] sm:$0xf]
      %v1044 = vld [vmem:[#allocation2 + $0x64] sm:$0xf]
      %v1045 = vld [vmem:[#allocation2 + $0x68] sm:$0x1]
      %v1046 = vld [vmem:[#allocation2 + $0x6c] sm:$0xf]
      %v1047 = vld [vmem:[#allocation2 + $0x70] sm:$0xf]
      %v1048 = vld [vmem:[#allocation2 + $0x74] sm:$0x1]
      %v1049 = vld [vmem:[#allocation2 + $0x78] sm:$0xf]
      %v1050 = vld [vmem:[#allocation2 + $0x7c] sm:$0xf]
      %v1051 = vld [vmem:[#allocation2 + $0x80] sm:$0x1]
      %v1052 = vld [vmem:[#allocation2 + $0x84] sm:$0xf]
      %v1053 = vld [vmem:[#allocation2 + $0x88] sm:$0xf]
      %v1054 = vld [vmem:[#allocation2 + $0x8c] sm:$0x1]
      %v1055 = vld [vmem:[#allocation2 + $0x90] sm:$0xf]
      %v1056 = vld [vmem:[#allocation2 + $0x94] sm:$0xf]
      %v1057 = vld [vmem:[#allocation2 + $0x98] sm:$0x1]
      %v1058 = vld [vmem:[#allocation2 + $0x9c] sm:$0xf]
      %v1059 = vld [vmem:[#allocation2 + $0xa0] sm:$0xf]
      %v1060 = vld [vmem:[#allocation2 + $0xa4] sm:$0x1]
      %v1061 = vld [vmem:[#allocation2 + $0xa8] sm:$0xf]
      %v1062 = vld [vmem:[#allocation2 + $0xac] sm:$0xf]
      %v1063 = vld [vmem:[#allocation2 + $0xb0] sm:$0x1]
      %v1064 = vld [vmem:[#allocation2 + $0xb4] sm:$0xf]
      %v1065 = vld [vmem:[#allocation2 + $0xb8] sm:$0xf]
      %v1066 = vld [vmem:[#allocation2 + $0xbc] sm:$0x1]
      %vm1067 = vsmask.f32 3328
      %vm1068 = vsmask.f32 7440
      %vm1069 = vmor %vm1067, %vm1068
      %v1071 = vshrl.u32 %v1019, 16
      %v1073 = vrot.slane %v1071, 4
      %v1074 = vshll.u32 %v1019, 16
      %v1076 = vrot.slane %v1074, 5
      %v1077 = vor.u32 %v1073, %v1076
      %v1078 = vrot.slane %v1077, 4
      %v1080 = vshll.u32 %v1020, 16
      %v1082 = vrot.slane %v1080, 5
      %v1083 = vsel %vm1069, %v1078, %v1082
      %v1084 = vshrl.u32 %v1020, 16
      %v1086 = vrot.slane %v1084, 4
      %v1087 = vor.u32 %v1086, %v1082
      %v1088 = vrot.slane %v1087, 4
      %v1090 = vshll.u32 %v1021, 16
      %v1092 = vrot.slane %v1090, 5
      %v1093 = vsel %vm1069, %v1088, %v1092
      %v1095 = vshrl.u32 %v1022, 16
      %v1097 = vrot.slane %v1095, 4
      %v1098 = vshll.u32 %v1022, 16
      %v1100 = vrot.slane %v1098, 5
      %v1101 = vor.u32 %v1097, %v1100
      %v1102 = vrot.slane %v1101, 4
      %v1104 = vshll.u32 %v1023, 16
      %v1106 = vrot.slane %v1104, 5
      %v1107 = vsel %vm1069, %v1102, %v1106
      %v1108 = vshrl.u32 %v1023, 16
      %v1110 = vrot.slane %v1108, 4
      %v1111 = vor.u32 %v1110, %v1106
      %v1112 = vrot.slane %v1111, 4
      %v1114 = vshll.u32 %v1024, 16
      %v1116 = vrot.slane %v1114, 5
      %v1117 = vsel %vm1069, %v1112, %v1116
      %v1119 = vshrl.u32 %v1025, 16
      %v1121 = vrot.slane %v1119, 4
      %v1122 = vshll.u32 %v1025, 16
      %v1124 = vrot.slane %v1122, 5
      %v1125 = vor.u32 %v1121, %v1124
      %v1126 = vrot.slane %v1125, 4
      %v1128 = vshll.u32 %v1026, 16
      %v1130 = vrot.slane %v1128, 5
      %v1131 = vsel %vm1069, %v1126, %v1130
      %v1132 = vshrl.u32 %v1026, 16
      %v1134 = vrot.slane %v1132, 4
      %v1135 = vor.u32 %v1134, %v1130
      %v1136 = vrot.slane %v1135, 4
      %v1138 = vshll.u32 %v1027, 16
      %v1140 = vrot.slane %v1138, 5
      %v1141 = vsel %vm1069, %v1136, %v1140
      %v1143 = vshrl.u32 %v1028, 16
      %v1145 = vrot.slane %v1143, 4
      %v1146 = vshll.u32 %v1028, 16
      %v1148 = vrot.slane %v1146, 5
      %v1149 = vor.u32 %v1145, %v1148
      %v1150 = vrot.slane %v1149, 4
      %v1152 = vshll.u32 %v1029, 16
      %v1154 = vrot.slane %v1152, 5
      %v1155 = vsel %vm1069, %v1150, %v1154
      %v1156 = vshrl.u32 %v1029, 16
      %v1158 = vrot.slane %v1156, 4
      %v1159 = vor.u32 %v1158, %v1154
      %v1160 = vrot.slane %v1159, 4
      %v1162 = vshll.u32 %v1030, 16
      %v1164 = vrot.slane %v1162, 5
      %v1165 = vsel %vm1069, %v1160, %v1164
      %v1167 = vshrl.u32 %v1031, 16
      %v1169 = vrot.slane %v1167, 4
      %v1170 = vshll.u32 %v1031, 16
      %v1172 = vrot.slane %v1170, 5
      %v1173 = vor.u32 %v1169, %v1172
      %v1174 = vrot.slane %v1173, 4
      %v1176 = vshll.u32 %v1032, 16
      %v1178 = vrot.slane %v1176, 5
      %v1179 = vsel %vm1069, %v1174, %v1178
      %v1180 = vshrl.u32 %v1032, 16
      %v1182 = vrot.slane %v1180, 4
      %v1183 = vor.u32 %v1182, %v1178
      %v1184 = vrot.slane %v1183, 4
      %v1186 = vshll.u32 %v1033, 16
      %v1188 = vrot.slane %v1186, 5
      %v1189 = vsel %vm1069, %v1184, %v1188
      %v1191 = vshrl.u32 %v1034, 16
      %v1193 = vrot.slane %v1191, 4
      %v1194 = vshll.u32 %v1034, 16
      %v1196 = vrot.slane %v1194, 5
      %v1197 = vor.u32 %v1193, %v1196
      %v1198 = vrot.slane %v1197, 4
      %v1200 = vshll.u32 %v1035, 16
      %v1202 = vrot.slane %v1200, 5
      %v1203 = vsel %vm1069, %v1198, %v1202
      %v1204 = vshrl.u32 %v1035, 16
      %v1206 = vrot.slane %v1204, 4
      %v1207 = vor.u32 %v1206, %v1202
      %v1208 = vrot.slane %v1207, 4
      %v1210 = vshll.u32 %v1036, 16
      %v1212 = vrot.slane %v1210, 5
      %v1213 = vsel %vm1069, %v1208, %v1212
      %v1215 = vshrl.u32 %v1037, 16
      %v1217 = vrot.slane %v1215, 4
      %v1218 = vshll.u32 %v1037, 16
      %v1220 = vrot.slane %v1218, 5
      %v1221 = vor.u32 %v1217, %v1220
      %v1222 = vrot.slane %v1221, 4
      %v1224 = vshll.u32 %v1038, 16
      %v1226 = vrot.slane %v1224, 5
      %v1227 = vsel %vm1069, %v1222, %v1226
      %v1228 = vshrl.u32 %v1038, 16
      %v1230 = vrot.slane %v1228, 4
      %v1231 = vor.u32 %v1230, %v1226
      %v1232 = vrot.slane %v1231, 4
      %v1234 = vshll.u32 %v1039, 16
      %v1236 = vrot.slane %v1234, 5
      %v1237 = vsel %vm1069, %v1232, %v1236
      %v1239 = vshrl.u32 %v1040, 16
      %v1241 = vrot.slane %v1239, 4
      %v1242 = vshll.u32 %v1040, 16
      %v1244 = vrot.slane %v1242, 5
      %v1245 = vor.u32 %v1241, %v1244
      %v1246 = vrot.slane %v1245, 4
      %v1248 = vshll.u32 %v1041, 16
      %v1250 = vrot.slane %v1248, 5
      %v1251 = vsel %vm1069, %v1246, %v1250
      %v1252 = vshrl.u32 %v1041, 16
      %v1254 = vrot.slane %v1252, 4
      %v1255 = vor.u32 %v1254, %v1250
      %v1256 = vrot.slane %v1255, 4
      %v1258 = vshll.u32 %v1042, 16
      %v1260 = vrot.slane %v1258, 5
      %v1261 = vsel %vm1069, %v1256, %v1260
      %v1263 = vshrl.u32 %v1043, 16
      %v1265 = vrot.slane %v1263, 4
      %v1266 = vshll.u32 %v1043, 16
      %v1268 = vrot.slane %v1266, 5
      %v1269 = vor.u32 %v1265, %v1268
      %v1270 = vrot.slane %v1269, 4
      %v1272 = vshll.u32 %v1044, 16
      %v1274 = vrot.slane %v1272, 5
      %v1275 = vsel %vm1069, %v1270, %v1274
      %v1276 = vshrl.u32 %v1044, 16
      %v1278 = vrot.slane %v1276, 4
      %v1279 = vor.u32 %v1278, %v1274
      %v1280 = vrot.slane %v1279, 4
      %v1282 = vshll.u32 %v1045, 16
      %v1284 = vrot.slane %v1282, 5
      %v1285 = vsel %vm1069, %v1280, %v1284
      %v1287 = vshrl.u32 %v1046, 16
      %v1289 = vrot.slane %v1287, 4
      %v1290 = vshll.u32 %v1046, 16
      %v1292 = vrot.slane %v1290, 5
      %v1293 = vor.u32 %v1289, %v1292
      %v1294 = vrot.slane %v1293, 4
      %v1296 = vshll.u32 %v1047, 16
      %v1298 = vrot.slane %v1296, 5
      %v1299 = vsel %vm1069, %v1294, %v1298
      %v1300 = vshrl.u32 %v1047, 16
      %v1302 = vrot.slane %v1300, 4
      %v1303 = vor.u32 %v1302, %v1298
      %v1304 = vrot.slane %v1303, 4
      %v1306 = vshll.u32 %v1048, 16
      %v1308 = vrot.slane %v1306, 5
      %v1309 = vsel %vm1069, %v1304, %v1308
      %v1311 = vshrl.u32 %v1049, 16
      %v1313 = vrot.slane %v1311, 4
      %v1314 = vshll.u32 %v1049, 16
      %v1316 = vrot.slane %v1314, 5
      %v1317 = vor.u32 %v1313, %v1316
      %v1318 = vrot.slane %v1317, 4
      %v1320 = vshll.u32 %v1050, 16
      %v1322 = vrot.slane %v1320, 5
      %v1323 = vsel %vm1069, %v1318, %v1322
      %v1324 = vshrl.u32 %v1050, 16
      %v1326 = vrot.slane %v1324, 4
      %v1327 = vor.u32 %v1326, %v1322
      %v1328 = vrot.slane %v1327, 4
      %v1330 = vshll.u32 %v1051, 16
      %v1332 = vrot.slane %v1330, 5
      %v1333 = vsel %vm1069, %v1328, %v1332
      %v1335 = vshrl.u32 %v1052, 16
      %v1337 = vrot.slane %v1335, 4
      %v1338 = vshll.u32 %v1052, 16
      %v1340 = vrot.slane %v1338, 5
      %v1341 = vor.u32 %v1337, %v1340
      %v1342 = vrot.slane %v1341, 4
      %v1344 = vshll.u32 %v1053, 16
      %v1346 = vrot.slane %v1344, 5
      %v1347 = vsel %vm1069, %v1342, %v1346
      %v1348 = vshrl.u32 %v1053, 16
      %v1350 = vrot.slane %v1348, 4
      %v1351 = vor.u32 %v1350, %v1346
      %v1352 = vrot.slane %v1351, 4
      %v1354 = vshll.u32 %v1054, 16
      %v1356 = vrot.slane %v1354, 5
      %v1357 = vsel %vm1069, %v1352, %v1356
      %v1359 = vshrl.u32 %v1055, 16
      %v1361 = vrot.slane %v1359, 4
      %v1362 = vshll.u32 %v1055, 16
      %v1364 = vrot.slane %v1362, 5
      %v1365 = vor.u32 %v1361, %v1364
      %v1366 = vrot.slane %v1365, 4
      %v1368 = vshll.u32 %v1056, 16
      %v1370 = vrot.slane %v1368, 5
      %v1371 = vsel %vm1069, %v1366, %v1370
      %v1372 = vshrl.u32 %v1056, 16
      %v1374 = vrot.slane %v1372, 4
      %v1375 = vor.u32 %v1374, %v1370
      %v1376 = vrot.slane %v1375, 4
      %v1378 = vshll.u32 %v1057, 16
      %v1380 = vrot.slane %v1378, 5
      %v1381 = vsel %vm1069, %v1376, %v1380
      %v1383 = vshrl.u32 %v1058, 16
      %v1385 = vrot.slane %v1383, 4
      %v1386 = vshll.u32 %v1058, 16
      %v1388 = vrot.slane %v1386, 5
      %v1389 = vor.u32 %v1385, %v1388
      %v1390 = vrot.slane %v1389, 4
      %v1392 = vshll.u32 %v1059, 16
      %v1394 = vrot.slane %v1392, 5
      %v1395 = vsel %vm1069, %v1390, %v1394
      %v1396 = vshrl.u32 %v1059, 16
      %v1398 = vrot.slane %v1396, 4
      %v1399 = vor.u32 %v1398, %v1394
      %v1400 = vrot.slane %v1399, 4
      %v1402 = vshll.u32 %v1060, 16
      %v1404 = vrot.slane %v1402, 5
      %v1405 = vsel %vm1069, %v1400, %v1404
      %v1407 = vshrl.u32 %v1061, 16
      %v1409 = vrot.slane %v1407, 4
      %v1410 = vshll.u32 %v1061, 16
      %v1412 = vrot.slane %v1410, 5
      %v1413 = vor.u32 %v1409, %v1412
      %v1414 = vrot.slane %v1413, 4
      %v1416 = vshll.u32 %v1062, 16
      %v1418 = vrot.slane %v1416, 5
      %v1419 = vsel %vm1069, %v1414, %v1418
      %v1420 = vshrl.u32 %v1062, 16
      %v1422 = vrot.slane %v1420, 4
      %v1423 = vor.u32 %v1422, %v1418
      %v1424 = vrot.slane %v1423, 4
      %v1426 = vshll.u32 %v1063, 16
      %v1428 = vrot.slane %v1426, 5
      %v1429 = vsel %vm1069, %v1424, %v1428
      %v1431 = vshrl.u32 %v1064, 16
      %v1433 = vrot.slane %v1431, 4
      %v1434 = vshll.u32 %v1064, 16
      %v1436 = vrot.slane %v1434, 5
      %v1437 = vor.u32 %v1433, %v1436
      %v1438 = vrot.slane %v1437, 4
      %v1440 = vshll.u32 %v1065, 16
      %v1442 = vrot.slane %v1440, 5
      %v1443 = vsel %vm1069, %v1438, %v1442
      %v1444 = vshrl.u32 %v1065, 16
      %v1446 = vrot.slane %v1444, 4
      %v1447 = vor.u32 %v1446, %v1442
      %v1448 = vrot.slane %v1447, 4
      %v1450 = vshll.u32 %v1066, 16
      %v1452 = vrot.slane %v1450, 5
      %v1453 = vsel %vm1069, %v1448, %v1452
      %1454 = vrot.lane.b32.xlu0 %v1083, 4
      %v1455 = vpop.permute.xlu0 %1454
      %1456 = vrot.lane.b32.xlu0 %v1093, 4
      %v1457 = vpop.permute.xlu0 %1456
      %1458 = vrot.lane.b32.xlu0 %v1107, 4
      %v1459 = vpop.permute.xlu0 %1458
      %1460 = vrot.lane.b32.xlu0 %v1117, 4
      %v1461 = vpop.permute.xlu0 %1460
      %1462 = vrot.lane.b32.xlu0 %v1131, 4
      %v1463 = vpop.permute.xlu0 %1462
      %1464 = vrot.lane.b32.xlu0 %v1141, 4
      %v1465 = vpop.permute.xlu0 %1464
      %1466 = vrot.lane.b32.xlu0 %v1155, 4
      %v1467 = vpop.permute.xlu0 %1466
      %1468 = vrot.lane.b32.xlu0 %v1165, 4
      %v1469 = vpop.permute.xlu0 %1468
      %1470 = vrot.lane.b32.xlu0 %v1179, 4
      %v1471 = vpop.permute.xlu0 %1470
      %1472 = vrot.lane.b32.xlu0 %v1189, 4
      %v1473 = vpop.permute.xlu0 %1472
      %1474 = vrot.lane.b32.xlu0 %v1203, 4
      %v1475 = vpop.permute.xlu0 %1474
      %1476 = vrot.lane.b32.xlu0 %v1213, 4
      %v1477 = vpop.permute.xlu0 %1476
      %1478 = vrot.lane.b32.xlu0 %v1227, 4
      %v1479 = vpop.permute.xlu0 %1478
      %1480 = vrot.lane.b32.xlu0 %v1237, 4
      %v1481 = vpop.permute.xlu0 %1480
      %1482 = vrot.lane.b32.xlu0 %v1251, 4
      %v1483 = vpop.permute.xlu0 %1482
      %1484 = vrot.lane.b32.xlu0 %v1261, 4
      %v1485 = vpop.permute.xlu0 %1484
      %1486 = vrot.lane.b32.xlu0 %v1275, 4
      %v1487 = vpop.permute.xlu0 %1486
      %1488 = vrot.lane.b32.xlu0 %v1285, 4
      %v1489 = vpop.permute.xlu0 %1488
      %1490 = vrot.lane.b32.xlu0 %v1299, 4
      %v1491 = vpop.permute.xlu0 %1490
      %1492 = vrot.lane.b32.xlu0 %v1309, 4
      %v1493 = vpop.permute.xlu0 %1492
      %1494 = vrot.lane.b32.xlu0 %v1323, 4
      %v1495 = vpop.permute.xlu0 %1494
      %1496 = vrot.lane.b32.xlu0 %v1333, 4
      %v1497 = vpop.permute.xlu0 %1496
      %1498 = vrot.lane.b32.xlu0 %v1347, 4
      %v1499 = vpop.permute.xlu0 %1498
      %1500 = vrot.lane.b32.xlu0 %v1357, 4
      %v1501 = vpop.permute.xlu0 %1500
      %1502 = vrot.lane.b32.xlu0 %v1371, 4
      %v1503 = vpop.permute.xlu0 %1502
      %1504 = vrot.lane.b32.xlu0 %v1381, 4
      %v1505 = vpop.permute.xlu0 %1504
      %1506 = vrot.lane.b32.xlu0 %v1395, 4
      %v1507 = vpop.permute.xlu0 %1506
      %1508 = vrot.lane.b32.xlu0 %v1405, 4
      %v1509 = vpop.permute.xlu0 %1508
      %1510 = vrot.lane.b32.xlu0 %v1419, 4
      %v1511 = vpop.permute.xlu0 %1510
      %1512 = vrot.lane.b32.xlu0 %v1429, 4
      %v1513 = vpop.permute.xlu0 %1512
      %1514 = vrot.lane.b32.xlu0 %v1443, 4
      %v1515 = vpop.permute.xlu0 %1514
      %1516 = vrot.lane.b32.xlu0 %v1453, 4
      %v1517 = vpop.permute.xlu0 %1516
      %vm1550 = vcmask 60448
      %1551 = vst.msk [vmem:[#allocation3] sm:$0xf] %vm1550, %v1455
      %1552 = vst.msk [vmem:[#allocation3 + $0x4] sm:$0xf] %vm1550, %v1457
      %1553 = vst.msk [vmem:[#allocation3 + $0x8] sm:$0xf] %vm1550, %v1459
      %1554 = vst.msk [vmem:[#allocation3 + $0xc] sm:$0xf] %vm1550, %v1461
      %1555 = vst.msk [vmem:[#allocation3 + $0x10] sm:$0xf] %vm1550, %v1463
      %1556 = vst.msk [vmem:[#allocation3 + $0x14] sm:$0xf] %vm1550, %v1465
      %1557 = vst.msk [vmem:[#allocation3 + $0x18] sm:$0xf] %vm1550, %v1467
      %1558 = vst.msk [vmem:[#allocation3 + $0x1c] sm:$0xf] %vm1550, %v1469
      %1559 = vst.msk [vmem:[#allocation3 + $0x20] sm:$0xf] %vm1550, %v1471
      %1560 = vst.msk [vmem:[#allocation3 + $0x24] sm:$0xf] %vm1550, %v1473
      %1561 = vst.msk [vmem:[#allocation3 + $0x28] sm:$0xf] %vm1550, %v1475
      %1562 = vst.msk [vmem:[#allocation3 + $0x2c] sm:$0xf] %vm1550, %v1477
      %1563 = vst.msk [vmem:[#allocation3 + $0x30] sm:$0xf] %vm1550, %v1479
      %1564 = vst.msk [vmem:[#allocation3 + $0x34] sm:$0xf] %vm1550, %v1481
      %1565 = vst.msk [vmem:[#allocation3 + $0x38] sm:$0xf] %vm1550, %v1483
      %1566 = vst.msk [vmem:[#allocation3 + $0x3c] sm:$0xf] %vm1550, %v1485
      %1567 = vst.msk [vmem:[#allocation3 + $0x40] sm:$0xf] %vm1550, %v1487
      %1568 = vst.msk [vmem:[#allocation3 + $0x44] sm:$0xf] %vm1550, %v1489
      %1569 = vst.msk [vmem:[#allocation3 + $0x48] sm:$0xf] %vm1550, %v1491
      %1570 = vst.msk [vmem:[#allocation3 + $0x4c] sm:$0xf] %vm1550, %v1493
      %1571 = vst.msk [vmem:[#allocation3 + $0x50] sm:$0xf] %vm1550, %v1495
      %1572 = vst.msk [vmem:[#allocation3 + $0x54] sm:$0xf] %vm1550, %v1497
      %1573 = vst.msk [vmem:[#allocation3 + $0x58] sm:$0xf] %vm1550, %v1499
      %1574 = vst.msk [vmem:[#allocation3 + $0x5c] sm:$0xf] %vm1550, %v1501
      %1575 = vst.msk [vmem:[#allocation3 + $0x60] sm:$0xf] %vm1550, %v1503
      %1576 = vst.msk [vmem:[#allocation3 + $0x64] sm:$0xf] %vm1550, %v1505
      %1577 = vst.msk [vmem:[#allocation3 + $0x68] sm:$0xf] %vm1550, %v1507
      %1578 = vst.msk [vmem:[#allocation3 + $0x6c] sm:$0xf] %vm1550, %v1509
      %1579 = vst.msk [vmem:[#allocation3 + $0x70] sm:$0xf] %vm1550, %v1511
      %1580 = vst.msk [vmem:[#allocation3 + $0x74] sm:$0xf] %vm1550, %v1513
      %1581 = vst.msk [vmem:[#allocation3 + $0x78] sm:$0xf] %vm1550, %v1515
      %1582 = vst.msk [vmem:[#allocation3 + $0x7c] sm:$0xf] %vm1550, %v1517
      %v1583 = vld [vmem:[#allocation2] sm:$0xe]
      %v1584 = vld [vmem:[#allocation2 + $0x4] sm:$0xf]
      %v1585 = vld [vmem:[#allocation2 + $0x8] sm:$0x1]
      %v1586 = vld [vmem:[#allocation2 + $0xc] sm:$0xe]
      %v1587 = vld [vmem:[#allocation2 + $0x10] sm:$0xf]
      %v1588 = vld [vmem:[#allocation2 + $0x14] sm:$0x1]
      %v1589 = vld [vmem:[#allocation2 + $0x18] sm:$0xe]
      %v1590 = vld [vmem:[#allocation2 + $0x1c] sm:$0xf]
      %v1591 = vld [vmem:[#allocation2 + $0x20] sm:$0x1]
      %v1592 = vld [vmem:[#allocation2 + $0x24] sm:$0xe]
      %v1593 = vld [vmem:[#allocation2 + $0x28] sm:$0xf]
      %v1594 = vld [vmem:[#allocation2 + $0x2c] sm:$0x1]
      %v1595 = vld [vmem:[#allocation2 + $0x30] sm:$0xe]
      %v1596 = vld [vmem:[#allocation2 + $0x34] sm:$0xf]
      %v1597 = vld [vmem:[#allocation2 + $0x38] sm:$0x1]
      %v1598 = vld [vmem:[#allocation2 + $0x3c] sm:$0xe]
      %v1599 = vld [vmem:[#allocation2 + $0x40] sm:$0xf]
      %v1600 = vld [vmem:[#allocation2 + $0x44] sm:$0x1]
      %v1601 = vld [vmem:[#allocation2 + $0x48] sm:$0xe]
      %v1602 = vld [vmem:[#allocation2 + $0x4c] sm:$0xf]
      %v1603 = vld [vmem:[#allocation2 + $0x50] sm:$0x1]
      %v1604 = vld [vmem:[#allocation2 + $0x54] sm:$0xe]
      %v1605 = vld [vmem:[#allocation2 + $0x58] sm:$0xf]
      %v1606 = vld [vmem:[#allocation2 + $0x5c] sm:$0x1]
      %v1607 = vld [vmem:[#allocation2 + $0x60] sm:$0xe]
      %v1608 = vld [vmem:[#allocation2 + $0x64] sm:$0xf]
      %v1609 = vld [vmem:[#allocation2 + $0x68] sm:$0x1]
      %v1610 = vld [vmem:[#allocation2 + $0x6c] sm:$0xe]
      %v1611 = vld [vmem:[#allocation2 + $0x70] sm:$0xf]
      %v1612 = vld [vmem:[#allocation2 + $0x74] sm:$0x1]
      %v1613 = vld [vmem:[#allocation2 + $0x78] sm:$0xe]
      %v1614 = vld [vmem:[#allocation2 + $0x7c] sm:$0xf]
      %v1615 = vld [vmem:[#allocation2 + $0x80] sm:$0x1]
      %v1616 = vld [vmem:[#allocation2 + $0x84] sm:$0xe]
      %v1617 = vld [vmem:[#allocation2 + $0x88] sm:$0xf]
      %v1618 = vld [vmem:[#allocation2 + $0x8c] sm:$0x1]
      %v1619 = vld [vmem:[#allocation2 + $0x90] sm:$0xe]
      %v1620 = vld [vmem:[#allocation2 + $0x94] sm:$0xf]
      %v1621 = vld [vmem:[#allocation2 + $0x98] sm:$0x1]
      %v1622 = vld [vmem:[#allocation2 + $0x9c] sm:$0xe]
      %v1623 = vld [vmem:[#allocation2 + $0xa0] sm:$0xf]
      %v1624 = vld [vmem:[#allocation2 + $0xa4] sm:$0x1]
      %v1625 = vld [vmem:[#allocation2 + $0xa8] sm:$0xe]
      %v1626 = vld [vmem:[#allocation2 + $0xac] sm:$0xf]
      %v1627 = vld [vmem:[#allocation2 + $0xb0] sm:$0x1]
      %v1628 = vld [vmem:[#allocation2 + $0xb4] sm:$0xe]
      %v1629 = vld [vmem:[#allocation2 + $0xb8] sm:$0xf]
      %v1630 = vld [vmem:[#allocation2 + $0xbc] sm:$0x1]
      %vm1679 = vcmask 1042432
      %vm1680 = vcmask 1046532
      %vm1681 = vmor %vm1679, %vm1680
      %v1682 = vrot.slane %v1583, 5
      %v1683 = vrot.slane %v1682, 4
      %v1684 = vrot.slane %v1584, 5
      %v1685 = vsel %vm1681, %v1683, %v1684
      %v1686 = vrot.slane %v1684, 4
      %v1687 = vrot.slane %v1585, 5
      %v1688 = vsel %vm1681, %v1686, %v1687
      %v1689 = vrot.slane %v1586, 5
      %v1690 = vrot.slane %v1689, 4
      %v1691 = vrot.slane %v1587, 5
      %v1692 = vsel %vm1681, %v1690, %v1691
      %v1693 = vrot.slane %v1691, 4
      %v1694 = vrot.slane %v1588, 5
      %v1695 = vsel %vm1681, %v1693, %v1694
      %v1696 = vrot.slane %v1589, 5
      %v1697 = vrot.slane %v1696, 4
      %v1698 = vrot.slane %v1590, 5
      %v1699 = vsel %vm1681, %v1697, %v1698
      %v1700 = vrot.slane %v1698, 4
      %v1701 = vrot.slane %v1591, 5
      %v1702 = vsel %vm1681, %v1700, %v1701
      %v1703 = vrot.slane %v1592, 5
      %v1704 = vrot.slane %v1703, 4
      %v1705 = vrot.slane %v1593, 5
      %v1706 = vsel %vm1681, %v1704, %v1705
      %v1707 = vrot.slane %v1705, 4
      %v1708 = vrot.slane %v1594, 5
      %v1709 = vsel %vm1681, %v1707, %v1708
      %v1710 = vrot.slane %v1595, 5
      %v1711 = vrot.slane %v1710, 4
      %v1712 = vrot.slane %v1596, 5
      %v1713 = vsel %vm1681, %v1711, %v1712
      %v1714 = vrot.slane %v1712, 4
      %v1715 = vrot.slane %v1597, 5
      %v1716 = vsel %vm1681, %v1714, %v1715
      %v1717 = vrot.slane %v1598, 5
      %v1718 = vrot.slane %v1717, 4
      %v1719 = vrot.slane %v1599, 5
      %v1720 = vsel %vm1681, %v1718, %v1719
      %v1721 = vrot.slane %v1719, 4
      %v1722 = vrot.slane %v1600, 5
      %v1723 = vsel %vm1681, %v1721, %v1722
      %v1724 = vrot.slane %v1601, 5
      %v1725 = vrot.slane %v1724, 4
      %v1726 = vrot.slane %v1602, 5
      %v1727 = vsel %vm1681, %v1725, %v1726
      %v1728 = vrot.slane %v1726, 4
      %v1729 = vrot.slane %v1603, 5
      %v1730 = vsel %vm1681, %v1728, %v1729
      %v1731 = vrot.slane %v1604, 5
      %v1732 = vrot.slane %v1731, 4
      %v1733 = vrot.slane %v1605, 5
      %v1734 = vsel %vm1681, %v1732, %v1733
      %v1735 = vrot.slane %v1733, 4
      %v1736 = vrot.slane %v1606, 5
      %v1737 = vsel %vm1681, %v1735, %v1736
      %v1738 = vrot.slane %v1607, 5
      %v1739 = vrot.slane %v1738, 4
      %v1740 = vrot.slane %v1608, 5
      %v1741 = vsel %vm1681, %v1739, %v1740
      %v1742 = vrot.slane %v1740, 4
      %v1743 = vrot.slane %v1609, 5
      %v1744 = vsel %vm1681, %v1742, %v1743
      %v1745 = vrot.slane %v1610, 5
      %v1746 = vrot.slane %v1745, 4
      %v1747 = vrot.slane %v1611, 5
      %v1748 = vsel %vm1681, %v1746, %v1747
      %v1749 = vrot.slane %v1747, 4
      %v1750 = vrot.slane %v1612, 5
      %v1751 = vsel %vm1681, %v1749, %v1750
      %v1752 = vrot.slane %v1613, 5
      %v1753 = vrot.slane %v1752, 4
      %v1754 = vrot.slane %v1614, 5
      %v1755 = vsel %vm1681, %v1753, %v1754
      %v1756 = vrot.slane %v1754, 4
      %v1757 = vrot.slane %v1615, 5
      %v1758 = vsel %vm1681, %v1756, %v1757
      %v1759 = vrot.slane %v1616, 5
      %v1760 = vrot.slane %v1759, 4
      %v1761 = vrot.slane %v1617, 5
      %v1762 = vsel %vm1681, %v1760, %v1761
      %v1763 = vrot.slane %v1761, 4
      %v1764 = vrot.slane %v1618, 5
      %v1765 = vsel %vm1681, %v1763, %v1764
      %v1766 = vrot.slane %v1619, 5
      %v1767 = vrot.slane %v1766, 4
      %v1768 = vrot.slane %v1620, 5
      %v1769 = vsel %vm1681, %v1767, %v1768
      %v1770 = vrot.slane %v1768, 4
      %v1771 = vrot.slane %v1621, 5
      %v1772 = vsel %vm1681, %v1770, %v1771
      %v1773 = vrot.slane %v1622, 5
      %v1774 = vrot.slane %v1773, 4
      %v1775 = vrot.slane %v1623, 5
      %v1776 = vsel %vm1681, %v1774, %v1775
      %v1777 = vrot.slane %v1775, 4
      %v1778 = vrot.slane %v1624, 5
      %v1779 = vsel %vm1681, %v1777, %v1778
      %v1780 = vrot.slane %v1625, 5
      %v1781 = vrot.slane %v1780, 4
      %v1782 = vrot.slane %v1626, 5
      %v1783 = vsel %vm1681, %v1781, %v1782
      %v1784 = vrot.slane %v1782, 4
      %v1785 = vrot.slane %v1627, 5
      %v1786 = vsel %vm1681, %v1784, %v1785
      %v1787 = vrot.slane %v1628, 5
      %v1788 = vrot.slane %v1787, 4
      %v1789 = vrot.slane %v1629, 5
      %v1790 = vsel %vm1681, %v1788, %v1789
      %v1791 = vrot.slane %v1789, 4
      %v1792 = vrot.slane %v1630, 5
      %v1793 = vsel %vm1681, %v1791, %v1792
      %1794 = vrot.lane.b32.xlu0 %v1685, 8
      %v1795 = vpop.permute.xlu0 %1794
      %1796 = vrot.lane.b32.xlu0 %v1688, 8
      %v1797 = vpop.permute.xlu0 %1796
      %1798 = vrot.lane.b32.xlu0 %v1692, 8
      %v1799 = vpop.permute.xlu0 %1798
      %1800 = vrot.lane.b32.xlu0 %v1695, 8
      %v1801 = vpop.permute.xlu0 %1800
      %1802 = vrot.lane.b32.xlu0 %v1699, 8
      %v1803 = vpop.permute.xlu0 %1802
      %1804 = vrot.lane.b32.xlu0 %v1702, 8
      %v1805 = vpop.permute.xlu0 %1804
      %1806 = vrot.lane.b32.xlu0 %v1706, 8
      %v1807 = vpop.permute.xlu0 %1806
      %1808 = vrot.lane.b32.xlu0 %v1709, 8
      %v1809 = vpop.permute.xlu0 %1808
      %1810 = vrot.lane.b32.xlu0 %v1713, 8
      %v1811 = vpop.permute.xlu0 %1810
      %1812 = vrot.lane.b32.xlu0 %v1716, 8
      %v1813 = vpop.permute.xlu0 %1812
      %1814 = vrot.lane.b32.xlu0 %v1720, 8
      %v1815 = vpop.permute.xlu0 %1814
      %1816 = vrot.lane.b32.xlu0 %v1723, 8
      %v1817 = vpop.permute.xlu0 %1816
      %1818 = vrot.lane.b32.xlu0 %v1727, 8
      %v1819 = vpop.permute.xlu0 %1818
      %1820 = vrot.lane.b32.xlu0 %v1730, 8
      %v1821 = vpop.permute.xlu0 %1820
      %1822 = vrot.lane.b32.xlu0 %v1734, 8
      %v1823 = vpop.permute.xlu0 %1822
      %1824 = vrot.lane.b32.xlu0 %v1737, 8
      %v1825 = vpop.permute.xlu0 %1824
      %1826 = vrot.lane.b32.xlu0 %v1741, 8
      %v1827 = vpop.permute.xlu0 %1826
      %1828 = vrot.lane.b32.xlu0 %v1744, 8
      %v1829 = vpop.permute.xlu0 %1828
      %1830 = vrot.lane.b32.xlu0 %v1748, 8
      %v1831 = vpop.permute.xlu0 %1830
      %1832 = vrot.lane.b32.xlu0 %v1751, 8
      %v1833 = vpop.permute.xlu0 %1832
      %1834 = vrot.lane.b32.xlu0 %v1755, 8
      %v1835 = vpop.permute.xlu0 %1834
      %1836 = vrot.lane.b32.xlu0 %v1758, 8
      %v1837 = vpop.permute.xlu0 %1836
      %1838 = vrot.lane.b32.xlu0 %v1762, 8
      %v1839 = vpop.permute.xlu0 %1838
      %1840 = vrot.lane.b32.xlu0 %v1765, 8
      %v1841 = vpop.permute.xlu0 %1840
      %1842 = vrot.lane.b32.xlu0 %v1769, 8
      %v1843 = vpop.permute.xlu0 %1842
      %1844 = vrot.lane.b32.xlu0 %v1772, 8
      %v1845 = vpop.permute.xlu0 %1844
      %1846 = vrot.lane.b32.xlu0 %v1776, 8
      %v1847 = vpop.permute.xlu0 %1846
      %1848 = vrot.lane.b32.xlu0 %v1779, 8
      %v1849 = vpop.permute.xlu0 %1848
      %1850 = vrot.lane.b32.xlu0 %v1783, 8
      %v1851 = vpop.permute.xlu0 %1850
      %1852 = vrot.lane.b32.xlu0 %v1786, 8
      %v1853 = vpop.permute.xlu0 %1852
      %1854 = vrot.lane.b32.xlu0 %v1790, 8
      %v1855 = vpop.permute.xlu0 %1854
      %1856 = vrot.lane.b32.xlu0 %v1793, 8
      %v1857 = vpop.permute.xlu0 %1856
      %vm1890 = vcmask 93248
      %1891 = vst.msk [vmem:[#allocation3] sm:$0xf] %vm1890, %v1795
      %1892 = vst.msk [vmem:[#allocation3 + $0x4] sm:$0xf] %vm1890, %v1797
      %1893 = vst.msk [vmem:[#allocation3 + $0x8] sm:$0xf] %vm1890, %v1799
      %1894 = vst.msk [vmem:[#allocation3 + $0xc] sm:$0xf] %vm1890, %v1801
      %1895 = vst.msk [vmem:[#allocation3 + $0x10] sm:$0xf] %vm1890, %v1803
      %1896 = vst.msk [vmem:[#allocation3 + $0x14] sm:$0xf] %vm1890, %v1805
      %1897 = vst.msk [vmem:[#allocation3 + $0x18] sm:$0xf] %vm1890, %v1807
      %1898 = vst.msk [vmem:[#allocation3 + $0x1c] sm:$0xf] %vm1890, %v1809
      %1899 = vst.msk [vmem:[#allocation3 + $0x20] sm:$0xf] %vm1890, %v1811
      %1900 = vst.msk [vmem:[#allocation3 + $0x24] sm:$0xf] %vm1890, %v1813
      %1901 = vst.msk [vmem:[#allocation3 + $0x28] sm:$0xf] %vm1890, %v1815
      %1902 = vst.msk [vmem:[#allocation3 + $0x2c] sm:$0xf] %vm1890, %v1817
      %1903 = vst.msk [vmem:[#allocation3 + $0x30] sm:$0xf] %vm1890, %v1819
      %1904 = vst.msk [vmem:[#allocation3 + $0x34] sm:$0xf] %vm1890, %v1821
      %1905 = vst.msk [vmem:[#allocation3 + $0x38] sm:$0xf] %vm1890, %v1823
      %1906 = vst.msk [vmem:[#allocation3 + $0x3c] sm:$0xf] %vm1890, %v1825
      %1907 = vst.msk [vmem:[#allocation3 + $0x40] sm:$0xf] %vm1890, %v1827
      %1908 = vst.msk [vmem:[#allocation3 + $0x44] sm:$0xf] %vm1890, %v1829
      %1909 = vst.msk [vmem:[#allocation3 + $0x48] sm:$0xf] %vm1890, %v1831
      %1910 = vst.msk [vmem:[#allocation3 + $0x4c] sm:$0xf] %vm1890, %v1833
      %1911 = vst.msk [vmem:[#allocation3 + $0x50] sm:$0xf] %vm1890, %v1835
      %1912 = vst.msk [vmem:[#allocation3 + $0x54] sm:$0xf] %vm1890, %v1837
      %1913 = vst.msk [vmem:[#allocation3 + $0x58] sm:$0xf] %vm1890, %v1839
      %1914 = vst.msk [vmem:[#allocation3 + $0x5c] sm:$0xf] %vm1890, %v1841
      %1915 = vst.msk [vmem:[#allocation3 + $0x60] sm:$0xf] %vm1890, %v1843
      %1916 = vst.msk [vmem:[#allocation3 + $0x64] sm:$0xf] %vm1890, %v1845
      %1917 = vst.msk [vmem:[#allocation3 + $0x68] sm:$0xf] %vm1890, %v1847
      %1918 = vst.msk [vmem:[#allocation3 + $0x6c] sm:$0xf] %vm1890, %v1849
      %1919 = vst.msk [vmem:[#allocation3 + $0x70] sm:$0xf] %vm1890, %v1851
      %1920 = vst.msk [vmem:[#allocation3 + $0x74] sm:$0xf] %vm1890, %v1853
      %1921 = vst.msk [vmem:[#allocation3 + $0x78] sm:$0xf] %vm1890, %v1855
      %1922 = vst.msk [vmem:[#allocation3 + $0x7c] sm:$0xf] %vm1890, %v1857
      %v1923 = vld [vmem:[%s289] sm:$0xf]
      %v1924 = vld [vmem:[%s289 + $0x4] sm:$0xf]
      %v1925 = vld [vmem:[%s289 + $0xc] sm:$0xf]
      %v1926 = vld [vmem:[%s289 + $0x10] sm:$0xf]
      %v1927 = vld [vmem:[%s289 + $0x18] sm:$0xf]
      %v1928 = vld [vmem:[%s289 + $0x1c] sm:$0xf]
      %v1929 = vld [vmem:[%s289 + $0x24] sm:$0xf]
      %v1930 = vld [vmem:[%s289 + $0x28] sm:$0xf]
      %v1931 = vld [vmem:[%s289 + $0x30] sm:$0xf]
      %v1932 = vld [vmem:[%s289 + $0x34] sm:$0xf]
      %v1933 = vld [vmem:[%s289 + $0x3c] sm:$0xf]
      %v1934 = vld [vmem:[%s289 + $0x40] sm:$0xf]
      %v1935 = vld [vmem:[%s289 + $0x48] sm:$0xf]
      %v1936 = vld [vmem:[%s289 + $0x4c] sm:$0xf]
      %v1937 = vld [vmem:[%s289 + $0x54] sm:$0xf]
      %v1938 = vld [vmem:[%s289 + $0x58] sm:$0xf]
      %v1939 = vld [vmem:[%s289 + $0x60] sm:$0xf]
      %v1940 = vld [vmem:[%s289 + $0x64] sm:$0xf]
      %v1941 = vld [vmem:[%s289 + $0x6c] sm:$0xf]
      %v1942 = vld [vmem:[%s289 + $0x70] sm:$0xf]
      %v1943 = vld [vmem:[%s289 + $0x78] sm:$0xf]
      %v1944 = vld [vmem:[%s289 + $0x7c] sm:$0xf]
      %v1945 = vld [vmem:[%s289 + $0x84] sm:$0xf]
      %v1946 = vld [vmem:[%s289 + $0x88] sm:$0xf]
      %v1947 = vld [vmem:[%s289 + $0x90] sm:$0xf]
      %v1948 = vld [vmem:[%s289 + $0x94] sm:$0xf]
      %v1949 = vld [vmem:[%s289 + $0x9c] sm:$0xf]
      %v1950 = vld [vmem:[%s289 + $0xa0] sm:$0xf]
      %v1951 = vld [vmem:[%s289 + $0xa8] sm:$0xf]
      %v1952 = vld [vmem:[%s289 + $0xac] sm:$0xf]
      %v1953 = vld [vmem:[%s289 + $0xb4] sm:$0xf]
      %v1954 = vld [vmem:[%s289 + $0xb8] sm:$0xf]
      %1987 = vrot.lane.b32.xlu0 %v1923, 12
      %v1988 = vpop.permute.xlu0 %1987
      %1989 = vrot.lane.b32.xlu0 %v1924, 12
      %v1990 = vpop.permute.xlu0 %1989
      %1991 = vrot.lane.b32.xlu0 %v1925, 12
      %v1992 = vpop.permute.xlu0 %1991
      %1993 = vrot.lane.b32.xlu0 %v1926, 12
      %v1994 = vpop.permute.xlu0 %1993
      %1995 = vrot.lane.b32.xlu0 %v1927, 12
      %v1996 = vpop.permute.xlu0 %1995
      %1997 = vrot.lane.b32.xlu0 %v1928, 12
      %v1998 = vpop.permute.xlu0 %1997
      %1999 = vrot.lane.b32.xlu0 %v1929, 12
      %v2000 = vpop.permute.xlu0 %1999
      %2001 = vrot.lane.b32.xlu0 %v1930, 12
      %v2002 = vpop.permute.xlu0 %2001
      %2003 = vrot.lane.b32.xlu0 %v1931, 12
      %v2004 = vpop.permute.xlu0 %2003
      %2005 = vrot.lane.b32.xlu0 %v1932, 12
      %v2006 = vpop.permute.xlu0 %2005
      %2007 = vrot.lane.b32.xlu0 %v1933, 12
      %v2008 = vpop.permute.xlu0 %2007
      %2009 = vrot.lane.b32.xlu0 %v1934, 12
      %v2010 = vpop.permute.xlu0 %2009
      %2011 = vrot.lane.b32.xlu0 %v1935, 12
      %v2012 = vpop.permute.xlu0 %2011
      %2013 = vrot.lane.b32.xlu0 %v1936, 12
      %v2014 = vpop.permute.xlu0 %2013
      %2015 = vrot.lane.b32.xlu0 %v1937, 12
      %v2016 = vpop.permute.xlu0 %2015
      %2017 = vrot.lane.b32.xlu0 %v1938, 12
      %v2018 = vpop.permute.xlu0 %2017
      %2019 = vrot.lane.b32.xlu0 %v1939, 12
      %v2020 = vpop.permute.xlu0 %2019
      %2021 = vrot.lane.b32.xlu0 %v1940, 12
      %v2022 = vpop.permute.xlu0 %2021
      %2023 = vrot.lane.b32.xlu0 %v1941, 12
      %v2024 = vpop.permute.xlu0 %2023
      %2025 = vrot.lane.b32.xlu0 %v1942, 12
      %v2026 = vpop.permute.xlu0 %2025
      %2027 = vrot.lane.b32.xlu0 %v1943, 12
      %v2028 = vpop.permute.xlu0 %2027
      %2029 = vrot.lane.b32.xlu0 %v1944, 12
      %v2030 = vpop.permute.xlu0 %2029
      %2031 = vrot.lane.b32.xlu0 %v1945, 12
      %v2032 = vpop.permute.xlu0 %2031
      %2033 = vrot.lane.b32.xlu0 %v1946, 12
      %v2034 = vpop.permute.xlu0 %2033
      %2035 = vrot.lane.b32.xlu0 %v1947, 12
      %v2036 = vpop.permute.xlu0 %2035
      %2037 = vrot.lane.b32.xlu0 %v1948, 12
      %v2038 = vpop.permute.xlu0 %2037
      %2039 = vrot.lane.b32.xlu0 %v1949, 12
      %v2040 = vpop.permute.xlu0 %2039
      %2041 = vrot.lane.b32.xlu0 %v1950, 12
      %v2042 = vpop.permute.xlu0 %2041
      %2043 = vrot.lane.b32.xlu0 %v1951, 12
      %v2044 = vpop.permute.xlu0 %2043
      %2045 = vrot.lane.b32.xlu0 %v1952, 12
      %v2046 = vpop.permute.xlu0 %2045
      %2047 = vrot.lane.b32.xlu0 %v1953, 12
      %v2048 = vpop.permute.xlu0 %2047
      %2049 = vrot.lane.b32.xlu0 %v1954, 12
      %v2050 = vpop.permute.xlu0 %2049
      %vm2083 = vcmask 126048
      %2084 = vst.msk [vmem:[#allocation3] sm:$0xf] %vm2083, %v1988
      %2085 = vst.msk [vmem:[#allocation3 + $0x4] sm:$0xf] %vm2083, %v1990
      %2086 = vst.msk [vmem:[#allocation3 + $0x8] sm:$0xf] %vm2083, %v1992
      %2087 = vst.msk [vmem:[#allocation3 + $0xc] sm:$0xf] %vm2083, %v1994
      %2088 = vst.msk [vmem:[#allocation3 + $0x10] sm:$0xf] %vm2083, %v1996
      %2089 = vst.msk [vmem:[#allocation3 + $0x14] sm:$0xf] %vm2083, %v1998
      %2090 = vst.msk [vmem:[#allocation3 + $0x18] sm:$0xf] %vm2083, %v2000
      %2091 = vst.msk [vmem:[#allocation3 + $0x1c] sm:$0xf] %vm2083, %v2002
      %2092 = vst.msk [vmem:[#allocation3 + $0x20] sm:$0xf] %vm2083, %v2004
      %2093 = vst.msk [vmem:[#allocation3 + $0x24] sm:$0xf] %vm2083, %v2006
      %2094 = vst.msk [vmem:[#allocation3 + $0x28] sm:$0xf] %vm2083, %v2008
      %2095 = vst.msk [vmem:[#allocation3 + $0x2c] sm:$0xf] %vm2083, %v2010
      %2096 = vst.msk [vmem:[#allocation3 + $0x30] sm:$0xf] %vm2083, %v2012
      %2097 = vst.msk [vmem:[#allocation3 + $0x34] sm:$0xf] %vm2083, %v2014
      %2098 = vst.msk [vmem:[#allocation3 + $0x38] sm:$0xf] %vm2083, %v2016
      %2099 = vst.msk [vmem:[#allocation3 + $0x3c] sm:$0xf] %vm2083, %v2018
      %2100 = vst.msk [vmem:[#allocation3 + $0x40] sm:$0xf] %vm2083, %v2020
      %2101 = vst.msk [vmem:[#allocation3 + $0x44] sm:$0xf] %vm2083, %v2022
      %2102 = vst.msk [vmem:[#allocation3 + $0x48] sm:$0xf] %vm2083, %v2024
      %2103 = vst.msk [vmem:[#allocation3 + $0x4c] sm:$0xf] %vm2083, %v2026
      %2104 = vst.msk [vmem:[#allocation3 + $0x50] sm:$0xf] %vm2083, %v2028
      %2105 = vst.msk [vmem:[#allocation3 + $0x54] sm:$0xf] %vm2083, %v2030
      %2106 = vst.msk [vmem:[#allocation3 + $0x58] sm:$0xf] %vm2083, %v2032
      %2107 = vst.msk [vmem:[#allocation3 + $0x5c] sm:$0xf] %vm2083, %v2034
      %2108 = vst.msk [vmem:[#allocation3 + $0x60] sm:$0xf] %vm2083, %v2036
      %2109 = vst.msk [vmem:[#allocation3 + $0x64] sm:$0xf] %vm2083, %v2038
      %2110 = vst.msk [vmem:[#allocation3 + $0x68] sm:$0xf] %vm2083, %v2040
      %2111 = vst.msk [vmem:[#allocation3 + $0x6c] sm:$0xf] %vm2083, %v2042
      %2112 = vst.msk [vmem:[#allocation3 + $0x70] sm:$0xf] %vm2083, %v2044
      %2113 = vst.msk [vmem:[#allocation3 + $0x74] sm:$0xf] %vm2083, %v2046
      %2114 = vst.msk [vmem:[#allocation3 + $0x78] sm:$0xf] %vm2083, %v2048
      %2115 = vst.msk [vmem:[#allocation3 + $0x7c] sm:$0xf] %vm2083, %v2050
      %v2116 = vld [vmem:[%s289] sm:$0xf]
      %v2117 = vld [vmem:[%s289 + $0x4] sm:$0xf]
      %v2118 = vld [vmem:[%s289 + $0x8] sm:$0x1]
      %v2119 = vld [vmem:[%s289 + $0xc] sm:$0xf]
      %v2120 = vld [vmem:[%s289 + $0x10] sm:$0xf]
      %v2121 = vld [vmem:[%s289 + $0x14] sm:$0x1]
      %v2122 = vld [vmem:[%s289 + $0x18] sm:$0xf]
      %v2123 = vld [vmem:[%s289 + $0x1c] sm:$0xf]
      %v2124 = vld [vmem:[%s289 + $0x20] sm:$0x1]
      %v2125 = vld [vmem:[%s289 + $0x24] sm:$0xf]
      %v2126 = vld [vmem:[%s289 + $0x28] sm:$0xf]
      %v2127 = vld [vmem:[%s289 + $0x2c] sm:$0x1]
      %v2128 = vld [vmem:[%s289 + $0x30] sm:$0xf]
      %v2129 = vld [vmem:[%s289 + $0x34] sm:$0xf]
      %v2130 = vld [vmem:[%s289 + $0x38] sm:$0x1]
      %v2131 = vld [vmem:[%s289 + $0x3c] sm:$0xf]
      %v2132 = vld [vmem:[%s289 + $0x40] sm:$0xf]
      %v2133 = vld [vmem:[%s289 + $0x44] sm:$0x1]
      %v2134 = vld [vmem:[%s289 + $0x48] sm:$0xf]
      %v2135 = vld [vmem:[%s289 + $0x4c] sm:$0xf]
      %v2136 = vld [vmem:[%s289 + $0x50] sm:$0x1]
      %v2137 = vld [vmem:[%s289 + $0x54] sm:$0xf]
      %v2138 = vld [vmem:[%s289 + $0x58] sm:$0xf]
      %v2139 = vld [vmem:[%s289 + $0x5c] sm:$0x1]
      %v2140 = vld [vmem:[%s289 + $0x60] sm:$0xf]
      %v2141 = vld [vmem:[%s289 + $0x64] sm:$0xf]
      %v2142 = vld [vmem:[%s289 + $0x68] sm:$0x1]
      %v2143 = vld [vmem:[%s289 + $0x6c] sm:$0xf]
      %v2144 = vld [vmem:[%s289 + $0x70] sm:$0xf]
      %v2145 = vld [vmem:[%s289 + $0x74] sm:$0x1]
      %v2146 = vld [vmem:[%s289 + $0x78] sm:$0xf]
      %v2147 = vld [vmem:[%s289 + $0x7c] sm:$0xf]
      %v2148 = vld [vmem:[%s289 + $0x80] sm:$0x1]
      %v2149 = vld [vmem:[%s289 + $0x84] sm:$0xf]
      %v2150 = vld [vmem:[%s289 + $0x88] sm:$0xf]
      %v2151 = vld [vmem:[%s289 + $0x8c] sm:$0x1]
      %v2152 = vld [vmem:[%s289 + $0x90] sm:$0xf]
      %v2153 = vld [vmem:[%s289 + $0x94] sm:$0xf]
      %v2154 = vld [vmem:[%s289 + $0x98] sm:$0x1]
      %v2155 = vld [vmem:[%s289 + $0x9c] sm:$0xf]
      %v2156 = vld [vmem:[%s289 + $0xa0] sm:$0xf]
      %v2157 = vld [vmem:[%s289 + $0xa4] sm:$0x1]
      %v2158 = vld [vmem:[%s289 + $0xa8] sm:$0xf]
      %v2159 = vld [vmem:[%s289 + $0xac] sm:$0xf]
      %v2160 = vld [vmem:[%s289 + $0xb0] sm:$0x1]
      %v2161 = vld [vmem:[%s289 + $0xb4] sm:$0xf]
      %v2162 = vld [vmem:[%s289 + $0xb8] sm:$0xf]
      %v2163 = vld [vmem:[%s289 + $0xbc] sm:$0x1]
      %v2165 = vshrl.u32 %v2116, 16
      %v2167 = vrot.slane %v2165, 4
      %v2168 = vshll.u32 %v2116, 16
      %v2170 = vrot.slane %v2168, 5
      %v2171 = vor.u32 %v2167, %v2170
      %v2172 = vrot.slane %v2171, 4
      %v2174 = vshll.u32 %v2117, 16
      %v2176 = vrot.slane %v2174, 5
      %v2177 = vsel %vm1069, %v2172, %v2176
      %v2178 = vshrl.u32 %v2117, 16
      %v2180 = vrot.slane %v2178, 4
      %v2181 = vor.u32 %v2180, %v2176
      %v2182 = vrot.slane %v2181, 4
      %v2184 = vshll.u32 %v2118, 16
      %v2186 = vrot.slane %v2184, 5
      %v2187 = vsel %vm1069, %v2182, %v2186
      %v2189 = vshrl.u32 %v2119, 16
      %v2191 = vrot.slane %v2189, 4
      %v2192 = vshll.u32 %v2119, 16
      %v2194 = vrot.slane %v2192, 5
      %v2195 = vor.u32 %v2191, %v2194
      %v2196 = vrot.slane %v2195, 4
      %v2198 = vshll.u32 %v2120, 16
      %v2200 = vrot.slane %v2198, 5
      %v2201 = vsel %vm1069, %v2196, %v2200
      %v2202 = vshrl.u32 %v2120, 16
      %v2204 = vrot.slane %v2202, 4
      %v2205 = vor.u32 %v2204, %v2200
      %v2206 = vrot.slane %v2205, 4
      %v2208 = vshll.u32 %v2121, 16
      %v2210 = vrot.slane %v2208, 5
      %v2211 = vsel %vm1069, %v2206, %v2210
      %v2213 = vshrl.u32 %v2122, 16
      %v2215 = vrot.slane %v2213, 4
      %v2216 = vshll.u32 %v2122, 16
      %v2218 = vrot.slane %v2216, 5
      %v2219 = vor.u32 %v2215, %v2218
      %v2220 = vrot.slane %v2219, 4
      %v2222 = vshll.u32 %v2123, 16
      %v2224 = vrot.slane %v2222, 5
      %v2225 = vsel %vm1069, %v2220, %v2224
      %v2226 = vshrl.u32 %v2123, 16
      %v2228 = vrot.slane %v2226, 4
      %v2229 = vor.u32 %v2228, %v2224
      %v2230 = vrot.slane %v2229, 4
      %v2232 = vshll.u32 %v2124, 16
      %v2234 = vrot.slane %v2232, 5
      %v2235 = vsel %vm1069, %v2230, %v2234
      %v2237 = vshrl.u32 %v2125, 16
      %v2239 = vrot.slane %v2237, 4
      %v2240 = vshll.u32 %v2125, 16
      %v2242 = vrot.slane %v2240, 5
      %v2243 = vor.u32 %v2239, %v2242
      %v2244 = vrot.slane %v2243, 4
      %v2246 = vshll.u32 %v2126, 16
      %v2248 = vrot.slane %v2246, 5
      %v2249 = vsel %vm1069, %v2244, %v2248
      %v2250 = vshrl.u32 %v2126, 16
      %v2252 = vrot.slane %v2250, 4
      %v2253 = vor.u32 %v2252, %v2248
      %v2254 = vrot.slane %v2253, 4
      %v2256 = vshll.u32 %v2127, 16
      %v2258 = vrot.slane %v2256, 5
      %v2259 = vsel %vm1069, %v2254, %v2258
      %v2261 = vshrl.u32 %v2128, 16
      %v2263 = vrot.slane %v2261, 4
      %v2264 = vshll.u32 %v2128, 16
      %v2266 = vrot.slane %v2264, 5
      %v2267 = vor.u32 %v2263, %v2266
      %v2268 = vrot.slane %v2267, 4
      %v2270 = vshll.u32 %v2129, 16
      %v2272 = vrot.slane %v2270, 5
      %v2273 = vsel %vm1069, %v2268, %v2272
      %v2274 = vshrl.u32 %v2129, 16
      %v2276 = vrot.slane %v2274, 4
      %v2277 = vor.u32 %v2276, %v2272
      %v2278 = vrot.slane %v2277, 4
      %v2280 = vshll.u32 %v2130, 16
      %v2282 = vrot.slane %v2280, 5
      %v2283 = vsel %vm1069, %v2278, %v2282
      %v2285 = vshrl.u32 %v2131, 16
      %v2287 = vrot.slane %v2285, 4
      %v2288 = vshll.u32 %v2131, 16
      %v2290 = vrot.slane %v2288, 5
      %v2291 = vor.u32 %v2287, %v2290
      %v2292 = vrot.slane %v2291, 4
      %v2294 = vshll.u32 %v2132, 16
      %v2296 = vrot.slane %v2294, 5
      %v2297 = vsel %vm1069, %v2292, %v2296
      %v2298 = vshrl.u32 %v2132, 16
      %v2300 = vrot.slane %v2298, 4
      %v2301 = vor.u32 %v2300, %v2296
      %v2302 = vrot.slane %v2301, 4
      %v2304 = vshll.u32 %v2133, 16
      %v2306 = vrot.slane %v2304, 5
      %v2307 = vsel %vm1069, %v2302, %v2306
      %v2309 = vshrl.u32 %v2134, 16
      %v2311 = vrot.slane %v2309, 4
      %v2312 = vshll.u32 %v2134, 16
      %v2314 = vrot.slane %v2312, 5
      %v2315 = vor.u32 %v2311, %v2314
      %v2316 = vrot.slane %v2315, 4
      %v2318 = vshll.u32 %v2135, 16
      %v2320 = vrot.slane %v2318, 5
      %v2321 = vsel %vm1069, %v2316, %v2320
      %v2322 = vshrl.u32 %v2135, 16
      %v2324 = vrot.slane %v2322, 4
      %v2325 = vor.u32 %v2324, %v2320
      %v2326 = vrot.slane %v2325, 4
      %v2328 = vshll.u32 %v2136, 16
      %v2330 = vrot.slane %v2328, 5
      %v2331 = vsel %vm1069, %v2326, %v2330
      %v2333 = vshrl.u32 %v2137, 16
      %v2335 = vrot.slane %v2333, 4
      %v2336 = vshll.u32 %v2137, 16
      %v2338 = vrot.slane %v2336, 5
      %v2339 = vor.u32 %v2335, %v2338
      %v2340 = vrot.slane %v2339, 4
      %v2342 = vshll.u32 %v2138, 16
      %v2344 = vrot.slane %v2342, 5
      %v2345 = vsel %vm1069, %v2340, %v2344
      %v2346 = vshrl.u32 %v2138, 16
      %v2348 = vrot.slane %v2346, 4
      %v2349 = vor.u32 %v2348, %v2344
      %v2350 = vrot.slane %v2349, 4
      %v2352 = vshll.u32 %v2139, 16
      %v2354 = vrot.slane %v2352, 5
      %v2355 = vsel %vm1069, %v2350, %v2354
      %v2357 = vshrl.u32 %v2140, 16
      %v2359 = vrot.slane %v2357, 4
      %v2360 = vshll.u32 %v2140, 16
      %v2362 = vrot.slane %v2360, 5
      %v2363 = vor.u32 %v2359, %v2362
      %v2364 = vrot.slane %v2363, 4
      %v2366 = vshll.u32 %v2141, 16
      %v2368 = vrot.slane %v2366, 5
      %v2369 = vsel %vm1069, %v2364, %v2368
      %v2370 = vshrl.u32 %v2141, 16
      %v2372 = vrot.slane %v2370, 4
      %v2373 = vor.u32 %v2372, %v2368
      %v2374 = vrot.slane %v2373, 4
      %v2376 = vshll.u32 %v2142, 16
      %v2378 = vrot.slane %v2376, 5
      %v2379 = vsel %vm1069, %v2374, %v2378
      %v2381 = vshrl.u32 %v2143, 16
      %v2383 = vrot.slane %v2381, 4
      %v2384 = vshll.u32 %v2143, 16
      %v2386 = vrot.slane %v2384, 5
      %v2387 = vor.u32 %v2383, %v2386
      %v2388 = vrot.slane %v2387, 4
      %v2390 = vshll.u32 %v2144, 16
      %v2392 = vrot.slane %v2390, 5
      %v2393 = vsel %vm1069, %v2388, %v2392
      %v2394 = vshrl.u32 %v2144, 16
      %v2396 = vrot.slane %v2394, 4
      %v2397 = vor.u32 %v2396, %v2392
      %v2398 = vrot.slane %v2397, 4
      %v2400 = vshll.u32 %v2145, 16
      %v2402 = vrot.slane %v2400, 5
      %v2403 = vsel %vm1069, %v2398, %v2402
      %v2405 = vshrl.u32 %v2146, 16
      %v2407 = vrot.slane %v2405, 4
      %v2408 = vshll.u32 %v2146, 16
      %v2410 = vrot.slane %v2408, 5
      %v2411 = vor.u32 %v2407, %v2410
      %v2412 = vrot.slane %v2411, 4
      %v2414 = vshll.u32 %v2147, 16
      %v2416 = vrot.slane %v2414, 5
      %v2417 = vsel %vm1069, %v2412, %v2416
      %v2418 = vshrl.u32 %v2147, 16
      %v2420 = vrot.slane %v2418, 4
      %v2421 = vor.u32 %v2420, %v2416
      %v2422 = vrot.slane %v2421, 4
      %v2424 = vshll.u32 %v2148, 16
      %v2426 = vrot.slane %v2424, 5
      %v2427 = vsel %vm1069, %v2422, %v2426
      %v2429 = vshrl.u32 %v2149, 16
      %v2431 = vrot.slane %v2429, 4
      %v2432 = vshll.u32 %v2149, 16
      %v2434 = vrot.slane %v2432, 5
      %v2435 = vor.u32 %v2431, %v2434
      %v2436 = vrot.slane %v2435, 4
      %v2438 = vshll.u32 %v2150, 16
      %v2440 = vrot.slane %v2438, 5
      %v2441 = vsel %vm1069, %v2436, %v2440
      %v2442 = vshrl.u32 %v2150, 16
      %v2444 = vrot.slane %v2442, 4
      %v2445 = vor.u32 %v2444, %v2440
      %v2446 = vrot.slane %v2445, 4
      %v2448 = vshll.u32 %v2151, 16
      %v2450 = vrot.slane %v2448, 5
      %v2451 = vsel %vm1069, %v2446, %v2450
      %v2453 = vshrl.u32 %v2152, 16
      %v2455 = vrot.slane %v2453, 4
      %v2456 = vshll.u32 %v2152, 16
      %v2458 = vrot.slane %v2456, 5
      %v2459 = vor.u32 %v2455, %v2458
      %v2460 = vrot.slane %v2459, 4
      %v2462 = vshll.u32 %v2153, 16
      %v2464 = vrot.slane %v2462, 5
      %v2465 = vsel %vm1069, %v2460, %v2464
      %v2466 = vshrl.u32 %v2153, 16
      %v2468 = vrot.slane %v2466, 4
      %v2469 = vor.u32 %v2468, %v2464
      %v2470 = vrot.slane %v2469, 4
      %v2472 = vshll.u32 %v2154, 16
      %v2474 = vrot.slane %v2472, 5
      %v2475 = vsel %vm1069, %v2470, %v2474
      %v2477 = vshrl.u32 %v2155, 16
      %v2479 = vrot.slane %v2477, 4
      %v2480 = vshll.u32 %v2155, 16
      %v2482 = vrot.slane %v2480, 5
      %v2483 = vor.u32 %v2479, %v2482
      %v2484 = vrot.slane %v2483, 4
      %v2486 = vshll.u32 %v2156, 16
      %v2488 = vrot.slane %v2486, 5
      %v2489 = vsel %vm1069, %v2484, %v2488
      %v2490 = vshrl.u32 %v2156, 16
      %v2492 = vrot.slane %v2490, 4
      %v2493 = vor.u32 %v2492, %v2488
      %v2494 = vrot.slane %v2493, 4
      %v2496 = vshll.u32 %v2157, 16
      %v2498 = vrot.slane %v2496, 5
      %v2499 = vsel %vm1069, %v2494, %v2498
      %v2501 = vshrl.u32 %v2158, 16
      %v2503 = vrot.slane %v2501, 4
      %v2504 = vshll.u32 %v2158, 16
      %v2506 = vrot.slane %v2504, 5
      %v2507 = vor.u32 %v2503, %v2506
      %v2508 = vrot.slane %v2507, 4
      %v2510 = vshll.u32 %v2159, 16
      %v2512 = vrot.slane %v2510, 5
      %v2513 = vsel %vm1069, %v2508, %v2512
      %v2514 = vshrl.u32 %v2159, 16
      %v2516 = vrot.slane %v2514, 4
      %v2517 = vor.u32 %v2516, %v2512
      %v2518 = vrot.slane %v2517, 4
      %v2520 = vshll.u32 %v2160, 16
      %v2522 = vrot.slane %v2520, 5
      %v2523 = vsel %vm1069, %v2518, %v2522
      %v2525 = vshrl.u32 %v2161, 16
      %v2527 = vrot.slane %v2525, 4
      %v2528 = vshll.u32 %v2161, 16
      %v2530 = vrot.slane %v2528, 5
      %v2531 = vor.u32 %v2527, %v2530
      %v2532 = vrot.slane %v2531, 4
      %v2534 = vshll.u32 %v2162, 16
      %v2536 = vrot.slane %v2534, 5
      %v2537 = vsel %vm1069, %v2532, %v2536
      %v2538 = vshrl.u32 %v2162, 16
      %v2540 = vrot.slane %v2538, 4
      %v2541 = vor.u32 %v2540, %v2536
      %v2542 = vrot.slane %v2541, 4
      %v2544 = vshll.u32 %v2163, 16
      %v2546 = vrot.slane %v2544, 5
      %v2547 = vsel %vm1069, %v2542, %v2546
      %2548 = vrot.lane.b32.xlu0 %v2177, 16
      %v2549 = vpop.permute.xlu0 %2548
      %2550 = vrot.lane.b32.xlu0 %v2187, 16
      %v2551 = vpop.permute.xlu0 %2550
      %2552 = vrot.lane.b32.xlu0 %v2201, 16
      %v2553 = vpop.permute.xlu0 %2552
      %2554 = vrot.lane.b32.xlu0 %v2211, 16
      %v2555 = vpop.permute.xlu0 %2554
      %2556 = vrot.lane.b32.xlu0 %v2225, 16
      %v2557 = vpop.permute.xlu0 %2556
      %2558 = vrot.lane.b32.xlu0 %v2235, 16
      %v2559 = vpop.permute.xlu0 %2558
      %2560 = vrot.lane.b32.xlu0 %v2249, 16
      %v2561 = vpop.permute.xlu0 %2560
      %2562 = vrot.lane.b32.xlu0 %v2259, 16
      %v2563 = vpop.permute.xlu0 %2562
      %2564 = vrot.lane.b32.xlu0 %v2273, 16
      %v2565 = vpop.permute.xlu0 %2564
      %2566 = vrot.lane.b32.xlu0 %v2283, 16
      %v2567 = vpop.permute.xlu0 %2566
      %2568 = vrot.lane.b32.xlu0 %v2297, 16
      %v2569 = vpop.permute.xlu0 %2568
      %2570 = vrot.lane.b32.xlu0 %v2307, 16
      %v2571 = vpop.permute.xlu0 %2570
      %2572 = vrot.lane.b32.xlu0 %v2321, 16
      %v2573 = vpop.permute.xlu0 %2572
      %2574 = vrot.lane.b32.xlu0 %v2331, 16
      %v2575 = vpop.permute.xlu0 %2574
      %2576 = vrot.lane.b32.xlu0 %v2345, 16
      %v2577 = vpop.permute.xlu0 %2576
      %2578 = vrot.lane.b32.xlu0 %v2355, 16
      %v2579 = vpop.permute.xlu0 %2578
      %2580 = vrot.lane.b32.xlu0 %v2369, 16
      %v2581 = vpop.permute.xlu0 %2580
      %2582 = vrot.lane.b32.xlu0 %v2379, 16
      %v2583 = vpop.permute.xlu0 %2582
      %2584 = vrot.lane.b32.xlu0 %v2393, 16
      %v2585 = vpop.permute.xlu0 %2584
      %2586 = vrot.lane.b32.xlu0 %v2403, 16
      %v2587 = vpop.permute.xlu0 %2586
      %2588 = vrot.lane.b32.xlu0 %v2417, 16
      %v2589 = vpop.permute.xlu0 %2588
      %2590 = vrot.lane.b32.xlu0 %v2427, 16
      %v2591 = vpop.permute.xlu0 %2590
      %2592 = vrot.lane.b32.xlu0 %v2441, 16
      %v2593 = vpop.permute.xlu0 %2592
      %2594 = vrot.lane.b32.xlu0 %v2451, 16
      %v2595 = vpop.permute.xlu0 %2594
      %2596 = vrot.lane.b32.xlu0 %v2465, 16
      %v2597 = vpop.permute.xlu0 %2596
      %2598 = vrot.lane.b32.xlu0 %v2475, 16
      %v2599 = vpop.permute.xlu0 %2598
      %2600 = vrot.lane.b32.xlu0 %v2489, 16
      %v2601 = vpop.permute.xlu0 %2600
      %2602 = vrot.lane.b32.xlu0 %v2499, 16
      %v2603 = vpop.permute.xlu0 %2602
      %2604 = vrot.lane.b32.xlu0 %v2513, 16
      %v2605 = vpop.permute.xlu0 %2604
      %2606 = vrot.lane.b32.xlu0 %v2523, 16
      %v2607 = vpop.permute.xlu0 %2606
      %2608 = vrot.lane.b32.xlu0 %v2537, 16
      %v2609 = vpop.permute.xlu0 %2608
      %2610 = vrot.lane.b32.xlu0 %v2547, 16
      %v2611 = vpop.permute.xlu0 %2610
      %vm2644 = vcmask 158848
      %2645 = vst.msk [vmem:[#allocation3] sm:$0xf] %vm2644, %v2549
      %2646 = vst.msk [vmem:[#allocation3 + $0x4] sm:$0xf] %vm2644, %v2551
      %2647 = vst.msk [vmem:[#allocation3 + $0x8] sm:$0xf] %vm2644, %v2553
      %2648 = vst.msk [vmem:[#allocation3 + $0xc] sm:$0xf] %vm2644, %v2555
      %2649 = vst.msk [vmem:[#allocation3 + $0x10] sm:$0xf] %vm2644, %v2557
      %2650 = vst.msk [vmem:[#allocation3 + $0x14] sm:$0xf] %vm2644, %v2559
      %2651 = vst.msk [vmem:[#allocation3 + $0x18] sm:$0xf] %vm2644, %v2561
      %2652 = vst.msk [vmem:[#allocation3 + $0x1c] sm:$0xf] %vm2644, %v2563
      %2653 = vst.msk [vmem:[#allocation3 + $0x20] sm:$0xf] %vm2644, %v2565
      %2654 = vst.msk [vmem:[#allocation3 + $0x24] sm:$0xf] %vm2644, %v2567
      %2655 = vst.msk [vmem:[#allocation3 + $0x28] sm:$0xf] %vm2644, %v2569
      %2656 = vst.msk [vmem:[#allocation3 + $0x2c] sm:$0xf] %vm2644, %v2571
      %2657 = vst.msk [vmem:[#allocation3 + $0x30] sm:$0xf] %vm2644, %v2573
      %2658 = vst.msk [vmem:[#allocation3 + $0x34] sm:$0xf] %vm2644, %v2575
      %2659 = vst.msk [vmem:[#allocation3 + $0x38] sm:$0xf] %vm2644, %v2577
      %2660 = vst.msk [vmem:[#allocation3 + $0x3c] sm:$0xf] %vm2644, %v2579
      %2661 = vst.msk [vmem:[#allocation3 + $0x40] sm:$0xf] %vm2644, %v2581
      %2662 = vst.msk [vmem:[#allocation3 + $0x44] sm:$0xf] %vm2644, %v2583
      %2663 = vst.msk [vmem:[#allocation3 + $0x48] sm:$0xf] %vm2644, %v2585
      %2664 = vst.msk [vmem:[#allocation3 + $0x4c] sm:$0xf] %vm2644, %v2587
      %2665 = vst.msk [vmem:[#allocation3 + $0x50] sm:$0xf] %vm2644, %v2589
      %2666 = vst.msk [vmem:[#allocation3 + $0x54] sm:$0xf] %vm2644, %v2591
      %2667 = vst.msk [vmem:[#allocation3 + $0x58] sm:$0xf] %vm2644, %v2593
      %2668 = vst.msk [vmem:[#allocation3 + $0x5c] sm:$0xf] %vm2644, %v2595
      %2669 = vst.msk [vmem:[#allocation3 + $0x60] sm:$0xf] %vm2644, %v2597
      %2670 = vst.msk [vmem:[#allocation3 + $0x64] sm:$0xf] %vm2644, %v2599
      %2671 = vst.msk [vmem:[#allocation3 + $0x68] sm:$0xf] %vm2644, %v2601
      %2672 = vst.msk [vmem:[#allocation3 + $0x6c] sm:$0xf] %vm2644, %v2603
      %2673 = vst.msk [vmem:[#allocation3 + $0x70] sm:$0xf] %vm2644, %v2605
      %2674 = vst.msk [vmem:[#allocation3 + $0x74] sm:$0xf] %vm2644, %v2607
      %2675 = vst.msk [vmem:[#allocation3 + $0x78] sm:$0xf] %vm2644, %v2609
      %2676 = vst.msk [vmem:[#allocation3 + $0x7c] sm:$0xf] %vm2644, %v2611
      %v2677 = vld [vmem:[%s289] sm:$0xe]
      %v2678 = vld [vmem:[%s289 + $0x4] sm:$0xf]
      %v2679 = vld [vmem:[%s289 + $0x8] sm:$0x1]
      %v2680 = vld [vmem:[%s289 + $0xc] sm:$0xe]
      %v2681 = vld [vmem:[%s289 + $0x10] sm:$0xf]
      %v2682 = vld [vmem:[%s289 + $0x14] sm:$0x1]
      %v2683 = vld [vmem:[%s289 + $0x18] sm:$0xe]
      %v2684 = vld [vmem:[%s289 + $0x1c] sm:$0xf]
      %v2685 = vld [vmem:[%s289 + $0x20] sm:$0x1]
      %v2686 = vld [vmem:[%s289 + $0x24] sm:$0xe]
      %v2687 = vld [vmem:[%s289 + $0x28] sm:$0xf]
      %v2688 = vld [vmem:[%s289 + $0x2c] sm:$0x1]
      %v2689 = vld [vmem:[%s289 + $0x30] sm:$0xe]
      %v2690 = vld [vmem:[%s289 + $0x34] sm:$0xf]
      %v2691 = vld [vmem:[%s289 + $0x38] sm:$0x1]
      %v2692 = vld [vmem:[%s289 + $0x3c] sm:$0xe]
      %v2693 = vld [vmem:[%s289 + $0x40] sm:$0xf]
      %v2694 = vld [vmem:[%s289 + $0x44] sm:$0x1]
      %v2695 = vld [vmem:[%s289 + $0x48] sm:$0xe]
      %v2696 = vld [vmem:[%s289 + $0x4c] sm:$0xf]
      %v2697 = vld [vmem:[%s289 + $0x50] sm:$0x1]
      %v2698 = vld [vmem:[%s289 + $0x54] sm:$0xe]
      %v2699 = vld [vmem:[%s289 + $0x58] sm:$0xf]
      %v2700 = vld [vmem:[%s289 + $0x5c] sm:$0x1]
      %v2701 = vld [vmem:[%s289 + $0x60] sm:$0xe]
      %v2702 = vld [vmem:[%s289 + $0x64] sm:$0xf]
      %v2703 = vld [vmem:[%s289 + $0x68] sm:$0x1]
      %v2704 = vld [vmem:[%s289 + $0x6c] sm:$0xe]
      %v2705 = vld [vmem:[%s289 + $0x70] sm:$0xf]
      %v2706 = vld [vmem:[%s289 + $0x74] sm:$0x1]
      %v2707 = vld [vmem:[%s289 + $0x78] sm:$0xe]
      %v2708 = vld [vmem:[%s289 + $0x7c] sm:$0xf]
      %v2709 = vld [vmem:[%s289 + $0x80] sm:$0x1]
      %v2710 = vld [vmem:[%s289 + $0x84] sm:$0xe]
      %v2711 = vld [vmem:[%s289 + $0x88] sm:$0xf]
      %v2712 = vld [vmem:[%s289 + $0x8c] sm:$0x1]
      %v2713 = vld [vmem:[%s289 + $0x90] sm:$0xe]
      %v2714 = vld [vmem:[%s289 + $0x94] sm:$0xf]
      %v2715 = vld [vmem:[%s289 + $0x98] sm:$0x1]
      %v2716 = vld [vmem:[%s289 + $0x9c] sm:$0xe]
      %v2717 = vld [vmem:[%s289 + $0xa0] sm:$0xf]
      %v2718 = vld [vmem:[%s289 + $0xa4] sm:$0x1]
      %v2719 = vld [vmem:[%s289 + $0xa8] sm:$0xe]
      %v2720 = vld [vmem:[%s289 + $0xac] sm:$0xf]
      %v2721 = vld [vmem:[%s289 + $0xb0] sm:$0x1]
      %v2722 = vld [vmem:[%s289 + $0xb4] sm:$0xe]
      %v2723 = vld [vmem:[%s289 + $0xb8] sm:$0xf]
      %v2724 = vld [vmem:[%s289 + $0xbc] sm:$0x1]
      %v2773 = vrot.slane %v2677, 5
      %v2774 = vrot.slane %v2773, 4
      %v2775 = vrot.slane %v2678, 5
      %v2776 = vsel %vm1681, %v2774, %v2775
      %v2777 = vrot.slane %v2775, 4
      %v2778 = vrot.slane %v2679, 5
      %v2779 = vsel %vm1681, %v2777, %v2778
      %v2780 = vrot.slane %v2680, 5
      %v2781 = vrot.slane %v2780, 4
      %v2782 = vrot.slane %v2681, 5
      %v2783 = vsel %vm1681, %v2781, %v2782
      %v2784 = vrot.slane %v2782, 4
      %v2785 = vrot.slane %v2682, 5
      %v2786 = vsel %vm1681, %v2784, %v2785
      %v2787 = vrot.slane %v2683, 5
      %v2788 = vrot.slane %v2787, 4
      %v2789 = vrot.slane %v2684, 5
      %v2790 = vsel %vm1681, %v2788, %v2789
      %v2791 = vrot.slane %v2789, 4
      %v2792 = vrot.slane %v2685, 5
      %v2793 = vsel %vm1681, %v2791, %v2792
      %v2794 = vrot.slane %v2686, 5
      %v2795 = vrot.slane %v2794, 4
      %v2796 = vrot.slane %v2687, 5
      %v2797 = vsel %vm1681, %v2795, %v2796
      %v2798 = vrot.slane %v2796, 4
      %v2799 = vrot.slane %v2688, 5
      %v2800 = vsel %vm1681, %v2798, %v2799
      %v2801 = vrot.slane %v2689, 5
      %v2802 = vrot.slane %v2801, 4
      %v2803 = vrot.slane %v2690, 5
      %v2804 = vsel %vm1681, %v2802, %v2803
      %v2805 = vrot.slane %v2803, 4
      %v2806 = vrot.slane %v2691, 5
      %v2807 = vsel %vm1681, %v2805, %v2806
      %v2808 = vrot.slane %v2692, 5
      %v2809 = vrot.slane %v2808, 4
      %v2810 = vrot.slane %v2693, 5
      %v2811 = vsel %vm1681, %v2809, %v2810
      %v2812 = vrot.slane %v2810, 4
      %v2813 = vrot.slane %v2694, 5
      %v2814 = vsel %vm1681, %v2812, %v2813
      %v2815 = vrot.slane %v2695, 5
      %v2816 = vrot.slane %v2815, 4
      %v2817 = vrot.slane %v2696, 5
      %v2818 = vsel %vm1681, %v2816, %v2817
      %v2819 = vrot.slane %v2817, 4
      %v2820 = vrot.slane %v2697, 5
      %v2821 = vsel %vm1681, %v2819, %v2820
      %v2822 = vrot.slane %v2698, 5
      %v2823 = vrot.slane %v2822, 4
      %v2824 = vrot.slane %v2699, 5
      %v2825 = vsel %vm1681, %v2823, %v2824
      %v2826 = vrot.slane %v2824, 4
      %v2827 = vrot.slane %v2700, 5
      %v2828 = vsel %vm1681, %v2826, %v2827
      %v2829 = vrot.slane %v2701, 5
      %v2830 = vrot.slane %v2829, 4
      %v2831 = vrot.slane %v2702, 5
      %v2832 = vsel %vm1681, %v2830, %v2831
      %v2833 = vrot.slane %v2831, 4
      %v2834 = vrot.slane %v2703, 5
      %v2835 = vsel %vm1681, %v2833, %v2834
      %v2836 = vrot.slane %v2704, 5
      %v2837 = vrot.slane %v2836, 4
      %v2838 = vrot.slane %v2705, 5
      %v2839 = vsel %vm1681, %v2837, %v2838
      %v2840 = vrot.slane %v2838, 4
      %v2841 = vrot.slane %v2706, 5
      %v2842 = vsel %vm1681, %v2840, %v2841
      %v2843 = vrot.slane %v2707, 5
      %v2844 = vrot.slane %v2843, 4
      %v2845 = vrot.slane %v2708, 5
      %v2846 = vsel %vm1681, %v2844, %v2845
      %v2847 = vrot.slane %v2845, 4
      %v2848 = vrot.slane %v2709, 5
      %v2849 = vsel %vm1681, %v2847, %v2848
      %v2850 = vrot.slane %v2710, 5
      %v2851 = vrot.slane %v2850, 4
      %v2852 = vrot.slane %v2711, 5
      %v2853 = vsel %vm1681, %v2851, %v2852
      %v2854 = vrot.slane %v2852, 4
      %v2855 = vrot.slane %v2712, 5
      %v2856 = vsel %vm1681, %v2854, %v2855
      %v2857 = vrot.slane %v2713, 5
      %v2858 = vrot.slane %v2857, 4
      %v2859 = vrot.slane %v2714, 5
      %v2860 = vsel %vm1681, %v2858, %v2859
      %v2861 = vrot.slane %v2859, 4
      %v2862 = vrot.slane %v2715, 5
      %v2863 = vsel %vm1681, %v2861, %v2862
      %v2864 = vrot.slane %v2716, 5
      %v2865 = vrot.slane %v2864, 4
      %v2866 = vrot.slane %v2717, 5
      %v2867 = vsel %vm1681, %v2865, %v2866
      %v2868 = vrot.slane %v2866, 4
      %v2869 = vrot.slane %v2718, 5
      %v2870 = vsel %vm1681, %v2868, %v2869
      %v2871 = vrot.slane %v2719, 5
      %v2872 = vrot.slane %v2871, 4
      %v2873 = vrot.slane %v2720, 5
      %v2874 = vsel %vm1681, %v2872, %v2873
      %v2875 = vrot.slane %v2873, 4
      %v2876 = vrot.slane %v2721, 5
      %v2877 = vsel %vm1681, %v2875, %v2876
      %v2878 = vrot.slane %v2722, 5
      %v2879 = vrot.slane %v2878, 4
      %v2880 = vrot.slane %v2723, 5
      %v2881 = vsel %vm1681, %v2879, %v2880
      %v2882 = vrot.slane %v2880, 4
      %v2883 = vrot.slane %v2724, 5
      %v2884 = vsel %vm1681, %v2882, %v2883
      %2885 = vrot.lane.b32.xlu0 %v2776, 20
      %v2886 = vpop.permute.xlu0 %2885
      %2887 = vrot.lane.b32.xlu0 %v2779, 20
      %v2888 = vpop.permute.xlu0 %2887
      %2889 = vrot.lane.b32.xlu0 %v2783, 20
      %v2890 = vpop.permute.xlu0 %2889
      %2891 = vrot.lane.b32.xlu0 %v2786, 20
      %v2892 = vpop.permute.xlu0 %2891
      %2893 = vrot.lane.b32.xlu0 %v2790, 20
      %v2894 = vpop.permute.xlu0 %2893
      %2895 = vrot.lane.b32.xlu0 %v2793, 20
      %v2896 = vpop.permute.xlu0 %2895
      %2897 = vrot.lane.b32.xlu0 %v2797, 20
      %v2898 = vpop.permute.xlu0 %2897
      %2899 = vrot.lane.b32.xlu0 %v2800, 20
      %v2900 = vpop.permute.xlu0 %2899
      %2901 = vrot.lane.b32.xlu0 %v2804, 20
      %v2902 = vpop.permute.xlu0 %2901
      %2903 = vrot.lane.b32.xlu0 %v2807, 20
      %v2904 = vpop.permute.xlu0 %2903
      %2905 = vrot.lane.b32.xlu0 %v2811, 20
      %v2906 = vpop.permute.xlu0 %2905
      %2907 = vrot.lane.b32.xlu0 %v2814, 20
      %v2908 = vpop.permute.xlu0 %2907
      %2909 = vrot.lane.b32.xlu0 %v2818, 20
      %v2910 = vpop.permute.xlu0 %2909
      %2911 = vrot.lane.b32.xlu0 %v2821, 20
      %v2912 = vpop.permute.xlu0 %2911
      %2913 = vrot.lane.b32.xlu0 %v2825, 20
      %v2914 = vpop.permute.xlu0 %2913
      %2915 = vrot.lane.b32.xlu0 %v2828, 20
      %v2916 = vpop.permute.xlu0 %2915
      %2917 = vrot.lane.b32.xlu0 %v2832, 20
      %v2918 = vpop.permute.xlu0 %2917
      %2919 = vrot.lane.b32.xlu0 %v2835, 20
      %v2920 = vpop.permute.xlu0 %2919
      %2921 = vrot.lane.b32.xlu0 %v2839, 20
      %v2922 = vpop.permute.xlu0 %2921
      %2923 = vrot.lane.b32.xlu0 %v2842, 20
      %v2924 = vpop.permute.xlu0 %2923
      %2925 = vrot.lane.b32.xlu0 %v2846, 20
      %v2926 = vpop.permute.xlu0 %2925
      %2927 = vrot.lane.b32.xlu0 %v2849, 20
      %v2928 = vpop.permute.xlu0 %2927
      %2929 = vrot.lane.b32.xlu0 %v2853, 20
      %v2930 = vpop.permute.xlu0 %2929
      %2931 = vrot.lane.b32.xlu0 %v2856, 20
      %v2932 = vpop.permute.xlu0 %2931
      %2933 = vrot.lane.b32.xlu0 %v2860, 20
      %v2934 = vpop.permute.xlu0 %2933
      %2935 = vrot.lane.b32.xlu0 %v2863, 20
      %v2936 = vpop.permute.xlu0 %2935
      %2937 = vrot.lane.b32.xlu0 %v2867, 20
      %v2938 = vpop.permute.xlu0 %2937
      %2939 = vrot.lane.b32.xlu0 %v2870, 20
      %v2940 = vpop.permute.xlu0 %2939
      %2941 = vrot.lane.b32.xlu0 %v2874, 20
      %v2942 = vpop.permute.xlu0 %2941
      %2943 = vrot.lane.b32.xlu0 %v2877, 20
      %v2944 = vpop.permute.xlu0 %2943
      %2945 = vrot.lane.b32.xlu0 %v2881, 20
      %v2946 = vpop.permute.xlu0 %2945
      %2947 = vrot.lane.b32.xlu0 %v2884, 20
      %v2948 = vpop.permute.xlu0 %2947
      %vm2981 = vcmask 191648
      %2982 = vst.msk [vmem:[#allocation3] sm:$0xf] %vm2981, %v2886
      %2983 = vst.msk [vmem:[#allocation3 + $0x4] sm:$0xf] %vm2981, %v2888
      %2984 = vst.msk [vmem:[#allocation3 + $0x8] sm:$0xf] %vm2981, %v2890
      %2985 = vst.msk [vmem:[#allocation3 + $0xc] sm:$0xf] %vm2981, %v2892
      %2986 = vst.msk [vmem:[#allocation3 + $0x10] sm:$0xf] %vm2981, %v2894
      %2987 = vst.msk [vmem:[#allocation3 + $0x14] sm:$0xf] %vm2981, %v2896
      %2988 = vst.msk [vmem:[#allocation3 + $0x18] sm:$0xf] %vm2981, %v2898
      %2989 = vst.msk [vmem:[#allocation3 + $0x1c] sm:$0xf] %vm2981, %v2900
      %2990 = vst.msk [vmem:[#allocation3 + $0x20] sm:$0xf] %vm2981, %v2902
      %2991 = vst.msk [vmem:[#allocation3 + $0x24] sm:$0xf] %vm2981, %v2904
      %2992 = vst.msk [vmem:[#allocation3 + $0x28] sm:$0xf] %vm2981, %v2906
      %2993 = vst.msk [vmem:[#allocation3 + $0x2c] sm:$0xf] %vm2981, %v2908
      %2994 = vst.msk [vmem:[#allocation3 + $0x30] sm:$0xf] %vm2981, %v2910
      %2995 = vst.msk [vmem:[#allocation3 + $0x34] sm:$0xf] %vm2981, %v2912
      %2996 = vst.msk [vmem:[#allocation3 + $0x38] sm:$0xf] %vm2981, %v2914
      %2997 = vst.msk [vmem:[#allocation3 + $0x3c] sm:$0xf] %vm2981, %v2916
      %2998 = vst.msk [vmem:[#allocation3 + $0x40] sm:$0xf] %vm2981, %v2918
      %2999 = vst.msk [vmem:[#allocation3 + $0x44] sm:$0xf] %vm2981, %v2920
      %3000 = vst.msk [vmem:[#allocation3 + $0x48] sm:$0xf] %vm2981, %v2922
      %3001 = vst.msk [vmem:[#allocation3 + $0x4c] sm:$0xf] %vm2981, %v2924
      %3002 = vst.msk [vmem:[#allocation3 + $0x50] sm:$0xf] %vm2981, %v2926
      %3003 = vst.msk [vmem:[#allocation3 + $0x54] sm:$0xf] %vm2981, %v2928
      %3004 = vst.msk [vmem:[#allocation3 + $0x58] sm:$0xf] %vm2981, %v2930
      %3005 = vst.msk [vmem:[#allocation3 + $0x5c] sm:$0xf] %vm2981, %v2932
      %3006 = vst.msk [vmem:[#allocation3 + $0x60] sm:$0xf] %vm2981, %v2934
      %3007 = vst.msk [vmem:[#allocation3 + $0x64] sm:$0xf] %vm2981, %v2936
      %3008 = vst.msk [vmem:[#allocation3 + $0x68] sm:$0xf] %vm2981, %v2938
      %3009 = vst.msk [vmem:[#allocation3 + $0x6c] sm:$0xf] %vm2981, %v2940
      %3010 = vst.msk [vmem:[#allocation3 + $0x70] sm:$0xf] %vm2981, %v2942
      %3011 = vst.msk [vmem:[#allocation3 + $0x74] sm:$0xf] %vm2981, %v2944
      %3012 = vst.msk [vmem:[#allocation3 + $0x78] sm:$0xf] %vm2981, %v2946
      %3013 = vst.msk [vmem:[#allocation3 + $0x7c] sm:$0xf] %vm2981, %v2948
      %s3014 = scalar_lea.vmem [#allocation2], 24
      %v3015 = vld [vmem:[%s3014] sm:$0xf]
      %v3016 = vld [vmem:[%s3014 + $0x4] sm:$0xf]
      %v3017 = vld [vmem:[%s3014 + $0xc] sm:$0xf]
      %v3018 = vld [vmem:[%s3014 + $0x10] sm:$0xf]
      %v3019 = vld [vmem:[%s3014 + $0x18] sm:$0xf]
      %v3020 = vld [vmem:[%s3014 + $0x1c] sm:$0xf]
      %v3021 = vld [vmem:[%s3014 + $0x24] sm:$0xf]
      %v3022 = vld [vmem:[%s3014 + $0x28] sm:$0xf]
      %v3023 = vld [vmem:[%s3014 + $0x30] sm:$0xf]
      %v3024 = vld [vmem:[%s3014 + $0x34] sm:$0xf]
      %v3025 = vld [vmem:[%s3014 + $0x3c] sm:$0xf]
      %v3026 = vld [vmem:[%s3014 + $0x40] sm:$0xf]
      %v3027 = vld [vmem:[%s3014 + $0x48] sm:$0xf]
      %v3028 = vld [vmem:[%s3014 + $0x4c] sm:$0xf]
      %v3029 = vld [vmem:[%s3014 + $0x54] sm:$0xf]
      %v3030 = vld [vmem:[%s3014 + $0x58] sm:$0xf]
      %v3031 = vld [vmem:[%s3014 + $0x60] sm:$0xf]
      %v3032 = vld [vmem:[%s3014 + $0x64] sm:$0xf]
      %v3033 = vld [vmem:[%s3014 + $0x6c] sm:$0xf]
      %v3034 = vld [vmem:[%s3014 + $0x70] sm:$0xf]
      %v3035 = vld [vmem:[%s3014 + $0x78] sm:$0xf]
      %v3036 = vld [vmem:[%s3014 + $0x7c] sm:$0xf]
      %v3037 = vld [vmem:[%s3014 + $0x84] sm:$0xf]
      %v3038 = vld [vmem:[%s3014 + $0x88] sm:$0xf]
      %v3039 = vld [vmem:[%s3014 + $0x90] sm:$0xf]
      %v3040 = vld [vmem:[%s3014 + $0x94] sm:$0xf]
      %v3041 = vld [vmem:[%s3014 + $0x9c] sm:$0xf]
      %v3042 = vld [vmem:[%s3014 + $0xa0] sm:$0xf]
      %v3043 = vld [vmem:[%s3014 + $0xa8] sm:$0xf]
      %v3044 = vld [vmem:[%s3014 + $0xac] sm:$0xf]
      %v3045 = vld [vmem:[%s3014 + $0xb4] sm:$0xf]
      %v3046 = vld [vmem:[%s3014 + $0xb8] sm:$0xf]
      %3079 = vrot.lane.b32.xlu0 %v3015, 24
      %v3080 = vpop.permute.xlu0 %3079
      %3081 = vrot.lane.b32.xlu0 %v3016, 24
      %v3082 = vpop.permute.xlu0 %3081
      %3083 = vrot.lane.b32.xlu0 %v3017, 24
      %v3084 = vpop.permute.xlu0 %3083
      %3085 = vrot.lane.b32.xlu0 %v3018, 24
      %v3086 = vpop.permute.xlu0 %3085
      %3087 = vrot.lane.b32.xlu0 %v3019, 24
      %v3088 = vpop.permute.xlu0 %3087
      %3089 = vrot.lane.b32.xlu0 %v3020, 24
      %v3090 = vpop.permute.xlu0 %3089
      %3091 = vrot.lane.b32.xlu0 %v3021, 24
      %v3092 = vpop.permute.xlu0 %3091
      %3093 = vrot.lane.b32.xlu0 %v3022, 24
      %v3094 = vpop.permute.xlu0 %3093
      %3095 = vrot.lane.b32.xlu0 %v3023, 24
      %v3096 = vpop.permute.xlu0 %3095
      %3097 = vrot.lane.b32.xlu0 %v3024, 24
      %v3098 = vpop.permute.xlu0 %3097
      %3099 = vrot.lane.b32.xlu0 %v3025, 24
      %v3100 = vpop.permute.xlu0 %3099
      %3101 = vrot.lane.b32.xlu0 %v3026, 24
      %v3102 = vpop.permute.xlu0 %3101
      %3103 = vrot.lane.b32.xlu0 %v3027, 24
      %v3104 = vpop.permute.xlu0 %3103
      %3105 = vrot.lane.b32.xlu0 %v3028, 24
      %v3106 = vpop.permute.xlu0 %3105
      %3107 = vrot.lane.b32.xlu0 %v3029, 24
      %v3108 = vpop.permute.xlu0 %3107
      %3109 = vrot.lane.b32.xlu0 %v3030, 24
      %v3110 = vpop.permute.xlu0 %3109
      %3111 = vrot.lane.b32.xlu0 %v3031, 24
      %v3112 = vpop.permute.xlu0 %3111
      %3113 = vrot.lane.b32.xlu0 %v3032, 24
      %v3114 = vpop.permute.xlu0 %3113
      %3115 = vrot.lane.b32.xlu0 %v3033, 24
      %v3116 = vpop.permute.xlu0 %3115
      %3117 = vrot.lane.b32.xlu0 %v3034, 24
      %v3118 = vpop.permute.xlu0 %3117
      %3119 = vrot.lane.b32.xlu0 %v3035, 24
      %v3120 = vpop.permute.xlu0 %3119
      %3121 = vrot.lane.b32.xlu0 %v3036, 24
      %v3122 = vpop.permute.xlu0 %3121
      %3123 = vrot.lane.b32.xlu0 %v3037, 24
      %v3124 = vpop.permute.xlu0 %3123
      %3125 = vrot.lane.b32.xlu0 %v3038, 24
      %v3126 = vpop.permute.xlu0 %3125
      %3127 = vrot.lane.b32.xlu0 %v3039, 24
      %v3128 = vpop.permute.xlu0 %3127
      %3129 = vrot.lane.b32.xlu0 %v3040, 24
      %v3130 = vpop.permute.xlu0 %3129
      %3131 = vrot.lane.b32.xlu0 %v3041, 24
      %v3132 = vpop.permute.xlu0 %3131
      %3133 = vrot.lane.b32.xlu0 %v3042, 24
      %v3134 = vpop.permute.xlu0 %3133
      %3135 = vrot.lane.b32.xlu0 %v3043, 24
      %v3136 = vpop.permute.xlu0 %3135
      %3137 = vrot.lane.b32.xlu0 %v3044, 24
      %v3138 = vpop.permute.xlu0 %3137
      %3139 = vrot.lane.b32.xlu0 %v3045, 24
      %v3140 = vpop.permute.xlu0 %3139
      %3141 = vrot.lane.b32.xlu0 %v3046, 24
      %v3142 = vpop.permute.xlu0 %3141
      %vm3175 = vcmask 224448
      %3176 = vst.msk [vmem:[#allocation3] sm:$0xf] %vm3175, %v3080
      %3177 = vst.msk [vmem:[#allocation3 + $0x4] sm:$0xf] %vm3175, %v3082
      %3178 = vst.msk [vmem:[#allocation3 + $0x8] sm:$0xf] %vm3175, %v3084
      %3179 = vst.msk [vmem:[#allocation3 + $0xc] sm:$0xf] %vm3175, %v3086
      %3180 = vst.msk [vmem:[#allocation3 + $0x10] sm:$0xf] %vm3175, %v3088
      %3181 = vst.msk [vmem:[#allocation3 + $0x14] sm:$0xf] %vm3175, %v3090
      %3182 = vst.msk [vmem:[#allocation3 + $0x18] sm:$0xf] %vm3175, %v3092
      %3183 = vst.msk [vmem:[#allocation3 + $0x1c] sm:$0xf] %vm3175, %v3094
      %3184 = vst.msk [vmem:[#allocation3 + $0x20] sm:$0xf] %vm3175, %v3096
      %3185 = vst.msk [vmem:[#allocation3 + $0x24] sm:$0xf] %vm3175, %v3098
      %3186 = vst.msk [vmem:[#allocation3 + $0x28] sm:$0xf] %vm3175, %v3100
      %3187 = vst.msk [vmem:[#allocation3 + $0x2c] sm:$0xf] %vm3175, %v3102
      %3188 = vst.msk [vmem:[#allocation3 + $0x30] sm:$0xf] %vm3175, %v3104
      %3189 = vst.msk [vmem:[#allocation3 + $0x34] sm:$0xf] %vm3175, %v3106
      %3190 = vst.msk [vmem:[#allocation3 + $0x38] sm:$0xf] %vm3175, %v3108
      %3191 = vst.msk [vmem:[#allocation3 + $0x3c] sm:$0xf] %vm3175, %v3110
      %3192 = vst.msk [vmem:[#allocation3 + $0x40] sm:$0xf] %vm3175, %v3112
      %3193 = vst.msk [vmem:[#allocation3 + $0x44] sm:$0xf] %vm3175, %v3114
      %3194 = vst.msk [vmem:[#allocation3 + $0x48] sm:$0xf] %vm3175, %v3116
      %3195 = vst.msk [vmem:[#allocation3 + $0x4c] sm:$0xf] %vm3175, %v3118
      %3196 = vst.msk [vmem:[#allocation3 + $0x50] sm:$0xf] %vm3175, %v3120
      %3197 = vst.msk [vmem:[#allocation3 + $0x54] sm:$0xf] %vm3175, %v3122
      %3198 = vst.msk [vmem:[#allocation3 + $0x58] sm:$0xf] %vm3175, %v3124
      %3199 = vst.msk [vmem:[#allocation3 + $0x5c] sm:$0xf] %vm3175, %v3126
      %3200 = vst.msk [vmem:[#allocation3 + $0x60] sm:$0xf] %vm3175, %v3128
      %3201 = vst.msk [vmem:[#allocation3 + $0x64] sm:$0xf] %vm3175, %v3130
      %3202 = vst.msk [vmem:[#allocation3 + $0x68] sm:$0xf] %vm3175, %v3132
      %3203 = vst.msk [vmem:[#allocation3 + $0x6c] sm:$0xf] %vm3175, %v3134
      %3204 = vst.msk [vmem:[#allocation3 + $0x70] sm:$0xf] %vm3175, %v3136
      %3205 = vst.msk [vmem:[#allocation3 + $0x74] sm:$0xf] %vm3175, %v3138
      %3206 = vst.msk [vmem:[#allocation3 + $0x78] sm:$0xf] %vm3175, %v3140
      %3207 = vst.msk [vmem:[#allocation3 + $0x7c] sm:$0xf] %vm3175, %v3142
      %v3208 = vld [vmem:[%s3014] sm:$0xf]
      %v3209 = vld [vmem:[%s3014 + $0x4] sm:$0xf]
      %v3210 = vld [vmem:[%s3014 + $0x8] sm:$0x1]
      %v3211 = vld [vmem:[%s3014 + $0xc] sm:$0xf]
      %v3212 = vld [vmem:[%s3014 + $0x10] sm:$0xf]
      %v3213 = vld [vmem:[%s3014 + $0x14] sm:$0x1]
      %v3214 = vld [vmem:[%s3014 + $0x18] sm:$0xf]
      %v3215 = vld [vmem:[%s3014 + $0x1c] sm:$0xf]
      %v3216 = vld [vmem:[%s3014 + $0x20] sm:$0x1]
      %v3217 = vld [vmem:[%s3014 + $0x24] sm:$0xf]
      %v3218 = vld [vmem:[%s3014 + $0x28] sm:$0xf]
      %v3219 = vld [vmem:[%s3014 + $0x2c] sm:$0x1]
      %v3220 = vld [vmem:[%s3014 + $0x30] sm:$0xf]
      %v3221 = vld [vmem:[%s3014 + $0x34] sm:$0xf]
      %v3222 = vld [vmem:[%s3014 + $0x38] sm:$0x1]
      %v3223 = vld [vmem:[%s3014 + $0x3c] sm:$0xf]
      %v3224 = vld [vmem:[%s3014 + $0x40] sm:$0xf]
      %v3225 = vld [vmem:[%s3014 + $0x44] sm:$0x1]
      %v3226 = vld [vmem:[%s3014 + $0x48] sm:$0xf]
      %v3227 = vld [vmem:[%s3014 + $0x4c] sm:$0xf]
      %v3228 = vld [vmem:[%s3014 + $0x50] sm:$0x1]
      %v3229 = vld [vmem:[%s3014 + $0x54] sm:$0xf]
      %v3230 = vld [vmem:[%s3014 + $0x58] sm:$0xf]
      %v3231 = vld [vmem:[%s3014 + $0x5c] sm:$0x1]
      %v3232 = vld [vmem:[%s3014 + $0x60] sm:$0xf]
      %v3233 = vld [vmem:[%s3014 + $0x64] sm:$0xf]
      %v3234 = vld [vmem:[%s3014 + $0x68] sm:$0x1]
      %v3235 = vld [vmem:[%s3014 + $0x6c] sm:$0xf]
      %v3236 = vld [vmem:[%s3014 + $0x70] sm:$0xf]
      %v3237 = vld [vmem:[%s3014 + $0x74] sm:$0x1]
      %v3238 = vld [vmem:[%s3014 + $0x78] sm:$0xf]
      %v3239 = vld [vmem:[%s3014 + $0x7c] sm:$0xf]
      %v3240 = vld [vmem:[%s3014 + $0x80] sm:$0x1]
      %v3241 = vld [vmem:[%s3014 + $0x84] sm:$0xf]
      %v3242 = vld [vmem:[%s3014 + $0x88] sm:$0xf]
      %v3243 = vld [vmem:[%s3014 + $0x8c] sm:$0x1]
      %v3244 = vld [vmem:[%s3014 + $0x90] sm:$0xf]
      %v3245 = vld [vmem:[%s3014 + $0x94] sm:$0xf]
      %v3246 = vld [vmem:[%s3014 + $0x98] sm:$0x1]
      %v3247 = vld [vmem:[%s3014 + $0x9c] sm:$0xf]
      %v3248 = vld [vmem:[%s3014 + $0xa0] sm:$0xf]
      %v3249 = vld [vmem:[%s3014 + $0xa4] sm:$0x1]
      %v3250 = vld [vmem:[%s3014 + $0xa8] sm:$0xf]
      %v3251 = vld [vmem:[%s3014 + $0xac] sm:$0xf]
      %v3252 = vld [vmem:[%s3014 + $0xb0] sm:$0x1]
      %v3253 = vld [vmem:[%s3014 + $0xb4] sm:$0xf]
      %v3254 = vld [vmem:[%s3014 + $0xb8] sm:$0xf]
      %v3255 = vld [vmem:[%s3014 + $0xbc] sm:$0x1]
      %v3257 = vshrl.u32 %v3208, 16
      %v3259 = vrot.slane %v3257, 4
      %v3260 = vshll.u32 %v3208, 16
      %v3262 = vrot.slane %v3260, 5
      %v3263 = vor.u32 %v3259, %v3262
      %v3264 = vrot.slane %v3263, 4
      %v3266 = vshll.u32 %v3209, 16
      %v3268 = vrot.slane %v3266, 5
      %v3269 = vsel %vm1069, %v3264, %v3268
      %v3270 = vshrl.u32 %v3209, 16
      %v3272 = vrot.slane %v3270, 4
      %v3273 = vor.u32 %v3272, %v3268
      %v3274 = vrot.slane %v3273, 4
      %v3276 = vshll.u32 %v3210, 16
      %v3278 = vrot.slane %v3276, 5
      %v3279 = vsel %vm1069, %v3274, %v3278
      %v3281 = vshrl.u32 %v3211, 16
      %v3283 = vrot.slane %v3281, 4
      %v3284 = vshll.u32 %v3211, 16
      %v3286 = vrot.slane %v3284, 5
      %v3287 = vor.u32 %v3283, %v3286
      %v3288 = vrot.slane %v3287, 4
      %v3290 = vshll.u32 %v3212, 16
      %v3292 = vrot.slane %v3290, 5
      %v3293 = vsel %vm1069, %v3288, %v3292
      %v3294 = vshrl.u32 %v3212, 16
      %v3296 = vrot.slane %v3294, 4
      %v3297 = vor.u32 %v3296, %v3292
      %v3298 = vrot.slane %v3297, 4
      %v3300 = vshll.u32 %v3213, 16
      %v3302 = vrot.slane %v3300, 5
      %v3303 = vsel %vm1069, %v3298, %v3302
      %v3305 = vshrl.u32 %v3214, 16
      %v3307 = vrot.slane %v3305, 4
      %v3308 = vshll.u32 %v3214, 16
      %v3310 = vrot.slane %v3308, 5
      %v3311 = vor.u32 %v3307, %v3310
      %v3312 = vrot.slane %v3311, 4
      %v3314 = vshll.u32 %v3215, 16
      %v3316 = vrot.slane %v3314, 5
      %v3317 = vsel %vm1069, %v3312, %v3316
      %v3318 = vshrl.u32 %v3215, 16
      %v3320 = vrot.slane %v3318, 4
      %v3321 = vor.u32 %v3320, %v3316
      %v3322 = vrot.slane %v3321, 4
      %v3324 = vshll.u32 %v3216, 16
      %v3326 = vrot.slane %v3324, 5
      %v3327 = vsel %vm1069, %v3322, %v3326
      %v3329 = vshrl.u32 %v3217, 16
      %v3331 = vrot.slane %v3329, 4
      %v3332 = vshll.u32 %v3217, 16
      %v3334 = vrot.slane %v3332, 5
      %v3335 = vor.u32 %v3331, %v3334
      %v3336 = vrot.slane %v3335, 4
      %v3338 = vshll.u32 %v3218, 16
      %v3340 = vrot.slane %v3338, 5
      %v3341 = vsel %vm1069, %v3336, %v3340
      %v3342 = vshrl.u32 %v3218, 16
      %v3344 = vrot.slane %v3342, 4
      %v3345 = vor.u32 %v3344, %v3340
      %v3346 = vrot.slane %v3345, 4
      %v3348 = vshll.u32 %v3219, 16
      %v3350 = vrot.slane %v3348, 5
      %v3351 = vsel %vm1069, %v3346, %v3350
      %v3353 = vshrl.u32 %v3220, 16
      %v3355 = vrot.slane %v3353, 4
      %v3356 = vshll.u32 %v3220, 16
      %v3358 = vrot.slane %v3356, 5
      %v3359 = vor.u32 %v3355, %v3358
      %v3360 = vrot.slane %v3359, 4
      %v3362 = vshll.u32 %v3221, 16
      %v3364 = vrot.slane %v3362, 5
      %v3365 = vsel %vm1069, %v3360, %v3364
      %v3366 = vshrl.u32 %v3221, 16
      %v3368 = vrot.slane %v3366, 4
      %v3369 = vor.u32 %v3368, %v3364
      %v3370 = vrot.slane %v3369, 4
      %v3372 = vshll.u32 %v3222, 16
      %v3374 = vrot.slane %v3372, 5
      %v3375 = vsel %vm1069, %v3370, %v3374
      %v3377 = vshrl.u32 %v3223, 16
      %v3379 = vrot.slane %v3377, 4
      %v3380 = vshll.u32 %v3223, 16
      %v3382 = vrot.slane %v3380, 5
      %v3383 = vor.u32 %v3379, %v3382
      %v3384 = vrot.slane %v3383, 4
      %v3386 = vshll.u32 %v3224, 16
      %v3388 = vrot.slane %v3386, 5
      %v3389 = vsel %vm1069, %v3384, %v3388
      %v3390 = vshrl.u32 %v3224, 16
      %v3392 = vrot.slane %v3390, 4
      %v3393 = vor.u32 %v3392, %v3388
      %v3394 = vrot.slane %v3393, 4
      %v3396 = vshll.u32 %v3225, 16
      %v3398 = vrot.slane %v3396, 5
      %v3399 = vsel %vm1069, %v3394, %v3398
      %v3401 = vshrl.u32 %v3226, 16
      %v3403 = vrot.slane %v3401, 4
      %v3404 = vshll.u32 %v3226, 16
      %v3406 = vrot.slane %v3404, 5
      %v3407 = vor.u32 %v3403, %v3406
      %v3408 = vrot.slane %v3407, 4
      %v3410 = vshll.u32 %v3227, 16
      %v3412 = vrot.slane %v3410, 5
      %v3413 = vsel %vm1069, %v3408, %v3412
      %v3414 = vshrl.u32 %v3227, 16
      %v3416 = vrot.slane %v3414, 4
      %v3417 = vor.u32 %v3416, %v3412
      %v3418 = vrot.slane %v3417, 4
      %v3420 = vshll.u32 %v3228, 16
      %v3422 = vrot.slane %v3420, 5
      %v3423 = vsel %vm1069, %v3418, %v3422
      %v3425 = vshrl.u32 %v3229, 16
      %v3427 = vrot.slane %v3425, 4
      %v3428 = vshll.u32 %v3229, 16
      %v3430 = vrot.slane %v3428, 5
      %v3431 = vor.u32 %v3427, %v3430
      %v3432 = vrot.slane %v3431, 4
      %v3434 = vshll.u32 %v3230, 16
      %v3436 = vrot.slane %v3434, 5
      %v3437 = vsel %vm1069, %v3432, %v3436
      %v3438 = vshrl.u32 %v3230, 16
      %v3440 = vrot.slane %v3438, 4
      %v3441 = vor.u32 %v3440, %v3436
      %v3442 = vrot.slane %v3441, 4
      %v3444 = vshll.u32 %v3231, 16
      %v3446 = vrot.slane %v3444, 5
      %v3447 = vsel %vm1069, %v3442, %v3446
      %v3449 = vshrl.u32 %v3232, 16
      %v3451 = vrot.slane %v3449, 4
      %v3452 = vshll.u32 %v3232, 16
      %v3454 = vrot.slane %v3452, 5
      %v3455 = vor.u32 %v3451, %v3454
      %v3456 = vrot.slane %v3455, 4
      %v3458 = vshll.u32 %v3233, 16
      %v3460 = vrot.slane %v3458, 5
      %v3461 = vsel %vm1069, %v3456, %v3460
      %v3462 = vshrl.u32 %v3233, 16
      %v3464 = vrot.slane %v3462, 4
      %v3465 = vor.u32 %v3464, %v3460
      %v3466 = vrot.slane %v3465, 4
      %v3468 = vshll.u32 %v3234, 16
      %v3470 = vrot.slane %v3468, 5
      %v3471 = vsel %vm1069, %v3466, %v3470
      %v3473 = vshrl.u32 %v3235, 16
      %v3475 = vrot.slane %v3473, 4
      %v3476 = vshll.u32 %v3235, 16
      %v3478 = vrot.slane %v3476, 5
      %v3479 = vor.u32 %v3475, %v3478
      %v3480 = vrot.slane %v3479, 4
      %v3482 = vshll.u32 %v3236, 16
      %v3484 = vrot.slane %v3482, 5
      %v3485 = vsel %vm1069, %v3480, %v3484
      %v3486 = vshrl.u32 %v3236, 16
      %v3488 = vrot.slane %v3486, 4
      %v3489 = vor.u32 %v3488, %v3484
      %v3490 = vrot.slane %v3489, 4
      %v3492 = vshll.u32 %v3237, 16
      %v3494 = vrot.slane %v3492, 5
      %v3495 = vsel %vm1069, %v3490, %v3494
      %v3497 = vshrl.u32 %v3238, 16
      %v3499 = vrot.slane %v3497, 4
      %v3500 = vshll.u32 %v3238, 16
      %v3502 = vrot.slane %v3500, 5
      %v3503 = vor.u32 %v3499, %v3502
      %v3504 = vrot.slane %v3503, 4
      %v3506 = vshll.u32 %v3239, 16
      %v3508 = vrot.slane %v3506, 5
      %v3509 = vsel %vm1069, %v3504, %v3508
      %v3510 = vshrl.u32 %v3239, 16
      %v3512 = vrot.slane %v3510, 4
      %v3513 = vor.u32 %v3512, %v3508
      %v3514 = vrot.slane %v3513, 4
      %v3516 = vshll.u32 %v3240, 16
      %v3518 = vrot.slane %v3516, 5
      %v3519 = vsel %vm1069, %v3514, %v3518
      %v3521 = vshrl.u32 %v3241, 16
      %v3523 = vrot.slane %v3521, 4
      %v3524 = vshll.u32 %v3241, 16
      %v3526 = vrot.slane %v3524, 5
      %v3527 = vor.u32 %v3523, %v3526
      %v3528 = vrot.slane %v3527, 4
      %v3530 = vshll.u32 %v3242, 16
      %v3532 = vrot.slane %v3530, 5
      %v3533 = vsel %vm1069, %v3528, %v3532
      %v3534 = vshrl.u32 %v3242, 16
      %v3536 = vrot.slane %v3534, 4
      %v3537 = vor.u32 %v3536, %v3532
      %v3538 = vrot.slane %v3537, 4
      %v3540 = vshll.u32 %v3243, 16
      %v3542 = vrot.slane %v3540, 5
      %v3543 = vsel %vm1069, %v3538, %v3542
      %v3545 = vshrl.u32 %v3244, 16
      %v3547 = vrot.slane %v3545, 4
      %v3548 = vshll.u32 %v3244, 16
      %v3550 = vrot.slane %v3548, 5
      %v3551 = vor.u32 %v3547, %v3550
      %v3552 = vrot.slane %v3551, 4
      %v3554 = vshll.u32 %v3245, 16
      %v3556 = vrot.slane %v3554, 5
      %v3557 = vsel %vm1069, %v3552, %v3556
      %v3558 = vshrl.u32 %v3245, 16
      %v3560 = vrot.slane %v3558, 4
      %v3561 = vor.u32 %v3560, %v3556
      %v3562 = vrot.slane %v3561, 4
      %v3564 = vshll.u32 %v3246, 16
      %v3566 = vrot.slane %v3564, 5
      %v3567 = vsel %vm1069, %v3562, %v3566
      %v3569 = vshrl.u32 %v3247, 16
      %v3571 = vrot.slane %v3569, 4
      %v3572 = vshll.u32 %v3247, 16
      %v3574 = vrot.slane %v3572, 5
      %v3575 = vor.u32 %v3571, %v3574
      %v3576 = vrot.slane %v3575, 4
      %v3578 = vshll.u32 %v3248, 16
      %v3580 = vrot.slane %v3578, 5
      %v3581 = vsel %vm1069, %v3576, %v3580
      %v3582 = vshrl.u32 %v3248, 16
      %v3584 = vrot.slane %v3582, 4
      %v3585 = vor.u32 %v3584, %v3580
      %v3586 = vrot.slane %v3585, 4
      %v3588 = vshll.u32 %v3249, 16
      %v3590 = vrot.slane %v3588, 5
      %v3591 = vsel %vm1069, %v3586, %v3590
      %v3593 = vshrl.u32 %v3250, 16
      %v3595 = vrot.slane %v3593, 4
      %v3596 = vshll.u32 %v3250, 16
      %v3598 = vrot.slane %v3596, 5
      %v3599 = vor.u32 %v3595, %v3598
      %v3600 = vrot.slane %v3599, 4
      %v3602 = vshll.u32 %v3251, 16
      %v3604 = vrot.slane %v3602, 5
      %v3605 = vsel %vm1069, %v3600, %v3604
      %v3606 = vshrl.u32 %v3251, 16
      %v3608 = vrot.slane %v3606, 4
      %v3609 = vor.u32 %v3608, %v3604
      %v3610 = vrot.slane %v3609, 4
      %v3612 = vshll.u32 %v3252, 16
      %v3614 = vrot.slane %v3612, 5
      %v3615 = vsel %vm1069, %v3610, %v3614
      %v3617 = vshrl.u32 %v3253, 16
      %v3619 = vrot.slane %v3617, 4
      %v3620 = vshll.u32 %v3253, 16
      %v3622 = vrot.slane %v3620, 5
      %v3623 = vor.u32 %v3619, %v3622
      %v3624 = vrot.slane %v3623, 4
      %v3626 = vshll.u32 %v3254, 16
      %v3628 = vrot.slane %v3626, 5
      %v3629 = vsel %vm1069, %v3624, %v3628
      %v3630 = vshrl.u32 %v3254, 16
      %v3632 = vrot.slane %v3630, 4
      %v3633 = vor.u32 %v3632, %v3628
      %v3634 = vrot.slane %v3633, 4
      %v3636 = vshll.u32 %v3255, 16
      %v3638 = vrot.slane %v3636, 5
      %v3639 = vsel %vm1069, %v3634, %v3638
      %3640 = vrot.lane.b32.xlu0 %v3269, 28
      %v3641 = vpop.permute.xlu0 %3640
      %3642 = vrot.lane.b32.xlu0 %v3279, 28
      %v3643 = vpop.permute.xlu0 %3642
      %3644 = vrot.lane.b32.xlu0 %v3293, 28
      %v3645 = vpop.permute.xlu0 %3644
      %3646 = vrot.lane.b32.xlu0 %v3303, 28
      %v3647 = vpop.permute.xlu0 %3646
      %3648 = vrot.lane.b32.xlu0 %v3317, 28
      %v3649 = vpop.permute.xlu0 %3648
      %3650 = vrot.lane.b32.xlu0 %v3327, 28
      %v3651 = vpop.permute.xlu0 %3650
      %3652 = vrot.lane.b32.xlu0 %v3341, 28
      %v3653 = vpop.permute.xlu0 %3652
      %3654 = vrot.lane.b32.xlu0 %v3351, 28
      %v3655 = vpop.permute.xlu0 %3654
      %3656 = vrot.lane.b32.xlu0 %v3365, 28
      %v3657 = vpop.permute.xlu0 %3656
      %3658 = vrot.lane.b32.xlu0 %v3375, 28
      %v3659 = vpop.permute.xlu0 %3658
      %3660 = vrot.lane.b32.xlu0 %v3389, 28
      %v3661 = vpop.permute.xlu0 %3660
      %3662 = vrot.lane.b32.xlu0 %v3399, 28
      %v3663 = vpop.permute.xlu0 %3662
      %3664 = vrot.lane.b32.xlu0 %v3413, 28
      %v3665 = vpop.permute.xlu0 %3664
      %3666 = vrot.lane.b32.xlu0 %v3423, 28
      %v3667 = vpop.permute.xlu0 %3666
      %3668 = vrot.lane.b32.xlu0 %v3437, 28
      %v3669 = vpop.permute.xlu0 %3668
      %3670 = vrot.lane.b32.xlu0 %v3447, 28
      %v3671 = vpop.permute.xlu0 %3670
      %3672 = vrot.lane.b32.xlu0 %v3461, 28
      %v3673 = vpop.permute.xlu0 %3672
      %3674 = vrot.lane.b32.xlu0 %v3471, 28
      %v3675 = vpop.permute.xlu0 %3674
      %3676 = vrot.lane.b32.xlu0 %v3485, 28
      %v3677 = vpop.permute.xlu0 %3676
      %3678 = vrot.lane.b32.xlu0 %v3495, 28
      %v3679 = vpop.permute.xlu0 %3678
      %3680 = vrot.lane.b32.xlu0 %v3509, 28
      %v3681 = vpop.permute.xlu0 %3680
      %3682 = vrot.lane.b32.xlu0 %v3519, 28
      %v3683 = vpop.permute.xlu0 %3682
      %3684 = vrot.lane.b32.xlu0 %v3533, 28
      %v3685 = vpop.permute.xlu0 %3684
      %3686 = vrot.lane.b32.xlu0 %v3543, 28
      %v3687 = vpop.permute.xlu0 %3686
      %3688 = vrot.lane.b32.xlu0 %v3557, 28
      %v3689 = vpop.permute.xlu0 %3688
      %3690 = vrot.lane.b32.xlu0 %v3567, 28
      %v3691 = vpop.permute.xlu0 %3690
      %3692 = vrot.lane.b32.xlu0 %v3581, 28
      %v3693 = vpop.permute.xlu0 %3692
      %3694 = vrot.lane.b32.xlu0 %v3591, 28
      %v3695 = vpop.permute.xlu0 %3694
      %3696 = vrot.lane.b32.xlu0 %v3605, 28
      %v3697 = vpop.permute.xlu0 %3696
      %3698 = vrot.lane.b32.xlu0 %v3615, 28
      %v3699 = vpop.permute.xlu0 %3698
      %3700 = vrot.lane.b32.xlu0 %v3629, 28
      %v3701 = vpop.permute.xlu0 %3700
      %3702 = vrot.lane.b32.xlu0 %v3639, 28
      %v3703 = vpop.permute.xlu0 %3702
      %vm3736 = vcmask 257248
      %3737 = vst.msk [vmem:[#allocation3] sm:$0xf] %vm3736, %v3641
      %3738 = vst.msk [vmem:[#allocation3 + $0x4] sm:$0xf] %vm3736, %v3643
      %3739 = vst.msk [vmem:[#allocation3 + $0x8] sm:$0xf] %vm3736, %v3645
      %3740 = vst.msk [vmem:[#allocation3 + $0xc] sm:$0xf] %vm3736, %v3647
      %3741 = vst.msk [vmem:[#allocation3 + $0x10] sm:$0xf] %vm3736, %v3649
      %3742 = vst.msk [vmem:[#allocation3 + $0x14] sm:$0xf] %vm3736, %v3651
      %3743 = vst.msk [vmem:[#allocation3 + $0x18] sm:$0xf] %vm3736, %v3653
      %3744 = vst.msk [vmem:[#allocation3 + $0x1c] sm:$0xf] %vm3736, %v3655
      %3745 = vst.msk [vmem:[#allocation3 + $0x20] sm:$0xf] %vm3736, %v3657
      %3746 = vst.msk [vmem:[#allocation3 + $0x24] sm:$0xf] %vm3736, %v3659
      %3747 = vst.msk [vmem:[#allocation3 + $0x28] sm:$0xf] %vm3736, %v3661
      %3748 = vst.msk [vmem:[#allocation3 + $0x2c] sm:$0xf] %vm3736, %v3663
      %3749 = vst.msk [vmem:[#allocation3 + $0x30] sm:$0xf] %vm3736, %v3665
      %3750 = vst.msk [vmem:[#allocation3 + $0x34] sm:$0xf] %vm3736, %v3667
      %3751 = vst.msk [vmem:[#allocation3 + $0x38] sm:$0xf] %vm3736, %v3669
      %3752 = vst.msk [vmem:[#allocation3 + $0x3c] sm:$0xf] %vm3736, %v3671
      %3753 = vst.msk [vmem:[#allocation3 + $0x40] sm:$0xf] %vm3736, %v3673
      %3754 = vst.msk [vmem:[#allocation3 + $0x44] sm:$0xf] %vm3736, %v3675
      %3755 = vst.msk [vmem:[#allocation3 + $0x48] sm:$0xf] %vm3736, %v3677
      %3756 = vst.msk [vmem:[#allocation3 + $0x4c] sm:$0xf] %vm3736, %v3679
      %3757 = vst.msk [vmem:[#allocation3 + $0x50] sm:$0xf] %vm3736, %v3681
      %3758 = vst.msk [vmem:[#allocation3 + $0x54] sm:$0xf] %vm3736, %v3683
      %3759 = vst.msk [vmem:[#allocation3 + $0x58] sm:$0xf] %vm3736, %v3685
      %3760 = vst.msk [vmem:[#allocation3 + $0x5c] sm:$0xf] %vm3736, %v3687
      %3761 = vst.msk [vmem:[#allocation3 + $0x60] sm:$0xf] %vm3736, %v3689
      %3762 = vst.msk [vmem:[#allocation3 + $0x64] sm:$0xf] %vm3736, %v3691
      %3763 = vst.msk [vmem:[#allocation3 + $0x68] sm:$0xf] %vm3736, %v3693
      %3764 = vst.msk [vmem:[#allocation3 + $0x6c] sm:$0xf] %vm3736, %v3695
      %3765 = vst.msk [vmem:[#allocation3 + $0x70] sm:$0xf] %vm3736, %v3697
      %3766 = vst.msk [vmem:[#allocation3 + $0x74] sm:$0xf] %vm3736, %v3699
      %3767 = vst.msk [vmem:[#allocation3 + $0x78] sm:$0xf] %vm3736, %v3701
      %3768 = vst.msk [vmem:[#allocation3 + $0x7c] sm:$0xf] %vm3736, %v3703
      %v3769 = vld [vmem:[%s3014] sm:$0xe]
      %v3770 = vld [vmem:[%s3014 + $0x4] sm:$0xf]
      %v3771 = vld [vmem:[%s3014 + $0x8] sm:$0x1]
      %v3772 = vld [vmem:[%s3014 + $0xc] sm:$0xe]
      %v3773 = vld [vmem:[%s3014 + $0x10] sm:$0xf]
      %v3774 = vld [vmem:[%s3014 + $0x14] sm:$0x1]
      %v3775 = vld [vmem:[%s3014 + $0x18] sm:$0xe]
      %v3776 = vld [vmem:[%s3014 + $0x1c] sm:$0xf]
      %v3777 = vld [vmem:[%s3014 + $0x20] sm:$0x1]
      %v3778 = vld [vmem:[%s3014 + $0x24] sm:$0xe]
      %v3779 = vld [vmem:[%s3014 + $0x28] sm:$0xf]
      %v3780 = vld [vmem:[%s3014 + $0x2c] sm:$0x1]
      %v3781 = vld [vmem:[%s3014 + $0x30] sm:$0xe]
      %v3782 = vld [vmem:[%s3014 + $0x34] sm:$0xf]
      %v3783 = vld [vmem:[%s3014 + $0x38] sm:$0x1]
      %v3784 = vld [vmem:[%s3014 + $0x3c] sm:$0xe]
      %v3785 = vld [vmem:[%s3014 + $0x40] sm:$0xf]
      %v3786 = vld [vmem:[%s3014 + $0x44] sm:$0x1]
      %v3787 = vld [vmem:[%s3014 + $0x48] sm:$0xe]
      %v3788 = vld [vmem:[%s3014 + $0x4c] sm:$0xf]
      %v3789 = vld [vmem:[%s3014 + $0x50] sm:$0x1]
      %v3790 = vld [vmem:[%s3014 + $0x54] sm:$0xe]
      %v3791 = vld [vmem:[%s3014 + $0x58] sm:$0xf]
      %v3792 = vld [vmem:[%s3014 + $0x5c] sm:$0x1]
      %v3793 = vld [vmem:[%s3014 + $0x60] sm:$0xe]
      %v3794 = vld [vmem:[%s3014 + $0x64] sm:$0xf]
      %v3795 = vld [vmem:[%s3014 + $0x68] sm:$0x1]
      %v3796 = vld [vmem:[%s3014 + $0x6c] sm:$0xe]
      %v3797 = vld [vmem:[%s3014 + $0x70] sm:$0xf]
      %v3798 = vld [vmem:[%s3014 + $0x74] sm:$0x1]
      %v3799 = vld [vmem:[%s3014 + $0x78] sm:$0xe]
      %v3800 = vld [vmem:[%s3014 + $0x7c] sm:$0xf]
      %v3801 = vld [vmem:[%s3014 + $0x80] sm:$0x1]
      %v3802 = vld [vmem:[%s3014 + $0x84] sm:$0xe]
      %v3803 = vld [vmem:[%s3014 + $0x88] sm:$0xf]
      %v3804 = vld [vmem:[%s3014 + $0x8c] sm:$0x1]
      %v3805 = vld [vmem:[%s3014 + $0x90] sm:$0xe]
      %v3806 = vld [vmem:[%s3014 + $0x94] sm:$0xf]
      %v3807 = vld [vmem:[%s3014 + $0x98] sm:$0x1]
      %v3808 = vld [vmem:[%s3014 + $0x9c] sm:$0xe]
      %v3809 = vld [vmem:[%s3014 + $0xa0] sm:$0xf]
      %v3810 = vld [vmem:[%s3014 + $0xa4] sm:$0x1]
      %v3811 = vld [vmem:[%s3014 + $0xa8] sm:$0xe]
      %v3812 = vld [vmem:[%s3014 + $0xac] sm:$0xf]
      %v3813 = vld [vmem:[%s3014 + $0xb0] sm:$0x1]
      %v3814 = vld [vmem:[%s3014 + $0xb4] sm:$0xe]
      %v3815 = vld [vmem:[%s3014 + $0xb8] sm:$0xf]
      %v3816 = vld [vmem:[%s3014 + $0xbc] sm:$0x1]
      %v3865 = vrot.slane %v3769, 5
      %v3866 = vrot.slane %v3865, 4
      %v3867 = vrot.slane %v3770, 5
      %v3868 = vsel %vm1681, %v3866, %v3867
      %v3869 = vrot.slane %v3867, 4
      %v3870 = vrot.slane %v3771, 5
      %v3871 = vsel %vm1681, %v3869, %v3870
      %v3872 = vrot.slane %v3772, 5
      %v3873 = vrot.slane %v3872, 4
      %v3874 = vrot.slane %v3773, 5
      %v3875 = vsel %vm1681, %v3873, %v3874
      %v3876 = vrot.slane %v3874, 4
      %v3877 = vrot.slane %v3774, 5
      %v3878 = vsel %vm1681, %v3876, %v3877
      %v3879 = vrot.slane %v3775, 5
      %v3880 = vrot.slane %v3879, 4
      %v3881 = vrot.slane %v3776, 5
      %v3882 = vsel %vm1681, %v3880, %v3881
      %v3883 = vrot.slane %v3881, 4
      %v3884 = vrot.slane %v3777, 5
      %v3885 = vsel %vm1681, %v3883, %v3884
      %v3886 = vrot.slane %v3778, 5
      %v3887 = vrot.slane %v3886, 4
      %v3888 = vrot.slane %v3779, 5
      %v3889 = vsel %vm1681, %v3887, %v3888
      %v3890 = vrot.slane %v3888, 4
      %v3891 = vrot.slane %v3780, 5
      %v3892 = vsel %vm1681, %v3890, %v3891
      %v3893 = vrot.slane %v3781, 5
      %v3894 = vrot.slane %v3893, 4
      %v3895 = vrot.slane %v3782, 5
      %v3896 = vsel %vm1681, %v3894, %v3895
      %v3897 = vrot.slane %v3895, 4
      %v3898 = vrot.slane %v3783, 5
      %v3899 = vsel %vm1681, %v3897, %v3898
      %v3900 = vrot.slane %v3784, 5
      %v3901 = vrot.slane %v3900, 4
      %v3902 = vrot.slane %v3785, 5
      %v3903 = vsel %vm1681, %v3901, %v3902
      %v3904 = vrot.slane %v3902, 4
      %v3905 = vrot.slane %v3786, 5
      %v3906 = vsel %vm1681, %v3904, %v3905
      %v3907 = vrot.slane %v3787, 5
      %v3908 = vrot.slane %v3907, 4
      %v3909 = vrot.slane %v3788, 5
      %v3910 = vsel %vm1681, %v3908, %v3909
      %v3911 = vrot.slane %v3909, 4
      %v3912 = vrot.slane %v3789, 5
      %v3913 = vsel %vm1681, %v3911, %v3912
      %v3914 = vrot.slane %v3790, 5
      %v3915 = vrot.slane %v3914, 4
      %v3916 = vrot.slane %v3791, 5
      %v3917 = vsel %vm1681, %v3915, %v3916
      %v3918 = vrot.slane %v3916, 4
      %v3919 = vrot.slane %v3792, 5
      %v3920 = vsel %vm1681, %v3918, %v3919
      %v3921 = vrot.slane %v3793, 5
      %v3922 = vrot.slane %v3921, 4
      %v3923 = vrot.slane %v3794, 5
      %v3924 = vsel %vm1681, %v3922, %v3923
      %v3925 = vrot.slane %v3923, 4
      %v3926 = vrot.slane %v3795, 5
      %v3927 = vsel %vm1681, %v3925, %v3926
      %v3928 = vrot.slane %v3796, 5
      %v3929 = vrot.slane %v3928, 4
      %v3930 = vrot.slane %v3797, 5
      %v3931 = vsel %vm1681, %v3929, %v3930
      %v3932 = vrot.slane %v3930, 4
      %v3933 = vrot.slane %v3798, 5
      %v3934 = vsel %vm1681, %v3932, %v3933
      %v3935 = vrot.slane %v3799, 5
      %v3936 = vrot.slane %v3935, 4
      %v3937 = vrot.slane %v3800, 5
      %v3938 = vsel %vm1681, %v3936, %v3937
      %v3939 = vrot.slane %v3937, 4
      %v3940 = vrot.slane %v3801, 5
      %v3941 = vsel %vm1681, %v3939, %v3940
      %v3942 = vrot.slane %v3802, 5
      %v3943 = vrot.slane %v3942, 4
      %v3944 = vrot.slane %v3803, 5
      %v3945 = vsel %vm1681, %v3943, %v3944
      %v3946 = vrot.slane %v3944, 4
      %v3947 = vrot.slane %v3804, 5
      %v3948 = vsel %vm1681, %v3946, %v3947
      %v3949 = vrot.slane %v3805, 5
      %v3950 = vrot.slane %v3949, 4
      %v3951 = vrot.slane %v3806, 5
      %v3952 = vsel %vm1681, %v3950, %v3951
      %v3953 = vrot.slane %v3951, 4
      %v3954 = vrot.slane %v3807, 5
      %v3955 = vsel %vm1681, %v3953, %v3954
      %v3956 = vrot.slane %v3808, 5
      %v3957 = vrot.slane %v3956, 4
      %v3958 = vrot.slane %v3809, 5
      %v3959 = vsel %vm1681, %v3957, %v3958
      %v3960 = vrot.slane %v3958, 4
      %v3961 = vrot.slane %v3810, 5
      %v3962 = vsel %vm1681, %v3960, %v3961
      %v3963 = vrot.slane %v3811, 5
      %v3964 = vrot.slane %v3963, 4
      %v3965 = vrot.slane %v3812, 5
      %v3966 = vsel %vm1681, %v3964, %v3965
      %v3967 = vrot.slane %v3965, 4
      %v3968 = vrot.slane %v3813, 5
      %v3969 = vsel %vm1681, %v3967, %v3968
      %v3970 = vrot.slane %v3814, 5
      %v3971 = vrot.slane %v3970, 4
      %v3972 = vrot.slane %v3815, 5
      %v3973 = vsel %vm1681, %v3971, %v3972
      %v3974 = vrot.slane %v3972, 4
      %v3975 = vrot.slane %v3816, 5
      %v3976 = vsel %vm1681, %v3974, %v3975
      %3977 = vrot.lane.b32.xlu0 %v3868, 32
      %v3978 = vpop.permute.xlu0 %3977
      %3979 = vrot.lane.b32.xlu0 %v3871, 32
      %v3980 = vpop.permute.xlu0 %3979
      %3981 = vrot.lane.b32.xlu0 %v3875, 32
      %v3982 = vpop.permute.xlu0 %3981
      %3983 = vrot.lane.b32.xlu0 %v3878, 32
      %v3984 = vpop.permute.xlu0 %3983
      %3985 = vrot.lane.b32.xlu0 %v3882, 32
      %v3986 = vpop.permute.xlu0 %3985
      %3987 = vrot.lane.b32.xlu0 %v3885, 32
      %v3988 = vpop.permute.xlu0 %3987
      %3989 = vrot.lane.b32.xlu0 %v3889, 32
      %v3990 = vpop.permute.xlu0 %3989
      %3991 = vrot.lane.b32.xlu0 %v3892, 32
      %v3992 = vpop.permute.xlu0 %3991
      %3993 = vrot.lane.b32.xlu0 %v3896, 32
      %v3994 = vpop.permute.xlu0 %3993
      %3995 = vrot.lane.b32.xlu0 %v3899, 32
      %v3996 = vpop.permute.xlu0 %3995
      %3997 = vrot.lane.b32.xlu0 %v3903, 32
      %v3998 = vpop.permute.xlu0 %3997
      %3999 = vrot.lane.b32.xlu0 %v3906, 32
      %v4000 = vpop.permute.xlu0 %3999
      %4001 = vrot.lane.b32.xlu0 %v3910, 32
      %v4002 = vpop.permute.xlu0 %4001
      %4003 = vrot.lane.b32.xlu0 %v3913, 32
      %v4004 = vpop.permute.xlu0 %4003
      %4005 = vrot.lane.b32.xlu0 %v3917, 32
      %v4006 = vpop.permute.xlu0 %4005
      %4007 = vrot.lane.b32.xlu0 %v3920, 32
      %v4008 = vpop.permute.xlu0 %4007
      %4009 = vrot.lane.b32.xlu0 %v3924, 32
      %v4010 = vpop.permute.xlu0 %4009
      %4011 = vrot.lane.b32.xlu0 %v3927, 32
      %v4012 = vpop.permute.xlu0 %4011
      %4013 = vrot.lane.b32.xlu0 %v3931, 32
      %v4014 = vpop.permute.xlu0 %4013
      %4015 = vrot.lane.b32.xlu0 %v3934, 32
      %v4016 = vpop.permute.xlu0 %4015
      %4017 = vrot.lane.b32.xlu0 %v3938, 32
      %v4018 = vpop.permute.xlu0 %4017
      %4019 = vrot.lane.b32.xlu0 %v3941, 32
      %v4020 = vpop.permute.xlu0 %4019
      %4021 = vrot.lane.b32.xlu0 %v3945, 32
      %v4022 = vpop.permute.xlu0 %4021
      %4023 = vrot.lane.b32.xlu0 %v3948, 32
      %v4024 = vpop.permute.xlu0 %4023
      %4025 = vrot.lane.b32.xlu0 %v3952, 32
      %v4026 = vpop.permute.xlu0 %4025
      %4027 = vrot.lane.b32.xlu0 %v3955, 32
      %v4028 = vpop.permute.xlu0 %4027
      %4029 = vrot.lane.b32.xlu0 %v3959, 32
      %v4030 = vpop.permute.xlu0 %4029
      %4031 = vrot.lane.b32.xlu0 %v3962, 32
      %v4032 = vpop.permute.xlu0 %4031
      %4033 = vrot.lane.b32.xlu0 %v3966, 32
      %v4034 = vpop.permute.xlu0 %4033
      %4035 = vrot.lane.b32.xlu0 %v3969, 32
      %v4036 = vpop.permute.xlu0 %4035
      %4037 = vrot.lane.b32.xlu0 %v3973, 32
      %v4038 = vpop.permute.xlu0 %4037
      %4039 = vrot.lane.b32.xlu0 %v3976, 32
      %v4040 = vpop.permute.xlu0 %4039
      %vm4073 = vcmask 290048
      %4074 = vst.msk [vmem:[#allocation3] sm:$0xf] %vm4073, %v3978
      %4075 = vst.msk [vmem:[#allocation3 + $0x4] sm:$0xf] %vm4073, %v3980
      %4076 = vst.msk [vmem:[#allocation3 + $0x8] sm:$0xf] %vm4073, %v3982
      %4077 = vst.msk [vmem:[#allocation3 + $0xc] sm:$0xf] %vm4073, %v3984
      %4078 = vst.msk [vmem:[#allocation3 + $0x10] sm:$0xf] %vm4073, %v3986
      %4079 = vst.msk [vmem:[#allocation3 + $0x14] sm:$0xf] %vm4073, %v3988
      %4080 = vst.msk [vmem:[#allocation3 + $0x18] sm:$0xf] %vm4073, %v3990
      %4081 = vst.msk [vmem:[#allocation3 + $0x1c] sm:$0xf] %vm4073, %v3992
      %4082 = vst.msk [vmem:[#allocation3 + $0x20] sm:$0xf] %vm4073, %v3994
      %4083 = vst.msk [vmem:[#allocation3 + $0x24] sm:$0xf] %vm4073, %v3996
      %4084 = vst.msk [vmem:[#allocation3 + $0x28] sm:$0xf] %vm4073, %v3998
      %4085 = vst.msk [vmem:[#allocation3 + $0x2c] sm:$0xf] %vm4073, %v4000
      %4086 = vst.msk [vmem:[#allocation3 + $0x30] sm:$0xf] %vm4073, %v4002
      %4087 = vst.msk [vmem:[#allocation3 + $0x34] sm:$0xf] %vm4073, %v4004
      %4088 = vst.msk [vmem:[#allocation3 + $0x38] sm:$0xf] %vm4073, %v4006
      %4089 = vst.msk [vmem:[#allocation3 + $0x3c] sm:$0xf] %vm4073, %v4008
      %4090 = vst.msk [vmem:[#allocation3 + $0x40] sm:$0xf] %vm4073, %v4010
      %4091 = vst.msk [vmem:[#allocation3 + $0x44] sm:$0xf] %vm4073, %v4012
      %4092 = vst.msk [vmem:[#allocation3 + $0x48] sm:$0xf] %vm4073, %v4014
      %4093 = vst.msk [vmem:[#allocation3 + $0x4c] sm:$0xf] %vm4073, %v4016
      %4094 = vst.msk [vmem:[#allocation3 + $0x50] sm:$0xf] %vm4073, %v4018
      %4095 = vst.msk [vmem:[#allocation3 + $0x54] sm:$0xf] %vm4073, %v4020
      %4096 = vst.msk [vmem:[#allocation3 + $0x58] sm:$0xf] %vm4073, %v4022
      %4097 = vst.msk [vmem:[#allocation3 + $0x5c] sm:$0xf] %vm4073, %v4024
      %4098 = vst.msk [vmem:[#allocation3 + $0x60] sm:$0xf] %vm4073, %v4026
      %4099 = vst.msk [vmem:[#allocation3 + $0x64] sm:$0xf] %vm4073, %v4028
      %4100 = vst.msk [vmem:[#allocation3 + $0x68] sm:$0xf] %vm4073, %v4030
      %4101 = vst.msk [vmem:[#allocation3 + $0x6c] sm:$0xf] %vm4073, %v4032
      %4102 = vst.msk [vmem:[#allocation3 + $0x70] sm:$0xf] %vm4073, %v4034
      %4103 = vst.msk [vmem:[#allocation3 + $0x74] sm:$0xf] %vm4073, %v4036
      %4104 = vst.msk [vmem:[#allocation3 + $0x78] sm:$0xf] %vm4073, %v4038
      %4105 = vst.msk [vmem:[#allocation3 + $0x7c] sm:$0xf] %vm4073, %v4040
      %v4106 = vld [vmem:[#allocation3] sm:$0xf]
      %v4107 = vld [vmem:[#allocation3 + $0x4] sm:$0xf]
      %v4108 = vld [vmem:[#allocation3 + $0x8] sm:$0xf]
      %v4109 = vld [vmem:[#allocation3 + $0xc] sm:$0xf]
      %v4110 = vld [vmem:[#allocation3 + $0x10] sm:$0xf]
      %v4111 = vld [vmem:[#allocation3 + $0x14] sm:$0xf]
      %v4112 = vld [vmem:[#allocation3 + $0x18] sm:$0xf]
      %v4113 = vld [vmem:[#allocation3 + $0x1c] sm:$0xf]
      %v4114 = vld [vmem:[#allocation3 + $0x20] sm:$0xf]
      %v4115 = vld [vmem:[#allocation3 + $0x24] sm:$0xf]
      %v4116 = vld [vmem:[#allocation3 + $0x28] sm:$0xf]
      %v4117 = vld [vmem:[#allocation3 + $0x2c] sm:$0xf]
      %v4118 = vld [vmem:[#allocation3 + $0x30] sm:$0xf]
      %v4119 = vld [vmem:[#allocation3 + $0x34] sm:$0xf]
      %v4120 = vld [vmem:[#allocation3 + $0x38] sm:$0xf]
      %v4121 = vld [vmem:[#allocation3 + $0x3c] sm:$0xf]
      %v4122 = vld [vmem:[#allocation3 + $0x40] sm:$0xf]
      %v4123 = vld [vmem:[#allocation3 + $0x44] sm:$0xf]
      %v4124 = vld [vmem:[#allocation3 + $0x48] sm:$0xf]
      %v4125 = vld [vmem:[#allocation3 + $0x4c] sm:$0xf]
      %v4126 = vld [vmem:[#allocation3 + $0x50] sm:$0xf]
      %v4127 = vld [vmem:[#allocation3 + $0x54] sm:$0xf]
      %v4128 = vld [vmem:[#allocation3 + $0x58] sm:$0xf]
      %v4129 = vld [vmem:[#allocation3 + $0x5c] sm:$0xf]
      %v4130 = vld [vmem:[#allocation3 + $0x60] sm:$0xf]
      %v4131 = vld [vmem:[#allocation3 + $0x64] sm:$0xf]
      %v4132 = vld [vmem:[#allocation3 + $0x68] sm:$0xf]
      %v4133 = vld [vmem:[#allocation3 + $0x6c] sm:$0xf]
      %v4134 = vld [vmem:[#allocation3 + $0x70] sm:$0xf]
      %v4135 = vld [vmem:[#allocation3 + $0x74] sm:$0xf]
      %v4136 = vld [vmem:[#allocation3 + $0x78] sm:$0xf]
      %v4137 = vld [vmem:[#allocation3 + $0x7c] sm:$0xf]
      %v4138 = vld [vmem:[%s1] sm:$0xf]
      %v4139 = vld [vmem:[%s1 + $0x4] sm:$0xf]
      %v4140 = vld [vmem:[%s1 + $0x8] sm:$0xf]
      %v4141 = vld [vmem:[%s1 + $0xc] sm:$0xf]
      %v4142 = vld [vmem:[%s1 + $0x10] sm:$0x3]
      %v4175 = vunpack.c.l.b16 %v4106
      %v4176 = vunpack.c.l.b16 %v4107
      %v4177 = vunpack.c.l.b16 %v4108
      %v4178 = vunpack.c.l.b16 %v4109
      %v4179 = vunpack.c.l.b16 %v4110
      %v4180 = vunpack.c.l.b16 %v4111
      %v4181 = vunpack.c.l.b16 %v4112
      %v4182 = vunpack.c.l.b16 %v4113
      %v4183 = vunpack.c.l.b16 %v4114
      %v4184 = vunpack.c.l.b16 %v4115
      %v4185 = vunpack.c.l.b16 %v4116
      %v4186 = vunpack.c.l.b16 %v4117
      %v4187 = vunpack.c.l.b16 %v4118
      %v4188 = vunpack.c.l.b16 %v4119
      %v4189 = vunpack.c.l.b16 %v4120
      %v4190 = vunpack.c.l.b16 %v4121
      %v4191 = vunpack.c.l.b16 %v4122
      %v4192 = vunpack.c.l.b16 %v4123
      %v4193 = vunpack.c.l.b16 %v4124
      %v4194 = vunpack.c.l.b16 %v4125
      %v4195 = vunpack.c.l.b16 %v4126
      %v4196 = vunpack.c.l.b16 %v4127
      %v4197 = vunpack.c.l.b16 %v4128
      %v4198 = vunpack.c.l.b16 %v4129
      %v4199 = vunpack.c.l.b16 %v4130
      %v4200 = vunpack.c.l.b16 %v4131
      %v4201 = vunpack.c.l.b16 %v4132
      %v4202 = vunpack.c.l.b16 %v4133
      %v4203 = vunpack.c.l.b16 %v4134
      %v4204 = vunpack.c.l.b16 %v4135
      %v4205 = vunpack.c.l.b16 %v4136
      %v4206 = vunpack.c.l.b16 %v4137
      %v4207 = vpack.c.b16 %v4176, %v4175
      %v4208 = vpack.c.b16 %v4178, %v4177
      %v4209 = vpack.c.b16 %v4180, %v4179
      %v4210 = vpack.c.b16 %v4182, %v4181
      %v4211 = vpack.c.b16 %v4184, %v4183
      %v4212 = vpack.c.b16 %v4186, %v4185
      %v4213 = vpack.c.b16 %v4188, %v4187
      %v4214 = vpack.c.b16 %v4190, %v4189
      %v4215 = vpack.c.b16 %v4192, %v4191
      %v4216 = vpack.c.b16 %v4194, %v4193
      %v4217 = vpack.c.b16 %v4196, %v4195
      %v4218 = vpack.c.b16 %v4198, %v4197
      %v4219 = vpack.c.b16 %v4200, %v4199
      %v4220 = vpack.c.b16 %v4202, %v4201
      %v4221 = vpack.c.b16 %v4204, %v4203
      %v4222 = vpack.c.b16 %v4206, %v4205
      %v4228 = vunpack.c.l.b16 %v4138
      %v4229 = vunpack.c.l.b16 %v4139
      %v4230 = vunpack.c.l.b16 %v4140
      %v4231 = vunpack.c.l.b16 %v4141
      %v4232 = vunpack.c.l.b16 %v4142
      %v4233 = vpack.c.b16 %v4229, %v4228
      %v4234 = vpack.c.b16 %v4231, %v4230
      %v4235 = vpack.c.b16 %v4232, %v4232
      %vm4238 = vcmask 293888
      %v4240 = vsel %vm4238, %v4207, 0
      %v4243 = vsel %vm4238, %v4208, 0
      %v4246 = vsel %vm4238, %v4209, 0
      %v4249 = vsel %vm4238, %v4210, 0
      %v4252 = vsel %vm4238, %v4211, 0
      %v4255 = vsel %vm4238, %v4212, 0
      %v4258 = vsel %vm4238, %v4213, 0
      %v4261 = vsel %vm4238, %v4214, 0
      %v4264 = vsel %vm4238, %v4215, 0
      %v4267 = vsel %vm4238, %v4216, 0
      %v4270 = vsel %vm4238, %v4217, 0
      %v4273 = vsel %vm4238, %v4218, 0
      %v4276 = vsel %vm4238, %v4219, 0
      %v4279 = vsel %vm4238, %v4220, 0
      %v4282 = vsel %vm4238, %v4221, 0
      %v4285 = vsel %vm4238, %v4222, 0
      %vm4287 = vcmask 1041408
      %v4289 = vsel %vm4287, %v4235, 0
      %4291 = vmatprep.subr.bf16.mxu0 0
      %4292 = vmatpush1.bf16.msra.mxu0 0
      %4293 = vmatprep.subr.bf16.mxu0 0
      %4294 = vmatpush1.bf16.msra.mxu0 0
      %4295 = vmatprep.subr.bf16.mxu0 0
      %4296 = vmatpush1.bf16.msra.mxu0 0
      %4297 = vmatprep.subr.bf16.mxu0 0
      %4298 = vmatpush1.bf16.msra.mxu0 0
      %4299 = vmatprep.subr.bf16.mxu0 0
      %4300 = vmatpush1.bf16.msra.mxu0 0
      %4301 = vmatprep.subr.bf16.mxu0 0
      %4302 = vmatpush1.bf16.msra.mxu0 %v4289
      %4303 = vmatprep.subr.bf16.mxu0 0
      %4304 = vmatpush1.bf16.msra.mxu0 %v4234
      %4305 = vmatprep.subr.bf16.mxu0 0
      %4306 = vmatpush1.bf16.msra.mxu0 %v4233
      %4307 = vmatprep.subr.bf16.mxu0 0
      %4308 = vmatpush2.bf16.msra.mxu0 0
      %4309 = vmatprep.subr.bf16.mxu0 0
      %4310 = vmatpush2.bf16.msra.mxu0 0
      %4311 = vmatprep.subr.bf16.mxu0 0
      %4312 = vmatpush2.bf16.msra.mxu0 0
      %4313 = vmatprep.subr.bf16.mxu0 0
      %4314 = vmatpush2.bf16.msra.mxu0 0
      %4315 = vmatprep.subr.bf16.mxu0 0
      %4316 = vmatpush2.bf16.msra.mxu0 0
      %4317 = vmatprep.subr.bf16.mxu0 0
      %4318 = vmatpush2.bf16.msra.mxu0 0
      %4319 = vmatprep.subr.bf16.mxu0 0
      %4320 = vmatpush2.bf16.msra.mxu0 0
      %4321 = vmatprep.subr.bf16.mxu0 0
      %4322 = vmatpush2.bf16.msra.mxu0 0
      %4323 = vmatprep.mubr.bf16.mxu0 0
      %4324 = vmatmul.mubr.bf16.gmra.mxu0 %v4240
      %v4325 = vpop.f32.mrf.mxu0
      %v4326 = vadd.f32 0.0, %v4325
      %v4327 = vpop.f32.mrf.mxu0
      %v4328 = vpop.f32.mrf.mxu0
      %v4329 = vadd.f32 0.0, %v4328
      %v4330 = vpop.f32.mrf.mxu0
      %4331 = vmatprep.mubr.bf16.mxu0 0
      %4332 = vmatmul.mubr.bf16.gmra.mxu0 %v4243
      %v4333 = vpop.f32.mrf.mxu0
      %v4334 = vadd.f32 0.0, %v4333
      %v4335 = vpop.f32.mrf.mxu0
      %v4336 = vpop.f32.mrf.mxu0
      %v4337 = vadd.f32 0.0, %v4336
      %v4338 = vpop.f32.mrf.mxu0
      %4339 = vmatprep.mubr.bf16.mxu0 0
      %4340 = vmatmul.mubr.bf16.gmra.mxu0 %v4246
      %v4341 = vpop.f32.mrf.mxu0
      %v4342 = vadd.f32 0.0, %v4341
      %v4343 = vpop.f32.mrf.mxu0
      %v4344 = vpop.f32.mrf.mxu0
      %v4345 = vadd.f32 0.0, %v4344
      %v4346 = vpop.f32.mrf.mxu0
      %4347 = vmatprep.mubr.bf16.mxu0 0
      %4348 = vmatmul.mubr.bf16.gmra.mxu0 %v4249
      %v4349 = vpop.f32.mrf.mxu0
      %v4350 = vadd.f32 0.0, %v4349
      %v4351 = vpop.f32.mrf.mxu0
      %v4352 = vpop.f32.mrf.mxu0
      %v4353 = vadd.f32 0.0, %v4352
      %v4354 = vpop.f32.mrf.mxu0
      %4355 = vmatprep.mubr.bf16.mxu0 0
      %4356 = vmatmul.mubr.bf16.gmra.mxu0 %v4252
      %v4357 = vpop.f32.mrf.mxu0
      %v4358 = vadd.f32 0.0, %v4357
      %v4359 = vpop.f32.mrf.mxu0
      %v4360 = vpop.f32.mrf.mxu0
      %v4361 = vadd.f32 0.0, %v4360
      %v4362 = vpop.f32.mrf.mxu0
      %4363 = vmatprep.mubr.bf16.mxu0 0
      %4364 = vmatmul.mubr.bf16.gmra.mxu0 %v4255
      %v4365 = vpop.f32.mrf.mxu0
      %v4366 = vadd.f32 0.0, %v4365
      %v4367 = vpop.f32.mrf.mxu0
      %v4368 = vpop.f32.mrf.mxu0
      %v4369 = vadd.f32 0.0, %v4368
      %v4370 = vpop.f32.mrf.mxu0
      %4371 = vmatprep.mubr.bf16.mxu0 0
      %4372 = vmatmul.mubr.bf16.gmra.mxu0 %v4258
      %v4373 = vpop.f32.mrf.mxu0
      %v4374 = vadd.f32 0.0, %v4373
      %v4375 = vpop.f32.mrf.mxu0
      %v4376 = vpop.f32.mrf.mxu0
      %v4377 = vadd.f32 0.0, %v4376
      %v4378 = vpop.f32.mrf.mxu0
      %4379 = vmatprep.mubr.bf16.mxu0 0
      %4380 = vmatmul.mubr.bf16.gmra.mxu0 %v4261
      %v4381 = vpop.f32.mrf.mxu0
      %v4382 = vadd.f32 0.0, %v4381
      %v4383 = vpop.f32.mrf.mxu0
      %v4384 = vpop.f32.mrf.mxu0
      %v4385 = vadd.f32 0.0, %v4384
      %v4386 = vpop.f32.mrf.mxu0
      %4387 = vmatprep.mubr.bf16.mxu0 0
      %4388 = vmatmul.mubr.bf16.gmra.mxu0 %v4264
      %v4389 = vpop.f32.mrf.mxu0
      %v4390 = vadd.f32 0.0, %v4389
      %v4391 = vpop.f32.mrf.mxu0
      %v4392 = vpop.f32.mrf.mxu0
      %v4393 = vadd.f32 0.0, %v4392
      %v4394 = vpop.f32.mrf.mxu0
      %4395 = vmatprep.mubr.bf16.mxu0 0
      %4396 = vmatmul.mubr.bf16.gmra.mxu0 %v4267
      %v4397 = vpop.f32.mrf.mxu0
      %v4398 = vadd.f32 0.0, %v4397
      %v4399 = vpop.f32.mrf.mxu0
      %v4400 = vpop.f32.mrf.mxu0
      %v4401 = vadd.f32 0.0, %v4400
      %v4402 = vpop.f32.mrf.mxu0
      %4403 = vmatprep.mubr.bf16.mxu0 0
      %4404 = vmatmul.mubr.bf16.gmra.mxu0 %v4270
      %v4405 = vpop.f32.mrf.mxu0
      %v4406 = vadd.f32 0.0, %v4405
      %v4407 = vpop.f32.mrf.mxu0
      %v4408 = vpop.f32.mrf.mxu0
      %v4409 = vadd.f32 0.0, %v4408
      %v4410 = vpop.f32.mrf.mxu0
      %4411 = vmatprep.mubr.bf16.mxu0 0
      %4412 = vmatmul.mubr.bf16.gmra.mxu0 %v4273
      %v4413 = vpop.f32.mrf.mxu0
      %v4414 = vadd.f32 0.0, %v4413
      %v4415 = vpop.f32.mrf.mxu0
      %v4416 = vpop.f32.mrf.mxu0
      %v4417 = vadd.f32 0.0, %v4416
      %v4418 = vpop.f32.mrf.mxu0
      %4419 = vmatprep.mubr.bf16.mxu0 0
      %4420 = vmatmul.mubr.bf16.gmra.mxu0 %v4276
      %v4421 = vpop.f32.mrf.mxu0
      %v4422 = vadd.f32 0.0, %v4421
      %v4423 = vpop.f32.mrf.mxu0
      %v4424 = vpop.f32.mrf.mxu0
      %v4425 = vadd.f32 0.0, %v4424
      %v4426 = vpop.f32.mrf.mxu0
      %4427 = vmatprep.mubr.bf16.mxu0 0
      %4428 = vmatmul.mubr.bf16.gmra.mxu0 %v4279
      %v4429 = vpop.f32.mrf.mxu0
      %v4430 = vadd.f32 0.0, %v4429
      %v4431 = vpop.f32.mrf.mxu0
      %v4432 = vpop.f32.mrf.mxu0
      %v4433 = vadd.f32 0.0, %v4432
      %v4434 = vpop.f32.mrf.mxu0
      %4435 = vmatprep.mubr.bf16.mxu0 0
      %4436 = vmatmul.mubr.bf16.gmra.mxu0 %v4282
      %v4437 = vpop.f32.mrf.mxu0
      %v4438 = vadd.f32 0.0, %v4437
      %v4439 = vpop.f32.mrf.mxu0
      %v4440 = vpop.f32.mrf.mxu0
      %v4441 = vadd.f32 0.0, %v4440
      %v4442 = vpop.f32.mrf.mxu0
      %4443 = vmatprep.mubr.bf16.mxu0 0
      %4444 = vmatmul.mubr.bf16.gmra.mxu0 %v4285
      %v4445 = vpop.f32.mrf.mxu0
      %v4446 = vadd.f32 0.0, %v4445
      %v4447 = vpop.f32.mrf.mxu0
      %v4448 = vpop.f32.mrf.mxu0
      %v4449 = vadd.f32 0.0, %v4448
      %v4450 = vpop.f32.mrf.mxu0
      %4451 = vdwg.mxu0
      %vm4452 = vcmask 31744
      %v4453 = vsel %vm4452, %v4326, 0.0
      %v4454 = vsel %vm4452, %v4329, 0.0
      %v4455 = vadd.f32 %v4453, %v4454
      %v4456 = vsel %vm4452, %v4334, 0.0
      %v4457 = vadd.f32 %v4455, %v4456
      %v4458 = vsel %vm4452, %v4337, 0.0
      %v4459 = vadd.f32 %v4457, %v4458
      %v4460 = vsel %vm4452, %v4342, 0.0
      %v4461 = vadd.f32 %v4459, %v4460
      %v4462 = vsel %vm4452, %v4345, 0.0
      %v4463 = vadd.f32 %v4461, %v4462
      %v4464 = vsel %vm4452, %v4350, 0.0
      %v4465 = vadd.f32 %v4463, %v4464
      %v4466 = vsel %vm4452, %v4353, 0.0
      %v4467 = vadd.f32 %v4465, %v4466
      %v4468 = vsel %vm4452, %v4358, 0.0
      %v4469 = vadd.f32 %v4467, %v4468
      %v4470 = vsel %vm4452, %v4361, 0.0
      %v4471 = vadd.f32 %v4469, %v4470
      %v4472 = vsel %vm4452, %v4366, 0.0
      %v4473 = vadd.f32 %v4471, %v4472
      %v4474 = vsel %vm4452, %v4369, 0.0
      %v4475 = vadd.f32 %v4473, %v4474
      %v4476 = vsel %vm4452, %v4374, 0.0
      %v4477 = vadd.f32 %v4475, %v4476
      %v4478 = vsel %vm4452, %v4377, 0.0
      %v4479 = vadd.f32 %v4477, %v4478
      %v4480 = vsel %vm4452, %v4382, 0.0
      %v4481 = vadd.f32 %v4479, %v4480
      %v4482 = vsel %vm4452, %v4385, 0.0
      %v4483 = vadd.f32 %v4481, %v4482
      %v4484 = vsel %vm4452, %v4390, 0.0
      %v4485 = vadd.f32 %v4483, %v4484
      %v4486 = vsel %vm4452, %v4393, 0.0
      %v4487 = vadd.f32 %v4485, %v4486
      %v4488 = vsel %vm4452, %v4398, 0.0
      %v4489 = vadd.f32 %v4487, %v4488
      %v4490 = vsel %vm4452, %v4401, 0.0
      %v4491 = vadd.f32 %v4489, %v4490
      %v4492 = vsel %vm4452, %v4406, 0.0
      %v4493 = vadd.f32 %v4491, %v4492
      %v4494 = vsel %vm4452, %v4409, 0.0
      %v4495 = vadd.f32 %v4493, %v4494
      %v4496 = vsel %vm4452, %v4414, 0.0
      %v4497 = vadd.f32 %v4495, %v4496
      %v4498 = vsel %vm4452, %v4417, 0.0
      %v4499 = vadd.f32 %v4497, %v4498
      %v4500 = vsel %vm4452, %v4422, 0.0
      %v4501 = vadd.f32 %v4499, %v4500
      %v4502 = vsel %vm4452, %v4425, 0.0
      %v4503 = vadd.f32 %v4501, %v4502
      %v4504 = vsel %vm4452, %v4430, 0.0
      %v4505 = vadd.f32 %v4503, %v4504
      %v4506 = vsel %vm4452, %v4433, 0.0
      %v4507 = vadd.f32 %v4505, %v4506
      %v4508 = vsel %vm4452, %v4438, 0.0
      %v4509 = vadd.f32 %v4507, %v4508
      %v4510 = vsel %vm4452, %v4441, 0.0
      %v4511 = vadd.f32 %v4509, %v4510
      %v4512 = vsel %vm4452, %v4446, 0.0
      %v4513 = vadd.f32 %v4511, %v4512
      %v4514 = vsel %vm4452, %v4449, 0.0
      %v4515 = vadd.f32 %v4513, %v4514
      %v4516 = vrot.slane %v4515, 4
      %v4517 = vadd.f32 %v4515, %v4516
      %v4518 = vrot.slane %v4517, 2
      %v4519 = vadd.f32 %v4517, %v4518
      %v4520 = vrot.slane %v4519, 1
      %v4521 = vadd.f32 %v4519, %v4520
      %v4522 = vmul.f32 %v4326, %v4326
      %v4523 = vmul.f32 %v4329, %v4329
      %v4524 = vmul.f32 %v4334, %v4334
      %v4525 = vmul.f32 %v4337, %v4337
      %v4526 = vmul.f32 %v4342, %v4342
      %v4527 = vmul.f32 %v4345, %v4345
      %v4528 = vmul.f32 %v4350, %v4350
      %v4529 = vmul.f32 %v4353, %v4353
      %v4530 = vmul.f32 %v4358, %v4358
      %v4531 = vmul.f32 %v4361, %v4361
      %v4532 = vmul.f32 %v4366, %v4366
      %v4533 = vmul.f32 %v4369, %v4369
      %v4534 = vmul.f32 %v4374, %v4374
      %v4535 = vmul.f32 %v4377, %v4377
      %v4536 = vmul.f32 %v4382, %v4382
      %v4537 = vmul.f32 %v4385, %v4385
      %v4538 = vmul.f32 %v4390, %v4390
      %v4539 = vmul.f32 %v4393, %v4393
      %v4540 = vmul.f32 %v4398, %v4398
      %v4541 = vmul.f32 %v4401, %v4401
      %v4542 = vmul.f32 %v4406, %v4406
      %v4543 = vmul.f32 %v4409, %v4409
      %v4544 = vmul.f32 %v4414, %v4414
      %v4545 = vmul.f32 %v4417, %v4417
      %v4546 = vmul.f32 %v4422, %v4422
      %v4547 = vmul.f32 %v4425, %v4425
      %v4548 = vmul.f32 %v4430, %v4430
      %v4549 = vmul.f32 %v4433, %v4433
      %v4550 = vmul.f32 %v4438, %v4438
      %v4551 = vmul.f32 %v4441, %v4441
      %v4552 = vmul.f32 %v4446, %v4446
      %v4553 = vmul.f32 %v4449, %v4449
      %v4554 = vsel %vm4452, %v4522, 0.0
      %v4555 = vsel %vm4452, %v4523, 0.0
      %v4556 = vadd.f32 %v4554, %v4555
      %v4557 = vsel %vm4452, %v4524, 0.0
      %v4558 = vadd.f32 %v4556, %v4557
      %v4559 = vsel %vm4452, %v4525, 0.0
      %v4560 = vadd.f32 %v4558, %v4559
      %v4561 = vsel %vm4452, %v4526, 0.0
      %v4562 = vadd.f32 %v4560, %v4561
      %v4563 = vsel %vm4452, %v4527, 0.0
      %v4564 = vadd.f32 %v4562, %v4563
      %v4565 = vsel %vm4452, %v4528, 0.0
      %v4566 = vadd.f32 %v4564, %v4565
      %v4567 = vsel %vm4452, %v4529, 0.0
      %v4568 = vadd.f32 %v4566, %v4567
      %v4569 = vsel %vm4452, %v4530, 0.0
      %v4570 = vadd.f32 %v4568, %v4569
      %v4571 = vsel %vm4452, %v4531, 0.0
      %v4572 = vadd.f32 %v4570, %v4571
      %v4573 = vsel %vm4452, %v4532, 0.0
      %v4574 = vadd.f32 %v4572, %v4573
      %v4575 = vsel %vm4452, %v4533, 0.0
      %v4576 = vadd.f32 %v4574, %v4575
      %v4577 = vsel %vm4452, %v4534, 0.0
      %v4578 = vadd.f32 %v4576, %v4577
      %v4579 = vsel %vm4452, %v4535, 0.0
      %v4580 = vadd.f32 %v4578, %v4579
      %v4581 = vsel %vm4452, %v4536, 0.0
      %v4582 = vadd.f32 %v4580, %v4581
      %v4583 = vsel %vm4452, %v4537, 0.0
      %v4584 = vadd.f32 %v4582, %v4583
      %v4585 = vsel %vm4452, %v4538, 0.0
      %v4586 = vadd.f32 %v4584, %v4585
      %v4587 = vsel %vm4452, %v4539, 0.0
      %v4588 = vadd.f32 %v4586, %v4587
      %v4589 = vsel %vm4452, %v4540, 0.0
      %v4590 = vadd.f32 %v4588, %v4589
      %v4591 = vsel %vm4452, %v4541, 0.0
      %v4592 = vadd.f32 %v4590, %v4591
      %v4593 = vsel %vm4452, %v4542, 0.0
      %v4594 = vadd.f32 %v4592, %v4593
      %v4595 = vsel %vm4452, %v4543, 0.0
      %v4596 = vadd.f32 %v4594, %v4595
      %v4597 = vsel %vm4452, %v4544, 0.0
      %v4598 = vadd.f32 %v4596, %v4597
      %v4599 = vsel %vm4452, %v4545, 0.0
      %v4600 = vadd.f32 %v4598, %v4599
      %v4601 = vsel %vm4452, %v4546, 0.0
      %v4602 = vadd.f32 %v4600, %v4601
      %v4603 = vsel %vm4452, %v4547, 0.0
      %v4604 = vadd.f32 %v4602, %v4603
      %v4605 = vsel %vm4452, %v4548, 0.0
      %v4606 = vadd.f32 %v4604, %v4605
      %v4607 = vsel %vm4452, %v4549, 0.0
      %v4608 = vadd.f32 %v4606, %v4607
      %v4609 = vsel %vm4452, %v4550, 0.0
      %v4610 = vadd.f32 %v4608, %v4609
      %v4611 = vsel %vm4452, %v4551, 0.0
      %v4612 = vadd.f32 %v4610, %v4611
      %v4613 = vsel %vm4452, %v4552, 0.0
      %v4614 = vadd.f32 %v4612, %v4613
      %v4615 = vsel %vm4452, %v4553, 0.0
      %v4616 = vadd.f32 %v4614, %v4615
      %v4617 = vrot.slane %v4616, 4
      %v4618 = vadd.f32 %v4616, %v4617
      %v4619 = vrot.slane %v4618, 2
      %v4620 = vadd.f32 %v4618, %v4619
      %v4621 = vrot.slane %v4620, 1
      %v4622 = vadd.f32 %v4620, %v4621
      %v4623 = vmul.f32 %v4521, 0.00390625
      %v4624 = vmul.f32 %v4622, 0.00390625
      %v4625 = vmul.f32 %v4623, %v4623
      %v4626 = vsub.f32 %v4624, %v4625
      %v4627 = vmax.f32 %v4626, 0.0
      %v4628 = vsub.f32 %v4326, %v4623
      %v4629 = vsub.f32 %v4329, %v4623
      %v4630 = vsub.f32 %v4334, %v4623
      %v4631 = vsub.f32 %v4337, %v4623
      %v4632 = vsub.f32 %v4342, %v4623
      %v4633 = vsub.f32 %v4345, %v4623
      %v4634 = vsub.f32 %v4350, %v4623
      %v4635 = vsub.f32 %v4353, %v4623
      %v4636 = vsub.f32 %v4358, %v4623
      %v4637 = vsub.f32 %v4361, %v4623
      %v4638 = vsub.f32 %v4366, %v4623
      %v4639 = vsub.f32 %v4369, %v4623
      %v4640 = vsub.f32 %v4374, %v4623
      %v4641 = vsub.f32 %v4377, %v4623
      %v4642 = vsub.f32 %v4382, %v4623
      %v4643 = vsub.f32 %v4385, %v4623
      %v4644 = vsub.f32 %v4390, %v4623
      %v4645 = vsub.f32 %v4393, %v4623
      %v4646 = vsub.f32 %v4398, %v4623
      %v4647 = vsub.f32 %v4401, %v4623
      %v4648 = vsub.f32 %v4406, %v4623
      %v4649 = vsub.f32 %v4409, %v4623
      %v4650 = vsub.f32 %v4414, %v4623
      %v4651 = vsub.f32 %v4417, %v4623
      %v4652 = vsub.f32 %v4422, %v4623
      %v4653 = vsub.f32 %v4425, %v4623
      %v4654 = vsub.f32 %v4430, %v4623
      %v4655 = vsub.f32 %v4433, %v4623
      %v4656 = vsub.f32 %v4438, %v4623
      %v4657 = vsub.f32 %v4441, %v4623
      %v4658 = vsub.f32 %v4446, %v4623
      %v4659 = vsub.f32 %v4449, %v4623
      %v4660 = vadd.f32 %v4627, 1e-05
      %v4661 = vrsqrt.pop %v4660
      %v4662 = vmul.f32 %v4628, %v4661
      %v4663 = vmul.f32 %v4629, %v4661
      %v4664 = vmul.f32 %v4630, %v4661
      %v4665 = vmul.f32 %v4631, %v4661
      %v4666 = vmul.f32 %v4632, %v4661
      %v4667 = vmul.f32 %v4633, %v4661
      %v4668 = vmul.f32 %v4634, %v4661
      %v4669 = vmul.f32 %v4635, %v4661
      %v4670 = vmul.f32 %v4636, %v4661
      %v4671 = vmul.f32 %v4637, %v4661
      %v4672 = vmul.f32 %v4638, %v4661
      %v4673 = vmul.f32 %v4639, %v4661
      %v4674 = vmul.f32 %v4640, %v4661
      %v4675 = vmul.f32 %v4641, %v4661
      %v4676 = vmul.f32 %v4642, %v4661
      %v4677 = vmul.f32 %v4643, %v4661
      %v4678 = vmul.f32 %v4644, %v4661
      %v4679 = vmul.f32 %v4645, %v4661
      %v4680 = vmul.f32 %v4646, %v4661
      %v4681 = vmul.f32 %v4647, %v4661
      %v4682 = vmul.f32 %v4648, %v4661
      %v4683 = vmul.f32 %v4649, %v4661
      %v4684 = vmul.f32 %v4650, %v4661
      %v4685 = vmul.f32 %v4651, %v4661
      %v4686 = vmul.f32 %v4652, %v4661
      %v4687 = vmul.f32 %v4653, %v4661
      %v4688 = vmul.f32 %v4654, %v4661
      %v4689 = vmul.f32 %v4655, %v4661
      %v4690 = vmul.f32 %v4656, %v4661
      %v4691 = vmul.f32 %v4657, %v4661
      %v4692 = vmul.f32 %v4658, %v4661
      %v4693 = vmul.f32 %v4659, %v4661
      %v4694 = vld [vmem:[%s2] sm:$0x1]
      %v4696 = vlaneseq
      %v4697 = vshrl.u32 %v4696, 7
      %v4698 = vsub.s32 0, %v4697
      %v4699 = vrot.slane %v4694, %v4698
      %v4701 = vmul.f32 %v4662, %v4699
      %v4702 = vmul.f32 %v4663, %v4699
      %v4703 = vmul.f32 %v4664, %v4699
      %v4704 = vmul.f32 %v4665, %v4699
      %v4705 = vmul.f32 %v4666, %v4699
      %v4706 = vmul.f32 %v4667, %v4699
      %v4707 = vmul.f32 %v4668, %v4699
      %v4708 = vmul.f32 %v4669, %v4699
      %v4709 = vmul.f32 %v4670, %v4699
      %v4710 = vmul.f32 %v4671, %v4699
      %v4711 = vmul.f32 %v4672, %v4699
      %v4712 = vmul.f32 %v4673, %v4699
      %v4713 = vmul.f32 %v4674, %v4699
      %v4714 = vmul.f32 %v4675, %v4699
      %v4715 = vmul.f32 %v4676, %v4699
      %v4716 = vmul.f32 %v4677, %v4699
      %v4717 = vmul.f32 %v4678, %v4699
      %v4718 = vmul.f32 %v4679, %v4699
      %v4719 = vmul.f32 %v4680, %v4699
      %v4720 = vmul.f32 %v4681, %v4699
      %v4721 = vmul.f32 %v4682, %v4699
      %v4722 = vmul.f32 %v4683, %v4699
      %v4723 = vmul.f32 %v4684, %v4699
      %v4724 = vmul.f32 %v4685, %v4699
      %v4725 = vmul.f32 %v4686, %v4699
      %v4726 = vmul.f32 %v4687, %v4699
      %v4727 = vmul.f32 %v4688, %v4699
      %v4728 = vmul.f32 %v4689, %v4699
      %v4729 = vmul.f32 %v4690, %v4699
      %v4730 = vmul.f32 %v4691, %v4699
      %v4731 = vmul.f32 %v4692, %v4699
      %v4732 = vmul.f32 %v4693, %v4699
      %v4733 = vld [vmem:[%s3] sm:$0x1]
      %v4735 = vlaneseq
      %v4736 = vshrl.u32 %v4735, 7
      %v4737 = vsub.s32 0, %v4736
      %v4738 = vrot.slane %v4733, %v4737
      %v4740 = vadd.f32 %v4701, %v4738
      %v4741 = vadd.f32 %v4702, %v4738
      %v4742 = vadd.f32 %v4703, %v4738
      %v4743 = vadd.f32 %v4704, %v4738
      %v4744 = vadd.f32 %v4705, %v4738
      %v4745 = vadd.f32 %v4706, %v4738
      %v4746 = vadd.f32 %v4707, %v4738
      %v4747 = vadd.f32 %v4708, %v4738
      %v4748 = vadd.f32 %v4709, %v4738
      %v4749 = vadd.f32 %v4710, %v4738
      %v4750 = vadd.f32 %v4711, %v4738
      %v4751 = vadd.f32 %v4712, %v4738
      %v4752 = vadd.f32 %v4713, %v4738
      %v4753 = vadd.f32 %v4714, %v4738
      %v4754 = vadd.f32 %v4715, %v4738
      %v4755 = vadd.f32 %v4716, %v4738
      %v4756 = vadd.f32 %v4717, %v4738
      %v4757 = vadd.f32 %v4718, %v4738
      %v4758 = vadd.f32 %v4719, %v4738
      %v4759 = vadd.f32 %v4720, %v4738
      %v4760 = vadd.f32 %v4721, %v4738
      %v4761 = vadd.f32 %v4722, %v4738
      %v4762 = vadd.f32 %v4723, %v4738
      %v4763 = vadd.f32 %v4724, %v4738
      %v4764 = vadd.f32 %v4725, %v4738
      %v4765 = vadd.f32 %v4726, %v4738
      %v4766 = vadd.f32 %v4727, %v4738
      %v4767 = vadd.f32 %v4728, %v4738
      %v4768 = vadd.f32 %v4729, %v4738
      %v4769 = vadd.f32 %v4730, %v4738
      %v4770 = vadd.f32 %v4731, %v4738
      %v4771 = vadd.f32 %v4732, %v4738
      %v4772 = vmax.f32 %v4740, 0.0
      %v4773 = vmax.f32 %v4741, 0.0
      %v4774 = vmax.f32 %v4742, 0.0
      %v4775 = vmax.f32 %v4743, 0.0
      %v4776 = vmax.f32 %v4744, 0.0
      %v4777 = vmax.f32 %v4745, 0.0
      %v4778 = vmax.f32 %v4746, 0.0
      %v4779 = vmax.f32 %v4747, 0.0
      %v4780 = vmax.f32 %v4748, 0.0
      %v4781 = vmax.f32 %v4749, 0.0
      %v4782 = vmax.f32 %v4750, 0.0
      %v4783 = vmax.f32 %v4751, 0.0
      %v4784 = vmax.f32 %v4752, 0.0
      %v4785 = vmax.f32 %v4753, 0.0
      %v4786 = vmax.f32 %v4754, 0.0
      %v4787 = vmax.f32 %v4755, 0.0
      %v4788 = vmax.f32 %v4756, 0.0
      %v4789 = vmax.f32 %v4757, 0.0
      %v4790 = vmax.f32 %v4758, 0.0
      %v4791 = vmax.f32 %v4759, 0.0
      %v4792 = vmax.f32 %v4760, 0.0
      %v4793 = vmax.f32 %v4761, 0.0
      %v4794 = vmax.f32 %v4762, 0.0
      %v4795 = vmax.f32 %v4763, 0.0
      %v4796 = vmax.f32 %v4764, 0.0
      %v4797 = vmax.f32 %v4765, 0.0
      %v4798 = vmax.f32 %v4766, 0.0
      %v4799 = vmax.f32 %v4767, 0.0
      %v4800 = vmax.f32 %v4768, 0.0
      %v4801 = vmax.f32 %v4769, 0.0
      %v4802 = vmax.f32 %v4770, 0.0
      %v4803 = vmax.f32 %v4771, 0.0
      %v4804 = vpack.c.bf16 %v4773, %v4772
      %v4805 = vpack.c.bf16 %v4775, %v4774
      %v4806 = vpack.c.bf16 %v4777, %v4776
      %v4807 = vpack.c.bf16 %v4779, %v4778
      %v4808 = vpack.c.bf16 %v4781, %v4780
      %v4809 = vpack.c.bf16 %v4783, %v4782
      %v4810 = vpack.c.bf16 %v4785, %v4784
      %v4811 = vpack.c.bf16 %v4787, %v4786
      %v4812 = vpack.c.bf16 %v4789, %v4788
      %v4813 = vpack.c.bf16 %v4791, %v4790
      %v4814 = vpack.c.bf16 %v4793, %v4792
      %v4815 = vpack.c.bf16 %v4795, %v4794
      %v4816 = vpack.c.bf16 %v4797, %v4796
      %v4817 = vpack.c.bf16 %v4799, %v4798
      %v4818 = vpack.c.bf16 %v4801, %v4800
      %v4819 = vpack.c.bf16 %v4803, %v4802
      %v4836 = vunpack.c.l.b16 %v4804
      %v4837 = vunpack.c.h.b16 %v4804
      %v4838 = vunpack.c.l.b16 %v4805
      %v4839 = vunpack.c.h.b16 %v4805
      %v4840 = vunpack.c.l.b16 %v4806
      %v4841 = vunpack.c.h.b16 %v4806
      %v4842 = vunpack.c.l.b16 %v4807
      %v4843 = vunpack.c.h.b16 %v4807
      %v4844 = vunpack.c.l.b16 %v4808
      %v4845 = vunpack.c.h.b16 %v4808
      %v4846 = vunpack.c.l.b16 %v4809
      %v4847 = vunpack.c.h.b16 %v4809
      %v4848 = vunpack.c.l.b16 %v4810
      %v4849 = vunpack.c.h.b16 %v4810
      %v4850 = vunpack.c.l.b16 %v4811
      %v4851 = vunpack.c.h.b16 %v4811
      %v4852 = vunpack.c.l.b16 %v4812
      %v4853 = vunpack.c.h.b16 %v4812
      %v4854 = vunpack.c.l.b16 %v4813
      %v4855 = vunpack.c.h.b16 %v4813
      %v4856 = vunpack.c.l.b16 %v4814
      %v4857 = vunpack.c.h.b16 %v4814
      %v4858 = vunpack.c.l.b16 %v4815
      %v4859 = vunpack.c.h.b16 %v4815
      %v4860 = vunpack.c.l.b16 %v4816
      %v4861 = vunpack.c.h.b16 %v4816
      %v4862 = vunpack.c.l.b16 %v4817
      %v4863 = vunpack.c.h.b16 %v4817
      %v4864 = vunpack.c.l.b16 %v4818
      %v4865 = vunpack.c.h.b16 %v4818
      %v4866 = vunpack.c.l.b16 %v4819
      %v4867 = vunpack.c.h.b16 %v4819
      %v4868 = vpack.c.b16 %v4836, %v4836
      %v4869 = vpack.c.b16 %v4837, %v4837
      %v4870 = vpack.c.b16 %v4838, %v4838
      %v4871 = vpack.c.b16 %v4839, %v4839
      %v4872 = vpack.c.b16 %v4840, %v4840
      %v4873 = vpack.c.b16 %v4841, %v4841
      %v4874 = vpack.c.b16 %v4842, %v4842
      %v4875 = vpack.c.b16 %v4843, %v4843
      %v4876 = vpack.c.b16 %v4844, %v4844
      %v4877 = vpack.c.b16 %v4845, %v4845
      %v4878 = vpack.c.b16 %v4846, %v4846
      %v4879 = vpack.c.b16 %v4847, %v4847
      %v4880 = vpack.c.b16 %v4848, %v4848
      %v4881 = vpack.c.b16 %v4849, %v4849
      %v4882 = vpack.c.b16 %v4850, %v4850
      %v4883 = vpack.c.b16 %v4851, %v4851
      %v4884 = vpack.c.b16 %v4852, %v4852
      %v4885 = vpack.c.b16 %v4853, %v4853
      %v4886 = vpack.c.b16 %v4854, %v4854
      %v4887 = vpack.c.b16 %v4855, %v4855
      %v4888 = vpack.c.b16 %v4856, %v4856
      %v4889 = vpack.c.b16 %v4857, %v4857
      %v4890 = vpack.c.b16 %v4858, %v4858
      %v4891 = vpack.c.b16 %v4859, %v4859
      %v4892 = vpack.c.b16 %v4860, %v4860
      %v4893 = vpack.c.b16 %v4861, %v4861
      %v4894 = vpack.c.b16 %v4862, %v4862
      %v4895 = vpack.c.b16 %v4863, %v4863
      %v4896 = vpack.c.b16 %v4864, %v4864
      %v4897 = vpack.c.b16 %v4865, %v4865
      %v4898 = vpack.c.b16 %v4866, %v4866
      %v4899 = vpack.c.b16 %v4867, %v4867
      %v4901 = vshrl.u32 %v4868, 16
      %v4903 = vrot.slane %v4901, 7
      %v4904 = vshll.u32 %v4868, 16
      %v4906 = vor.u32 %v4903, %v4904
      %v4907 = vrot.slane %v4903, 4
      %v4909 = vshrl.u32 %v4869, 16
      %v4911 = vrot.slane %v4909, 7
      %v4912 = vshll.u32 %v4869, 16
      %v4914 = vor.u32 %v4911, %v4912
      %v4915 = vsel %vm520, %v4907, %v4914
      %v4916 = vrot.slane %v4911, 4
      %v4918 = vshrl.u32 %v4870, 16
      %v4920 = vrot.slane %v4918, 7
      %v4921 = vshll.u32 %v4870, 16
      %v4923 = vor.u32 %v4920, %v4921
      %v4924 = vrot.slane %v4920, 4
      %v4926 = vshrl.u32 %v4871, 16
      %v4928 = vrot.slane %v4926, 7
      %v4929 = vshll.u32 %v4871, 16
      %v4931 = vor.u32 %v4928, %v4929
      %v4932 = vsel %vm520, %v4924, %v4931
      %v4933 = vrot.slane %v4928, 4
      %v4935 = vshrl.u32 %v4872, 16
      %v4937 = vrot.slane %v4935, 7
      %v4938 = vshll.u32 %v4872, 16
      %v4940 = vor.u32 %v4937, %v4938
      %v4941 = vrot.slane %v4937, 4
      %v4943 = vshrl.u32 %v4873, 16
      %v4945 = vrot.slane %v4943, 7
      %v4946 = vshll.u32 %v4873, 16
      %v4948 = vor.u32 %v4945, %v4946
      %v4949 = vsel %vm520, %v4941, %v4948
      %v4950 = vrot.slane %v4945, 4
      %v4952 = vshrl.u32 %v4874, 16
      %v4954 = vrot.slane %v4952, 7
      %v4955 = vshll.u32 %v4874, 16
      %v4957 = vor.u32 %v4954, %v4955
      %v4958 = vrot.slane %v4954, 4
      %v4960 = vshrl.u32 %v4875, 16
      %v4962 = vrot.slane %v4960, 7
      %v4963 = vshll.u32 %v4875, 16
      %v4965 = vor.u32 %v4962, %v4963
      %v4966 = vsel %vm520, %v4958, %v4965
      %v4967 = vrot.slane %v4962, 4
      %v4969 = vshrl.u32 %v4876, 16
      %v4971 = vrot.slane %v4969, 7
      %v4972 = vshll.u32 %v4876, 16
      %v4974 = vor.u32 %v4971, %v4972
      %v4975 = vrot.slane %v4971, 4
      %v4977 = vshrl.u32 %v4877, 16
      %v4979 = vrot.slane %v4977, 7
      %v4980 = vshll.u32 %v4877, 16
      %v4982 = vor.u32 %v4979, %v4980
      %v4983 = vsel %vm520, %v4975, %v4982
      %v4984 = vrot.slane %v4979, 4
      %v4986 = vshrl.u32 %v4878, 16
      %v4988 = vrot.slane %v4986, 7
      %v4989 = vshll.u32 %v4878, 16
      %v4991 = vor.u32 %v4988, %v4989
      %v4992 = vrot.slane %v4988, 4
      %v4994 = vshrl.u32 %v4879, 16
      %v4996 = vrot.slane %v4994, 7
      %v4997 = vshll.u32 %v4879, 16
      %v4999 = vor.u32 %v4996, %v4997
      %v5000 = vsel %vm520, %v4992, %v4999
      %v5001 = vrot.slane %v4996, 4
      %v5003 = vshrl.u32 %v4880, 16
      %v5005 = vrot.slane %v5003, 7
      %v5006 = vshll.u32 %v4880, 16
      %v5008 = vor.u32 %v5005, %v5006
      %v5009 = vrot.slane %v5005, 4
      %v5011 = vshrl.u32 %v4881, 16
      %v5013 = vrot.slane %v5011, 7
      %v5014 = vshll.u32 %v4881, 16
      %v5016 = vor.u32 %v5013, %v5014
      %v5017 = vsel %vm520, %v5009, %v5016
      %v5018 = vrot.slane %v5013, 4
      %v5020 = vshrl.u32 %v4882, 16
      %v5022 = vrot.slane %v5020, 7
      %v5023 = vshll.u32 %v4882, 16
      %v5025 = vor.u32 %v5022, %v5023
      %v5026 = vrot.slane %v5022, 4
      %v5028 = vshrl.u32 %v4883, 16
      %v5030 = vrot.slane %v5028, 7
      %v5031 = vshll.u32 %v4883, 16
      %v5033 = vor.u32 %v5030, %v5031
      %v5034 = vsel %vm520, %v5026, %v5033
      %v5035 = vrot.slane %v5030, 4
      %v5037 = vshrl.u32 %v4884, 16
      %v5039 = vrot.slane %v5037, 7
      %v5040 = vshll.u32 %v4884, 16
      %v5042 = vor.u32 %v5039, %v5040
      %v5043 = vrot.slane %v5039, 4
      %v5045 = vshrl.u32 %v4885, 16
      %v5047 = vrot.slane %v5045, 7
      %v5048 = vshll.u32 %v4885, 16
      %v5050 = vor.u32 %v5047, %v5048
      %v5051 = vsel %vm520, %v5043, %v5050
      %v5052 = vrot.slane %v5047, 4
      %v5054 = vshrl.u32 %v4886, 16
      %v5056 = vrot.slane %v5054, 7
      %v5057 = vshll.u32 %v4886, 16
      %v5059 = vor.u32 %v5056, %v5057
      %v5060 = vrot.slane %v5056, 4
      %v5062 = vshrl.u32 %v4887, 16
      %v5064 = vrot.slane %v5062, 7
      %v5065 = vshll.u32 %v4887, 16
      %v5067 = vor.u32 %v5064, %v5065
      %v5068 = vsel %vm520, %v5060, %v5067
      %v5069 = vrot.slane %v5064, 4
      %v5071 = vshrl.u32 %v4888, 16
      %v5073 = vrot.slane %v5071, 7
      %v5074 = vshll.u32 %v4888, 16
      %v5076 = vor.u32 %v5073, %v5074
      %v5077 = vrot.slane %v5073, 4
      %v5079 = vshrl.u32 %v4889, 16
      %v5081 = vrot.slane %v5079, 7
      %v5082 = vshll.u32 %v4889, 16
      %v5084 = vor.u32 %v5081, %v5082
      %v5085 = vsel %vm520, %v5077, %v5084
      %v5086 = vrot.slane %v5081, 4
      %v5088 = vshrl.u32 %v4890, 16
      %v5090 = vrot.slane %v5088, 7
      %v5091 = vshll.u32 %v4890, 16
      %v5093 = vor.u32 %v5090, %v5091
      %v5094 = vrot.slane %v5090, 4
      %v5096 = vshrl.u32 %v4891, 16
      %v5098 = vrot.slane %v5096, 7
      %v5099 = vshll.u32 %v4891, 16
      %v5101 = vor.u32 %v5098, %v5099
      %v5102 = vsel %vm520, %v5094, %v5101
      %v5103 = vrot.slane %v5098, 4
      %v5105 = vshrl.u32 %v4892, 16
      %v5107 = vrot.slane %v5105, 7
      %v5108 = vshll.u32 %v4892, 16
      %v5110 = vor.u32 %v5107, %v5108
      %v5111 = vrot.slane %v5107, 4
      %v5113 = vshrl.u32 %v4893, 16
      %v5115 = vrot.slane %v5113, 7
      %v5116 = vshll.u32 %v4893, 16
      %v5118 = vor.u32 %v5115, %v5116
      %v5119 = vsel %vm520, %v5111, %v5118
      %v5120 = vrot.slane %v5115, 4
      %v5122 = vshrl.u32 %v4894, 16
      %v5124 = vrot.slane %v5122, 7
      %v5125 = vshll.u32 %v4894, 16
      %v5127 = vor.u32 %v5124, %v5125
      %v5128 = vrot.slane %v5124, 4
      %v5130 = vshrl.u32 %v4895, 16
      %v5132 = vrot.slane %v5130, 7
      %v5133 = vshll.u32 %v4895, 16
      %v5135 = vor.u32 %v5132, %v5133
      %v5136 = vsel %vm520, %v5128, %v5135
      %v5137 = vrot.slane %v5132, 4
      %v5139 = vshrl.u32 %v4896, 16
      %v5141 = vrot.slane %v5139, 7
      %v5142 = vshll.u32 %v4896, 16
      %v5144 = vor.u32 %v5141, %v5142
      %v5145 = vrot.slane %v5141, 4
      %v5147 = vshrl.u32 %v4897, 16
      %v5149 = vrot.slane %v5147, 7
      %v5150 = vshll.u32 %v4897, 16
      %v5152 = vor.u32 %v5149, %v5150
      %v5153 = vsel %vm520, %v5145, %v5152
      %v5154 = vrot.slane %v5149, 4
      %v5156 = vshrl.u32 %v4898, 16
      %v5158 = vrot.slane %v5156, 7
      %v5159 = vshll.u32 %v4898, 16
      %v5161 = vor.u32 %v5158, %v5159
      %v5162 = vrot.slane %v5158, 4
      %v5164 = vshrl.u32 %v4899, 16
      %v5166 = vrot.slane %v5164, 7
      %v5167 = vshll.u32 %v4899, 16
      %v5169 = vor.u32 %v5166, %v5167
      %v5170 = vsel %vm520, %v5162, %v5169
      %v5171 = vrot.slane %v5166, 4
      %v5220 = vld [vmem:[%s289] sm:$0xf]
      %v5221 = vsel %vm842, %v4906, %v5220
      %5222 = vst [vmem:[%s289] sm:$0xf] %v5221
      %5223 = vst.msk [vmem:[%s289 + $0x4] sm:$0xf] %vm280, %v4915
      %v5224 = vld [vmem:[%s289 + $0x8] sm:$0x1]
      %v5225 = vsel %vm292, %v4916, %v5224
      %5226 = vst [vmem:[%s289 + $0x8] sm:$0x1] %v5225
      %v5227 = vld [vmem:[%s289 + $0xc] sm:$0xf]
      %v5228 = vsel %vm842, %v4923, %v5227
      %5229 = vst [vmem:[%s289 + $0xc] sm:$0xf] %v5228
      %5230 = vst.msk [vmem:[%s289 + $0x10] sm:$0xf] %vm280, %v4932
      %v5231 = vld [vmem:[%s289 + $0x14] sm:$0x1]
      %v5232 = vsel %vm292, %v4933, %v5231
      %5233 = vst [vmem:[%s289 + $0x14] sm:$0x1] %v5232
      %v5234 = vld [vmem:[%s289 + $0x18] sm:$0xf]
      %v5235 = vsel %vm842, %v4940, %v5234
      %5236 = vst [vmem:[%s289 + $0x18] sm:$0xf] %v5235
      %5237 = vst.msk [vmem:[%s289 + $0x1c] sm:$0xf] %vm280, %v4949
      %v5238 = vld [vmem:[%s289 + $0x20] sm:$0x1]
      %v5239 = vsel %vm292, %v4950, %v5238
      %5240 = vst [vmem:[%s289 + $0x20] sm:$0x1] %v5239
      %v5241 = vld [vmem:[%s289 + $0x24] sm:$0xf]
      %v5242 = vsel %vm842, %v4957, %v5241
      %5243 = vst [vmem:[%s289 + $0x24] sm:$0xf] %v5242
      %5244 = vst.msk [vmem:[%s289 + $0x28] sm:$0xf] %vm280, %v4966
      %v5245 = vld [vmem:[%s289 + $0x2c] sm:$0x1]
      %v5246 = vsel %vm292, %v4967, %v5245
      %5247 = vst [vmem:[%s289 + $0x2c] sm:$0x1] %v5246
      %v5248 = vld [vmem:[%s289 + $0x30] sm:$0xf]
      %v5249 = vsel %vm842, %v4974, %v5248
      %5250 = vst [vmem:[%s289 + $0x30] sm:$0xf] %v5249
      %5251 = vst.msk [vmem:[%s289 + $0x34] sm:$0xf] %vm280, %v4983
      %v5252 = vld [vmem:[%s289 + $0x38] sm:$0x1]
      %v5253 = vsel %vm292, %v4984, %v5252
      %5254 = vst [vmem:[%s289 + $0x38] sm:$0x1] %v5253
      %v5255 = vld [vmem:[%s289 + $0x3c] sm:$0xf]
      %v5256 = vsel %vm842, %v4991, %v5255
      %5257 = vst [vmem:[%s289 + $0x3c] sm:$0xf] %v5256
      %5258 = vst.msk [vmem:[%s289 + $0x40] sm:$0xf] %vm280, %v5000
      %v5259 = vld [vmem:[%s289 + $0x44] sm:$0x1]
      %v5260 = vsel %vm292, %v5001, %v5259
      %5261 = vst [vmem:[%s289 + $0x44] sm:$0x1] %v5260
      %v5262 = vld [vmem:[%s289 + $0x48] sm:$0xf]
      %v5263 = vsel %vm842, %v5008, %v5262
      %5264 = vst [vmem:[%s289 + $0x48] sm:$0xf] %v5263
      %5265 = vst.msk [vmem:[%s289 + $0x4c] sm:$0xf] %vm280, %v5017
      %v5266 = vld [vmem:[%s289 + $0x50] sm:$0x1]
      %v5267 = vsel %vm292, %v5018, %v5266
      %5268 = vst [vmem:[%s289 + $0x50] sm:$0x1] %v5267
      %v5269 = vld [vmem:[%s289 + $0x54] sm:$0xf]
      %v5270 = vsel %vm842, %v5025, %v5269
      %5271 = vst [vmem:[%s289 + $0x54] sm:$0xf] %v5270
      %5272 = vst.msk [vmem:[%s289 + $0x58] sm:$0xf] %vm280, %v5034
      %v5273 = vld [vmem:[%s289 + $0x5c] sm:$0x1]
      %v5274 = vsel %vm292, %v5035, %v5273
      %5275 = vst [vmem:[%s289 + $0x5c] sm:$0x1] %v5274
      %v5276 = vld [vmem:[%s289 + $0x60] sm:$0xf]
      %v5277 = vsel %vm842, %v5042, %v5276
      %5278 = vst [vmem:[%s289 + $0x60] sm:$0xf] %v5277
      %5279 = vst.msk [vmem:[%s289 + $0x64] sm:$0xf] %vm280, %v5051
      %v5280 = vld [vmem:[%s289 + $0x68] sm:$0x1]
      %v5281 = vsel %vm292, %v5052, %v5280
      %5282 = vst [vmem:[%s289 + $0x68] sm:$0x1] %v5281
      %v5283 = vld [vmem:[%s289 + $0x6c] sm:$0xf]
      %v5284 = vsel %vm842, %v5059, %v5283
      %5285 = vst [vmem:[%s289 + $0x6c] sm:$0xf] %v5284
      %5286 = vst.msk [vmem:[%s289 + $0x70] sm:$0xf] %vm280, %v5068
      %v5287 = vld [vmem:[%s289 + $0x74] sm:$0x1]
      %v5288 = vsel %vm292, %v5069, %v5287
      %5289 = vst [vmem:[%s289 + $0x74] sm:$0x1] %v5288
      %v5290 = vld [vmem:[%s289 + $0x78] sm:$0xf]
      %v5291 = vsel %vm842, %v5076, %v5290
      %5292 = vst [vmem:[%s289 + $0x78] sm:$0xf] %v5291
      %5293 = vst.msk [vmem:[%s289 + $0x7c] sm:$0xf] %vm280, %v5085
      %v5294 = vld [vmem:[%s289 + $0x80] sm:$0x1]
      %v5295 = vsel %vm292, %v5086, %v5294
      %5296 = vst [vmem:[%s289 + $0x80] sm:$0x1] %v5295
      %v5297 = vld [vmem:[%s289 + $0x84] sm:$0xf]
      %v5298 = vsel %vm842, %v5093, %v5297
      %5299 = vst [vmem:[%s289 + $0x84] sm:$0xf] %v5298
      %5300 = vst.msk [vmem:[%s289 + $0x88] sm:$0xf] %vm280, %v5102
      %v5301 = vld [vmem:[%s289 + $0x8c] sm:$0x1]
      %v5302 = vsel %vm292, %v5103, %v5301
      %5303 = vst [vmem:[%s289 + $0x8c] sm:$0x1] %v5302
      %v5304 = vld [vmem:[%s289 + $0x90] sm:$0xf]
      %v5305 = vsel %vm842, %v5110, %v5304
      %5306 = vst [vmem:[%s289 + $0x90] sm:$0xf] %v5305
      %5307 = vst.msk [vmem:[%s289 + $0x94] sm:$0xf] %vm280, %v5119
      %v5308 = vld [vmem:[%s289 + $0x98] sm:$0x1]
      %v5309 = vsel %vm292, %v5120, %v5308
      %5310 = vst [vmem:[%s289 + $0x98] sm:$0x1] %v5309
      %v5311 = vld [vmem:[%s289 + $0x9c] sm:$0xf]
      %v5312 = vsel %vm842, %v5127, %v5311
      %5313 = vst [vmem:[%s289 + $0x9c] sm:$0xf] %v5312
      %5314 = vst.msk [vmem:[%s289 + $0xa0] sm:$0xf] %vm280, %v5136
      %v5315 = vld [vmem:[%s289 + $0xa4] sm:$0x1]
      %v5316 = vsel %vm292, %v5137, %v5315
      %5317 = vst [vmem:[%s289 + $0xa4] sm:$0x1] %v5316
      %v5318 = vld [vmem:[%s289 + $0xa8] sm:$0xf]
      %v5319 = vsel %vm842, %v5144, %v5318
      %5320 = vst [vmem:[%s289 + $0xa8] sm:$0xf] %v5319
      %5321 = vst.msk [vmem:[%s289 + $0xac] sm:$0xf] %vm280, %v5153
      %v5322 = vld [vmem:[%s289 + $0xb0] sm:$0x1]
      %v5323 = vsel %vm292, %v5154, %v5322
      %5324 = vst [vmem:[%s289 + $0xb0] sm:$0x1] %v5323
      %v5325 = vld [vmem:[%s289 + $0xb4] sm:$0xf]
      %v5326 = vsel %vm842, %v5161, %v5325
      %5327 = vst [vmem:[%s289 + $0xb4] sm:$0xf] %v5326
      %5328 = vst.msk [vmem:[%s289 + $0xb8] sm:$0xf] %vm280, %v5170
      %v5329 = vld [vmem:[%s289 + $0xbc] sm:$0x1]
      %v5330 = vsel %vm292, %v5171, %v5329
      %5331 = vst [vmem:[%s289 + $0xbc] sm:$0x1] %v5330
      %v5332 = vld [vmem:[#allocation2] sm:$0xf]
      %v5333 = vld [vmem:[#allocation2 + $0x4] sm:$0xf]
      %v5334 = vld [vmem:[#allocation2 + $0xc] sm:$0xf]
      %v5335 = vld [vmem:[#allocation2 + $0x10] sm:$0xf]
      %v5336 = vld [vmem:[#allocation2 + $0x18] sm:$0xf]
      %v5337 = vld [vmem:[#allocation2 + $0x1c] sm:$0xf]
      %v5338 = vld [vmem:[#allocation2 + $0x24] sm:$0xf]
      %v5339 = vld [vmem:[#allocation2 + $0x28] sm:$0xf]
      %v5340 = vld [vmem:[#allocation2 + $0x30] sm:$0xf]
      %v5341 = vld [vmem:[#allocation2 + $0x34] sm:$0xf]
      %v5342 = vld [vmem:[#allocation2 + $0x3c] sm:$0xf]
      %v5343 = vld [vmem:[#allocation2 + $0x40] sm:$0xf]
      %v5344 = vld [vmem:[#allocation2 + $0x48] sm:$0xf]
      %v5345 = vld [vmem:[#allocation2 + $0x4c] sm:$0xf]
      %v5346 = vld [vmem:[#allocation2 + $0x54] sm:$0xf]
      %v5347 = vld [vmem:[#allocation2 + $0x58] sm:$0xf]
      %v5348 = vld [vmem:[#allocation2 + $0x60] sm:$0xf]
      %v5349 = vld [vmem:[#allocation2 + $0x64] sm:$0xf]
      %v5350 = vld [vmem:[#allocation2 + $0x6c] sm:$0xf]
      %v5351 = vld [vmem:[#allocation2 + $0x70] sm:$0xf]
      %v5352 = vld [vmem:[#allocation2 + $0x78] sm:$0xf]
      %v5353 = vld [vmem:[#allocation2 + $0x7c] sm:$0xf]
      %v5354 = vld [vmem:[#allocation2 + $0x84] sm:$0xf]
      %v5355 = vld [vmem:[#allocation2 + $0x88] sm:$0xf]
      %v5356 = vld [vmem:[#allocation2 + $0x90] sm:$0xf]
      %v5357 = vld [vmem:[#allocation2 + $0x94] sm:$0xf]
      %v5358 = vld [vmem:[#allocation2 + $0x9c] sm:$0xf]
      %v5359 = vld [vmem:[#allocation2 + $0xa0] sm:$0xf]
      %v5360 = vld [vmem:[#allocation2 + $0xa8] sm:$0xf]
      %v5361 = vld [vmem:[#allocation2 + $0xac] sm:$0xf]
      %v5362 = vld [vmem:[#allocation2 + $0xb4] sm:$0xf]
      %v5363 = vld [vmem:[#allocation2 + $0xb8] sm:$0xf]
      %5364 = vst.msk [vmem:[#allocation3] sm:$0xf] %vm280, %v5332
      %5365 = vst.msk [vmem:[#allocation3 + $0x4] sm:$0xf] %vm280, %v5333
      %5366 = vst.msk [vmem:[#allocation3 + $0x8] sm:$0xf] %vm280, %v5334
      %5367 = vst.msk [vmem:[#allocation3 + $0xc] sm:$0xf] %vm280, %v5335
      %5368 = vst.msk [vmem:[#allocation3 + $0x10] sm:$0xf] %vm280, %v5336
      %5369 = vst.msk [vmem:[#allocation3 + $0x14] sm:$0xf] %vm280, %v5337
      %5370 = vst.msk [vmem:[#allocation3 + $0x18] sm:$0xf] %vm280, %v5338
      %5371 = vst.msk [vmem:[#allocation3 + $0x1c] sm:$0xf] %vm280, %v5339
      %5372 = vst.msk [vmem:[#allocation3 + $0x20] sm:$0xf] %vm280, %v5340
      %5373 = vst.msk [vmem:[#allocation3 + $0x24] sm:$0xf] %vm280, %v5341
      %5374 = vst.msk [vmem:[#allocation3 + $0x28] sm:$0xf] %vm280, %v5342
      %5375 = vst.msk [vmem:[#allocation3 + $0x2c] sm:$0xf] %vm280, %v5343
      %5376 = vst.msk [vmem:[#allocation3 + $0x30] sm:$0xf] %vm280, %v5344
      %5377 = vst.msk [vmem:[#allocation3 + $0x34] sm:$0xf] %vm280, %v5345
      %5378 = vst.msk [vmem:[#allocation3 + $0x38] sm:$0xf] %vm280, %v5346
      %5379 = vst.msk [vmem:[#allocation3 + $0x3c] sm:$0xf] %vm280, %v5347
      %5380 = vst.msk [vmem:[#allocation3 + $0x40] sm:$0xf] %vm280, %v5348
      %5381 = vst.msk [vmem:[#allocation3 + $0x44] sm:$0xf] %vm280, %v5349
      %5382 = vst.msk [vmem:[#allocation3 + $0x48] sm:$0xf] %vm280, %v5350
      %5383 = vst.msk [vmem:[#allocation3 + $0x4c] sm:$0xf] %vm280, %v5351
      %5384 = vst.msk [vmem:[#allocation3 + $0x50] sm:$0xf] %vm280, %v5352
      %5385 = vst.msk [vmem:[#allocation3 + $0x54] sm:$0xf] %vm280, %v5353
      %5386 = vst.msk [vmem:[#allocation3 + $0x58] sm:$0xf] %vm280, %v5354
      %5387 = vst.msk [vmem:[#allocation3 + $0x5c] sm:$0xf] %vm280, %v5355
      %5388 = vst.msk [vmem:[#allocation3 + $0x60] sm:$0xf] %vm280, %v5356
      %5389 = vst.msk [vmem:[#allocation3 + $0x64] sm:$0xf] %vm280, %v5357
      %5390 = vst.msk [vmem:[#allocation3 + $0x68] sm:$0xf] %vm280, %v5358
      %5391 = vst.msk [vmem:[#allocation3 + $0x6c] sm:$0xf] %vm280, %v5359
      %5392 = vst.msk [vmem:[#allocation3 + $0x70] sm:$0xf] %vm280, %v5360
      %5393 = vst.msk [vmem:[#allocation3 + $0x74] sm:$0xf] %vm280, %v5361
      %5394 = vst.msk [vmem:[#allocation3 + $0x78] sm:$0xf] %vm280, %v5362
      %5395 = vst.msk [vmem:[#allocation3 + $0x7c] sm:$0xf] %vm280, %v5363
      %v5396 = vld [vmem:[#allocation2] sm:$0xf]
      %v5397 = vld [vmem:[#allocation2 + $0x4] sm:$0xf]
      %v5398 = vld [vmem:[#allocation2 + $0x8] sm:$0x1]
      %v5399 = vld [vmem:[#allocation2 + $0xc] sm:$0xf]
      %v5400 = vld [vmem:[#allocation2 + $0x10] sm:$0xf]
      %v5401 = vld [vmem:[#allocation2 + $0x14] sm:$0x1]
      %v5402 = vld [vmem:[#allocation2 + $0x18] sm:$0xf]
      %v5403 = vld [vmem:[#allocation2 + $0x1c] sm:$0xf]
      %v5404 = vld [vmem:[#allocation2 + $0x20] sm:$0x1]
      %v5405 = vld [vmem:[#allocation2 + $0x24] sm:$0xf]
      %v5406 = vld [vmem:[#allocation2 + $0x28] sm:$0xf]
      %v5407 = vld [vmem:[#allocation2 + $0x2c] sm:$0x1]
      %v5408 = vld [vmem:[#allocation2 + $0x30] sm:$0xf]
      %v5409 = vld [vmem:[#allocation2 + $0x34] sm:$0xf]
      %v5410 = vld [vmem:[#allocation2 + $0x38] sm:$0x1]
      %v5411 = vld [vmem:[#allocation2 + $0x3c] sm:$0xf]
      %v5412 = vld [vmem:[#allocation2 + $0x40] sm:$0xf]
      %v5413 = vld [vmem:[#allocation2 + $0x44] sm:$0x1]
      %v5414 = vld [vmem:[#allocation2 + $0x48] sm:$0xf]
      %v5415 = vld [vmem:[#allocation2 + $0x4c] sm:$0xf]
      %v5416 = vld [vmem:[#allocation2 + $0x50] sm:$0x1]
      %v5417 = vld [vmem:[#allocation2 + $0x54] sm:$0xf]
      %v5418 = vld [vmem:[#allocation2 + $0x58] sm:$0xf]
      %v5419 = vld [vmem:[#allocation2 + $0x5c] sm:$0x1]
      %v5420 = vld [vmem:[#allocation2 + $0x60] sm:$0xf]
      %v5421 = vld [vmem:[#allocation2 + $0x64] sm:$0xf]
      %v5422 = vld [vmem:[#allocation2 + $0x68] sm:$0x1]
      %v5423 = vld [vmem:[#allocation2 + $0x6c] sm:$0xf]
      %v5424 = vld [vmem:[#allocation2 + $0x70] sm:$0xf]
      %v5425 = vld [vmem:[#allocation2 + $0x74] sm:$0x1]
      %v5426 = vld [vmem:[#allocation2 + $0x78] sm:$0xf]
      %v5427 = vld [vmem:[#allocation2 + $0x7c] sm:$0xf]
      %v5428 = vld [vmem:[#allocation2 + $0x80] sm:$0x1]
      %v5429 = vld [vmem:[#allocation2 + $0x84] sm:$0xf]
      %v5430 = vld [vmem:[#allocation2 + $0x88] sm:$0xf]
      %v5431 = vld [vmem:[#allocation2 + $0x8c] sm:$0x1]
      %v5432 = vld [vmem:[#allocation2 + $0x90] sm:$0xf]
      %v5433 = vld [vmem:[#allocation2 + $0x94] sm:$0xf]
      %v5434 = vld [vmem:[#allocation2 + $0x98] sm:$0x1]
      %v5435 = vld [vmem:[#allocation2 + $0x9c] sm:$0xf]
      %v5436 = vld [vmem:[#allocation2 + $0xa0] sm:$0xf]
      %v5437 = vld [vmem:[#allocation2 + $0xa4] sm:$0x1]
      %v5438 = vld [vmem:[#allocation2 + $0xa8] sm:$0xf]
      %v5439 = vld [vmem:[#allocation2 + $0xac] sm:$0xf]
      %v5440 = vld [vmem:[#allocation2 + $0xb0] sm:$0x1]
      %v5441 = vld [vmem:[#allocation2 + $0xb4] sm:$0xf]
      %v5442 = vld [vmem:[#allocation2 + $0xb8] sm:$0xf]
      %v5443 = vld [vmem:[#allocation2 + $0xbc] sm:$0x1]
      %v5445 = vshrl.u32 %v5396, 16
      %v5447 = vrot.slane %v5445, 4
      %v5448 = vshll.u32 %v5396, 16
      %v5450 = vrot.slane %v5448, 5
      %v5451 = vor.u32 %v5447, %v5450
      %v5452 = vrot.slane %v5451, 4
      %v5454 = vshll.u32 %v5397, 16
      %v5456 = vrot.slane %v5454, 5
      %v5457 = vsel %vm1069, %v5452, %v5456
      %v5458 = vshrl.u32 %v5397, 16
      %v5460 = vrot.slane %v5458, 4
      %v5461 = vor.u32 %v5460, %v5456
      %v5462 = vrot.slane %v5461, 4
      %v5464 = vshll.u32 %v5398, 16
      %v5466 = vrot.slane %v5464, 5
      %v5467 = vsel %vm1069, %v5462, %v5466
      %v5469 = vshrl.u32 %v5399, 16
      %v5471 = vrot.slane %v5469, 4
      %v5472 = vshll.u32 %v5399, 16
      %v5474 = vrot.slane %v5472, 5
      %v5475 = vor.u32 %v5471, %v5474
      %v5476 = vrot.slane %v5475, 4
      %v5478 = vshll.u32 %v5400, 16
      %v5480 = vrot.slane %v5478, 5
      %v5481 = vsel %vm1069, %v5476, %v5480
      %v5482 = vshrl.u32 %v5400, 16
      %v5484 = vrot.slane %v5482, 4
      %v5485 = vor.u32 %v5484, %v5480
      %v5486 = vrot.slane %v5485, 4
      %v5488 = vshll.u32 %v5401, 16
      %v5490 = vrot.slane %v5488, 5
      %v5491 = vsel %vm1069, %v5486, %v5490
      %v5493 = vshrl.u32 %v5402, 16
      %v5495 = vrot.slane %v5493, 4
      %v5496 = vshll.u32 %v5402, 16
      %v5498 = vrot.slane %v5496, 5
      %v5499 = vor.u32 %v5495, %v5498
      %v5500 = vrot.slane %v5499, 4
      %v5502 = vshll.u32 %v5403, 16
      %v5504 = vrot.slane %v5502, 5
      %v5505 = vsel %vm1069, %v5500, %v5504
      %v5506 = vshrl.u32 %v5403, 16
      %v5508 = vrot.slane %v5506, 4
      %v5509 = vor.u32 %v5508, %v5504
      %v5510 = vrot.slane %v5509, 4
      %v5512 = vshll.u32 %v5404, 16
      %v5514 = vrot.slane %v5512, 5
      %v5515 = vsel %vm1069, %v5510, %v5514
      %v5517 = vshrl.u32 %v5405, 16
      %v5519 = vrot.slane %v5517, 4
      %v5520 = vshll.u32 %v5405, 16
      %v5522 = vrot.slane %v5520, 5
      %v5523 = vor.u32 %v5519, %v5522
      %v5524 = vrot.slane %v5523, 4
      %v5526 = vshll.u32 %v5406, 16
      %v5528 = vrot.slane %v5526, 5
      %v5529 = vsel %vm1069, %v5524, %v5528
      %v5530 = vshrl.u32 %v5406, 16
      %v5532 = vrot.slane %v5530, 4
      %v5533 = vor.u32 %v5532, %v5528
      %v5534 = vrot.slane %v5533, 4
      %v5536 = vshll.u32 %v5407, 16
      %v5538 = vrot.slane %v5536, 5
      %v5539 = vsel %vm1069, %v5534, %v5538
      %v5541 = vshrl.u32 %v5408, 16
      %v5543 = vrot.slane %v5541, 4
      %v5544 = vshll.u32 %v5408, 16
      %v5546 = vrot.slane %v5544, 5
      %v5547 = vor.u32 %v5543, %v5546
      %v5548 = vrot.slane %v5547, 4
      %v5550 = vshll.u32 %v5409, 16
      %v5552 = vrot.slane %v5550, 5
      %v5553 = vsel %vm1069, %v5548, %v5552
      %v5554 = vshrl.u32 %v5409, 16
      %v5556 = vrot.slane %v5554, 4
      %v5557 = vor.u32 %v5556, %v5552
      %v5558 = vrot.slane %v5557, 4
      %v5560 = vshll.u32 %v5410, 16
      %v5562 = vrot.slane %v5560, 5
      %v5563 = vsel %vm1069, %v5558, %v5562
      %v5565 = vshrl.u32 %v5411, 16
      %v5567 = vrot.slane %v5565, 4
      %v5568 = vshll.u32 %v5411, 16
      %v5570 = vrot.slane %v5568, 5
      %v5571 = vor.u32 %v5567, %v5570
      %v5572 = vrot.slane %v5571, 4
      %v5574 = vshll.u32 %v5412, 16
      %v5576 = vrot.slane %v5574, 5
      %v5577 = vsel %vm1069, %v5572, %v5576
      %v5578 = vshrl.u32 %v5412, 16
      %v5580 = vrot.slane %v5578, 4
      %v5581 = vor.u32 %v5580, %v5576
      %v5582 = vrot.slane %v5581, 4
      %v5584 = vshll.u32 %v5413, 16
      %v5586 = vrot.slane %v5584, 5
      %v5587 = vsel %vm1069, %v5582, %v5586
      %v5589 = vshrl.u32 %v5414, 16
      %v5591 = vrot.slane %v5589, 4
      %v5592 = vshll.u32 %v5414, 16
      %v5594 = vrot.slane %v5592, 5
      %v5595 = vor.u32 %v5591, %v5594
      %v5596 = vrot.slane %v5595, 4
      %v5598 = vshll.u32 %v5415, 16
      %v5600 = vrot.slane %v5598, 5
      %v5601 = vsel %vm1069, %v5596, %v5600
      %v5602 = vshrl.u32 %v5415, 16
      %v5604 = vrot.slane %v5602, 4
      %v5605 = vor.u32 %v5604, %v5600
      %v5606 = vrot.slane %v5605, 4
      %v5608 = vshll.u32 %v5416, 16
      %v5610 = vrot.slane %v5608, 5
      %v5611 = vsel %vm1069, %v5606, %v5610
      %v5613 = vshrl.u32 %v5417, 16
      %v5615 = vrot.slane %v5613, 4
      %v5616 = vshll.u32 %v5417, 16
      %v5618 = vrot.slane %v5616, 5
      %v5619 = vor.u32 %v5615, %v5618
      %v5620 = vrot.slane %v5619, 4
      %v5622 = vshll.u32 %v5418, 16
      %v5624 = vrot.slane %v5622, 5
      %v5625 = vsel %vm1069, %v5620, %v5624
      %v5626 = vshrl.u32 %v5418, 16
      %v5628 = vrot.slane %v5626, 4
      %v5629 = vor.u32 %v5628, %v5624
      %v5630 = vrot.slane %v5629, 4
      %v5632 = vshll.u32 %v5419, 16
      %v5634 = vrot.slane %v5632, 5
      %v5635 = vsel %vm1069, %v5630, %v5634
      %v5637 = vshrl.u32 %v5420, 16
      %v5639 = vrot.slane %v5637, 4
      %v5640 = vshll.u32 %v5420, 16
      %v5642 = vrot.slane %v5640, 5
      %v5643 = vor.u32 %v5639, %v5642
      %v5644 = vrot.slane %v5643, 4
      %v5646 = vshll.u32 %v5421, 16
      %v5648 = vrot.slane %v5646, 5
      %v5649 = vsel %vm1069, %v5644, %v5648
      %v5650 = vshrl.u32 %v5421, 16
      %v5652 = vrot.slane %v5650, 4
      %v5653 = vor.u32 %v5652, %v5648
      %v5654 = vrot.slane %v5653, 4
      %v5656 = vshll.u32 %v5422, 16
      %v5658 = vrot.slane %v5656, 5
      %v5659 = vsel %vm1069, %v5654, %v5658
      %v5661 = vshrl.u32 %v5423, 16
      %v5663 = vrot.slane %v5661, 4
      %v5664 = vshll.u32 %v5423, 16
      %v5666 = vrot.slane %v5664, 5
      %v5667 = vor.u32 %v5663, %v5666
      %v5668 = vrot.slane %v5667, 4
      %v5670 = vshll.u32 %v5424, 16
      %v5672 = vrot.slane %v5670, 5
      %v5673 = vsel %vm1069, %v5668, %v5672
      %v5674 = vshrl.u32 %v5424, 16
      %v5676 = vrot.slane %v5674, 4
      %v5677 = vor.u32 %v5676, %v5672
      %v5678 = vrot.slane %v5677, 4
      %v5680 = vshll.u32 %v5425, 16
      %v5682 = vrot.slane %v5680, 5
      %v5683 = vsel %vm1069, %v5678, %v5682
      %v5685 = vshrl.u32 %v5426, 16
      %v5687 = vrot.slane %v5685, 4
      %v5688 = vshll.u32 %v5426, 16
      %v5690 = vrot.slane %v5688, 5
      %v5691 = vor.u32 %v5687, %v5690
      %v5692 = vrot.slane %v5691, 4
      %v5694 = vshll.u32 %v5427, 16
      %v5696 = vrot.slane %v5694, 5
      %v5697 = vsel %vm1069, %v5692, %v5696
      %v5698 = vshrl.u32 %v5427, 16
      %v5700 = vrot.slane %v5698, 4
      %v5701 = vor.u32 %v5700, %v5696
      %v5702 = vrot.slane %v5701, 4
      %v5704 = vshll.u32 %v5428, 16
      %v5706 = vrot.slane %v5704, 5
      %v5707 = vsel %vm1069, %v5702, %v5706
      %v5709 = vshrl.u32 %v5429, 16
      %v5711 = vrot.slane %v5709, 4
      %v5712 = vshll.u32 %v5429, 16
      %v5714 = vrot.slane %v5712, 5
      %v5715 = vor.u32 %v5711, %v5714
      %v5716 = vrot.slane %v5715, 4
      %v5718 = vshll.u32 %v5430, 16
      %v5720 = vrot.slane %v5718, 5
      %v5721 = vsel %vm1069, %v5716, %v5720
      %v5722 = vshrl.u32 %v5430, 16
      %v5724 = vrot.slane %v5722, 4
      %v5725 = vor.u32 %v5724, %v5720
      %v5726 = vrot.slane %v5725, 4
      %v5728 = vshll.u32 %v5431, 16
      %v5730 = vrot.slane %v5728, 5
      %v5731 = vsel %vm1069, %v5726, %v5730
      %v5733 = vshrl.u32 %v5432, 16
      %v5735 = vrot.slane %v5733, 4
      %v5736 = vshll.u32 %v5432, 16
      %v5738 = vrot.slane %v5736, 5
      %v5739 = vor.u32 %v5735, %v5738
      %v5740 = vrot.slane %v5739, 4
      %v5742 = vshll.u32 %v5433, 16
      %v5744 = vrot.slane %v5742, 5
      %v5745 = vsel %vm1069, %v5740, %v5744
      %v5746 = vshrl.u32 %v5433, 16
      %v5748 = vrot.slane %v5746, 4
      %v5749 = vor.u32 %v5748, %v5744
      %v5750 = vrot.slane %v5749, 4
      %v5752 = vshll.u32 %v5434, 16
      %v5754 = vrot.slane %v5752, 5
      %v5755 = vsel %vm1069, %v5750, %v5754
      %v5757 = vshrl.u32 %v5435, 16
      %v5759 = vrot.slane %v5757, 4
      %v5760 = vshll.u32 %v5435, 16
      %v5762 = vrot.slane %v5760, 5
      %v5763 = vor.u32 %v5759, %v5762
      %v5764 = vrot.slane %v5763, 4
      %v5766 = vshll.u32 %v5436, 16
      %v5768 = vrot.slane %v5766, 5
      %v5769 = vsel %vm1069, %v5764, %v5768
      %v5770 = vshrl.u32 %v5436, 16
      %v5772 = vrot.slane %v5770, 4
      %v5773 = vor.u32 %v5772, %v5768
      %v5774 = vrot.slane %v5773, 4
      %v5776 = vshll.u32 %v5437, 16
      %v5778 = vrot.slane %v5776, 5
      %v5779 = vsel %vm1069, %v5774, %v5778
      %v5781 = vshrl.u32 %v5438, 16
      %v5783 = vrot.slane %v5781, 4
      %v5784 = vshll.u32 %v5438, 16
      %v5786 = vrot.slane %v5784, 5
      %v5787 = vor.u32 %v5783, %v5786
      %v5788 = vrot.slane %v5787, 4
      %v5790 = vshll.u32 %v5439, 16
      %v5792 = vrot.slane %v5790, 5
      %v5793 = vsel %vm1069, %v5788, %v5792
      %v5794 = vshrl.u32 %v5439, 16
      %v5796 = vrot.slane %v5794, 4
      %v5797 = vor.u32 %v5796, %v5792
      %v5798 = vrot.slane %v5797, 4
      %v5800 = vshll.u32 %v5440, 16
      %v5802 = vrot.slane %v5800, 5
      %v5803 = vsel %vm1069, %v5798, %v5802
      %v5805 = vshrl.u32 %v5441, 16
      %v5807 = vrot.slane %v5805, 4
      %v5808 = vshll.u32 %v5441, 16
      %v5810 = vrot.slane %v5808, 5
      %v5811 = vor.u32 %v5807, %v5810
      %v5812 = vrot.slane %v5811, 4
      %v5814 = vshll.u32 %v5442, 16
      %v5816 = vrot.slane %v5814, 5
      %v5817 = vsel %vm1069, %v5812, %v5816
      %v5818 = vshrl.u32 %v5442, 16
      %v5820 = vrot.slane %v5818, 4
      %v5821 = vor.u32 %v5820, %v5816
      %v5822 = vrot.slane %v5821, 4
      %v5824 = vshll.u32 %v5443, 16
      %v5826 = vrot.slane %v5824, 5
      %v5827 = vsel %vm1069, %v5822, %v5826
      %5828 = vrot.lane.b32.xlu0 %v5457, 4
      %v5829 = vpop.permute.xlu0 %5828
      %5830 = vrot.lane.b32.xlu0 %v5467, 4
      %v5831 = vpop.permute.xlu0 %5830
      %5832 = vrot.lane.b32.xlu0 %v5481, 4
      %v5833 = vpop.permute.xlu0 %5832
      %5834 = vrot.lane.b32.xlu0 %v5491, 4
      %v5835 = vpop.permute.xlu0 %5834
      %5836 = vrot.lane.b32.xlu0 %v5505, 4
      %v5837 = vpop.permute.xlu0 %5836
      %5838 = vrot.lane.b32.xlu0 %v5515, 4
      %v5839 = vpop.permute.xlu0 %5838
      %5840 = vrot.lane.b32.xlu0 %v5529, 4
      %v5841 = vpop.permute.xlu0 %5840
      %5842 = vrot.lane.b32.xlu0 %v5539, 4
      %v5843 = vpop.permute.xlu0 %5842
      %5844 = vrot.lane.b32.xlu0 %v5553, 4
      %v5845 = vpop.permute.xlu0 %5844
      %5846 = vrot.lane.b32.xlu0 %v5563, 4
      %v5847 = vpop.permute.xlu0 %5846
      %5848 = vrot.lane.b32.xlu0 %v5577, 4
      %v5849 = vpop.permute.xlu0 %5848
      %5850 = vrot.lane.b32.xlu0 %v5587, 4
      %v5851 = vpop.permute.xlu0 %5850
      %5852 = vrot.lane.b32.xlu0 %v5601, 4
      %v5853 = vpop.permute.xlu0 %5852
      %5854 = vrot.lane.b32.xlu0 %v5611, 4
      %v5855 = vpop.permute.xlu0 %5854
      %5856 = vrot.lane.b32.xlu0 %v5625, 4
      %v5857 = vpop.permute.xlu0 %5856
      %5858 = vrot.lane.b32.xlu0 %v5635, 4
      %v5859 = vpop.permute.xlu0 %5858
      %5860 = vrot.lane.b32.xlu0 %v5649, 4
      %v5861 = vpop.permute.xlu0 %5860
      %5862 = vrot.lane.b32.xlu0 %v5659, 4
      %v5863 = vpop.permute.xlu0 %5862
      %5864 = vrot.lane.b32.xlu0 %v5673, 4
      %v5865 = vpop.permute.xlu0 %5864
      %5866 = vrot.lane.b32.xlu0 %v5683, 4
      %v5867 = vpop.permute.xlu0 %5866
      %5868 = vrot.lane.b32.xlu0 %v5697, 4
      %v5869 = vpop.permute.xlu0 %5868
      %5870 = vrot.lane.b32.xlu0 %v5707, 4
      %v5871 = vpop.permute.xlu0 %5870
      %5872 = vrot.lane.b32.xlu0 %v5721, 4
      %v5873 = vpop.permute.xlu0 %5872
      %5874 = vrot.lane.b32.xlu0 %v5731, 4
      %v5875 = vpop.permute.xlu0 %5874
      %5876 = vrot.lane.b32.xlu0 %v5745, 4
      %v5877 = vpop.permute.xlu0 %5876
      %5878 = vrot.lane.b32.xlu0 %v5755, 4
      %v5879 = vpop.permute.xlu0 %5878
      %5880 = vrot.lane.b32.xlu0 %v5769, 4
      %v5881 = vpop.permute.xlu0 %5880
      %5882 = vrot.lane.b32.xlu0 %v5779, 4
      %v5883 = vpop.permute.xlu0 %5882
      %5884 = vrot.lane.b32.xlu0 %v5793, 4
      %v5885 = vpop.permute.xlu0 %5884
      %5886 = vrot.lane.b32.xlu0 %v5803, 4
      %v5887 = vpop.permute.xlu0 %5886
      %5888 = vrot.lane.b32.xlu0 %v5817, 4
      %v5889 = vpop.permute.xlu0 %5888
      %5890 = vrot.lane.b32.xlu0 %v5827, 4
      %v5891 = vpop.permute.xlu0 %5890
      %5924 = vst.msk [vmem:[#allocation3] sm:$0xf] %vm1550, %v5829
      %5925 = vst.msk [vmem:[#allocation3 + $0x4] sm:$0xf] %vm1550, %v5831
      %5926 = vst.msk [vmem:[#allocation3 + $0x8] sm:$0xf] %vm1550, %v5833
      %5927 = vst.msk [vmem:[#allocation3 + $0xc] sm:$0xf] %vm1550, %v5835
      %5928 = vst.msk [vmem:[#allocation3 + $0x10] sm:$0xf] %vm1550, %v5837
      %5929 = vst.msk [vmem:[#allocation3 + $0x14] sm:$0xf] %vm1550, %v5839
      %5930 = vst.msk [vmem:[#allocation3 + $0x18] sm:$0xf] %vm1550, %v5841
      %5931 = vst.msk [vmem:[#allocation3 + $0x1c] sm:$0xf] %vm1550, %v5843
      %5932 = vst.msk [vmem:[#allocation3 + $0x20] sm:$0xf] %vm1550, %v5845
      %5933 = vst.msk [vmem:[#allocation3 + $0x24] sm:$0xf] %vm1550, %v5847
      %5934 = vst.msk [vmem:[#allocation3 + $0x28] sm:$0xf] %vm1550, %v5849
      %5935 = vst.msk [vmem:[#allocation3 + $0x2c] sm:$0xf] %vm1550, %v5851
      %5936 = vst.msk [vmem:[#allocation3 + $0x30] sm:$0xf] %vm1550, %v5853
      %5937 = vst.msk [vmem:[#allocation3 + $0x34] sm:$0xf] %vm1550, %v5855
      %5938 = vst.msk [vmem:[#allocation3 + $0x38] sm:$0xf] %vm1550, %v5857
      %5939 = vst.msk [vmem:[#allocation3 + $0x3c] sm:$0xf] %vm1550, %v5859
      %5940 = vst.msk [vmem:[#allocation3 + $0x40] sm:$0xf] %vm1550, %v5861
      %5941 = vst.msk [vmem:[#allocation3 + $0x44] sm:$0xf] %vm1550, %v5863
      %5942 = vst.msk [vmem:[#allocation3 + $0x48] sm:$0xf] %vm1550, %v5865
      %5943 = vst.msk [vmem:[#allocation3 + $0x4c] sm:$0xf] %vm1550, %v5867
      %5944 = vst.msk [vmem:[#allocation3 + $0x50] sm:$0xf] %vm1550, %v5869
      %5945 = vst.msk [vmem:[#allocation3 + $0x54] sm:$0xf] %vm1550, %v5871
      %5946 = vst.msk [vmem:[#allocation3 + $0x58] sm:$0xf] %vm1550, %v5873
      %5947 = vst.msk [vmem:[#allocation3 + $0x5c] sm:$0xf] %vm1550, %v5875
      %5948 = vst.msk [vmem:[#allocation3 + $0x60] sm:$0xf] %vm1550, %v5877
      %5949 = vst.msk [vmem:[#allocation3 + $0x64] sm:$0xf] %vm1550, %v5879
      %5950 = vst.msk [vmem:[#allocation3 + $0x68] sm:$0xf] %vm1550, %v5881
      %5951 = vst.msk [vmem:[#allocation3 + $0x6c] sm:$0xf] %vm1550, %v5883
      %5952 = vst.msk [vmem:[#allocation3 + $0x70] sm:$0xf] %vm1550, %v5885
      %5953 = vst.msk [vmem:[#allocation3 + $0x74] sm:$0xf] %vm1550, %v5887
      %5954 = vst.msk [vmem:[#allocation3 + $0x78] sm:$0xf] %vm1550, %v5889
      %5955 = vst.msk [vmem:[#allocation3 + $0x7c] sm:$0xf] %vm1550, %v5891
      %v5956 = vld [vmem:[#allocation2] sm:$0xe]
      %v5957 = vld [vmem:[#allocation2 + $0x4] sm:$0xf]
      %v5958 = vld [vmem:[#allocation2 + $0x8] sm:$0x1]
      %v5959 = vld [vmem:[#allocation2 + $0xc] sm:$0xe]
      %v5960 = vld [vmem:[#allocation2 + $0x10] sm:$0xf]
      %v5961 = vld [vmem:[#allocation2 + $0x14] sm:$0x1]
      %v5962 = vld [vmem:[#allocation2 + $0x18] sm:$0xe]
      %v5963 = vld [vmem:[#allocation2 + $0x1c] sm:$0xf]
      %v5964 = vld [vmem:[#allocation2 + $0x20] sm:$0x1]
      %v5965 = vld [vmem:[#allocation2 + $0x24] sm:$0xe]
      %v5966 = vld [vmem:[#allocation2 + $0x28] sm:$0xf]
      %v5967 = vld [vmem:[#allocation2 + $0x2c] sm:$0x1]
      %v5968 = vld [vmem:[#allocation2 + $0x30] sm:$0xe]
      %v5969 = vld [vmem:[#allocation2 + $0x34] sm:$0xf]
      %v5970 = vld [vmem:[#allocation2 + $0x38] sm:$0x1]
      %v5971 = vld [vmem:[#allocation2 + $0x3c] sm:$0xe]
      %v5972 = vld [vmem:[#allocation2 + $0x40] sm:$0xf]
      %v5973 = vld [vmem:[#allocation2 + $0x44] sm:$0x1]
      %v5974 = vld [vmem:[#allocation2 + $0x48] sm:$0xe]
      %v5975 = vld [vmem:[#allocation2 + $0x4c] sm:$0xf]
      %v5976 = vld [vmem:[#allocation2 + $0x50] sm:$0x1]
      %v5977 = vld [vmem:[#allocation2 + $0x54] sm:$0xe]
      %v5978 = vld [vmem:[#allocation2 + $0x58] sm:$0xf]
      %v5979 = vld [vmem:[#allocation2 + $0x5c] sm:$0x1]
      %v5980 = vld [vmem:[#allocation2 + $0x60] sm:$0xe]
      %v5981 = vld [vmem:[#allocation2 + $0x64] sm:$0xf]
      %v5982 = vld [vmem:[#allocation2 + $0x68] sm:$0x1]
      %v5983 = vld [vmem:[#allocation2 + $0x6c] sm:$0xe]
      %v5984 = vld [vmem:[#allocation2 + $0x70] sm:$0xf]
      %v5985 = vld [vmem:[#allocation2 + $0x74] sm:$0x1]
      %v5986 = vld [vmem:[#allocation2 + $0x78] sm:$0xe]
      %v5987 = vld [vmem:[#allocation2 + $0x7c] sm:$0xf]
      %v5988 = vld [vmem:[#allocation2 + $0x80] sm:$0x1]
      %v5989 = vld [vmem:[#allocation2 + $0x84] sm:$0xe]
      %v5990 = vld [vmem:[#allocation2 + $0x88] sm:$0xf]
      %v5991 = vld [vmem:[#allocation2 + $0x8c] sm:$0x1]
      %v5992 = vld [vmem:[#allocation2 + $0x90] sm:$0xe]
      %v5993 = vld [vmem:[#allocation2 + $0x94] sm:$0xf]
      %v5994 = vld [vmem:[#allocation2 + $0x98] sm:$0x1]
      %v5995 = vld [vmem:[#allocation2 + $0x9c] sm:$0xe]
      %v5996 = vld [vmem:[#allocation2 + $0xa0] sm:$0xf]
      %v5997 = vld [vmem:[#allocation2 + $0xa4] sm:$0x1]
      %v5998 = vld [vmem:[#allocation2 + $0xa8] sm:$0xe]
      %v5999 = vld [vmem:[#allocation2 + $0xac] sm:$0xf]
      %v6000 = vld [vmem:[#allocation2 + $0xb0] sm:$0x1]
      %v6001 = vld [vmem:[#allocation2 + $0xb4] sm:$0xe]
      %v6002 = vld [vmem:[#allocation2 + $0xb8] sm:$0xf]
      %v6003 = vld [vmem:[#allocation2 + $0xbc] sm:$0x1]
      %v6052 = vrot.slane %v5956, 5
      %v6053 = vrot.slane %v6052, 4
      %v6054 = vrot.slane %v5957, 5
      %v6055 = vsel %vm1681, %v6053, %v6054
      %v6056 = vrot.slane %v6054, 4
      %v6057 = vrot.slane %v5958, 5
      %v6058 = vsel %vm1681, %v6056, %v6057
      %v6059 = vrot.slane %v5959, 5
      %v6060 = vrot.slane %v6059, 4
      %v6061 = vrot.slane %v5960, 5
      %v6062 = vsel %vm1681, %v6060, %v6061
      %v6063 = vrot.slane %v6061, 4
      %v6064 = vrot.slane %v5961, 5
      %v6065 = vsel %vm1681, %v6063, %v6064
      %v6066 = vrot.slane %v5962, 5
      %v6067 = vrot.slane %v6066, 4
      %v6068 = vrot.slane %v5963, 5
      %v6069 = vsel %vm1681, %v6067, %v6068
      %v6070 = vrot.slane %v6068, 4
      %v6071 = vrot.slane %v5964, 5
      %v6072 = vsel %vm1681, %v6070, %v6071
      %v6073 = vrot.slane %v5965, 5
      %v6074 = vrot.slane %v6073, 4
      %v6075 = vrot.slane %v5966, 5
      %v6076 = vsel %vm1681, %v6074, %v6075
      %v6077 = vrot.slane %v6075, 4
      %v6078 = vrot.slane %v5967, 5
      %v6079 = vsel %vm1681, %v6077, %v6078
      %v6080 = vrot.slane %v5968, 5
      %v6081 = vrot.slane %v6080, 4
      %v6082 = vrot.slane %v5969, 5
      %v6083 = vsel %vm1681, %v6081, %v6082
      %v6084 = vrot.slane %v6082, 4
      %v6085 = vrot.slane %v5970, 5
      %v6086 = vsel %vm1681, %v6084, %v6085
      %v6087 = vrot.slane %v5971, 5
      %v6088 = vrot.slane %v6087, 4
      %v6089 = vrot.slane %v5972, 5
      %v6090 = vsel %vm1681, %v6088, %v6089
      %v6091 = vrot.slane %v6089, 4
      %v6092 = vrot.slane %v5973, 5
      %v6093 = vsel %vm1681, %v6091, %v6092
      %v6094 = vrot.slane %v5974, 5
      %v6095 = vrot.slane %v6094, 4
      %v6096 = vrot.slane %v5975, 5
      %v6097 = vsel %vm1681, %v6095, %v6096
      %v6098 = vrot.slane %v6096, 4
      %v6099 = vrot.slane %v5976, 5
      %v6100 = vsel %vm1681, %v6098, %v6099
      %v6101 = vrot.slane %v5977, 5
      %v6102 = vrot.slane %v6101, 4
      %v6103 = vrot.slane %v5978, 5
      %v6104 = vsel %vm1681, %v6102, %v6103
      %v6105 = vrot.slane %v6103, 4
      %v6106 = vrot.slane %v5979, 5
      %v6107 = vsel %vm1681, %v6105, %v6106
      %v6108 = vrot.slane %v5980, 5
      %v6109 = vrot.slane %v6108, 4
      %v6110 = vrot.slane %v5981, 5
      %v6111 = vsel %vm1681, %v6109, %v6110
      %v6112 = vrot.slane %v6110, 4
      %v6113 = vrot.slane %v5982, 5
      %v6114 = vsel %vm1681, %v6112, %v6113
      %v6115 = vrot.slane %v5983, 5
      %v6116 = vrot.slane %v6115, 4
      %v6117 = vrot.slane %v5984, 5
      %v6118 = vsel %vm1681, %v6116, %v6117
      %v6119 = vrot.slane %v6117, 4
      %v6120 = vrot.slane %v5985, 5
      %v6121 = vsel %vm1681, %v6119, %v6120
      %v6122 = vrot.slane %v5986, 5
      %v6123 = vrot.slane %v6122, 4
      %v6124 = vrot.slane %v5987, 5
      %v6125 = vsel %vm1681, %v6123, %v6124
      %v6126 = vrot.slane %v6124, 4
      %v6127 = vrot.slane %v5988, 5
      %v6128 = vsel %vm1681, %v6126, %v6127
      %v6129 = vrot.slane %v5989, 5
      %v6130 = vrot.slane %v6129, 4
      %v6131 = vrot.slane %v5990, 5
      %v6132 = vsel %vm1681, %v6130, %v6131
      %v6133 = vrot.slane %v6131, 4
      %v6134 = vrot.slane %v5991, 5
      %v6135 = vsel %vm1681, %v6133, %v6134
      %v6136 = vrot.slane %v5992, 5
      %v6137 = vrot.slane %v6136, 4
      %v6138 = vrot.slane %v5993, 5
      %v6139 = vsel %vm1681, %v6137, %v6138
      %v6140 = vrot.slane %v6138, 4
      %v6141 = vrot.slane %v5994, 5
      %v6142 = vsel %vm1681, %v6140, %v6141
      %v6143 = vrot.slane %v5995, 5
      %v6144 = vrot.slane %v6143, 4
      %v6145 = vrot.slane %v5996, 5
      %v6146 = vsel %vm1681, %v6144, %v6145
      %v6147 = vrot.slane %v6145, 4
      %v6148 = vrot.slane %v5997, 5
      %v6149 = vsel %vm1681, %v6147, %v6148
      %v6150 = vrot.slane %v5998, 5
      %v6151 = vrot.slane %v6150, 4
      %v6152 = vrot.slane %v5999, 5
      %v6153 = vsel %vm1681, %v6151, %v6152
      %v6154 = vrot.slane %v6152, 4
      %v6155 = vrot.slane %v6000, 5
      %v6156 = vsel %vm1681, %v6154, %v6155
      %v6157 = vrot.slane %v6001, 5
      %v6158 = vrot.slane %v6157, 4
      %v6159 = vrot.slane %v6002, 5
      %v6160 = vsel %vm1681, %v6158, %v6159
      %v6161 = vrot.slane %v6159, 4
      %v6162 = vrot.slane %v6003, 5
      %v6163 = vsel %vm1681, %v6161, %v6162
      %6164 = vrot.lane.b32.xlu0 %v6055, 8
      %v6165 = vpop.permute.xlu0 %6164
      %6166 = vrot.lane.b32.xlu0 %v6058, 8
      %v6167 = vpop.permute.xlu0 %6166
      %6168 = vrot.lane.b32.xlu0 %v6062, 8
      %v6169 = vpop.permute.xlu0 %6168
      %6170 = vrot.lane.b32.xlu0 %v6065, 8
      %v6171 = vpop.permute.xlu0 %6170
      %6172 = vrot.lane.b32.xlu0 %v6069, 8
      %v6173 = vpop.permute.xlu0 %6172
      %6174 = vrot.lane.b32.xlu0 %v6072, 8
      %v6175 = vpop.permute.xlu0 %6174
      %6176 = vrot.lane.b32.xlu0 %v6076, 8
      %v6177 = vpop.permute.xlu0 %6176
      %6178 = vrot.lane.b32.xlu0 %v6079, 8
      %v6179 = vpop.permute.xlu0 %6178
      %6180 = vrot.lane.b32.xlu0 %v6083, 8
      %v6181 = vpop.permute.xlu0 %6180
      %6182 = vrot.lane.b32.xlu0 %v6086, 8
      %v6183 = vpop.permute.xlu0 %6182
      %6184 = vrot.lane.b32.xlu0 %v6090, 8
      %v6185 = vpop.permute.xlu0 %6184
      %6186 = vrot.lane.b32.xlu0 %v6093, 8
      %v6187 = vpop.permute.xlu0 %6186
      %6188 = vrot.lane.b32.xlu0 %v6097, 8
      %v6189 = vpop.permute.xlu0 %6188
      %6190 = vrot.lane.b32.xlu0 %v6100, 8
      %v6191 = vpop.permute.xlu0 %6190
      %6192 = vrot.lane.b32.xlu0 %v6104, 8
      %v6193 = vpop.permute.xlu0 %6192
      %6194 = vrot.lane.b32.xlu0 %v6107, 8
      %v6195 = vpop.permute.xlu0 %6194
      %6196 = vrot.lane.b32.xlu0 %v6111, 8
      %v6197 = vpop.permute.xlu0 %6196
      %6198 = vrot.lane.b32.xlu0 %v6114, 8
      %v6199 = vpop.permute.xlu0 %6198
      %6200 = vrot.lane.b32.xlu0 %v6118, 8
      %v6201 = vpop.permute.xlu0 %6200
      %6202 = vrot.lane.b32.xlu0 %v6121, 8
      %v6203 = vpop.permute.xlu0 %6202
      %6204 = vrot.lane.b32.xlu0 %v6125, 8
      %v6205 = vpop.permute.xlu0 %6204
      %6206 = vrot.lane.b32.xlu0 %v6128, 8
      %v6207 = vpop.permute.xlu0 %6206
      %6208 = vrot.lane.b32.xlu0 %v6132, 8
      %v6209 = vpop.permute.xlu0 %6208
      %6210 = vrot.lane.b32.xlu0 %v6135, 8
      %v6211 = vpop.permute.xlu0 %6210
      %6212 = vrot.lane.b32.xlu0 %v6139, 8
      %v6213 = vpop.permute.xlu0 %6212
      %6214 = vrot.lane.b32.xlu0 %v6142, 8
      %v6215 = vpop.permute.xlu0 %6214
      %6216 = vrot.lane.b32.xlu0 %v6146, 8
      %v6217 = vpop.permute.xlu0 %6216
      %6218 = vrot.lane.b32.xlu0 %v6149, 8
      %v6219 = vpop.permute.xlu0 %6218
      %6220 = vrot.lane.b32.xlu0 %v6153, 8
      %v6221 = vpop.permute.xlu0 %6220
      %6222 = vrot.lane.b32.xlu0 %v6156, 8
      %v6223 = vpop.permute.xlu0 %6222
      %6224 = vrot.lane.b32.xlu0 %v6160, 8
      %v6225 = vpop.permute.xlu0 %6224
      %6226 = vrot.lane.b32.xlu0 %v6163, 8
      %v6227 = vpop.permute.xlu0 %6226
      %6260 = vst.msk [vmem:[#allocation3] sm:$0xf] %vm1890, %v6165
      %6261 = vst.msk [vmem:[#allocation3 + $0x4] sm:$0xf] %vm1890, %v6167
      %6262 = vst.msk [vmem:[#allocation3 + $0x8] sm:$0xf] %vm1890, %v6169
      %6263 = vst.msk [vmem:[#allocation3 + $0xc] sm:$0xf] %vm1890, %v6171
      %6264 = vst.msk [vmem:[#allocation3 + $0x10] sm:$0xf] %vm1890, %v6173
      %6265 = vst.msk [vmem:[#allocation3 + $0x14] sm:$0xf] %vm1890, %v6175
      %6266 = vst.msk [vmem:[#allocation3 + $0x18] sm:$0xf] %vm1890, %v6177
      %6267 = vst.msk [vmem:[#allocation3 + $0x1c] sm:$0xf] %vm1890, %v6179
      %6268 = vst.msk [vmem:[#allocation3 + $0x20] sm:$0xf] %vm1890, %v6181
      %6269 = vst.msk [vmem:[#allocation3 + $0x24] sm:$0xf] %vm1890, %v6183
      %6270 = vst.msk [vmem:[#allocation3 + $0x28] sm:$0xf] %vm1890, %v6185
      %6271 = vst.msk [vmem:[#allocation3 + $0x2c] sm:$0xf] %vm1890, %v6187
      %6272 = vst.msk [vmem:[#allocation3 + $0x30] sm:$0xf] %vm1890, %v6189
      %6273 = vst.msk [vmem:[#allocation3 + $0x34] sm:$0xf] %vm1890, %v6191
      %6274 = vst.msk [vmem:[#allocation3 + $0x38] sm:$0xf] %vm1890, %v6193
      %6275 = vst.msk [vmem:[#allocation3 + $0x3c] sm:$0xf] %vm1890, %v6195
      %6276 = vst.msk [vmem:[#allocation3 + $0x40] sm:$0xf] %vm1890, %v6197
      %6277 = vst.msk [vmem:[#allocation3 + $0x44] sm:$0xf] %vm1890, %v6199
      %6278 = vst.msk [vmem:[#allocation3 + $0x48] sm:$0xf] %vm1890, %v6201
      %6279 = vst.msk [vmem:[#allocation3 + $0x4c] sm:$0xf] %vm1890, %v6203
      %6280 = vst.msk [vmem:[#allocation3 + $0x50] sm:$0xf] %vm1890, %v6205
      %6281 = vst.msk [vmem:[#allocation3 + $0x54] sm:$0xf] %vm1890, %v6207
      %6282 = vst.msk [vmem:[#allocation3 + $0x58] sm:$0xf] %vm1890, %v6209
      %6283 = vst.msk [vmem:[#allocation3 + $0x5c] sm:$0xf] %vm1890, %v6211
      %6284 = vst.msk [vmem:[#allocation3 + $0x60] sm:$0xf] %vm1890, %v6213
      %6285 = vst.msk [vmem:[#allocation3 + $0x64] sm:$0xf] %vm1890, %v6215
      %6286 = vst.msk [vmem:[#allocation3 + $0x68] sm:$0xf] %vm1890, %v6217
      %6287 = vst.msk [vmem:[#allocation3 + $0x6c] sm:$0xf] %vm1890, %v6219
      %6288 = vst.msk [vmem:[#allocation3 + $0x70] sm:$0xf] %vm1890, %v6221
      %6289 = vst.msk [vmem:[#allocation3 + $0x74] sm:$0xf] %vm1890, %v6223
      %6290 = vst.msk [vmem:[#allocation3 + $0x78] sm:$0xf] %vm1890, %v6225
      %6291 = vst.msk [vmem:[#allocation3 + $0x7c] sm:$0xf] %vm1890, %v6227
      %v6292 = vld [vmem:[%s289] sm:$0xf]
      %v6293 = vld [vmem:[%s289 + $0x4] sm:$0xf]
      %v6294 = vld [vmem:[%s289 + $0xc] sm:$0xf]
      %v6295 = vld [vmem:[%s289 + $0x10] sm:$0xf]
      %v6296 = vld [vmem:[%s289 + $0x18] sm:$0xf]
      %v6297 = vld [vmem:[%s289 + $0x1c] sm:$0xf]
      %v6298 = vld [vmem:[%s289 + $0x24] sm:$0xf]
      %v6299 = vld [vmem:[%s289 + $0x28] sm:$0xf]
      %v6300 = vld [vmem:[%s289 + $0x30] sm:$0xf]
      %v6301 = vld [vmem:[%s289 + $0x34] sm:$0xf]
      %v6302 = vld [vmem:[%s289 + $0x3c] sm:$0xf]
      %v6303 = vld [vmem:[%s289 + $0x40] sm:$0xf]
      %v6304 = vld [vmem:[%s289 + $0x48] sm:$0xf]
      %v6305 = vld [vmem:[%s289 + $0x4c] sm:$0xf]
      %v6306 = vld [vmem:[%s289 + $0x54] sm:$0xf]
      %v6307 = vld [vmem:[%s289 + $0x58] sm:$0xf]
      %v6308 = vld [vmem:[%s289 + $0x60] sm:$0xf]
      %v6309 = vld [vmem:[%s289 + $0x64] sm:$0xf]
      %v6310 = vld [vmem:[%s289 + $0x6c] sm:$0xf]
      %v6311 = vld [vmem:[%s289 + $0x70] sm:$0xf]
      %v6312 = vld [vmem:[%s289 + $0x78] sm:$0xf]
      %v6313 = vld [vmem:[%s289 + $0x7c] sm:$0xf]
      %v6314 = vld [vmem:[%s289 + $0x84] sm:$0xf]
      %v6315 = vld [vmem:[%s289 + $0x88] sm:$0xf]
      %v6316 = vld [vmem:[%s289 + $0x90] sm:$0xf]
      %v6317 = vld [vmem:[%s289 + $0x94] sm:$0xf]
      %v6318 = vld [vmem:[%s289 + $0x9c] sm:$0xf]
      %v6319 = vld [vmem:[%s289 + $0xa0] sm:$0xf]
      %v6320 = vld [vmem:[%s289 + $0xa8] sm:$0xf]
      %v6321 = vld [vmem:[%s289 + $0xac] sm:$0xf]
      %v6322 = vld [vmem:[%s289 + $0xb4] sm:$0xf]
      %v6323 = vld [vmem:[%s289 + $0xb8] sm:$0xf]
      %6356 = vrot.lane.b32.xlu0 %v6292, 12
      %v6357 = vpop.permute.xlu0 %6356
      %6358 = vrot.lane.b32.xlu0 %v6293, 12
      %v6359 = vpop.permute.xlu0 %6358
      %6360 = vrot.lane.b32.xlu0 %v6294, 12
      %v6361 = vpop.permute.xlu0 %6360
      %6362 = vrot.lane.b32.xlu0 %v6295, 12
      %v6363 = vpop.permute.xlu0 %6362
      %6364 = vrot.lane.b32.xlu0 %v6296, 12
      %v6365 = vpop.permute.xlu0 %6364
      %6366 = vrot.lane.b32.xlu0 %v6297, 12
      %v6367 = vpop.permute.xlu0 %6366
      %6368 = vrot.lane.b32.xlu0 %v6298, 12
      %v6369 = vpop.permute.xlu0 %6368
      %6370 = vrot.lane.b32.xlu0 %v6299, 12
      %v6371 = vpop.permute.xlu0 %6370
      %6372 = vrot.lane.b32.xlu0 %v6300, 12
      %v6373 = vpop.permute.xlu0 %6372
      %6374 = vrot.lane.b32.xlu0 %v6301, 12
      %v6375 = vpop.permute.xlu0 %6374
      %6376 = vrot.lane.b32.xlu0 %v6302, 12
      %v6377 = vpop.permute.xlu0 %6376
      %6378 = vrot.lane.b32.xlu0 %v6303, 12
      %v6379 = vpop.permute.xlu0 %6378
      %6380 = vrot.lane.b32.xlu0 %v6304, 12
      %v6381 = vpop.permute.xlu0 %6380
      %6382 = vrot.lane.b32.xlu0 %v6305, 12
      %v6383 = vpop.permute.xlu0 %6382
      %6384 = vrot.lane.b32.xlu0 %v6306, 12
      %v6385 = vpop.permute.xlu0 %6384
      %6386 = vrot.lane.b32.xlu0 %v6307, 12
      %v6387 = vpop.permute.xlu0 %6386
      %6388 = vrot.lane.b32.xlu0 %v6308, 12
      %v6389 = vpop.permute.xlu0 %6388
      %6390 = vrot.lane.b32.xlu0 %v6309, 12
      %v6391 = vpop.permute.xlu0 %6390
      %6392 = vrot.lane.b32.xlu0 %v6310, 12
      %v6393 = vpop.permute.xlu0 %6392
      %6394 = vrot.lane.b32.xlu0 %v6311, 12
      %v6395 = vpop.permute.xlu0 %6394
      %6396 = vrot.lane.b32.xlu0 %v6312, 12
      %v6397 = vpop.permute.xlu0 %6396
      %6398 = vrot.lane.b32.xlu0 %v6313, 12
      %v6399 = vpop.permute.xlu0 %6398
      %6400 = vrot.lane.b32.xlu0 %v6314, 12
      %v6401 = vpop.permute.xlu0 %6400
      %6402 = vrot.lane.b32.xlu0 %v6315, 12
      %v6403 = vpop.permute.xlu0 %6402
      %6404 = vrot.lane.b32.xlu0 %v6316, 12
      %v6405 = vpop.permute.xlu0 %6404
      %6406 = vrot.lane.b32.xlu0 %v6317, 12
      %v6407 = vpop.permute.xlu0 %6406
      %6408 = vrot.lane.b32.xlu0 %v6318, 12
      %v6409 = vpop.permute.xlu0 %6408
      %6410 = vrot.lane.b32.xlu0 %v6319, 12
      %v6411 = vpop.permute.xlu0 %6410
      %6412 = vrot.lane.b32.xlu0 %v6320, 12
      %v6413 = vpop.permute.xlu0 %6412
      %6414 = vrot.lane.b32.xlu0 %v6321, 12
      %v6415 = vpop.permute.xlu0 %6414
      %6416 = vrot.lane.b32.xlu0 %v6322, 12
      %v6417 = vpop.permute.xlu0 %6416
      %6418 = vrot.lane.b32.xlu0 %v6323, 12
      %v6419 = vpop.permute.xlu0 %6418
      %6452 = vst.msk [vmem:[#allocation3] sm:$0xf] %vm2083, %v6357
      %6453 = vst.msk [vmem:[#allocation3 + $0x4] sm:$0xf] %vm2083, %v6359
      %6454 = vst.msk [vmem:[#allocation3 + $0x8] sm:$0xf] %vm2083, %v6361
      %6455 = vst.msk [vmem:[#allocation3 + $0xc] sm:$0xf] %vm2083, %v6363
      %6456 = vst.msk [vmem:[#allocation3 + $0x10] sm:$0xf] %vm2083, %v6365
      %6457 = vst.msk [vmem:[#allocation3 + $0x14] sm:$0xf] %vm2083, %v6367
      %6458 = vst.msk [vmem:[#allocation3 + $0x18] sm:$0xf] %vm2083, %v6369
      %6459 = vst.msk [vmem:[#allocation3 + $0x1c] sm:$0xf] %vm2083, %v6371
      %6460 = vst.msk [vmem:[#allocation3 + $0x20] sm:$0xf] %vm2083, %v6373
      %6461 = vst.msk [vmem:[#allocation3 + $0x24] sm:$0xf] %vm2083, %v6375
      %6462 = vst.msk [vmem:[#allocation3 + $0x28] sm:$0xf] %vm2083, %v6377
      %6463 = vst.msk [vmem:[#allocation3 + $0x2c] sm:$0xf] %vm2083, %v6379
      %6464 = vst.msk [vmem:[#allocation3 + $0x30] sm:$0xf] %vm2083, %v6381
      %6465 = vst.msk [vmem:[#allocation3 + $0x34] sm:$0xf] %vm2083, %v6383
      %6466 = vst.msk [vmem:[#allocation3 + $0x38] sm:$0xf] %vm2083, %v6385
      %6467 = vst.msk [vmem:[#allocation3 + $0x3c] sm:$0xf] %vm2083, %v6387
      %6468 = vst.msk [vmem:[#allocation3 + $0x40] sm:$0xf] %vm2083, %v6389
      %6469 = vst.msk [vmem:[#allocation3 + $0x44] sm:$0xf] %vm2083, %v6391
      %6470 = vst.msk [vmem:[#allocation3 + $0x48] sm:$0xf] %vm2083, %v6393
      %6471 = vst.msk [vmem:[#allocation3 + $0x4c] sm:$0xf] %vm2083, %v6395
      %6472 = vst.msk [vmem:[#allocation3 + $0x50] sm:$0xf] %vm2083, %v6397
      %6473 = vst.msk [vmem:[#allocation3 + $0x54] sm:$0xf] %vm2083, %v6399
      %6474 = vst.msk [vmem:[#allocation3 + $0x58] sm:$0xf] %vm2083, %v6401
      %6475 = vst.msk [vmem:[#allocation3 + $0x5c] sm:$0xf] %vm2083, %v6403
      %6476 = vst.msk [vmem:[#allocation3 + $0x60] sm:$0xf] %vm2083, %v6405
      %6477 = vst.msk [vmem:[#allocation3 + $0x64] sm:$0xf] %vm2083, %v6407
      %6478 = vst.msk [vmem:[#allocation3 + $0x68] sm:$0xf] %vm2083, %v6409
      %6479 = vst.msk [vmem:[#allocation3 + $0x6c] sm:$0xf] %vm2083, %v6411
      %6480 = vst.msk [vmem:[#allocation3 + $0x70] sm:$0xf] %vm2083, %v6413
      %6481 = vst.msk [vmem:[#allocation3 + $0x74] sm:$0xf] %vm2083, %v6415
      %6482 = vst.msk [vmem:[#allocation3 + $0x78] sm:$0xf] %vm2083, %v6417
      %6483 = vst.msk [vmem:[#allocation3 + $0x7c] sm:$0xf] %vm2083, %v6419
      %v6484 = vld [vmem:[%s289] sm:$0xf]
      %v6485 = vld [vmem:[%s289 + $0x4] sm:$0xf]
      %v6486 = vld [vmem:[%s289 + $0x8] sm:$0x1]
      %v6487 = vld [vmem:[%s289 + $0xc] sm:$0xf]
      %v6488 = vld [vmem:[%s289 + $0x10] sm:$0xf]
      %v6489 = vld [vmem:[%s289 + $0x14] sm:$0x1]
      %v6490 = vld [vmem:[%s289 + $0x18] sm:$0xf]
      %v6491 = vld [vmem:[%s289 + $0x1c] sm:$0xf]
      %v6492 = vld [vmem:[%s289 + $0x20] sm:$0x1]
      %v6493 = vld [vmem:[%s289 + $0x24] sm:$0xf]
      %v6494 = vld [vmem:[%s289 + $0x28] sm:$0xf]
      %v6495 = vld [vmem:[%s289 + $0x2c] sm:$0x1]
      %v6496 = vld [vmem:[%s289 + $0x30] sm:$0xf]
      %v6497 = vld [vmem:[%s289 + $0x34] sm:$0xf]
      %v6498 = vld [vmem:[%s289 + $0x38] sm:$0x1]
      %v6499 = vld [vmem:[%s289 + $0x3c] sm:$0xf]
      %v6500 = vld [vmem:[%s289 + $0x40] sm:$0xf]
      %v6501 = vld [vmem:[%s289 + $0x44] sm:$0x1]
      %v6502 = vld [vmem:[%s289 + $0x48] sm:$0xf]
      %v6503 = vld [vmem:[%s289 + $0x4c] sm:$0xf]
      %v6504 = vld [vmem:[%s289 + $0x50] sm:$0x1]
      %v6505 = vld [vmem:[%s289 + $0x54] sm:$0xf]
      %v6506 = vld [vmem:[%s289 + $0x58] sm:$0xf]
      %v6507 = vld [vmem:[%s289 + $0x5c] sm:$0x1]
      %v6508 = vld [vmem:[%s289 + $0x60] sm:$0xf]
      %v6509 = vld [vmem:[%s289 + $0x64] sm:$0xf]
      %v6510 = vld [vmem:[%s289 + $0x68] sm:$0x1]
      %v6511 = vld [vmem:[%s289 + $0x6c] sm:$0xf]
      %v6512 = vld [vmem:[%s289 + $0x70] sm:$0xf]
      %v6513 = vld [vmem:[%s289 + $0x74] sm:$0x1]
      %v6514 = vld [vmem:[%s289 + $0x78] sm:$0xf]
      %v6515 = vld [vmem:[%s289 + $0x7c] sm:$0xf]
      %v6516 = vld [vmem:[%s289 + $0x80] sm:$0x1]
      %v6517 = vld [vmem:[%s289 + $0x84] sm:$0xf]
      %v6518 = vld [vmem:[%s289 + $0x88] sm:$0xf]
      %v6519 = vld [vmem:[%s289 + $0x8c] sm:$0x1]
      %v6520 = vld [vmem:[%s289 + $0x90] sm:$0xf]
      %v6521 = vld [vmem:[%s289 + $0x94] sm:$0xf]
      %v6522 = vld [vmem:[%s289 + $0x98] sm:$0x1]
      %v6523 = vld [vmem:[%s289 + $0x9c] sm:$0xf]
      %v6524 = vld [vmem:[%s289 + $0xa0] sm:$0xf]
      %v6525 = vld [vmem:[%s289 + $0xa4] sm:$0x1]
      %v6526 = vld [vmem:[%s289 + $0xa8] sm:$0xf]
      %v6527 = vld [vmem:[%s289 + $0xac] sm:$0xf]
      %v6528 = vld [vmem:[%s289 + $0xb0] sm:$0x1]
      %v6529 = vld [vmem:[%s289 + $0xb4] sm:$0xf]
      %v6530 = vld [vmem:[%s289 + $0xb8] sm:$0xf]
      %v6531 = vld [vmem:[%s289 + $0xbc] sm:$0x1]
      %v6533 = vshrl.u32 %v6484, 16
      %v6535 = vrot.slane %v6533, 4
      %v6536 = vshll.u32 %v6484, 16
      %v6538 = vrot.slane %v6536, 5
      %v6539 = vor.u32 %v6535, %v6538
      %v6540 = vrot.slane %v6539, 4
      %v6542 = vshll.u32 %v6485, 16
      %v6544 = vrot.slane %v6542, 5
      %v6545 = vsel %vm1069, %v6540, %v6544
      %v6546 = vshrl.u32 %v6485, 16
      %v6548 = vrot.slane %v6546, 4
      %v6549 = vor.u32 %v6548, %v6544
      %v6550 = vrot.slane %v6549, 4
      %v6552 = vshll.u32 %v6486, 16
      %v6554 = vrot.slane %v6552, 5
      %v6555 = vsel %vm1069, %v6550, %v6554
      %v6557 = vshrl.u32 %v6487, 16
      %v6559 = vrot.slane %v6557, 4
      %v6560 = vshll.u32 %v6487, 16
      %v6562 = vrot.slane %v6560, 5
      %v6563 = vor.u32 %v6559, %v6562
      %v6564 = vrot.slane %v6563, 4
      %v6566 = vshll.u32 %v6488, 16
      %v6568 = vrot.slane %v6566, 5
      %v6569 = vsel %vm1069, %v6564, %v6568
      %v6570 = vshrl.u32 %v6488, 16
      %v6572 = vrot.slane %v6570, 4
      %v6573 = vor.u32 %v6572, %v6568
      %v6574 = vrot.slane %v6573, 4
      %v6576 = vshll.u32 %v6489, 16
      %v6578 = vrot.slane %v6576, 5
      %v6579 = vsel %vm1069, %v6574, %v6578
      %v6581 = vshrl.u32 %v6490, 16
      %v6583 = vrot.slane %v6581, 4
      %v6584 = vshll.u32 %v6490, 16
      %v6586 = vrot.slane %v6584, 5
      %v6587 = vor.u32 %v6583, %v6586
      %v6588 = vrot.slane %v6587, 4
      %v6590 = vshll.u32 %v6491, 16
      %v6592 = vrot.slane %v6590, 5
      %v6593 = vsel %vm1069, %v6588, %v6592
      %v6594 = vshrl.u32 %v6491, 16
      %v6596 = vrot.slane %v6594, 4
      %v6597 = vor.u32 %v6596, %v6592
      %v6598 = vrot.slane %v6597, 4
      %v6600 = vshll.u32 %v6492, 16
      %v6602 = vrot.slane %v6600, 5
      %v6603 = vsel %vm1069, %v6598, %v6602
      %v6605 = vshrl.u32 %v6493, 16
      %v6607 = vrot.slane %v6605, 4
      %v6608 = vshll.u32 %v6493, 16
      %v6610 = vrot.slane %v6608, 5
      %v6611 = vor.u32 %v6607, %v6610
      %v6612 = vrot.slane %v6611, 4
      %v6614 = vshll.u32 %v6494, 16
      %v6616 = vrot.slane %v6614, 5
      %v6617 = vsel %vm1069, %v6612, %v6616
      %v6618 = vshrl.u32 %v6494, 16
      %v6620 = vrot.slane %v6618, 4
      %v6621 = vor.u32 %v6620, %v6616
      %v6622 = vrot.slane %v6621, 4
      %v6624 = vshll.u32 %v6495, 16
      %v6626 = vrot.slane %v6624, 5
      %v6627 = vsel %vm1069, %v6622, %v6626
      %v6629 = vshrl.u32 %v6496, 16
      %v6631 = vrot.slane %v6629, 4
      %v6632 = vshll.u32 %v6496, 16
      %v6634 = vrot.slane %v6632, 5
      %v6635 = vor.u32 %v6631, %v6634
      %v6636 = vrot.slane %v6635, 4
      %v6638 = vshll.u32 %v6497, 16
      %v6640 = vrot.slane %v6638, 5
      %v6641 = vsel %vm1069, %v6636, %v6640
      %v6642 = vshrl.u32 %v6497, 16
      %v6644 = vrot.slane %v6642, 4
      %v6645 = vor.u32 %v6644, %v6640
      %v6646 = vrot.slane %v6645, 4
      %v6648 = vshll.u32 %v6498, 16
      %v6650 = vrot.slane %v6648, 5
      %v6651 = vsel %vm1069, %v6646, %v6650
      %v6653 = vshrl.u32 %v6499, 16
      %v6655 = vrot.slane %v6653, 4
      %v6656 = vshll.u32 %v6499, 16
      %v6658 = vrot.slane %v6656, 5
      %v6659 = vor.u32 %v6655, %v6658
      %v6660 = vrot.slane %v6659, 4
      %v6662 = vshll.u32 %v6500, 16
      %v6664 = vrot.slane %v6662, 5
      %v6665 = vsel %vm1069, %v6660, %v6664
      %v6666 = vshrl.u32 %v6500, 16
      %v6668 = vrot.slane %v6666, 4
      %v6669 = vor.u32 %v6668, %v6664
      %v6670 = vrot.slane %v6669, 4
      %v6672 = vshll.u32 %v6501, 16
      %v6674 = vrot.slane %v6672, 5
      %v6675 = vsel %vm1069, %v6670, %v6674
      %v6677 = vshrl.u32 %v6502, 16
      %v6679 = vrot.slane %v6677, 4
      %v6680 = vshll.u32 %v6502, 16
      %v6682 = vrot.slane %v6680, 5
      %v6683 = vor.u32 %v6679, %v6682
      %v6684 = vrot.slane %v6683, 4
      %v6686 = vshll.u32 %v6503, 16
      %v6688 = vrot.slane %v6686, 5
      %v6689 = vsel %vm1069, %v6684, %v6688
      %v6690 = vshrl.u32 %v6503, 16
      %v6692 = vrot.slane %v6690, 4
      %v6693 = vor.u32 %v6692, %v6688
      %v6694 = vrot.slane %v6693, 4
      %v6696 = vshll.u32 %v6504, 16
      %v6698 = vrot.slane %v6696, 5
      %v6699 = vsel %vm1069, %v6694, %v6698
      %v6701 = vshrl.u32 %v6505, 16
      %v6703 = vrot.slane %v6701, 4
      %v6704 = vshll.u32 %v6505, 16
      %v6706 = vrot.slane %v6704, 5
      %v6707 = vor.u32 %v6703, %v6706
      %v6708 = vrot.slane %v6707, 4
      %v6710 = vshll.u32 %v6506, 16
      %v6712 = vrot.slane %v6710, 5
      %v6713 = vsel %vm1069, %v6708, %v6712
      %v6714 = vshrl.u32 %v6506, 16
      %v6716 = vrot.slane %v6714, 4
      %v6717 = vor.u32 %v6716, %v6712
      %v6718 = vrot.slane %v6717, 4
      %v6720 = vshll.u32 %v6507, 16
      %v6722 = vrot.slane %v6720, 5
      %v6723 = vsel %vm1069, %v6718, %v6722
      %v6725 = vshrl.u32 %v6508, 16
      %v6727 = vrot.slane %v6725, 4
      %v6728 = vshll.u32 %v6508, 16
      %v6730 = vrot.slane %v6728, 5
      %v6731 = vor.u32 %v6727, %v6730
      %v6732 = vrot.slane %v6731, 4
      %v6734 = vshll.u32 %v6509, 16
      %v6736 = vrot.slane %v6734, 5
      %v6737 = vsel %vm1069, %v6732, %v6736
      %v6738 = vshrl.u32 %v6509, 16
      %v6740 = vrot.slane %v6738, 4
      %v6741 = vor.u32 %v6740, %v6736
      %v6742 = vrot.slane %v6741, 4
      %v6744 = vshll.u32 %v6510, 16
      %v6746 = vrot.slane %v6744, 5
      %v6747 = vsel %vm1069, %v6742, %v6746
      %v6749 = vshrl.u32 %v6511, 16
      %v6751 = vrot.slane %v6749, 4
      %v6752 = vshll.u32 %v6511, 16
      %v6754 = vrot.slane %v6752, 5
      %v6755 = vor.u32 %v6751, %v6754
      %v6756 = vrot.slane %v6755, 4
      %v6758 = vshll.u32 %v6512, 16
      %v6760 = vrot.slane %v6758, 5
      %v6761 = vsel %vm1069, %v6756, %v6760
      %v6762 = vshrl.u32 %v6512, 16
      %v6764 = vrot.slane %v6762, 4
      %v6765 = vor.u32 %v6764, %v6760
      %v6766 = vrot.slane %v6765, 4
      %v6768 = vshll.u32 %v6513, 16
      %v6770 = vrot.slane %v6768, 5
      %v6771 = vsel %vm1069, %v6766, %v6770
      %v6773 = vshrl.u32 %v6514, 16
      %v6775 = vrot.slane %v6773, 4
      %v6776 = vshll.u32 %v6514, 16
      %v6778 = vrot.slane %v6776, 5
      %v6779 = vor.u32 %v6775, %v6778
      %v6780 = vrot.slane %v6779, 4
      %v6782 = vshll.u32 %v6515, 16
      %v6784 = vrot.slane %v6782, 5
      %v6785 = vsel %vm1069, %v6780, %v6784
      %v6786 = vshrl.u32 %v6515, 16
      %v6788 = vrot.slane %v6786, 4
      %v6789 = vor.u32 %v6788, %v6784
      %v6790 = vrot.slane %v6789, 4
      %v6792 = vshll.u32 %v6516, 16
      %v6794 = vrot.slane %v6792, 5
      %v6795 = vsel %vm1069, %v6790, %v6794
      %v6797 = vshrl.u32 %v6517, 16
      %v6799 = vrot.slane %v6797, 4
      %v6800 = vshll.u32 %v6517, 16
      %v6802 = vrot.slane %v6800, 5
      %v6803 = vor.u32 %v6799, %v6802
      %v6804 = vrot.slane %v6803, 4
      %v6806 = vshll.u32 %v6518, 16
      %v6808 = vrot.slane %v6806, 5
      %v6809 = vsel %vm1069, %v6804, %v6808
      %v6810 = vshrl.u32 %v6518, 16
      %v6812 = vrot.slane %v6810, 4
      %v6813 = vor.u32 %v6812, %v6808
      %v6814 = vrot.slane %v6813, 4
      %v6816 = vshll.u32 %v6519, 16
      %v6818 = vrot.slane %v6816, 5
      %v6819 = vsel %vm1069, %v6814, %v6818
      %v6821 = vshrl.u32 %v6520, 16
      %v6823 = vrot.slane %v6821, 4
      %v6824 = vshll.u32 %v6520, 16
      %v6826 = vrot.slane %v6824, 5
      %v6827 = vor.u32 %v6823, %v6826
      %v6828 = vrot.slane %v6827, 4
      %v6830 = vshll.u32 %v6521, 16
      %v6832 = vrot.slane %v6830, 5
      %v6833 = vsel %vm1069, %v6828, %v6832
      %v6834 = vshrl.u32 %v6521, 16
      %v6836 = vrot.slane %v6834, 4
      %v6837 = vor.u32 %v6836, %v6832
      %v6838 = vrot.slane %v6837, 4
      %v6840 = vshll.u32 %v6522, 16
      %v6842 = vrot.slane %v6840, 5
      %v6843 = vsel %vm1069, %v6838, %v6842
      %v6845 = vshrl.u32 %v6523, 16
      %v6847 = vrot.slane %v6845, 4
      %v6848 = vshll.u32 %v6523, 16
      %v6850 = vrot.slane %v6848, 5
      %v6851 = vor.u32 %v6847, %v6850
      %v6852 = vrot.slane %v6851, 4
      %v6854 = vshll.u32 %v6524, 16
      %v6856 = vrot.slane %v6854, 5
      %v6857 = vsel %vm1069, %v6852, %v6856
      %v6858 = vshrl.u32 %v6524, 16
      %v6860 = vrot.slane %v6858, 4
      %v6861 = vor.u32 %v6860, %v6856
      %v6862 = vrot.slane %v6861, 4
      %v6864 = vshll.u32 %v6525, 16
      %v6866 = vrot.slane %v6864, 5
      %v6867 = vsel %vm1069, %v6862, %v6866
      %v6869 = vshrl.u32 %v6526, 16
      %v6871 = vrot.slane %v6869, 4
      %v6872 = vshll.u32 %v6526, 16
      %v6874 = vrot.slane %v6872, 5
      %v6875 = vor.u32 %v6871, %v6874
      %v6876 = vrot.slane %v6875, 4
      %v6878 = vshll.u32 %v6527, 16
      %v6880 = vrot.slane %v6878, 5
      %v6881 = vsel %vm1069, %v6876, %v6880
      %v6882 = vshrl.u32 %v6527, 16
      %v6884 = vrot.slane %v6882, 4
      %v6885 = vor.u32 %v6884, %v6880
      %v6886 = vrot.slane %v6885, 4
      %v6888 = vshll.u32 %v6528, 16
      %v6890 = vrot.slane %v6888, 5
      %v6891 = vsel %vm1069, %v6886, %v6890
      %v6893 = vshrl.u32 %v6529, 16
      %v6895 = vrot.slane %v6893, 4
      %v6896 = vshll.u32 %v6529, 16
      %v6898 = vrot.slane %v6896, 5
      %v6899 = vor.u32 %v6895, %v6898
      %v6900 = vrot.slane %v6899, 4
      %v6902 = vshll.u32 %v6530, 16
      %v6904 = vrot.slane %v6902, 5
      %v6905 = vsel %vm1069, %v6900, %v6904
      %v6906 = vshrl.u32 %v6530, 16
      %v6908 = vrot.slane %v6906, 4
      %v6909 = vor.u32 %v6908, %v6904
      %v6910 = vrot.slane %v6909, 4
      %v6912 = vshll.u32 %v6531, 16
      %v6914 = vrot.slane %v6912, 5
      %v6915 = vsel %vm1069, %v6910, %v6914
      %6916 = vrot.lane.b32.xlu0 %v6545, 16
      %v6917 = vpop.permute.xlu0 %6916
      %6918 = vrot.lane.b32.xlu0 %v6555, 16
      %v6919 = vpop.permute.xlu0 %6918
      %6920 = vrot.lane.b32.xlu0 %v6569, 16
      %v6921 = vpop.permute.xlu0 %6920
      %6922 = vrot.lane.b32.xlu0 %v6579, 16
      %v6923 = vpop.permute.xlu0 %6922
      %6924 = vrot.lane.b32.xlu0 %v6593, 16
      %v6925 = vpop.permute.xlu0 %6924
      %6926 = vrot.lane.b32.xlu0 %v6603, 16
      %v6927 = vpop.permute.xlu0 %6926
      %6928 = vrot.lane.b32.xlu0 %v6617, 16
      %v6929 = vpop.permute.xlu0 %6928
      %6930 = vrot.lane.b32.xlu0 %v6627, 16
      %v6931 = vpop.permute.xlu0 %6930
      %6932 = vrot.lane.b32.xlu0 %v6641, 16
      %v6933 = vpop.permute.xlu0 %6932
      %6934 = vrot.lane.b32.xlu0 %v6651, 16
      %v6935 = vpop.permute.xlu0 %6934
      %6936 = vrot.lane.b32.xlu0 %v6665, 16
      %v6937 = vpop.permute.xlu0 %6936
      %6938 = vrot.lane.b32.xlu0 %v6675, 16
      %v6939 = vpop.permute.xlu0 %6938
      %6940 = vrot.lane.b32.xlu0 %v6689, 16
      %v6941 = vpop.permute.xlu0 %6940
      %6942 = vrot.lane.b32.xlu0 %v6699, 16
      %v6943 = vpop.permute.xlu0 %6942
      %6944 = vrot.lane.b32.xlu0 %v6713, 16
      %v6945 = vpop.permute.xlu0 %6944
      %6946 = vrot.lane.b32.xlu0 %v6723, 16
      %v6947 = vpop.permute.xlu0 %6946
      %6948 = vrot.lane.b32.xlu0 %v6737, 16
      %v6949 = vpop.permute.xlu0 %6948
      %6950 = vrot.lane.b32.xlu0 %v6747, 16
      %v6951 = vpop.permute.xlu0 %6950
      %6952 = vrot.lane.b32.xlu0 %v6761, 16
      %v6953 = vpop.permute.xlu0 %6952
      %6954 = vrot.lane.b32.xlu0 %v6771, 16
      %v6955 = vpop.permute.xlu0 %6954
      %6956 = vrot.lane.b32.xlu0 %v6785, 16
      %v6957 = vpop.permute.xlu0 %6956
      %6958 = vrot.lane.b32.xlu0 %v6795, 16
      %v6959 = vpop.permute.xlu0 %6958
      %6960 = vrot.lane.b32.xlu0 %v6809, 16
      %v6961 = vpop.permute.xlu0 %6960
      %6962 = vrot.lane.b32.xlu0 %v6819, 16
      %v6963 = vpop.permute.xlu0 %6962
      %6964 = vrot.lane.b32.xlu0 %v6833, 16
      %v6965 = vpop.permute.xlu0 %6964
      %6966 = vrot.lane.b32.xlu0 %v6843, 16
      %v6967 = vpop.permute.xlu0 %6966
      %6968 = vrot.lane.b32.xlu0 %v6857, 16
      %v6969 = vpop.permute.xlu0 %6968
      %6970 = vrot.lane.b32.xlu0 %v6867, 16
      %v6971 = vpop.permute.xlu0 %6970
      %6972 = vrot.lane.b32.xlu0 %v6881, 16
      %v6973 = vpop.permute.xlu0 %6972
      %6974 = vrot.lane.b32.xlu0 %v6891, 16
      %v6975 = vpop.permute.xlu0 %6974
      %6976 = vrot.lane.b32.xlu0 %v6905, 16
      %v6977 = vpop.permute.xlu0 %6976
      %6978 = vrot.lane.b32.xlu0 %v6915, 16
      %v6979 = vpop.permute.xlu0 %6978
      %7012 = vst.msk [vmem:[#allocation3] sm:$0xf] %vm2644, %v6917
      %7013 = vst.msk [vmem:[#allocation3 + $0x4] sm:$0xf] %vm2644, %v6919
      %7014 = vst.msk [vmem:[#allocation3 + $0x8] sm:$0xf] %vm2644, %v6921
      %7015 = vst.msk [vmem:[#allocation3 + $0xc] sm:$0xf] %vm2644, %v6923
      %7016 = vst.msk [vmem:[#allocation3 + $0x10] sm:$0xf] %vm2644, %v6925
      %7017 = vst.msk [vmem:[#allocation3 + $0x14] sm:$0xf] %vm2644, %v6927
      %7018 = vst.msk [vmem:[#allocation3 + $0x18] sm:$0xf] %vm2644, %v6929
      %7019 = vst.msk [vmem:[#allocation3 + $0x1c] sm:$0xf] %vm2644, %v6931
      %7020 = vst.msk [vmem:[#allocation3 + $0x20] sm:$0xf] %vm2644, %v6933
      %7021 = vst.msk [vmem:[#allocation3 + $0x24] sm:$0xf] %vm2644, %v6935
      %7022 = vst.msk [vmem:[#allocation3 + $0x28] sm:$0xf] %vm2644, %v6937
      %7023 = vst.msk [vmem:[#allocation3 + $0x2c] sm:$0xf] %vm2644, %v6939
      %7024 = vst.msk [vmem:[#allocation3 + $0x30] sm:$0xf] %vm2644, %v6941
      %7025 = vst.msk [vmem:[#allocation3 + $0x34] sm:$0xf] %vm2644, %v6943
      %7026 = vst.msk [vmem:[#allocation3 + $0x38] sm:$0xf] %vm2644, %v6945
      %7027 = vst.msk [vmem:[#allocation3 + $0x3c] sm:$0xf] %vm2644, %v6947
      %7028 = vst.msk [vmem:[#allocation3 + $0x40] sm:$0xf] %vm2644, %v6949
      %7029 = vst.msk [vmem:[#allocation3 + $0x44] sm:$0xf] %vm2644, %v6951
      %7030 = vst.msk [vmem:[#allocation3 + $0x48] sm:$0xf] %vm2644, %v6953
      %7031 = vst.msk [vmem:[#allocation3 + $0x4c] sm:$0xf] %vm2644, %v6955
      %7032 = vst.msk [vmem:[#allocation3 + $0x50] sm:$0xf] %vm2644, %v6957
      %7033 = vst.msk [vmem:[#allocation3 + $0x54] sm:$0xf] %vm2644, %v6959
      %7034 = vst.msk [vmem:[#allocation3 + $0x58] sm:$0xf] %vm2644, %v6961
      %7035 = vst.msk [vmem:[#allocation3 + $0x5c] sm:$0xf] %vm2644, %v6963
      %7036 = vst.msk [vmem:[#allocation3 + $0x60] sm:$0xf] %vm2644, %v6965
      %7037 = vst.msk [vmem:[#allocation3 + $0x64] sm:$0xf] %vm2644, %v6967
      %7038 = vst.msk [vmem:[#allocation3 + $0x68] sm:$0xf] %vm2644, %v6969
      %7039 = vst.msk [vmem:[#allocation3 + $0x6c] sm:$0xf] %vm2644, %v6971
      %7040 = vst.msk [vmem:[#allocation3 + $0x70] sm:$0xf] %vm2644, %v6973
      %7041 = vst.msk [vmem:[#allocation3 + $0x74] sm:$0xf] %vm2644, %v6975
      %7042 = vst.msk [vmem:[#allocation3 + $0x78] sm:$0xf] %vm2644, %v6977
      %7043 = vst.msk [vmem:[#allocation3 + $0x7c] sm:$0xf] %vm2644, %v6979
      %v7044 = vld [vmem:[%s289] sm:$0xe]
      %v7045 = vld [vmem:[%s289 + $0x4] sm:$0xf]
      %v7046 = vld [vmem:[%s289 + $0x8] sm:$0x1]
      %v7047 = vld [vmem:[%s289 + $0xc] sm:$0xe]
      %v7048 = vld [vmem:[%s289 + $0x10] sm:$0xf]
      %v7049 = vld [vmem:[%s289 + $0x14] sm:$0x1]
      %v7050 = vld [vmem:[%s289 + $0x18] sm:$0xe]
      %v7051 = vld [vmem:[%s289 + $0x1c] sm:$0xf]
      %v7052 = vld [vmem:[%s289 + $0x20] sm:$0x1]
      %v7053 = vld [vmem:[%s289 + $0x24] sm:$0xe]
      %v7054 = vld [vmem:[%s289 + $0x28] sm:$0xf]
      %v7055 = vld [vmem:[%s289 + $0x2c] sm:$0x1]
      %v7056 = vld [vmem:[%s289 + $0x30] sm:$0xe]
      %v7057 = vld [vmem:[%s289 + $0x34] sm:$0xf]
      %v7058 = vld [vmem:[%s289 + $0x38] sm:$0x1]
      %v7059 = vld [vmem:[%s289 + $0x3c] sm:$0xe]
      %v7060 = vld [vmem:[%s289 + $0x40] sm:$0xf]
      %v7061 = vld [vmem:[%s289 + $0x44] sm:$0x1]
      %v7062 = vld [vmem:[%s289 + $0x48] sm:$0xe]
      %v7063 = vld [vmem:[%s289 + $0x4c] sm:$0xf]
      %v7064 = vld [vmem:[%s289 + $0x50] sm:$0x1]
      %v7065 = vld [vmem:[%s289 + $0x54] sm:$0xe]
      %v7066 = vld [vmem:[%s289 + $0x58] sm:$0xf]
      %v7067 = vld [vmem:[%s289 + $0x5c] sm:$0x1]
      %v7068 = vld [vmem:[%s289 + $0x60] sm:$0xe]
      %v7069 = vld [vmem:[%s289 + $0x64] sm:$0xf]
      %v7070 = vld [vmem:[%s289 + $0x68] sm:$0x1]
      %v7071 = vld [vmem:[%s289 + $0x6c] sm:$0xe]
      %v7072 = vld [vmem:[%s289 + $0x70] sm:$0xf]
      %v7073 = vld [vmem:[%s289 + $0x74] sm:$0x1]
      %v7074 = vld [vmem:[%s289 + $0x78] sm:$0xe]
      %v7075 = vld [vmem:[%s289 + $0x7c] sm:$0xf]
      %v7076 = vld [vmem:[%s289 + $0x80] sm:$0x1]
      %v7077 = vld [vmem:[%s289 + $0x84] sm:$0xe]
      %v7078 = vld [vmem:[%s289 + $0x88] sm:$0xf]
      %v7079 = vld [vmem:[%s289 + $0x8c] sm:$0x1]
      %v7080 = vld [vmem:[%s289 + $0x90] sm:$0xe]
      %v7081 = vld [vmem:[%s289 + $0x94] sm:$0xf]
      %v7082 = vld [vmem:[%s289 + $0x98] sm:$0x1]
      %v7083 = vld [vmem:[%s289 + $0x9c] sm:$0xe]
      %v7084 = vld [vmem:[%s289 + $0xa0] sm:$0xf]
      %v7085 = vld [vmem:[%s289 + $0xa4] sm:$0x1]
      %v7086 = vld [vmem:[%s289 + $0xa8] sm:$0xe]
      %v7087 = vld [vmem:[%s289 + $0xac] sm:$0xf]
      %v7088 = vld [vmem:[%s289 + $0xb0] sm:$0x1]
      %v7089 = vld [vmem:[%s289 + $0xb4] sm:$0xe]
      %v7090 = vld [vmem:[%s289 + $0xb8] sm:$0xf]
      %v7091 = vld [vmem:[%s289 + $0xbc] sm:$0x1]
      %v7140 = vrot.slane %v7044, 5
      %v7141 = vrot.slane %v7140, 4
      %v7142 = vrot.slane %v7045, 5
      %v7143 = vsel %vm1681, %v7141, %v7142
      %v7144 = vrot.slane %v7142, 4
      %v7145 = vrot.slane %v7046, 5
      %v7146 = vsel %vm1681, %v7144, %v7145
      %v7147 = vrot.slane %v7047, 5
      %v7148 = vrot.slane %v7147, 4
      %v7149 = vrot.slane %v7048, 5
      %v7150 = vsel %vm1681, %v7148, %v7149
      %v7151 = vrot.slane %v7149, 4
      %v7152 = vrot.slane %v7049, 5
      %v7153 = vsel %vm1681, %v7151, %v7152
      %v7154 = vrot.slane %v7050, 5
      %v7155 = vrot.slane %v7154, 4
      %v7156 = vrot.slane %v7051, 5
      %v7157 = vsel %vm1681, %v7155, %v7156
      %v7158 = vrot.slane %v7156, 4
      %v7159 = vrot.slane %v7052, 5
      %v7160 = vsel %vm1681, %v7158, %v7159
      %v7161 = vrot.slane %v7053, 5
      %v7162 = vrot.slane %v7161, 4
      %v7163 = vrot.slane %v7054, 5
      %v7164 = vsel %vm1681, %v7162, %v7163
      %v7165 = vrot.slane %v7163, 4
      %v7166 = vrot.slane %v7055, 5
      %v7167 = vsel %vm1681, %v7165, %v7166
      %v7168 = vrot.slane %v7056, 5
      %v7169 = vrot.slane %v7168, 4
      %v7170 = vrot.slane %v7057, 5
      %v7171 = vsel %vm1681, %v7169, %v7170
      %v7172 = vrot.slane %v7170, 4
      %v7173 = vrot.slane %v7058, 5
      %v7174 = vsel %vm1681, %v7172, %v7173
      %v7175 = vrot.slane %v7059, 5
      %v7176 = vrot.slane %v7175, 4
      %v7177 = vrot.slane %v7060, 5
      %v7178 = vsel %vm1681, %v7176, %v7177
      %v7179 = vrot.slane %v7177, 4
      %v7180 = vrot.slane %v7061, 5
      %v7181 = vsel %vm1681, %v7179, %v7180
      %v7182 = vrot.slane %v7062, 5
      %v7183 = vrot.slane %v7182, 4
      %v7184 = vrot.slane %v7063, 5
      %v7185 = vsel %vm1681, %v7183, %v7184
      %v7186 = vrot.slane %v7184, 4
      %v7187 = vrot.slane %v7064, 5
      %v7188 = vsel %vm1681, %v7186, %v7187
      %v7189 = vrot.slane %v7065, 5
      %v7190 = vrot.slane %v7189, 4
      %v7191 = vrot.slane %v7066, 5
      %v7192 = vsel %vm1681, %v7190, %v7191
      %v7193 = vrot.slane %v7191, 4
      %v7194 = vrot.slane %v7067, 5
      %v7195 = vsel %vm1681, %v7193, %v7194
      %v7196 = vrot.slane %v7068, 5
      %v7197 = vrot.slane %v7196, 4
      %v7198 = vrot.slane %v7069, 5
      %v7199 = vsel %vm1681, %v7197, %v7198
      %v7200 = vrot.slane %v7198, 4
      %v7201 = vrot.slane %v7070, 5
      %v7202 = vsel %vm1681, %v7200, %v7201
      %v7203 = vrot.slane %v7071, 5
      %v7204 = vrot.slane %v7203, 4
      %v7205 = vrot.slane %v7072, 5
      %v7206 = vsel %vm1681, %v7204, %v7205
      %v7207 = vrot.slane %v7205, 4
      %v7208 = vrot.slane %v7073, 5
      %v7209 = vsel %vm1681, %v7207, %v7208
      %v7210 = vrot.slane %v7074, 5
      %v7211 = vrot.slane %v7210, 4
      %v7212 = vrot.slane %v7075, 5
      %v7213 = vsel %vm1681, %v7211, %v7212
      %v7214 = vrot.slane %v7212, 4
      %v7215 = vrot.slane %v7076, 5
      %v7216 = vsel %vm1681, %v7214, %v7215
      %v7217 = vrot.slane %v7077, 5
      %v7218 = vrot.slane %v7217, 4
      %v7219 = vrot.slane %v7078, 5
      %v7220 = vsel %vm1681, %v7218, %v7219
      %v7221 = vrot.slane %v7219, 4
      %v7222 = vrot.slane %v7079, 5
      %v7223 = vsel %vm1681, %v7221, %v7222
      %v7224 = vrot.slane %v7080, 5
      %v7225 = vrot.slane %v7224, 4
      %v7226 = vrot.slane %v7081, 5
      %v7227 = vsel %vm1681, %v7225, %v7226
      %v7228 = vrot.slane %v7226, 4
      %v7229 = vrot.slane %v7082, 5
      %v7230 = vsel %vm1681, %v7228, %v7229
      %v7231 = vrot.slane %v7083, 5
      %v7232 = vrot.slane %v7231, 4
      %v7233 = vrot.slane %v7084, 5
      %v7234 = vsel %vm1681, %v7232, %v7233
      %v7235 = vrot.slane %v7233, 4
      %v7236 = vrot.slane %v7085, 5
      %v7237 = vsel %vm1681, %v7235, %v7236
      %v7238 = vrot.slane %v7086, 5
      %v7239 = vrot.slane %v7238, 4
      %v7240 = vrot.slane %v7087, 5
      %v7241 = vsel %vm1681, %v7239, %v7240
      %v7242 = vrot.slane %v7240, 4
      %v7243 = vrot.slane %v7088, 5
      %v7244 = vsel %vm1681, %v7242, %v7243
      %v7245 = vrot.slane %v7089, 5
      %v7246 = vrot.slane %v7245, 4
      %v7247 = vrot.slane %v7090, 5
      %v7248 = vsel %vm1681, %v7246, %v7247
      %v7249 = vrot.slane %v7247, 4
      %v7250 = vrot.slane %v7091, 5
      %v7251 = vsel %vm1681, %v7249, %v7250
      %7252 = vrot.lane.b32.xlu0 %v7143, 20
      %v7253 = vpop.permute.xlu0 %7252
      %7254 = vrot.lane.b32.xlu0 %v7146, 20
      %v7255 = vpop.permute.xlu0 %7254
      %7256 = vrot.lane.b32.xlu0 %v7150, 20
      %v7257 = vpop.permute.xlu0 %7256
      %7258 = vrot.lane.b32.xlu0 %v7153, 20
      %v7259 = vpop.permute.xlu0 %7258
      %7260 = vrot.lane.b32.xlu0 %v7157, 20
      %v7261 = vpop.permute.xlu0 %7260
      %7262 = vrot.lane.b32.xlu0 %v7160, 20
      %v7263 = vpop.permute.xlu0 %7262
      %7264 = vrot.lane.b32.xlu0 %v7164, 20
      %v7265 = vpop.permute.xlu0 %7264
      %7266 = vrot.lane.b32.xlu0 %v7167, 20
      %v7267 = vpop.permute.xlu0 %7266
      %7268 = vrot.lane.b32.xlu0 %v7171, 20
      %v7269 = vpop.permute.xlu0 %7268
      %7270 = vrot.lane.b32.xlu0 %v7174, 20
      %v7271 = vpop.permute.xlu0 %7270
      %7272 = vrot.lane.b32.xlu0 %v7178, 20
      %v7273 = vpop.permute.xlu0 %7272
      %7274 = vrot.lane.b32.xlu0 %v7181, 20
      %v7275 = vpop.permute.xlu0 %7274
      %7276 = vrot.lane.b32.xlu0 %v7185, 20
      %v7277 = vpop.permute.xlu0 %7276
      %7278 = vrot.lane.b32.xlu0 %v7188, 20
      %v7279 = vpop.permute.xlu0 %7278
      %7280 = vrot.lane.b32.xlu0 %v7192, 20
      %v7281 = vpop.permute.xlu0 %7280
      %7282 = vrot.lane.b32.xlu0 %v7195, 20
      %v7283 = vpop.permute.xlu0 %7282
      %7284 = vrot.lane.b32.xlu0 %v7199, 20
      %v7285 = vpop.permute.xlu0 %7284
      %7286 = vrot.lane.b32.xlu0 %v7202, 20
      %v7287 = vpop.permute.xlu0 %7286
      %7288 = vrot.lane.b32.xlu0 %v7206, 20
      %v7289 = vpop.permute.xlu0 %7288
      %7290 = vrot.lane.b32.xlu0 %v7209, 20
      %v7291 = vpop.permute.xlu0 %7290
      %7292 = vrot.lane.b32.xlu0 %v7213, 20
      %v7293 = vpop.permute.xlu0 %7292
      %7294 = vrot.lane.b32.xlu0 %v7216, 20
      %v7295 = vpop.permute.xlu0 %7294
      %7296 = vrot.lane.b32.xlu0 %v7220, 20
      %v7297 = vpop.permute.xlu0 %7296
      %7298 = vrot.lane.b32.xlu0 %v7223, 20
      %v7299 = vpop.permute.xlu0 %7298
      %7300 = vrot.lane.b32.xlu0 %v7227, 20
      %v7301 = vpop.permute.xlu0 %7300
      %7302 = vrot.lane.b32.xlu0 %v7230, 20
      %v7303 = vpop.permute.xlu0 %7302
      %7304 = vrot.lane.b32.xlu0 %v7234, 20
      %v7305 = vpop.permute.xlu0 %7304
      %7306 = vrot.lane.b32.xlu0 %v7237, 20
      %v7307 = vpop.permute.xlu0 %7306
      %7308 = vrot.lane.b32.xlu0 %v7241, 20
      %v7309 = vpop.permute.xlu0 %7308
      %7310 = vrot.lane.b32.xlu0 %v7244, 20
      %v7311 = vpop.permute.xlu0 %7310
      %7312 = vrot.lane.b32.xlu0 %v7248, 20
      %v7313 = vpop.permute.xlu0 %7312
      %7314 = vrot.lane.b32.xlu0 %v7251, 20
      %v7315 = vpop.permute.xlu0 %7314
      %7348 = vst.msk [vmem:[#allocation3] sm:$0xf] %vm2981, %v7253
      %7349 = vst.msk [vmem:[#allocation3 + $0x4] sm:$0xf] %vm2981, %v7255
      %7350 = vst.msk [vmem:[#allocation3 + $0x8] sm:$0xf] %vm2981, %v7257
      %7351 = vst.msk [vmem:[#allocation3 + $0xc] sm:$0xf] %vm2981, %v7259
      %7352 = vst.msk [vmem:[#allocation3 + $0x10] sm:$0xf] %vm2981, %v7261
      %7353 = vst.msk [vmem:[#allocation3 + $0x14] sm:$0xf] %vm2981, %v7263
      %7354 = vst.msk [vmem:[#allocation3 + $0x18] sm:$0xf] %vm2981, %v7265
      %7355 = vst.msk [vmem:[#allocation3 + $0x1c] sm:$0xf] %vm2981, %v7267
      %7356 = vst.msk [vmem:[#allocation3 + $0x20] sm:$0xf] %vm2981, %v7269
      %7357 = vst.msk [vmem:[#allocation3 + $0x24] sm:$0xf] %vm2981, %v7271
      %7358 = vst.msk [vmem:[#allocation3 + $0x28] sm:$0xf] %vm2981, %v7273
      %7359 = vst.msk [vmem:[#allocation3 + $0x2c] sm:$0xf] %vm2981, %v7275
      %7360 = vst.msk [vmem:[#allocation3 + $0x30] sm:$0xf] %vm2981, %v7277
      %7361 = vst.msk [vmem:[#allocation3 + $0x34] sm:$0xf] %vm2981, %v7279
      %7362 = vst.msk [vmem:[#allocation3 + $0x38] sm:$0xf] %vm2981, %v7281
      %7363 = vst.msk [vmem:[#allocation3 + $0x3c] sm:$0xf] %vm2981, %v7283
      %7364 = vst.msk [vmem:[#allocation3 + $0x40] sm:$0xf] %vm2981, %v7285
      %7365 = vst.msk [vmem:[#allocation3 + $0x44] sm:$0xf] %vm2981, %v7287
      %7366 = vst.msk [vmem:[#allocation3 + $0x48] sm:$0xf] %vm2981, %v7289
      %7367 = vst.msk [vmem:[#allocation3 + $0x4c] sm:$0xf] %vm2981, %v7291
      %7368 = vst.msk [vmem:[#allocation3 + $0x50] sm:$0xf] %vm2981, %v7293
      %7369 = vst.msk [vmem:[#allocation3 + $0x54] sm:$0xf] %vm2981, %v7295
      %7370 = vst.msk [vmem:[#allocation3 + $0x58] sm:$0xf] %vm2981, %v7297
      %7371 = vst.msk [vmem:[#allocation3 + $0x5c] sm:$0xf] %vm2981, %v7299
      %7372 = vst.msk [vmem:[#allocation3 + $0x60] sm:$0xf] %vm2981, %v7301
      %7373 = vst.msk [vmem:[#allocation3 + $0x64] sm:$0xf] %vm2981, %v7303
      %7374 = vst.msk [vmem:[#allocation3 + $0x68] sm:$0xf] %vm2981, %v7305
      %7375 = vst.msk [vmem:[#allocation3 + $0x6c] sm:$0xf] %vm2981, %v7307
      %7376 = vst.msk [vmem:[#allocation3 + $0x70] sm:$0xf] %vm2981, %v7309
      %7377 = vst.msk [vmem:[#allocation3 + $0x74] sm:$0xf] %vm2981, %v7311
      %7378 = vst.msk [vmem:[#allocation3 + $0x78] sm:$0xf] %vm2981, %v7313
      %7379 = vst.msk [vmem:[#allocation3 + $0x7c] sm:$0xf] %vm2981, %v7315
      %v7380 = vld [vmem:[%s3014] sm:$0xf]
      %v7381 = vld [vmem:[%s3014 + $0x4] sm:$0xf]
      %v7382 = vld [vmem:[%s3014 + $0xc] sm:$0xf]
      %v7383 = vld [vmem:[%s3014 + $0x10] sm:$0xf]
      %v7384 = vld [vmem:[%s3014 + $0x18] sm:$0xf]
      %v7385 = vld [vmem:[%s3014 + $0x1c] sm:$0xf]
      %v7386 = vld [vmem:[%s3014 + $0x24] sm:$0xf]
      %v7387 = vld [vmem:[%s3014 + $0x28] sm:$0xf]
      %v7388 = vld [vmem:[%s3014 + $0x30] sm:$0xf]
      %v7389 = vld [vmem:[%s3014 + $0x34] sm:$0xf]
      %v7390 = vld [vmem:[%s3014 + $0x3c] sm:$0xf]
      %v7391 = vld [vmem:[%s3014 + $0x40] sm:$0xf]
      %v7392 = vld [vmem:[%s3014 + $0x48] sm:$0xf]
      %v7393 = vld [vmem:[%s3014 + $0x4c] sm:$0xf]
      %v7394 = vld [vmem:[%s3014 + $0x54] sm:$0xf]
      %v7395 = vld [vmem:[%s3014 + $0x58] sm:$0xf]
      %v7396 = vld [vmem:[%s3014 + $0x60] sm:$0xf]
      %v7397 = vld [vmem:[%s3014 + $0x64] sm:$0xf]
      %v7398 = vld [vmem:[%s3014 + $0x6c] sm:$0xf]
      %v7399 = vld [vmem:[%s3014 + $0x70] sm:$0xf]
      %v7400 = vld [vmem:[%s3014 + $0x78] sm:$0xf]
      %v7401 = vld [vmem:[%s3014 + $0x7c] sm:$0xf]
      %v7402 = vld [vmem:[%s3014 + $0x84] sm:$0xf]
      %v7403 = vld [vmem:[%s3014 + $0x88] sm:$0xf]
      %v7404 = vld [vmem:[%s3014 + $0x90] sm:$0xf]
      %v7405 = vld [vmem:[%s3014 + $0x94] sm:$0xf]
      %v7406 = vld [vmem:[%s3014 + $0x9c] sm:$0xf]
      %v7407 = vld [vmem:[%s3014 + $0xa0] sm:$0xf]
      %v7408 = vld [vmem:[%s3014 + $0xa8] sm:$0xf]
      %v7409 = vld [vmem:[%s3014 + $0xac] sm:$0xf]
      %v7410 = vld [vmem:[%s3014 + $0xb4] sm:$0xf]
      %v7411 = vld [vmem:[%s3014 + $0xb8] sm:$0xf]
      %7444 = vrot.lane.b32.xlu0 %v7380, 24
      %v7445 = vpop.permute.xlu0 %7444
      %7446 = vrot.lane.b32.xlu0 %v7381, 24
      %v7447 = vpop.permute.xlu0 %7446
      %7448 = vrot.lane.b32.xlu0 %v7382, 24
      %v7449 = vpop.permute.xlu0 %7448
      %7450 = vrot.lane.b32.xlu0 %v7383, 24
      %v7451 = vpop.permute.xlu0 %7450
      %7452 = vrot.lane.b32.xlu0 %v7384, 24
      %v7453 = vpop.permute.xlu0 %7452
      %7454 = vrot.lane.b32.xlu0 %v7385, 24
      %v7455 = vpop.permute.xlu0 %7454
      %7456 = vrot.lane.b32.xlu0 %v7386, 24
      %v7457 = vpop.permute.xlu0 %7456
      %7458 = vrot.lane.b32.xlu0 %v7387, 24
      %v7459 = vpop.permute.xlu0 %7458
      %7460 = vrot.lane.b32.xlu0 %v7388, 24
      %v7461 = vpop.permute.xlu0 %7460
      %7462 = vrot.lane.b32.xlu0 %v7389, 24
      %v7463 = vpop.permute.xlu0 %7462
      %7464 = vrot.lane.b32.xlu0 %v7390, 24
      %v7465 = vpop.permute.xlu0 %7464
      %7466 = vrot.lane.b32.xlu0 %v7391, 24
      %v7467 = vpop.permute.xlu0 %7466
      %7468 = vrot.lane.b32.xlu0 %v7392, 24
      %v7469 = vpop.permute.xlu0 %7468
      %7470 = vrot.lane.b32.xlu0 %v7393, 24
      %v7471 = vpop.permute.xlu0 %7470
      %7472 = vrot.lane.b32.xlu0 %v7394, 24
      %v7473 = vpop.permute.xlu0 %7472
      %7474 = vrot.lane.b32.xlu0 %v7395, 24
      %v7475 = vpop.permute.xlu0 %7474
      %7476 = vrot.lane.b32.xlu0 %v7396, 24
      %v7477 = vpop.permute.xlu0 %7476
      %7478 = vrot.lane.b32.xlu0 %v7397, 24
      %v7479 = vpop.permute.xlu0 %7478
      %7480 = vrot.lane.b32.xlu0 %v7398, 24
      %v7481 = vpop.permute.xlu0 %7480
      %7482 = vrot.lane.b32.xlu0 %v7399, 24
      %v7483 = vpop.permute.xlu0 %7482
      %7484 = vrot.lane.b32.xlu0 %v7400, 24
      %v7485 = vpop.permute.xlu0 %7484
      %7486 = vrot.lane.b32.xlu0 %v7401, 24
      %v7487 = vpop.permute.xlu0 %7486
      %7488 = vrot.lane.b32.xlu0 %v7402, 24
      %v7489 = vpop.permute.xlu0 %7488
      %7490 = vrot.lane.b32.xlu0 %v7403, 24
      %v7491 = vpop.permute.xlu0 %7490
      %7492 = vrot.lane.b32.xlu0 %v7404, 24
      %v7493 = vpop.permute.xlu0 %7492
      %7494 = vrot.lane.b32.xlu0 %v7405, 24
      %v7495 = vpop.permute.xlu0 %7494
      %7496 = vrot.lane.b32.xlu0 %v7406, 24
      %v7497 = vpop.permute.xlu0 %7496
      %7498 = vrot.lane.b32.xlu0 %v7407, 24
      %v7499 = vpop.permute.xlu0 %7498
      %7500 = vrot.lane.b32.xlu0 %v7408, 24
      %v7501 = vpop.permute.xlu0 %7500
      %7502 = vrot.lane.b32.xlu0 %v7409, 24
      %v7503 = vpop.permute.xlu0 %7502
      %7504 = vrot.lane.b32.xlu0 %v7410, 24
      %v7505 = vpop.permute.xlu0 %7504
      %7506 = vrot.lane.b32.xlu0 %v7411, 24
      %v7507 = vpop.permute.xlu0 %7506
      %7540 = vst.msk [vmem:[#allocation3] sm:$0xf] %vm3175, %v7445
      %7541 = vst.msk [vmem:[#allocation3 + $0x4] sm:$0xf] %vm3175, %v7447
      %7542 = vst.msk [vmem:[#allocation3 + $0x8] sm:$0xf] %vm3175, %v7449
      %7543 = vst.msk [vmem:[#allocation3 + $0xc] sm:$0xf] %vm3175, %v7451
      %7544 = vst.msk [vmem:[#allocation3 + $0x10] sm:$0xf] %vm3175, %v7453
      %7545 = vst.msk [vmem:[#allocation3 + $0x14] sm:$0xf] %vm3175, %v7455
      %7546 = vst.msk [vmem:[#allocation3 + $0x18] sm:$0xf] %vm3175, %v7457
      %7547 = vst.msk [vmem:[#allocation3 + $0x1c] sm:$0xf] %vm3175, %v7459
      %7548 = vst.msk [vmem:[#allocation3 + $0x20] sm:$0xf] %vm3175, %v7461
      %7549 = vst.msk [vmem:[#allocation3 + $0x24] sm:$0xf] %vm3175, %v7463
      %7550 = vst.msk [vmem:[#allocation3 + $0x28] sm:$0xf] %vm3175, %v7465
      %7551 = vst.msk [vmem:[#allocation3 + $0x2c] sm:$0xf] %vm3175, %v7467
      %7552 = vst.msk [vmem:[#allocation3 + $0x30] sm:$0xf] %vm3175, %v7469
      %7553 = vst.msk [vmem:[#allocation3 + $0x34] sm:$0xf] %vm3175, %v7471
      %7554 = vst.msk [vmem:[#allocation3 + $0x38] sm:$0xf] %vm3175, %v7473
      %7555 = vst.msk [vmem:[#allocation3 + $0x3c] sm:$0xf] %vm3175, %v7475
      %7556 = vst.msk [vmem:[#allocation3 + $0x40] sm:$0xf] %vm3175, %v7477
      %7557 = vst.msk [vmem:[#allocation3 + $0x44] sm:$0xf] %vm3175, %v7479
      %7558 = vst.msk [vmem:[#allocation3 + $0x48] sm:$0xf] %vm3175, %v7481
      %7559 = vst.msk [vmem:[#allocation3 + $0x4c] sm:$0xf] %vm3175, %v7483
      %7560 = vst.msk [vmem:[#allocation3 + $0x50] sm:$0xf] %vm3175, %v7485
      %7561 = vst.msk [vmem:[#allocation3 + $0x54] sm:$0xf] %vm3175, %v7487
      %7562 = vst.msk [vmem:[#allocation3 + $0x58] sm:$0xf] %vm3175, %v7489
      %7563 = vst.msk [vmem:[#allocation3 + $0x5c] sm:$0xf] %vm3175, %v7491
      %7564 = vst.msk [vmem:[#allocation3 + $0x60] sm:$0xf] %vm3175, %v7493
      %7565 = vst.msk [vmem:[#allocation3 + $0x64] sm:$0xf] %vm3175, %v7495
      %7566 = vst.msk [vmem:[#allocation3 + $0x68] sm:$0xf] %vm3175, %v7497
      %7567 = vst.msk [vmem:[#allocation3 + $0x6c] sm:$0xf] %vm3175, %v7499
      %7568 = vst.msk [vmem:[#allocation3 + $0x70] sm:$0xf] %vm3175, %v7501
      %7569 = vst.msk [vmem:[#allocation3 + $0x74] sm:$0xf] %vm3175, %v7503
      %7570 = vst.msk [vmem:[#allocation3 + $0x78] sm:$0xf] %vm3175, %v7505
      %7571 = vst.msk [vmem:[#allocation3 + $0x7c] sm:$0xf] %vm3175, %v7507
      %v7572 = vld [vmem:[%s3014] sm:$0xf]
      %v7573 = vld [vmem:[%s3014 + $0x4] sm:$0xf]
      %v7574 = vld [vmem:[%s3014 + $0x8] sm:$0x1]
      %v7575 = vld [vmem:[%s3014 + $0xc] sm:$0xf]
      %v7576 = vld [vmem:[%s3014 + $0x10] sm:$0xf]
      %v7577 = vld [vmem:[%s3014 + $0x14] sm:$0x1]
      %v7578 = vld [vmem:[%s3014 + $0x18] sm:$0xf]
      %v7579 = vld [vmem:[%s3014 + $0x1c] sm:$0xf]
      %v7580 = vld [vmem:[%s3014 + $0x20] sm:$0x1]
      %v7581 = vld [vmem:[%s3014 + $0x24] sm:$0xf]
      %v7582 = vld [vmem:[%s3014 + $0x28] sm:$0xf]
      %v7583 = vld [vmem:[%s3014 + $0x2c] sm:$0x1]
      %v7584 = vld [vmem:[%s3014 + $0x30] sm:$0xf]
      %v7585 = vld [vmem:[%s3014 + $0x34] sm:$0xf]
      %v7586 = vld [vmem:[%s3014 + $0x38] sm:$0x1]
      %v7587 = vld [vmem:[%s3014 + $0x3c] sm:$0xf]
      %v7588 = vld [vmem:[%s3014 + $0x40] sm:$0xf]
      %v7589 = vld [vmem:[%s3014 + $0x44] sm:$0x1]
      %v7590 = vld [vmem:[%s3014 + $0x48] sm:$0xf]
      %v7591 = vld [vmem:[%s3014 + $0x4c] sm:$0xf]
      %v7592 = vld [vmem:[%s3014 + $0x50] sm:$0x1]
      %v7593 = vld [vmem:[%s3014 + $0x54] sm:$0xf]
      %v7594 = vld [vmem:[%s3014 + $0x58] sm:$0xf]
      %v7595 = vld [vmem:[%s3014 + $0x5c] sm:$0x1]
      %v7596 = vld [vmem:[%s3014 + $0x60] sm:$0xf]
      %v7597 = vld [vmem:[%s3014 + $0x64] sm:$0xf]
      %v7598 = vld [vmem:[%s3014 + $0x68] sm:$0x1]
      %v7599 = vld [vmem:[%s3014 + $0x6c] sm:$0xf]
      %v7600 = vld [vmem:[%s3014 + $0x70] sm:$0xf]
      %v7601 = vld [vmem:[%s3014 + $0x74] sm:$0x1]
      %v7602 = vld [vmem:[%s3014 + $0x78] sm:$0xf]
      %v7603 = vld [vmem:[%s3014 + $0x7c] sm:$0xf]
      %v7604 = vld [vmem:[%s3014 + $0x80] sm:$0x1]
      %v7605 = vld [vmem:[%s3014 + $0x84] sm:$0xf]
      %v7606 = vld [vmem:[%s3014 + $0x88] sm:$0xf]
      %v7607 = vld [vmem:[%s3014 + $0x8c] sm:$0x1]
      %v7608 = vld [vmem:[%s3014 + $0x90] sm:$0xf]
      %v7609 = vld [vmem:[%s3014 + $0x94] sm:$0xf]
      %v7610 = vld [vmem:[%s3014 + $0x98] sm:$0x1]
      %v7611 = vld [vmem:[%s3014 + $0x9c] sm:$0xf]
      %v7612 = vld [vmem:[%s3014 + $0xa0] sm:$0xf]
      %v7613 = vld [vmem:[%s3014 + $0xa4] sm:$0x1]
      %v7614 = vld [vmem:[%s3014 + $0xa8] sm:$0xf]
      %v7615 = vld [vmem:[%s3014 + $0xac] sm:$0xf]
      %v7616 = vld [vmem:[%s3014 + $0xb0] sm:$0x1]
      %v7617 = vld [vmem:[%s3014 + $0xb4] sm:$0xf]
      %v7618 = vld [vmem:[%s3014 + $0xb8] sm:$0xf]
      %v7619 = vld [vmem:[%s3014 + $0xbc] sm:$0x1]
      %v7621 = vshrl.u32 %v7572, 16
      %v7623 = vrot.slane %v7621, 4
      %v7624 = vshll.u32 %v7572, 16
      %v7626 = vrot.slane %v7624, 5
      %v7627 = vor.u32 %v7623, %v7626
      %v7628 = vrot.slane %v7627, 4
      %v7630 = vshll.u32 %v7573, 16
      %v7632 = vrot.slane %v7630, 5
      %v7633 = vsel %vm1069, %v7628, %v7632
      %v7634 = vshrl.u32 %v7573, 16
      %v7636 = vrot.slane %v7634, 4
      %v7637 = vor.u32 %v7636, %v7632
      %v7638 = vrot.slane %v7637, 4
      %v7640 = vshll.u32 %v7574, 16
      %v7642 = vrot.slane %v7640, 5
      %v7643 = vsel %vm1069, %v7638, %v7642
      %v7645 = vshrl.u32 %v7575, 16
      %v7647 = vrot.slane %v7645, 4
      %v7648 = vshll.u32 %v7575, 16
      %v7650 = vrot.slane %v7648, 5
      %v7651 = vor.u32 %v7647, %v7650
      %v7652 = vrot.slane %v7651, 4
      %v7654 = vshll.u32 %v7576, 16
      %v7656 = vrot.slane %v7654, 5
      %v7657 = vsel %vm1069, %v7652, %v7656
      %v7658 = vshrl.u32 %v7576, 16
      %v7660 = vrot.slane %v7658, 4
      %v7661 = vor.u32 %v7660, %v7656
      %v7662 = vrot.slane %v7661, 4
      %v7664 = vshll.u32 %v7577, 16
      %v7666 = vrot.slane %v7664, 5
      %v7667 = vsel %vm1069, %v7662, %v7666
      %v7669 = vshrl.u32 %v7578, 16
      %v7671 = vrot.slane %v7669, 4
      %v7672 = vshll.u32 %v7578, 16
      %v7674 = vrot.slane %v7672, 5
      %v7675 = vor.u32 %v7671, %v7674
      %v7676 = vrot.slane %v7675, 4
      %v7678 = vshll.u32 %v7579, 16
      %v7680 = vrot.slane %v7678, 5
      %v7681 = vsel %vm1069, %v7676, %v7680
      %v7682 = vshrl.u32 %v7579, 16
      %v7684 = vrot.slane %v7682, 4
      %v7685 = vor.u32 %v7684, %v7680
      %v7686 = vrot.slane %v7685, 4
      %v7688 = vshll.u32 %v7580, 16
      %v7690 = vrot.slane %v7688, 5
      %v7691 = vsel %vm1069, %v7686, %v7690
      %v7693 = vshrl.u32 %v7581, 16
      %v7695 = vrot.slane %v7693, 4
      %v7696 = vshll.u32 %v7581, 16
      %v7698 = vrot.slane %v7696, 5
      %v7699 = vor.u32 %v7695, %v7698
      %v7700 = vrot.slane %v7699, 4
      %v7702 = vshll.u32 %v7582, 16
      %v7704 = vrot.slane %v7702, 5
      %v7705 = vsel %vm1069, %v7700, %v7704
      %v7706 = vshrl.u32 %v7582, 16
      %v7708 = vrot.slane %v7706, 4
      %v7709 = vor.u32 %v7708, %v7704
      %v7710 = vrot.slane %v7709, 4
      %v7712 = vshll.u32 %v7583, 16
      %v7714 = vrot.slane %v7712, 5
      %v7715 = vsel %vm1069, %v7710, %v7714
      %v7717 = vshrl.u32 %v7584, 16
      %v7719 = vrot.slane %v7717, 4
      %v7720 = vshll.u32 %v7584, 16
      %v7722 = vrot.slane %v7720, 5
      %v7723 = vor.u32 %v7719, %v7722
      %v7724 = vrot.slane %v7723, 4
      %v7726 = vshll.u32 %v7585, 16
      %v7728 = vrot.slane %v7726, 5
      %v7729 = vsel %vm1069, %v7724, %v7728
      %v7730 = vshrl.u32 %v7585, 16
      %v7732 = vrot.slane %v7730, 4
      %v7733 = vor.u32 %v7732, %v7728
      %v7734 = vrot.slane %v7733, 4
      %v7736 = vshll.u32 %v7586, 16
      %v7738 = vrot.slane %v7736, 5
      %v7739 = vsel %vm1069, %v7734, %v7738
      %v7741 = vshrl.u32 %v7587, 16
      %v7743 = vrot.slane %v7741, 4
      %v7744 = vshll.u32 %v7587, 16
      %v7746 = vrot.slane %v7744, 5
      %v7747 = vor.u32 %v7743, %v7746
      %v7748 = vrot.slane %v7747, 4
      %v7750 = vshll.u32 %v7588, 16
      %v7752 = vrot.slane %v7750, 5
      %v7753 = vsel %vm1069, %v7748, %v7752
      %v7754 = vshrl.u32 %v7588, 16
      %v7756 = vrot.slane %v7754, 4
      %v7757 = vor.u32 %v7756, %v7752
      %v7758 = vrot.slane %v7757, 4
      %v7760 = vshll.u32 %v7589, 16
      %v7762 = vrot.slane %v7760, 5
      %v7763 = vsel %vm1069, %v7758, %v7762
      %v7765 = vshrl.u32 %v7590, 16
      %v7767 = vrot.slane %v7765, 4
      %v7768 = vshll.u32 %v7590, 16
      %v7770 = vrot.slane %v7768, 5
      %v7771 = vor.u32 %v7767, %v7770
      %v7772 = vrot.slane %v7771, 4
      %v7774 = vshll.u32 %v7591, 16
      %v7776 = vrot.slane %v7774, 5
      %v7777 = vsel %vm1069, %v7772, %v7776
      %v7778 = vshrl.u32 %v7591, 16
      %v7780 = vrot.slane %v7778, 4
      %v7781 = vor.u32 %v7780, %v7776
      %v7782 = vrot.slane %v7781, 4
      %v7784 = vshll.u32 %v7592, 16
      %v7786 = vrot.slane %v7784, 5
      %v7787 = vsel %vm1069, %v7782, %v7786
      %v7789 = vshrl.u32 %v7593, 16
      %v7791 = vrot.slane %v7789, 4
      %v7792 = vshll.u32 %v7593, 16
      %v7794 = vrot.slane %v7792, 5
      %v7795 = vor.u32 %v7791, %v7794
      %v7796 = vrot.slane %v7795, 4
      %v7798 = vshll.u32 %v7594, 16
      %v7800 = vrot.slane %v7798, 5
      %v7801 = vsel %vm1069, %v7796, %v7800
      %v7802 = vshrl.u32 %v7594, 16
      %v7804 = vrot.slane %v7802, 4
      %v7805 = vor.u32 %v7804, %v7800
      %v7806 = vrot.slane %v7805, 4
      %v7808 = vshll.u32 %v7595, 16
      %v7810 = vrot.slane %v7808, 5
      %v7811 = vsel %vm1069, %v7806, %v7810
      %v7813 = vshrl.u32 %v7596, 16
      %v7815 = vrot.slane %v7813, 4
      %v7816 = vshll.u32 %v7596, 16
      %v7818 = vrot.slane %v7816, 5
      %v7819 = vor.u32 %v7815, %v7818
      %v7820 = vrot.slane %v7819, 4
      %v7822 = vshll.u32 %v7597, 16
      %v7824 = vrot.slane %v7822, 5
      %v7825 = vsel %vm1069, %v7820, %v7824
      %v7826 = vshrl.u32 %v7597, 16
      %v7828 = vrot.slane %v7826, 4
      %v7829 = vor.u32 %v7828, %v7824
      %v7830 = vrot.slane %v7829, 4
      %v7832 = vshll.u32 %v7598, 16
      %v7834 = vrot.slane %v7832, 5
      %v7835 = vsel %vm1069, %v7830, %v7834
      %v7837 = vshrl.u32 %v7599, 16
      %v7839 = vrot.slane %v7837, 4
      %v7840 = vshll.u32 %v7599, 16
      %v7842 = vrot.slane %v7840, 5
      %v7843 = vor.u32 %v7839, %v7842
      %v7844 = vrot.slane %v7843, 4
      %v7846 = vshll.u32 %v7600, 16
      %v7848 = vrot.slane %v7846, 5
      %v7849 = vsel %vm1069, %v7844, %v7848
      %v7850 = vshrl.u32 %v7600, 16
      %v7852 = vrot.slane %v7850, 4
      %v7853 = vor.u32 %v7852, %v7848
      %v7854 = vrot.slane %v7853, 4
      %v7856 = vshll.u32 %v7601, 16
      %v7858 = vrot.slane %v7856, 5
      %v7859 = vsel %vm1069, %v7854, %v7858
      %v7861 = vshrl.u32 %v7602, 16
      %v7863 = vrot.slane %v7861, 4
      %v7864 = vshll.u32 %v7602, 16
      %v7866 = vrot.slane %v7864, 5
      %v7867 = vor.u32 %v7863, %v7866
      %v7868 = vrot.slane %v7867, 4
      %v7870 = vshll.u32 %v7603, 16
      %v7872 = vrot.slane %v7870, 5
      %v7873 = vsel %vm1069, %v7868, %v7872
      %v7874 = vshrl.u32 %v7603, 16
      %v7876 = vrot.slane %v7874, 4
      %v7877 = vor.u32 %v7876, %v7872
      %v7878 = vrot.slane %v7877, 4
      %v7880 = vshll.u32 %v7604, 16
      %v7882 = vrot.slane %v7880, 5
      %v7883 = vsel %vm1069, %v7878, %v7882
      %v7885 = vshrl.u32 %v7605, 16
      %v7887 = vrot.slane %v7885, 4
      %v7888 = vshll.u32 %v7605, 16
      %v7890 = vrot.slane %v7888, 5
      %v7891 = vor.u32 %v7887, %v7890
      %v7892 = vrot.slane %v7891, 4
      %v7894 = vshll.u32 %v7606, 16
      %v7896 = vrot.slane %v7894, 5
      %v7897 = vsel %vm1069, %v7892, %v7896
      %v7898 = vshrl.u32 %v7606, 16
      %v7900 = vrot.slane %v7898, 4
      %v7901 = vor.u32 %v7900, %v7896
      %v7902 = vrot.slane %v7901, 4
      %v7904 = vshll.u32 %v7607, 16
      %v7906 = vrot.slane %v7904, 5
      %v7907 = vsel %vm1069, %v7902, %v7906
      %v7909 = vshrl.u32 %v7608, 16
      %v7911 = vrot.slane %v7909, 4
      %v7912 = vshll.u32 %v7608, 16
      %v7914 = vrot.slane %v7912, 5
      %v7915 = vor.u32 %v7911, %v7914
      %v7916 = vrot.slane %v7915, 4
      %v7918 = vshll.u32 %v7609, 16
      %v7920 = vrot.slane %v7918, 5
      %v7921 = vsel %vm1069, %v7916, %v7920
      %v7922 = vshrl.u32 %v7609, 16
      %v7924 = vrot.slane %v7922, 4
      %v7925 = vor.u32 %v7924, %v7920
      %v7926 = vrot.slane %v7925, 4
      %v7928 = vshll.u32 %v7610, 16
      %v7930 = vrot.slane %v7928, 5
      %v7931 = vsel %vm1069, %v7926, %v7930
      %v7933 = vshrl.u32 %v7611, 16
      %v7935 = vrot.slane %v7933, 4
      %v7936 = vshll.u32 %v7611, 16
      %v7938 = vrot.slane %v7936, 5
      %v7939 = vor.u32 %v7935, %v7938
      %v7940 = vrot.slane %v7939, 4
      %v7942 = vshll.u32 %v7612, 16
      %v7944 = vrot.slane %v7942, 5
      %v7945 = vsel %vm1069, %v7940, %v7944
      %v7946 = vshrl.u32 %v7612, 16
      %v7948 = vrot.slane %v7946, 4
      %v7949 = vor.u32 %v7948, %v7944
      %v7950 = vrot.slane %v7949, 4
      %v7952 = vshll.u32 %v7613, 16
      %v7954 = vrot.slane %v7952, 5
      %v7955 = vsel %vm1069, %v7950, %v7954
      %v7957 = vshrl.u32 %v7614, 16
      %v7959 = vrot.slane %v7957, 4
      %v7960 = vshll.u32 %v7614, 16
      %v7962 = vrot.slane %v7960, 5
      %v7963 = vor.u32 %v7959, %v7962
      %v7964 = vrot.slane %v7963, 4
      %v7966 = vshll.u32 %v7615, 16
      %v7968 = vrot.slane %v7966, 5
      %v7969 = vsel %vm1069, %v7964, %v7968
      %v7970 = vshrl.u32 %v7615, 16
      %v7972 = vrot.slane %v7970, 4
      %v7973 = vor.u32 %v7972, %v7968
      %v7974 = vrot.slane %v7973, 4
      %v7976 = vshll.u32 %v7616, 16
      %v7978 = vrot.slane %v7976, 5
      %v7979 = vsel %vm1069, %v7974, %v7978
      %v7981 = vshrl.u32 %v7617, 16
      %v7983 = vrot.slane %v7981, 4
      %v7984 = vshll.u32 %v7617, 16
      %v7986 = vrot.slane %v7984, 5
      %v7987 = vor.u32 %v7983, %v7986
      %v7988 = vrot.slane %v7987, 4
      %v7990 = vshll.u32 %v7618, 16
      %v7992 = vrot.slane %v7990, 5
      %v7993 = vsel %vm1069, %v7988, %v7992
      %v7994 = vshrl.u32 %v7618, 16
      %v7996 = vrot.slane %v7994, 4
      %v7997 = vor.u32 %v7996, %v7992
      %v7998 = vrot.slane %v7997, 4
      %v8000 = vshll.u32 %v7619, 16
      %v8002 = vrot.slane %v8000, 5
      %v8003 = vsel %vm1069, %v7998, %v8002
      %8004 = vrot.lane.b32.xlu0 %v7633, 28
      %v8005 = vpop.permute.xlu0 %8004
      %8006 = vrot.lane.b32.xlu0 %v7643, 28
      %v8007 = vpop.permute.xlu0 %8006
      %8008 = vrot.lane.b32.xlu0 %v7657, 28
      %v8009 = vpop.permute.xlu0 %8008
      %8010 = vrot.lane.b32.xlu0 %v7667, 28
      %v8011 = vpop.permute.xlu0 %8010
      %8012 = vrot.lane.b32.xlu0 %v7681, 28
      %v8013 = vpop.permute.xlu0 %8012
      %8014 = vrot.lane.b32.xlu0 %v7691, 28
      %v8015 = vpop.permute.xlu0 %8014
      %8016 = vrot.lane.b32.xlu0 %v7705, 28
      %v8017 = vpop.permute.xlu0 %8016
      %8018 = vrot.lane.b32.xlu0 %v7715, 28
      %v8019 = vpop.permute.xlu0 %8018
      %8020 = vrot.lane.b32.xlu0 %v7729, 28
      %v8021 = vpop.permute.xlu0 %8020
      %8022 = vrot.lane.b32.xlu0 %v7739, 28
      %v8023 = vpop.permute.xlu0 %8022
      %8024 = vrot.lane.b32.xlu0 %v7753, 28
      %v8025 = vpop.permute.xlu0 %8024
      %8026 = vrot.lane.b32.xlu0 %v7763, 28
      %v8027 = vpop.permute.xlu0 %8026
      %8028 = vrot.lane.b32.xlu0 %v7777, 28
      %v8029 = vpop.permute.xlu0 %8028
      %8030 = vrot.lane.b32.xlu0 %v7787, 28
      %v8031 = vpop.permute.xlu0 %8030
      %8032 = vrot.lane.b32.xlu0 %v7801, 28
      %v8033 = vpop.permute.xlu0 %8032
      %8034 = vrot.lane.b32.xlu0 %v7811, 28
      %v8035 = vpop.permute.xlu0 %8034
      %8036 = vrot.lane.b32.xlu0 %v7825, 28
      %v8037 = vpop.permute.xlu0 %8036
      %8038 = vrot.lane.b32.xlu0 %v7835, 28
      %v8039 = vpop.permute.xlu0 %8038
      %8040 = vrot.lane.b32.xlu0 %v7849, 28
      %v8041 = vpop.permute.xlu0 %8040
      %8042 = vrot.lane.b32.xlu0 %v7859, 28
      %v8043 = vpop.permute.xlu0 %8042
      %8044 = vrot.lane.b32.xlu0 %v7873, 28
      %v8045 = vpop.permute.xlu0 %8044
      %8046 = vrot.lane.b32.xlu0 %v7883, 28
      %v8047 = vpop.permute.xlu0 %8046
      %8048 = vrot.lane.b32.xlu0 %v7897, 28
      %v8049 = vpop.permute.xlu0 %8048
      %8050 = vrot.lane.b32.xlu0 %v7907, 28
      %v8051 = vpop.permute.xlu0 %8050
      %8052 = vrot.lane.b32.xlu0 %v7921, 28
      %v8053 = vpop.permute.xlu0 %8052
      %8054 = vrot.lane.b32.xlu0 %v7931, 28
      %v8055 = vpop.permute.xlu0 %8054
      %8056 = vrot.lane.b32.xlu0 %v7945, 28
      %v8057 = vpop.permute.xlu0 %8056
      %8058 = vrot.lane.b32.xlu0 %v7955, 28
      %v8059 = vpop.permute.xlu0 %8058
      %8060 = vrot.lane.b32.xlu0 %v7969, 28
      %v8061 = vpop.permute.xlu0 %8060
      %8062 = vrot.lane.b32.xlu0 %v7979, 28
      %v8063 = vpop.permute.xlu0 %8062
      %8064 = vrot.lane.b32.xlu0 %v7993, 28
      %v8065 = vpop.permute.xlu0 %8064
      %8066 = vrot.lane.b32.xlu0 %v8003, 28
      %v8067 = vpop.permute.xlu0 %8066
      %8100 = vst.msk [vmem:[#allocation3] sm:$0xf] %vm3736, %v8005
      %8101 = vst.msk [vmem:[#allocation3 + $0x4] sm:$0xf] %vm3736, %v8007
      %8102 = vst.msk [vmem:[#allocation3 + $0x8] sm:$0xf] %vm3736, %v8009
      %8103 = vst.msk [vmem:[#allocation3 + $0xc] sm:$0xf] %vm3736, %v8011
      %8104 = vst.msk [vmem:[#allocation3 + $0x10] sm:$0xf] %vm3736, %v8013
      %8105 = vst.msk [vmem:[#allocation3 + $0x14] sm:$0xf] %vm3736, %v8015
      %8106 = vst.msk [vmem:[#allocation3 + $0x18] sm:$0xf] %vm3736, %v8017
      %8107 = vst.msk [vmem:[#allocation3 + $0x1c] sm:$0xf] %vm3736, %v8019
      %8108 = vst.msk [vmem:[#allocation3 + $0x20] sm:$0xf] %vm3736, %v8021
      %8109 = vst.msk [vmem:[#allocation3 + $0x24] sm:$0xf] %vm3736, %v8023
      %8110 = vst.msk [vmem:[#allocation3 + $0x28] sm:$0xf] %vm3736, %v8025
      %8111 = vst.msk [vmem:[#allocation3 + $0x2c] sm:$0xf] %vm3736, %v8027
      %8112 = vst.msk [vmem:[#allocation3 + $0x30] sm:$0xf] %vm3736, %v8029
      %8113 = vst.msk [vmem:[#allocation3 + $0x34] sm:$0xf] %vm3736, %v8031
      %8114 = vst.msk [vmem:[#allocation3 + $0x38] sm:$0xf] %vm3736, %v8033
      %8115 = vst.msk [vmem:[#allocation3 + $0x3c] sm:$0xf] %vm3736, %v8035
      %8116 = vst.msk [vmem:[#allocation3 + $0x40] sm:$0xf] %vm3736, %v8037
      %8117 = vst.msk [vmem:[#allocation3 + $0x44] sm:$0xf] %vm3736, %v8039
      %8118 = vst.msk [vmem:[#allocation3 + $0x48] sm:$0xf] %vm3736, %v8041
      %8119 = vst.msk [vmem:[#allocation3 + $0x4c] sm:$0xf] %vm3736, %v8043
      %8120 = vst.msk [vmem:[#allocation3 + $0x50] sm:$0xf] %vm3736, %v8045
      %8121 = vst.msk [vmem:[#allocation3 + $0x54] sm:$0xf] %vm3736, %v8047
      %8122 = vst.msk [vmem:[#allocation3 + $0x58] sm:$0xf] %vm3736, %v8049
      %8123 = vst.msk [vmem:[#allocation3 + $0x5c] sm:$0xf] %vm3736, %v8051
      %8124 = vst.msk [vmem:[#allocation3 + $0x60] sm:$0xf] %vm3736, %v8053
      %8125 = vst.msk [vmem:[#allocation3 + $0x64] sm:$0xf] %vm3736, %v8055
      %8126 = vst.msk [vmem:[#allocation3 + $0x68] sm:$0xf] %vm3736, %v8057
      %8127 = vst.msk [vmem:[#allocation3 + $0x6c] sm:$0xf] %vm3736, %v8059
      %8128 = vst.msk [vmem:[#allocation3 + $0x70] sm:$0xf] %vm3736, %v8061
      %8129 = vst.msk [vmem:[#allocation3 + $0x74] sm:$0xf] %vm3736, %v8063
      %8130 = vst.msk [vmem:[#allocation3 + $0x78] sm:$0xf] %vm3736, %v8065
      %8131 = vst.msk [vmem:[#allocation3 + $0x7c] sm:$0xf] %vm3736, %v8067
      %v8132 = vld [vmem:[%s3014] sm:$0xe]
      %v8133 = vld [vmem:[%s3014 + $0x4] sm:$0xf]
      %v8134 = vld [vmem:[%s3014 + $0x8] sm:$0x1]
      %v8135 = vld [vmem:[%s3014 + $0xc] sm:$0xe]
      %v8136 = vld [vmem:[%s3014 + $0x10] sm:$0xf]
      %v8137 = vld [vmem:[%s3014 + $0x14] sm:$0x1]
      %v8138 = vld [vmem:[%s3014 + $0x18] sm:$0xe]
      %v8139 = vld [vmem:[%s3014 + $0x1c] sm:$0xf]
      %v8140 = vld [vmem:[%s3014 + $0x20] sm:$0x1]
      %v8141 = vld [vmem:[%s3014 + $0x24] sm:$0xe]
      %v8142 = vld [vmem:[%s3014 + $0x28] sm:$0xf]
      %v8143 = vld [vmem:[%s3014 + $0x2c] sm:$0x1]
      %v8144 = vld [vmem:[%s3014 + $0x30] sm:$0xe]
      %v8145 = vld [vmem:[%s3014 + $0x34] sm:$0xf]
      %v8146 = vld [vmem:[%s3014 + $0x38] sm:$0x1]
      %v8147 = vld [vmem:[%s3014 + $0x3c] sm:$0xe]
      %v8148 = vld [vmem:[%s3014 + $0x40] sm:$0xf]
      %v8149 = vld [vmem:[%s3014 + $0x44] sm:$0x1]
      %v8150 = vld [vmem:[%s3014 + $0x48] sm:$0xe]
      %v8151 = vld [vmem:[%s3014 + $0x4c] sm:$0xf]
      %v8152 = vld [vmem:[%s3014 + $0x50] sm:$0x1]
      %v8153 = vld [vmem:[%s3014 + $0x54] sm:$0xe]
      %v8154 = vld [vmem:[%s3014 + $0x58] sm:$0xf]
      %v8155 = vld [vmem:[%s3014 + $0x5c] sm:$0x1]
      %v8156 = vld [vmem:[%s3014 + $0x60] sm:$0xe]
      %v8157 = vld [vmem:[%s3014 + $0x64] sm:$0xf]
      %v8158 = vld [vmem:[%s3014 + $0x68] sm:$0x1]
      %v8159 = vld [vmem:[%s3014 + $0x6c] sm:$0xe]
      %v8160 = vld [vmem:[%s3014 + $0x70] sm:$0xf]
      %v8161 = vld [vmem:[%s3014 + $0x74] sm:$0x1]
      %v8162 = vld [vmem:[%s3014 + $0x78] sm:$0xe]
      %v8163 = vld [vmem:[%s3014 + $0x7c] sm:$0xf]
      %v8164 = vld [vmem:[%s3014 + $0x80] sm:$0x1]
      %v8165 = vld [vmem:[%s3014 + $0x84] sm:$0xe]
      %v8166 = vld [vmem:[%s3014 + $0x88] sm:$0xf]
      %v8167 = vld [vmem:[%s3014 + $0x8c] sm:$0x1]
      %v8168 = vld [vmem:[%s3014 + $0x90] sm:$0xe]
      %v8169 = vld [vmem:[%s3014 + $0x94] sm:$0xf]
      %v8170 = vld [vmem:[%s3014 + $0x98] sm:$0x1]
      %v8171 = vld [vmem:[%s3014 + $0x9c] sm:$0xe]
      %v8172 = vld [vmem:[%s3014 + $0xa0] sm:$0xf]
      %v8173 = vld [vmem:[%s3014 + $0xa4] sm:$0x1]
      %v8174 = vld [vmem:[%s3014 + $0xa8] sm:$0xe]
      %v8175 = vld [vmem:[%s3014 + $0xac] sm:$0xf]
      %v8176 = vld [vmem:[%s3014 + $0xb0] sm:$0x1]
      %v8177 = vld [vmem:[%s3014 + $0xb4] sm:$0xe]
      %v8178 = vld [vmem:[%s3014 + $0xb8] sm:$0xf]
      %v8179 = vld [vmem:[%s3014 + $0xbc] sm:$0x1]
      %v8228 = vrot.slane %v8132, 5
      %v8229 = vrot.slane %v8228, 4
      %v8230 = vrot.slane %v8133, 5
      %v8231 = vsel %vm1681, %v8229, %v8230
      %v8232 = vrot.slane %v8230, 4
      %v8233 = vrot.slane %v8134, 5
      %v8234 = vsel %vm1681, %v8232, %v8233
      %v8235 = vrot.slane %v8135, 5
      %v8236 = vrot.slane %v8235, 4
      %v8237 = vrot.slane %v8136, 5
      %v8238 = vsel %vm1681, %v8236, %v8237
      %v8239 = vrot.slane %v8237, 4
      %v8240 = vrot.slane %v8137, 5
      %v8241 = vsel %vm1681, %v8239, %v8240
      %v8242 = vrot.slane %v8138, 5
      %v8243 = vrot.slane %v8242, 4
      %v8244 = vrot.slane %v8139, 5
      %v8245 = vsel %vm1681, %v8243, %v8244
      %v8246 = vrot.slane %v8244, 4
      %v8247 = vrot.slane %v8140, 5
      %v8248 = vsel %vm1681, %v8246, %v8247
      %v8249 = vrot.slane %v8141, 5
      %v8250 = vrot.slane %v8249, 4
      %v8251 = vrot.slane %v8142, 5
      %v8252 = vsel %vm1681, %v8250, %v8251
      %v8253 = vrot.slane %v8251, 4
      %v8254 = vrot.slane %v8143, 5
      %v8255 = vsel %vm1681, %v8253, %v8254
      %v8256 = vrot.slane %v8144, 5
      %v8257 = vrot.slane %v8256, 4
      %v8258 = vrot.slane %v8145, 5
      %v8259 = vsel %vm1681, %v8257, %v8258
      %v8260 = vrot.slane %v8258, 4
      %v8261 = vrot.slane %v8146, 5
      %v8262 = vsel %vm1681, %v8260, %v8261
      %v8263 = vrot.slane %v8147, 5
      %v8264 = vrot.slane %v8263, 4
      %v8265 = vrot.slane %v8148, 5
      %v8266 = vsel %vm1681, %v8264, %v8265
      %v8267 = vrot.slane %v8265, 4
      %v8268 = vrot.slane %v8149, 5
      %v8269 = vsel %vm1681, %v8267, %v8268
      %v8270 = vrot.slane %v8150, 5
      %v8271 = vrot.slane %v8270, 4
      %v8272 = vrot.slane %v8151, 5
      %v8273 = vsel %vm1681, %v8271, %v8272
      %v8274 = vrot.slane %v8272, 4
      %v8275 = vrot.slane %v8152, 5
      %v8276 = vsel %vm1681, %v8274, %v8275
      %v8277 = vrot.slane %v8153, 5
      %v8278 = vrot.slane %v8277, 4
      %v8279 = vrot.slane %v8154, 5
      %v8280 = vsel %vm1681, %v8278, %v8279
      %v8281 = vrot.slane %v8279, 4
      %v8282 = vrot.slane %v8155, 5
      %v8283 = vsel %vm1681, %v8281, %v8282
      %v8284 = vrot.slane %v8156, 5
      %v8285 = vrot.slane %v8284, 4
      %v8286 = vrot.slane %v8157, 5
      %v8287 = vsel %vm1681, %v8285, %v8286
      %v8288 = vrot.slane %v8286, 4
      %v8289 = vrot.slane %v8158, 5
      %v8290 = vsel %vm1681, %v8288, %v8289
      %v8291 = vrot.slane %v8159, 5
      %v8292 = vrot.slane %v8291, 4
      %v8293 = vrot.slane %v8160, 5
      %v8294 = vsel %vm1681, %v8292, %v8293
      %v8295 = vrot.slane %v8293, 4
      %v8296 = vrot.slane %v8161, 5
      %v8297 = vsel %vm1681, %v8295, %v8296
      %v8298 = vrot.slane %v8162, 5
      %v8299 = vrot.slane %v8298, 4
      %v8300 = vrot.slane %v8163, 5
      %v8301 = vsel %vm1681, %v8299, %v8300
      %v8302 = vrot.slane %v8300, 4
      %v8303 = vrot.slane %v8164, 5
      %v8304 = vsel %vm1681, %v8302, %v8303
      %v8305 = vrot.slane %v8165, 5
      %v8306 = vrot.slane %v8305, 4
      %v8307 = vrot.slane %v8166, 5
      %v8308 = vsel %vm1681, %v8306, %v8307
      %v8309 = vrot.slane %v8307, 4
      %v8310 = vrot.slane %v8167, 5
      %v8311 = vsel %vm1681, %v8309, %v8310
      %v8312 = vrot.slane %v8168, 5
      %v8313 = vrot.slane %v8312, 4
      %v8314 = vrot.slane %v8169, 5
      %v8315 = vsel %vm1681, %v8313, %v8314
      %v8316 = vrot.slane %v8314, 4
      %v8317 = vrot.slane %v8170, 5
      %v8318 = vsel %vm1681, %v8316, %v8317
      %v8319 = vrot.slane %v8171, 5
      %v8320 = vrot.slane %v8319, 4
      %v8321 = vrot.slane %v8172, 5
      %v8322 = vsel %vm1681, %v8320, %v8321
      %v8323 = vrot.slane %v8321, 4
      %v8324 = vrot.slane %v8173, 5
      %v8325 = vsel %vm1681, %v8323, %v8324
      %v8326 = vrot.slane %v8174, 5
      %v8327 = vrot.slane %v8326, 4
      %v8328 = vrot.slane %v8175, 5
      %v8329 = vsel %vm1681, %v8327, %v8328
      %v8330 = vrot.slane %v8328, 4
      %v8331 = vrot.slane %v8176, 5
      %v8332 = vsel %vm1681, %v8330, %v8331
      %v8333 = vrot.slane %v8177, 5
      %v8334 = vrot.slane %v8333, 4
      %v8335 = vrot.slane %v8178, 5
      %v8336 = vsel %vm1681, %v8334, %v8335
      %v8337 = vrot.slane %v8335, 4
      %v8338 = vrot.slane %v8179, 5
      %v8339 = vsel %vm1681, %v8337, %v8338
      %8340 = vrot.lane.b32.xlu0 %v8231, 32
      %v8341 = vpop.permute.xlu0 %8340
      %8342 = vrot.lane.b32.xlu0 %v8234, 32
      %v8343 = vpop.permute.xlu0 %8342
      %8344 = vrot.lane.b32.xlu0 %v8238, 32
      %v8345 = vpop.permute.xlu0 %8344
      %8346 = vrot.lane.b32.xlu0 %v8241, 32
      %v8347 = vpop.permute.xlu0 %8346
      %8348 = vrot.lane.b32.xlu0 %v8245, 32
      %v8349 = vpop.permute.xlu0 %8348
      %8350 = vrot.lane.b32.xlu0 %v8248, 32
      %v8351 = vpop.permute.xlu0 %8350
      %8352 = vrot.lane.b32.xlu0 %v8252, 32
      %v8353 = vpop.permute.xlu0 %8352
      %8354 = vrot.lane.b32.xlu0 %v8255, 32
      %v8355 = vpop.permute.xlu0 %8354
      %8356 = vrot.lane.b32.xlu0 %v8259, 32
      %v8357 = vpop.permute.xlu0 %8356
      %8358 = vrot.lane.b32.xlu0 %v8262, 32
      %v8359 = vpop.permute.xlu0 %8358
      %8360 = vrot.lane.b32.xlu0 %v8266, 32
      %v8361 = vpop.permute.xlu0 %8360
      %8362 = vrot.lane.b32.xlu0 %v8269, 32
      %v8363 = vpop.permute.xlu0 %8362
      %8364 = vrot.lane.b32.xlu0 %v8273, 32
      %v8365 = vpop.permute.xlu0 %8364
      %8366 = vrot.lane.b32.xlu0 %v8276, 32
      %v8367 = vpop.permute.xlu0 %8366
      %8368 = vrot.lane.b32.xlu0 %v8280, 32
      %v8369 = vpop.permute.xlu0 %8368
      %8370 = vrot.lane.b32.xlu0 %v8283, 32
      %v8371 = vpop.permute.xlu0 %8370
      %8372 = vrot.lane.b32.xlu0 %v8287, 32
      %v8373 = vpop.permute.xlu0 %8372
      %8374 = vrot.lane.b32.xlu0 %v8290, 32
      %v8375 = vpop.permute.xlu0 %8374
      %8376 = vrot.lane.b32.xlu0 %v8294, 32
      %v8377 = vpop.permute.xlu0 %8376
      %8378 = vrot.lane.b32.xlu0 %v8297, 32
      %v8379 = vpop.permute.xlu0 %8378
      %8380 = vrot.lane.b32.xlu0 %v8301, 32
      %v8381 = vpop.permute.xlu0 %8380
      %8382 = vrot.lane.b32.xlu0 %v8304, 32
      %v8383 = vpop.permute.xlu0 %8382
      %8384 = vrot.lane.b32.xlu0 %v8308, 32
      %v8385 = vpop.permute.xlu0 %8384
      %8386 = vrot.lane.b32.xlu0 %v8311, 32
      %v8387 = vpop.permute.xlu0 %8386
      %8388 = vrot.lane.b32.xlu0 %v8315, 32
      %v8389 = vpop.permute.xlu0 %8388
      %8390 = vrot.lane.b32.xlu0 %v8318, 32
      %v8391 = vpop.permute.xlu0 %8390
      %8392 = vrot.lane.b32.xlu0 %v8322, 32
      %v8393 = vpop.permute.xlu0 %8392
      %8394 = vrot.lane.b32.xlu0 %v8325, 32
      %v8395 = vpop.permute.xlu0 %8394
      %8396 = vrot.lane.b32.xlu0 %v8329, 32
      %v8397 = vpop.permute.xlu0 %8396
      %8398 = vrot.lane.b32.xlu0 %v8332, 32
      %v8399 = vpop.permute.xlu0 %8398
      %8400 = vrot.lane.b32.xlu0 %v8336, 32
      %v8401 = vpop.permute.xlu0 %8400
      %8402 = vrot.lane.b32.xlu0 %v8339, 32
      %v8403 = vpop.permute.xlu0 %8402
      %8436 = vst.msk [vmem:[#allocation3] sm:$0xf] %vm4073, %v8341
      %8437 = vst.msk [vmem:[#allocation3 + $0x4] sm:$0xf] %vm4073, %v8343
      %8438 = vst.msk [vmem:[#allocation3 + $0x8] sm:$0xf] %vm4073, %v8345
      %8439 = vst.msk [vmem:[#allocation3 + $0xc] sm:$0xf] %vm4073, %v8347
      %8440 = vst.msk [vmem:[#allocation3 + $0x10] sm:$0xf] %vm4073, %v8349
      %8441 = vst.msk [vmem:[#allocation3 + $0x14] sm:$0xf] %vm4073, %v8351
      %8442 = vst.msk [vmem:[#allocation3 + $0x18] sm:$0xf] %vm4073, %v8353
      %8443 = vst.msk [vmem:[#allocation3 + $0x1c] sm:$0xf] %vm4073, %v8355
      %8444 = vst.msk [vmem:[#allocation3 + $0x20] sm:$0xf] %vm4073, %v8357
      %8445 = vst.msk [vmem:[#allocation3 + $0x24] sm:$0xf] %vm4073, %v8359
      %8446 = vst.msk [vmem:[#allocation3 + $0x28] sm:$0xf] %vm4073, %v8361
      %8447 = vst.msk [vmem:[#allocation3 + $0x2c] sm:$0xf] %vm4073, %v8363
      %8448 = vst.msk [vmem:[#allocation3 + $0x30] sm:$0xf] %vm4073, %v8365
      %8449 = vst.msk [vmem:[#allocation3 + $0x34] sm:$0xf] %vm4073, %v8367
      %8450 = vst.msk [vmem:[#allocation3 + $0x38] sm:$0xf] %vm4073, %v8369
      %8451 = vst.msk [vmem:[#allocation3 + $0x3c] sm:$0xf] %vm4073, %v8371
      %8452 = vst.msk [vmem:[#allocation3 + $0x40] sm:$0xf] %vm4073, %v8373
      %8453 = vst.msk [vmem:[#allocation3 + $0x44] sm:$0xf] %vm4073, %v8375
      %8454 = vst.msk [vmem:[#allocation3 + $0x48] sm:$0xf] %vm4073, %v8377
      %8455 = vst.msk [vmem:[#allocation3 + $0x4c] sm:$0xf] %vm4073, %v8379
      %8456 = vst.msk [vmem:[#allocation3 + $0x50] sm:$0xf] %vm4073, %v8381
      %8457 = vst.msk [vmem:[#allocation3 + $0x54] sm:$0xf] %vm4073, %v8383
      %8458 = vst.msk [vmem:[#allocation3 + $0x58] sm:$0xf] %vm4073, %v8385
      %8459 = vst.msk [vmem:[#allocation3 + $0x5c] sm:$0xf] %vm4073, %v8387
      %8460 = vst.msk [vmem:[#allocation3 + $0x60] sm:$0xf] %vm4073, %v8389
      %8461 = vst.msk [vmem:[#allocation3 + $0x64] sm:$0xf] %vm4073, %v8391
      %8462 = vst.msk [vmem:[#allocation3 + $0x68] sm:$0xf] %vm4073, %v8393
      %8463 = vst.msk [vmem:[#allocation3 + $0x6c] sm:$0xf] %vm4073, %v8395
      %8464 = vst.msk [vmem:[#allocation3 + $0x70] sm:$0xf] %vm4073, %v8397
      %8465 = vst.msk [vmem:[#allocation3 + $0x74] sm:$0xf] %vm4073, %v8399
      %8466 = vst.msk [vmem:[#allocation3 + $0x78] sm:$0xf] %vm4073, %v8401
      %8467 = vst.msk [vmem:[#allocation3 + $0x7c] sm:$0xf] %vm4073, %v8403
      %v8468 = vld [vmem:[#allocation3] sm:$0xf]
      %v8469 = vld [vmem:[#allocation3 + $0x4] sm:$0xf]
      %v8470 = vld [vmem:[#allocation3 + $0x8] sm:$0xf]
      %v8471 = vld [vmem:[#allocation3 + $0xc] sm:$0xf]
      %v8472 = vld [vmem:[#allocation3 + $0x10] sm:$0xf]
      %v8473 = vld [vmem:[#allocation3 + $0x14] sm:$0xf]
      %v8474 = vld [vmem:[#allocation3 + $0x18] sm:$0xf]
      %v8475 = vld [vmem:[#allocation3 + $0x1c] sm:$0xf]
      %v8476 = vld [vmem:[#allocation3 + $0x20] sm:$0xf]
      %v8477 = vld [vmem:[#allocation3 + $0x24] sm:$0xf]
      %v8478 = vld [vmem:[#allocation3 + $0x28] sm:$0xf]
      %v8479 = vld [vmem:[#allocation3 + $0x2c] sm:$0xf]
      %v8480 = vld [vmem:[#allocation3 + $0x30] sm:$0xf]
      %v8481 = vld [vmem:[#allocation3 + $0x34] sm:$0xf]
      %v8482 = vld [vmem:[#allocation3 + $0x38] sm:$0xf]
      %v8483 = vld [vmem:[#allocation3 + $0x3c] sm:$0xf]
      %v8484 = vld [vmem:[#allocation3 + $0x40] sm:$0xf]
      %v8485 = vld [vmem:[#allocation3 + $0x44] sm:$0xf]
      %v8486 = vld [vmem:[#allocation3 + $0x48] sm:$0xf]
      %v8487 = vld [vmem:[#allocation3 + $0x4c] sm:$0xf]
      %v8488 = vld [vmem:[#allocation3 + $0x50] sm:$0xf]
      %v8489 = vld [vmem:[#allocation3 + $0x54] sm:$0xf]
      %v8490 = vld [vmem:[#allocation3 + $0x58] sm:$0xf]
      %v8491 = vld [vmem:[#allocation3 + $0x5c] sm:$0xf]
      %v8492 = vld [vmem:[#allocation3 + $0x60] sm:$0xf]
      %v8493 = vld [vmem:[#allocation3 + $0x64] sm:$0xf]
      %v8494 = vld [vmem:[#allocation3 + $0x68] sm:$0xf]
      %v8495 = vld [vmem:[#allocation3 + $0x6c] sm:$0xf]
      %v8496 = vld [vmem:[#allocation3 + $0x70] sm:$0xf]
      %v8497 = vld [vmem:[#allocation3 + $0x74] sm:$0xf]
      %v8498 = vld [vmem:[#allocation3 + $0x78] sm:$0xf]
      %v8499 = vld [vmem:[#allocation3 + $0x7c] sm:$0xf]
      %v8500 = vld [vmem:[%s4] sm:$0xf]
      %v8501 = vld [vmem:[%s4 + $0x4] sm:$0xf]
      %v8502 = vld [vmem:[%s4 + $0x8] sm:$0xf]
      %v8503 = vld [vmem:[%s4 + $0xc] sm:$0xf]
      %v8504 = vld [vmem:[%s4 + $0x10] sm:$0x3]
      %v8537 = vunpack.c.l.b16 %v8468
      %v8538 = vunpack.c.l.b16 %v8469
      %v8539 = vunpack.c.l.b16 %v8470
      %v8540 = vunpack.c.l.b16 %v8471
      %v8541 = vunpack.c.l.b16 %v8472
      %v8542 = vunpack.c.l.b16 %v8473
      %v8543 = vunpack.c.l.b16 %v8474
      %v8544 = vunpack.c.l.b16 %v8475
      %v8545 = vunpack.c.l.b16 %v8476
      %v8546 = vunpack.c.l.b16 %v8477
      %v8547 = vunpack.c.l.b16 %v8478
      %v8548 = vunpack.c.l.b16 %v8479
      %v8549 = vunpack.c.l.b16 %v8480
      %v8550 = vunpack.c.l.b16 %v8481
      %v8551 = vunpack.c.l.b16 %v8482
      %v8552 = vunpack.c.l.b16 %v8483
      %v8553 = vunpack.c.l.b16 %v8484
      %v8554 = vunpack.c.l.b16 %v8485
      %v8555 = vunpack.c.l.b16 %v8486
      %v8556 = vunpack.c.l.b16 %v8487
      %v8557 = vunpack.c.l.b16 %v8488
      %v8558 = vunpack.c.l.b16 %v8489
      %v8559 = vunpack.c.l.b16 %v8490
      %v8560 = vunpack.c.l.b16 %v8491
      %v8561 = vunpack.c.l.b16 %v8492
      %v8562 = vunpack.c.l.b16 %v8493
      %v8563 = vunpack.c.l.b16 %v8494
      %v8564 = vunpack.c.l.b16 %v8495
      %v8565 = vunpack.c.l.b16 %v8496
      %v8566 = vunpack.c.l.b16 %v8497
      %v8567 = vunpack.c.l.b16 %v8498
      %v8568 = vunpack.c.l.b16 %v8499
      %v8569 = vpack.c.b16 %v8538, %v8537
      %v8570 = vpack.c.b16 %v8540, %v8539
      %v8571 = vpack.c.b16 %v8542, %v8541
      %v8572 = vpack.c.b16 %v8544, %v8543
      %v8573 = vpack.c.b16 %v8546, %v8545
      %v8574 = vpack.c.b16 %v8548, %v8547
      %v8575 = vpack.c.b16 %v8550, %v8549
      %v8576 = vpack.c.b16 %v8552, %v8551
      %v8577 = vpack.c.b16 %v8554, %v8553
      %v8578 = vpack.c.b16 %v8556, %v8555
      %v8579 = vpack.c.b16 %v8558, %v8557
      %v8580 = vpack.c.b16 %v8560, %v8559
      %v8581 = vpack.c.b16 %v8562, %v8561
      %v8582 = vpack.c.b16 %v8564, %v8563
      %v8583 = vpack.c.b16 %v8566, %v8565
      %v8584 = vpack.c.b16 %v8568, %v8567
      %v8590 = vunpack.c.l.b16 %v8500
      %v8591 = vunpack.c.l.b16 %v8501
      %v8592 = vunpack.c.l.b16 %v8502
      %v8593 = vunpack.c.l.b16 %v8503
      %v8594 = vunpack.c.l.b16 %v8504
      %v8595 = vpack.c.b16 %v8591, %v8590
      %v8596 = vpack.c.b16 %v8593, %v8592
      %v8597 = vpack.c.b16 %v8594, %v8594
      %v8601 = vsel %vm4238, %v8569, 0
      %v8604 = vsel %vm4238, %v8570, 0
      %v8607 = vsel %vm4238, %v8571, 0
      %v8610 = vsel %vm4238, %v8572, 0
      %v8613 = vsel %vm4238, %v8573, 0
      %v8616 = vsel %vm4238, %v8574, 0
      %v8619 = vsel %vm4238, %v8575, 0
      %v8622 = vsel %vm4238, %v8576, 0
      %v8625 = vsel %vm4238, %v8577, 0
      %v8628 = vsel %vm4238, %v8578, 0
      %v8631 = vsel %vm4238, %v8579, 0
      %v8634 = vsel %vm4238, %v8580, 0
      %v8637 = vsel %vm4238, %v8581, 0
      %v8640 = vsel %vm4238, %v8582, 0
      %v8643 = vsel %vm4238, %v8583, 0
      %v8646 = vsel %vm4238, %v8584, 0
      %v8649 = vsel %vm4287, %v8597, 0
      %8651 = vmatprep.subr.bf16.mxu0 0
      %8652 = vmatpush1.bf16.msra.mxu0 0
      %8653 = vmatprep.subr.bf16.mxu0 0
      %8654 = vmatpush1.bf16.msra.mxu0 0
      %8655 = vmatprep.subr.bf16.mxu0 0
      %8656 = vmatpush1.bf16.msra.mxu0 0
      %8657 = vmatprep.subr.bf16.mxu0 0
      %8658 = vmatpush1.bf16.msra.mxu0 0
      %8659 = vmatprep.subr.bf16.mxu0 0
      %8660 = vmatpush1.bf16.msra.mxu0 0
      %8661 = vmatprep.subr.bf16.mxu0 0
      %8662 = vmatpush1.bf16.msra.mxu0 %v8649
      %8663 = vmatprep.subr.bf16.mxu0 0
      %8664 = vmatpush1.bf16.msra.mxu0 %v8596
      %8665 = vmatprep.subr.bf16.mxu0 0
      %8666 = vmatpush1.bf16.msra.mxu0 %v8595
      %8667 = vmatprep.subr.bf16.mxu0 0
      %8668 = vmatpush2.bf16.msra.mxu0 0
      %8669 = vmatprep.subr.bf16.mxu0 0
      %8670 = vmatpush2.bf16.msra.mxu0 0
      %8671 = vmatprep.subr.bf16.mxu0 0
      %8672 = vmatpush2.bf16.msra.mxu0 0
      %8673 = vmatprep.subr.bf16.mxu0 0
      %8674 = vmatpush2.bf16.msra.mxu0 0
      %8675 = vmatprep.subr.bf16.mxu0 0
      %8676 = vmatpush2.bf16.msra.mxu0 0
      %8677 = vmatprep.subr.bf16.mxu0 0
      %8678 = vmatpush2.bf16.msra.mxu0 0
      %8679 = vmatprep.subr.bf16.mxu0 0
      %8680 = vmatpush2.bf16.msra.mxu0 0
      %8681 = vmatprep.subr.bf16.mxu0 0
      %8682 = vmatpush2.bf16.msra.mxu0 0
      %8683 = vmatprep.mubr.bf16.mxu0 0
      %8684 = vmatmul.mubr.bf16.gmra.mxu0 %v8601
      %v8685 = vpop.f32.mrf.mxu0
      %v8686 = vadd.f32 0.0, %v8685
      %v8687 = vpop.f32.mrf.mxu0
      %v8688 = vpop.f32.mrf.mxu0
      %v8689 = vadd.f32 0.0, %v8688
      %v8690 = vpop.f32.mrf.mxu0
      %8691 = vmatprep.mubr.bf16.mxu0 0
      %8692 = vmatmul.mubr.bf16.gmra.mxu0 %v8604
      %v8693 = vpop.f32.mrf.mxu0
      %v8694 = vadd.f32 0.0, %v8693
      %v8695 = vpop.f32.mrf.mxu0
      %v8696 = vpop.f32.mrf.mxu0
      %v8697 = vadd.f32 0.0, %v8696
      %v8698 = vpop.f32.mrf.mxu0
      %8699 = vmatprep.mubr.bf16.mxu0 0
      %8700 = vmatmul.mubr.bf16.gmra.mxu0 %v8607
      %v8701 = vpop.f32.mrf.mxu0
      %v8702 = vadd.f32 0.0, %v8701
      %v8703 = vpop.f32.mrf.mxu0
      %v8704 = vpop.f32.mrf.mxu0
      %v8705 = vadd.f32 0.0, %v8704
      %v8706 = vpop.f32.mrf.mxu0
      %8707 = vmatprep.mubr.bf16.mxu0 0
      %8708 = vmatmul.mubr.bf16.gmra.mxu0 %v8610
      %v8709 = vpop.f32.mrf.mxu0
      %v8710 = vadd.f32 0.0, %v8709
      %v8711 = vpop.f32.mrf.mxu0
      %v8712 = vpop.f32.mrf.mxu0
      %v8713 = vadd.f32 0.0, %v8712
      %v8714 = vpop.f32.mrf.mxu0
      %8715 = vmatprep.mubr.bf16.mxu0 0
      %8716 = vmatmul.mubr.bf16.gmra.mxu0 %v8613
      %v8717 = vpop.f32.mrf.mxu0
      %v8718 = vadd.f32 0.0, %v8717
      %v8719 = vpop.f32.mrf.mxu0
      %v8720 = vpop.f32.mrf.mxu0
      %v8721 = vadd.f32 0.0, %v8720
      %v8722 = vpop.f32.mrf.mxu0
      %8723 = vmatprep.mubr.bf16.mxu0 0
      %8724 = vmatmul.mubr.bf16.gmra.mxu0 %v8616
      %v8725 = vpop.f32.mrf.mxu0
      %v8726 = vadd.f32 0.0, %v8725
      %v8727 = vpop.f32.mrf.mxu0
      %v8728 = vpop.f32.mrf.mxu0
      %v8729 = vadd.f32 0.0, %v8728
      %v8730 = vpop.f32.mrf.mxu0
      %8731 = vmatprep.mubr.bf16.mxu0 0
      %8732 = vmatmul.mubr.bf16.gmra.mxu0 %v8619
      %v8733 = vpop.f32.mrf.mxu0
      %v8734 = vadd.f32 0.0, %v8733
      %v8735 = vpop.f32.mrf.mxu0
      %v8736 = vpop.f32.mrf.mxu0
      %v8737 = vadd.f32 0.0, %v8736
      %v8738 = vpop.f32.mrf.mxu0
      %8739 = vmatprep.mubr.bf16.mxu0 0
      %8740 = vmatmul.mubr.bf16.gmra.mxu0 %v8622
      %v8741 = vpop.f32.mrf.mxu0
      %v8742 = vadd.f32 0.0, %v8741
      %v8743 = vpop.f32.mrf.mxu0
      %v8744 = vpop.f32.mrf.mxu0
      %v8745 = vadd.f32 0.0, %v8744
      %v8746 = vpop.f32.mrf.mxu0
      %8747 = vmatprep.mubr.bf16.mxu0 0
      %8748 = vmatmul.mubr.bf16.gmra.mxu0 %v8625
      %v8749 = vpop.f32.mrf.mxu0
      %v8750 = vadd.f32 0.0, %v8749
      %v8751 = vpop.f32.mrf.mxu0
      %v8752 = vpop.f32.mrf.mxu0
      %v8753 = vadd.f32 0.0, %v8752
      %v8754 = vpop.f32.mrf.mxu0
      %8755 = vmatprep.mubr.bf16.mxu0 0
      %8756 = vmatmul.mubr.bf16.gmra.mxu0 %v8628
      %v8757 = vpop.f32.mrf.mxu0
      %v8758 = vadd.f32 0.0, %v8757
      %v8759 = vpop.f32.mrf.mxu0
      %v8760 = vpop.f32.mrf.mxu0
      %v8761 = vadd.f32 0.0, %v8760
      %v8762 = vpop.f32.mrf.mxu0
      %8763 = vmatprep.mubr.bf16.mxu0 0
      %8764 = vmatmul.mubr.bf16.gmra.mxu0 %v8631
      %v8765 = vpop.f32.mrf.mxu0
      %v8766 = vadd.f32 0.0, %v8765
      %v8767 = vpop.f32.mrf.mxu0
      %v8768 = vpop.f32.mrf.mxu0
      %v8769 = vadd.f32 0.0, %v8768
      %v8770 = vpop.f32.mrf.mxu0
      %8771 = vmatprep.mubr.bf16.mxu0 0
      %8772 = vmatmul.mubr.bf16.gmra.mxu0 %v8634
      %v8773 = vpop.f32.mrf.mxu0
      %v8774 = vadd.f32 0.0, %v8773
      %v8775 = vpop.f32.mrf.mxu0
      %v8776 = vpop.f32.mrf.mxu0
      %v8777 = vadd.f32 0.0, %v8776
      %v8778 = vpop.f32.mrf.mxu0
      %8779 = vmatprep.mubr.bf16.mxu0 0
      %8780 = vmatmul.mubr.bf16.gmra.mxu0 %v8637
      %v8781 = vpop.f32.mrf.mxu0
      %v8782 = vadd.f32 0.0, %v8781
      %v8783 = vpop.f32.mrf.mxu0
      %v8784 = vpop.f32.mrf.mxu0
      %v8785 = vadd.f32 0.0, %v8784
      %v8786 = vpop.f32.mrf.mxu0
      %8787 = vmatprep.mubr.bf16.mxu0 0
      %8788 = vmatmul.mubr.bf16.gmra.mxu0 %v8640
      %v8789 = vpop.f32.mrf.mxu0
      %v8790 = vadd.f32 0.0, %v8789
      %v8791 = vpop.f32.mrf.mxu0
      %v8792 = vpop.f32.mrf.mxu0
      %v8793 = vadd.f32 0.0, %v8792
      %v8794 = vpop.f32.mrf.mxu0
      %8795 = vmatprep.mubr.bf16.mxu0 0
      %8796 = vmatmul.mubr.bf16.gmra.mxu0 %v8643
      %v8797 = vpop.f32.mrf.mxu0
      %v8798 = vadd.f32 0.0, %v8797
      %v8799 = vpop.f32.mrf.mxu0
      %v8800 = vpop.f32.mrf.mxu0
      %v8801 = vadd.f32 0.0, %v8800
      %v8802 = vpop.f32.mrf.mxu0
      %8803 = vmatprep.mubr.bf16.mxu0 0
      %8804 = vmatmul.mubr.bf16.gmra.mxu0 %v8646
      %v8805 = vpop.f32.mrf.mxu0
      %v8806 = vadd.f32 0.0, %v8805
      %v8807 = vpop.f32.mrf.mxu0
      %v8808 = vpop.f32.mrf.mxu0
      %v8809 = vadd.f32 0.0, %v8808
      %v8810 = vpop.f32.mrf.mxu0
      %8811 = vdwg.mxu0
      %v8812 = vsel %vm4452, %v8686, 0.0
      %v8813 = vsel %vm4452, %v8689, 0.0
      %v8814 = vadd.f32 %v8812, %v8813
      %v8815 = vsel %vm4452, %v8694, 0.0
      %v8816 = vadd.f32 %v8814, %v8815
      %v8817 = vsel %vm4452, %v8697, 0.0
      %v8818 = vadd.f32 %v8816, %v8817
      %v8819 = vsel %vm4452, %v8702, 0.0
      %v8820 = vadd.f32 %v8818, %v8819
      %v8821 = vsel %vm4452, %v8705, 0.0
      %v8822 = vadd.f32 %v8820, %v8821
      %v8823 = vsel %vm4452, %v8710, 0.0
      %v8824 = vadd.f32 %v8822, %v8823
      %v8825 = vsel %vm4452, %v8713, 0.0
      %v8826 = vadd.f32 %v8824, %v8825
      %v8827 = vsel %vm4452, %v8718, 0.0
      %v8828 = vadd.f32 %v8826, %v8827
      %v8829 = vsel %vm4452, %v8721, 0.0
      %v8830 = vadd.f32 %v8828, %v8829
      %v8831 = vsel %vm4452, %v8726, 0.0
      %v8832 = vadd.f32 %v8830, %v8831
      %v8833 = vsel %vm4452, %v8729, 0.0
      %v8834 = vadd.f32 %v8832, %v8833
      %v8835 = vsel %vm4452, %v8734, 0.0
      %v8836 = vadd.f32 %v8834, %v8835
      %v8837 = vsel %vm4452, %v8737, 0.0
      %v8838 = vadd.f32 %v8836, %v8837
      %v8839 = vsel %vm4452, %v8742, 0.0
      %v8840 = vadd.f32 %v8838, %v8839
      %v8841 = vsel %vm4452, %v8745, 0.0
      %v8842 = vadd.f32 %v8840, %v8841
      %v8843 = vsel %vm4452, %v8750, 0.0
      %v8844 = vadd.f32 %v8842, %v8843
      %v8845 = vsel %vm4452, %v8753, 0.0
      %v8846 = vadd.f32 %v8844, %v8845
      %v8847 = vsel %vm4452, %v8758, 0.0
      %v8848 = vadd.f32 %v8846, %v8847
      %v8849 = vsel %vm4452, %v8761, 0.0
      %v8850 = vadd.f32 %v8848, %v8849
      %v8851 = vsel %vm4452, %v8766, 0.0
      %v8852 = vadd.f32 %v8850, %v8851
      %v8853 = vsel %vm4452, %v8769, 0.0
      %v8854 = vadd.f32 %v8852, %v8853
      %v8855 = vsel %vm4452, %v8774, 0.0
      %v8856 = vadd.f32 %v8854, %v8855
      %v8857 = vsel %vm4452, %v8777, 0.0
      %v8858 = vadd.f32 %v8856, %v8857
      %v8859 = vsel %vm4452, %v8782, 0.0
      %v8860 = vadd.f32 %v8858, %v8859
      %v8861 = vsel %vm4452, %v8785, 0.0
      %v8862 = vadd.f32 %v8860, %v8861
      %v8863 = vsel %vm4452, %v8790, 0.0
      %v8864 = vadd.f32 %v8862, %v8863
      %v8865 = vsel %vm4452, %v8793, 0.0
      %v8866 = vadd.f32 %v8864, %v8865
      %v8867 = vsel %vm4452, %v8798, 0.0
      %v8868 = vadd.f32 %v8866, %v8867
      %v8869 = vsel %vm4452, %v8801, 0.0
      %v8870 = vadd.f32 %v8868, %v8869
      %v8871 = vsel %vm4452, %v8806, 0.0
      %v8872 = vadd.f32 %v8870, %v8871
      %v8873 = vsel %vm4452, %v8809, 0.0
      %v8874 = vadd.f32 %v8872, %v8873
      %v8875 = vrot.slane %v8874, 4
      %v8876 = vadd.f32 %v8874, %v8875
      %v8877 = vrot.slane %v8876, 2
      %v8878 = vadd.f32 %v8876, %v8877
      %v8879 = vrot.slane %v8878, 1
      %v8880 = vadd.f32 %v8878, %v8879
      %v8881 = vmul.f32 %v8686, %v8686
      %v8882 = vmul.f32 %v8689, %v8689
      %v8883 = vmul.f32 %v8694, %v8694
      %v8884 = vmul.f32 %v8697, %v8697
      %v8885 = vmul.f32 %v8702, %v8702
      %v8886 = vmul.f32 %v8705, %v8705
      %v8887 = vmul.f32 %v8710, %v8710
      %v8888 = vmul.f32 %v8713, %v8713
      %v8889 = vmul.f32 %v8718, %v8718
      %v8890 = vmul.f32 %v8721, %v8721
      %v8891 = vmul.f32 %v8726, %v8726
      %v8892 = vmul.f32 %v8729, %v8729
      %v8893 = vmul.f32 %v8734, %v8734
      %v8894 = vmul.f32 %v8737, %v8737
      %v8895 = vmul.f32 %v8742, %v8742
      %v8896 = vmul.f32 %v8745, %v8745
      %v8897 = vmul.f32 %v8750, %v8750
      %v8898 = vmul.f32 %v8753, %v8753
      %v8899 = vmul.f32 %v8758, %v8758
      %v8900 = vmul.f32 %v8761, %v8761
      %v8901 = vmul.f32 %v8766, %v8766
      %v8902 = vmul.f32 %v8769, %v8769
      %v8903 = vmul.f32 %v8774, %v8774
      %v8904 = vmul.f32 %v8777, %v8777
      %v8905 = vmul.f32 %v8782, %v8782
      %v8906 = vmul.f32 %v8785, %v8785
      %v8907 = vmul.f32 %v8790, %v8790
      %v8908 = vmul.f32 %v8793, %v8793
      %v8909 = vmul.f32 %v8798, %v8798
      %v8910 = vmul.f32 %v8801, %v8801
      %v8911 = vmul.f32 %v8806, %v8806
      %v8912 = vmul.f32 %v8809, %v8809
      %v8913 = vsel %vm4452, %v8881, 0.0
      %v8914 = vsel %vm4452, %v8882, 0.0
      %v8915 = vadd.f32 %v8913, %v8914
      %v8916 = vsel %vm4452, %v8883, 0.0
      %v8917 = vadd.f32 %v8915, %v8916
      %v8918 = vsel %vm4452, %v8884, 0.0
      %v8919 = vadd.f32 %v8917, %v8918
      %v8920 = vsel %vm4452, %v8885, 0.0
      %v8921 = vadd.f32 %v8919, %v8920
      %v8922 = vsel %vm4452, %v8886, 0.0
      %v8923 = vadd.f32 %v8921, %v8922
      %v8924 = vsel %vm4452, %v8887, 0.0
      %v8925 = vadd.f32 %v8923, %v8924
      %v8926 = vsel %vm4452, %v8888, 0.0
      %v8927 = vadd.f32 %v8925, %v8926
      %v8928 = vsel %vm4452, %v8889, 0.0
      %v8929 = vadd.f32 %v8927, %v8928
      %v8930 = vsel %vm4452, %v8890, 0.0
      %v8931 = vadd.f32 %v8929, %v8930
      %v8932 = vsel %vm4452, %v8891, 0.0
      %v8933 = vadd.f32 %v8931, %v8932
      %v8934 = vsel %vm4452, %v8892, 0.0
      %v8935 = vadd.f32 %v8933, %v8934
      %v8936 = vsel %vm4452, %v8893, 0.0
      %v8937 = vadd.f32 %v8935, %v8936
      %v8938 = vsel %vm4452, %v8894, 0.0
      %v8939 = vadd.f32 %v8937, %v8938
      %v8940 = vsel %vm4452, %v8895, 0.0
      %v8941 = vadd.f32 %v8939, %v8940
      %v8942 = vsel %vm4452, %v8896, 0.0
      %v8943 = vadd.f32 %v8941, %v8942
      %v8944 = vsel %vm4452, %v8897, 0.0
      %v8945 = vadd.f32 %v8943, %v8944
      %v8946 = vsel %vm4452, %v8898, 0.0
      %v8947 = vadd.f32 %v8945, %v8946
      %v8948 = vsel %vm4452, %v8899, 0.0
      %v8949 = vadd.f32 %v8947, %v8948
      %v8950 = vsel %vm4452, %v8900, 0.0
      %v8951 = vadd.f32 %v8949, %v8950
      %v8952 = vsel %vm4452, %v8901, 0.0
      %v8953 = vadd.f32 %v8951, %v8952
      %v8954 = vsel %vm4452, %v8902, 0.0
      %v8955 = vadd.f32 %v8953, %v8954
      %v8956 = vsel %vm4452, %v8903, 0.0
      %v8957 = vadd.f32 %v8955, %v8956
      %v8958 = vsel %vm4452, %v8904, 0.0
      %v8959 = vadd.f32 %v8957, %v8958
      %v8960 = vsel %vm4452, %v8905, 0.0
      %v8961 = vadd.f32 %v8959, %v8960
      %v8962 = vsel %vm4452, %v8906, 0.0
      %v8963 = vadd.f32 %v8961, %v8962
      %v8964 = vsel %vm4452, %v8907, 0.0
      %v8965 = vadd.f32 %v8963, %v8964
      %v8966 = vsel %vm4452, %v8908, 0.0
      %v8967 = vadd.f32 %v8965, %v8966
      %v8968 = vsel %vm4452, %v8909, 0.0
      %v8969 = vadd.f32 %v8967, %v8968
      %v8970 = vsel %vm4452, %v8910, 0.0
      %v8971 = vadd.f32 %v8969, %v8970
      %v8972 = vsel %vm4452, %v8911, 0.0
      %v8973 = vadd.f32 %v8971, %v8972
      %v8974 = vsel %vm4452, %v8912, 0.0
      %v8975 = vadd.f32 %v8973, %v8974
      %v8976 = vrot.slane %v8975, 4
      %v8977 = vadd.f32 %v8975, %v8976
      %v8978 = vrot.slane %v8977, 2
      %v8979 = vadd.f32 %v8977, %v8978
      %v8980 = vrot.slane %v8979, 1
      %v8981 = vadd.f32 %v8979, %v8980
      %v8982 = vmul.f32 %v8880, 0.00390625
      %v8983 = vmul.f32 %v8981, 0.00390625
      %v8984 = vmul.f32 %v8982, %v8982
      %v8985 = vsub.f32 %v8983, %v8984
      %v8986 = vmax.f32 %v8985, 0.0
      %v8987 = vsub.f32 %v8686, %v8982
      %v8988 = vsub.f32 %v8689, %v8982
      %v8989 = vsub.f32 %v8694, %v8982
      %v8990 = vsub.f32 %v8697, %v8982
      %v8991 = vsub.f32 %v8702, %v8982
      %v8992 = vsub.f32 %v8705, %v8982
      %v8993 = vsub.f32 %v8710, %v8982
      %v8994 = vsub.f32 %v8713, %v8982
      %v8995 = vsub.f32 %v8718, %v8982
      %v8996 = vsub.f32 %v8721, %v8982
      %v8997 = vsub.f32 %v8726, %v8982
      %v8998 = vsub.f32 %v8729, %v8982
      %v8999 = vsub.f32 %v8734, %v8982
      %v9000 = vsub.f32 %v8737, %v8982
      %v9001 = vsub.f32 %v8742, %v8982
      %v9002 = vsub.f32 %v8745, %v8982
      %v9003 = vsub.f32 %v8750, %v8982
      %v9004 = vsub.f32 %v8753, %v8982
      %v9005 = vsub.f32 %v8758, %v8982
      %v9006 = vsub.f32 %v8761, %v8982
      %v9007 = vsub.f32 %v8766, %v8982
      %v9008 = vsub.f32 %v8769, %v8982
      %v9009 = vsub.f32 %v8774, %v8982
      %v9010 = vsub.f32 %v8777, %v8982
      %v9011 = vsub.f32 %v8782, %v8982
      %v9012 = vsub.f32 %v8785, %v8982
      %v9013 = vsub.f32 %v8790, %v8982
      %v9014 = vsub.f32 %v8793, %v8982
      %v9015 = vsub.f32 %v8798, %v8982
      %v9016 = vsub.f32 %v8801, %v8982
      %v9017 = vsub.f32 %v8806, %v8982
      %v9018 = vsub.f32 %v8809, %v8982
      %v9019 = vadd.f32 %v8986, 1e-05
      %v9020 = vrsqrt.pop %v9019
      %v9021 = vmul.f32 %v8987, %v9020
      %v9022 = vmul.f32 %v8988, %v9020
      %v9023 = vmul.f32 %v8989, %v9020
      %v9024 = vmul.f32 %v8990, %v9020
      %v9025 = vmul.f32 %v8991, %v9020
      %v9026 = vmul.f32 %v8992, %v9020
      %v9027 = vmul.f32 %v8993, %v9020
      %v9028 = vmul.f32 %v8994, %v9020
      %v9029 = vmul.f32 %v8995, %v9020
      %v9030 = vmul.f32 %v8996, %v9020
      %v9031 = vmul.f32 %v8997, %v9020
      %v9032 = vmul.f32 %v8998, %v9020
      %v9033 = vmul.f32 %v8999, %v9020
      %v9034 = vmul.f32 %v9000, %v9020
      %v9035 = vmul.f32 %v9001, %v9020
      %v9036 = vmul.f32 %v9002, %v9020
      %v9037 = vmul.f32 %v9003, %v9020
      %v9038 = vmul.f32 %v9004, %v9020
      %v9039 = vmul.f32 %v9005, %v9020
      %v9040 = vmul.f32 %v9006, %v9020
      %v9041 = vmul.f32 %v9007, %v9020
      %v9042 = vmul.f32 %v9008, %v9020
      %v9043 = vmul.f32 %v9009, %v9020
      %v9044 = vmul.f32 %v9010, %v9020
      %v9045 = vmul.f32 %v9011, %v9020
      %v9046 = vmul.f32 %v9012, %v9020
      %v9047 = vmul.f32 %v9013, %v9020
      %v9048 = vmul.f32 %v9014, %v9020
      %v9049 = vmul.f32 %v9015, %v9020
      %v9050 = vmul.f32 %v9016, %v9020
      %v9051 = vmul.f32 %v9017, %v9020
      %v9052 = vmul.f32 %v9018, %v9020
      %v9053 = vld [vmem:[%s5] sm:$0x1]
      %v9055 = vlaneseq
      %v9056 = vshrl.u32 %v9055, 7
      %v9057 = vsub.s32 0, %v9056
      %v9058 = vrot.slane %v9053, %v9057
      %v9060 = vmul.f32 %v9021, %v9058
      %v9061 = vmul.f32 %v9022, %v9058
      %v9062 = vmul.f32 %v9023, %v9058
      %v9063 = vmul.f32 %v9024, %v9058
      %v9064 = vmul.f32 %v9025, %v9058
      %v9065 = vmul.f32 %v9026, %v9058
      %v9066 = vmul.f32 %v9027, %v9058
      %v9067 = vmul.f32 %v9028, %v9058
      %v9068 = vmul.f32 %v9029, %v9058
      %v9069 = vmul.f32 %v9030, %v9058
      %v9070 = vmul.f32 %v9031, %v9058
      %v9071 = vmul.f32 %v9032, %v9058
      %v9072 = vmul.f32 %v9033, %v9058
      %v9073 = vmul.f32 %v9034, %v9058
      %v9074 = vmul.f32 %v9035, %v9058
      %v9075 = vmul.f32 %v9036, %v9058
      %v9076 = vmul.f32 %v9037, %v9058
      %v9077 = vmul.f32 %v9038, %v9058
      %v9078 = vmul.f32 %v9039, %v9058
      %v9079 = vmul.f32 %v9040, %v9058
      %v9080 = vmul.f32 %v9041, %v9058
      %v9081 = vmul.f32 %v9042, %v9058
      %v9082 = vmul.f32 %v9043, %v9058
      %v9083 = vmul.f32 %v9044, %v9058
      %v9084 = vmul.f32 %v9045, %v9058
      %v9085 = vmul.f32 %v9046, %v9058
      %v9086 = vmul.f32 %v9047, %v9058
      %v9087 = vmul.f32 %v9048, %v9058
      %v9088 = vmul.f32 %v9049, %v9058
      %v9089 = vmul.f32 %v9050, %v9058
      %v9090 = vmul.f32 %v9051, %v9058
      %v9091 = vmul.f32 %v9052, %v9058
      %v9092 = vld [vmem:[%s6] sm:$0x1]
      %v9094 = vlaneseq
      %v9095 = vshrl.u32 %v9094, 7
      %v9096 = vsub.s32 0, %v9095
      %v9097 = vrot.slane %v9092, %v9096
      %v9099 = vadd.f32 %v9060, %v9097
      %v9100 = vadd.f32 %v9061, %v9097
      %v9101 = vadd.f32 %v9062, %v9097
      %v9102 = vadd.f32 %v9063, %v9097
      %v9103 = vadd.f32 %v9064, %v9097
      %v9104 = vadd.f32 %v9065, %v9097
      %v9105 = vadd.f32 %v9066, %v9097
      %v9106 = vadd.f32 %v9067, %v9097
      %v9107 = vadd.f32 %v9068, %v9097
      %v9108 = vadd.f32 %v9069, %v9097
      %v9109 = vadd.f32 %v9070, %v9097
      %v9110 = vadd.f32 %v9071, %v9097
      %v9111 = vadd.f32 %v9072, %v9097
      %v9112 = vadd.f32 %v9073, %v9097
      %v9113 = vadd.f32 %v9074, %v9097
      %v9114 = vadd.f32 %v9075, %v9097
      %v9115 = vadd.f32 %v9076, %v9097
      %v9116 = vadd.f32 %v9077, %v9097
      %v9117 = vadd.f32 %v9078, %v9097
      %v9118 = vadd.f32 %v9079, %v9097
      %v9119 = vadd.f32 %v9080, %v9097
      %v9120 = vadd.f32 %v9081, %v9097
      %v9121 = vadd.f32 %v9082, %v9097
      %v9122 = vadd.f32 %v9083, %v9097
      %v9123 = vadd.f32 %v9084, %v9097
      %v9124 = vadd.f32 %v9085, %v9097
      %v9125 = vadd.f32 %v9086, %v9097
      %v9126 = vadd.f32 %v9087, %v9097
      %v9127 = vadd.f32 %v9088, %v9097
      %v9128 = vadd.f32 %v9089, %v9097
      %v9129 = vadd.f32 %v9090, %v9097
      %v9130 = vadd.f32 %v9091, %v9097
      %v9131 = vadd.f32 %v391, %v9099
      %v9132 = vadd.f32 %v392, %v9100
      %v9133 = vadd.f32 %v393, %v9101
      %v9134 = vadd.f32 %v394, %v9102
      %v9135 = vadd.f32 %v395, %v9103
      %v9136 = vadd.f32 %v396, %v9104
      %v9137 = vadd.f32 %v397, %v9105
      %v9138 = vadd.f32 %v398, %v9106
      %v9139 = vadd.f32 %v399, %v9107
      %v9140 = vadd.f32 %v400, %v9108
      %v9141 = vadd.f32 %v401, %v9109
      %v9142 = vadd.f32 %v402, %v9110
      %v9143 = vadd.f32 %v403, %v9111
      %v9144 = vadd.f32 %v404, %v9112
      %v9145 = vadd.f32 %v405, %v9113
      %v9146 = vadd.f32 %v406, %v9114
      %v9147 = vadd.f32 %v407, %v9115
      %v9148 = vadd.f32 %v408, %v9116
      %v9149 = vadd.f32 %v409, %v9117
      %v9150 = vadd.f32 %v410, %v9118
      %v9151 = vadd.f32 %v411, %v9119
      %v9152 = vadd.f32 %v412, %v9120
      %v9153 = vadd.f32 %v413, %v9121
      %v9154 = vadd.f32 %v414, %v9122
      %v9155 = vadd.f32 %v415, %v9123
      %v9156 = vadd.f32 %v416, %v9124
      %v9157 = vadd.f32 %v417, %v9125
      %v9158 = vadd.f32 %v418, %v9126
      %v9159 = vadd.f32 %v419, %v9127
      %v9160 = vadd.f32 %v420, %v9128
      %v9161 = vadd.f32 %v421, %v9129
      %v9162 = vadd.f32 %v422, %v9130
      %v9163 = vmax.f32 %v9131, 0.0
      %v9164 = vmax.f32 %v9132, 0.0
      %v9165 = vmax.f32 %v9133, 0.0
      %v9166 = vmax.f32 %v9134, 0.0
      %v9167 = vmax.f32 %v9135, 0.0
      %v9168 = vmax.f32 %v9136, 0.0
      %v9169 = vmax.f32 %v9137, 0.0
      %v9170 = vmax.f32 %v9138, 0.0
      %v9171 = vmax.f32 %v9139, 0.0
      %v9172 = vmax.f32 %v9140, 0.0
      %v9173 = vmax.f32 %v9141, 0.0
      %v9174 = vmax.f32 %v9142, 0.0
      %v9175 = vmax.f32 %v9143, 0.0
      %v9176 = vmax.f32 %v9144, 0.0
      %v9177 = vmax.f32 %v9145, 0.0
      %v9178 = vmax.f32 %v9146, 0.0
      %v9179 = vmax.f32 %v9147, 0.0
      %v9180 = vmax.f32 %v9148, 0.0
      %v9181 = vmax.f32 %v9149, 0.0
      %v9182 = vmax.f32 %v9150, 0.0
      %v9183 = vmax.f32 %v9151, 0.0
      %v9184 = vmax.f32 %v9152, 0.0
      %v9185 = vmax.f32 %v9153, 0.0
      %v9186 = vmax.f32 %v9154, 0.0
      %v9187 = vmax.f32 %v9155, 0.0
      %v9188 = vmax.f32 %v9156, 0.0
      %v9189 = vmax.f32 %v9157, 0.0
      %v9190 = vmax.f32 %v9158, 0.0
      %v9191 = vmax.f32 %v9159, 0.0
      %v9192 = vmax.f32 %v9160, 0.0
      %v9193 = vmax.f32 %v9161, 0.0
      %v9194 = vmax.f32 %v9162, 0.0
      %9195 = vst.msk [vmem:[%s278] sm:$0xff] %vm4452, %v9163
      %9196 = vst.msk [vmem:[%s278 + $0x8] sm:$0xff] %vm4452, %v9164
      %9197 = vst.msk [vmem:[%s278 + $0x10] sm:$0xff] %vm4452, %v9165
      %9198 = vst.msk [vmem:[%s278 + $0x18] sm:$0xff] %vm4452, %v9166
      %9199 = vst.msk [vmem:[%s278 + $0x20] sm:$0xff] %vm4452, %v9167
      %9200 = vst.msk [vmem:[%s278 + $0x28] sm:$0xff] %vm4452, %v9168
      %9201 = vst.msk [vmem:[%s278 + $0x30] sm:$0xff] %vm4452, %v9169
      %9202 = vst.msk [vmem:[%s278 + $0x38] sm:$0xff] %vm4452, %v9170
      %9203 = vst.msk [vmem:[%s278 + $0x40] sm:$0xff] %vm4452, %v9171
      %9204 = vst.msk [vmem:[%s278 + $0x48] sm:$0xff] %vm4452, %v9172
      %9205 = vst.msk [vmem:[%s278 + $0x50] sm:$0xff] %vm4452, %v9173
      %9206 = vst.msk [vmem:[%s278 + $0x58] sm:$0xff] %vm4452, %v9174
      %9207 = vst.msk [vmem:[%s278 + $0x60] sm:$0xff] %vm4452, %v9175
      %9208 = vst.msk [vmem:[%s278 + $0x68] sm:$0xff] %vm4452, %v9176
      %9209 = vst.msk [vmem:[%s278 + $0x70] sm:$0xff] %vm4452, %v9177
      %9210 = vst.msk [vmem:[%s278 + $0x78] sm:$0xff] %vm4452, %v9178
      %9211 = vst.msk [vmem:[%s278 + $0x80] sm:$0xff] %vm4452, %v9179
      %9212 = vst.msk [vmem:[%s278 + $0x88] sm:$0xff] %vm4452, %v9180
      %9213 = vst.msk [vmem:[%s278 + $0x90] sm:$0xff] %vm4452, %v9181
      %9214 = vst.msk [vmem:[%s278 + $0x98] sm:$0xff] %vm4452, %v9182
      %9215 = vst.msk [vmem:[%s278 + $0xa0] sm:$0xff] %vm4452, %v9183
      %9216 = vst.msk [vmem:[%s278 + $0xa8] sm:$0xff] %vm4452, %v9184
      %9217 = vst.msk [vmem:[%s278 + $0xb0] sm:$0xff] %vm4452, %v9185
      %9218 = vst.msk [vmem:[%s278 + $0xb8] sm:$0xff] %vm4452, %v9186
      %9219 = vst.msk [vmem:[%s278 + $0xc0] sm:$0xff] %vm4452, %v9187
      %9220 = vst.msk [vmem:[%s278 + $0xc8] sm:$0xff] %vm4452, %v9188
      %9221 = vst.msk [vmem:[%s278 + $0xd0] sm:$0xff] %vm4452, %v9189
      %9222 = vst.msk [vmem:[%s278 + $0xd8] sm:$0xff] %vm4452, %v9190
      %9223 = vst.msk [vmem:[%s278 + $0xe0] sm:$0xff] %vm4452, %v9191
      %9224 = vst.msk [vmem:[%s278 + $0xe8] sm:$0xff] %vm4452, %v9192
      %9225 = vst.msk [vmem:[%s278 + $0xf0] sm:$0xff] %vm4452, %v9193
      %9226 = vst.msk [vmem:[%s278 + $0xf8] sm:$0xff] %vm4452, %v9194
      %p9227 = scmp.lt.s32.totalorder %s18, 1
      %s9228 = scalar_select %p9227, %s18, 1
      %s9229 = smul.addr %s9228, 32
      %s9230 = smul.addr %s9229, 8
      %s9231 = scalar_lea.vmem %s7, %s9230
      // Predicated region
      $region49: #{tpu_custom_call.1} parent=47 // pred_check
        %p9232 = pneg %p188
      $region50: #{tpu_custom_call.1} parent=47 // pred_check_branch
        %9234 = sbr.rel (%p9232) target = $region52
      $region51: #{tpu_custom_call.1} parent=47 // pred_region
        _
      $region52: #{tpu_custom_call.1} parent=47 // pred_fallthru
        _
    $region48: #{tpu_custom_call.1} parent=5 // pred_fallthru
      _
    %p9235 = scmp.le.s32.totalorder 2, %s13
    // Predicated region
    $region53: #{tpu_custom_call.1} parent=5 // pred_check
      %p9236 = pneg %p9235
    $region54: #{tpu_custom_call.1} parent=5 // pred_check_branch
      %9238 = sbr.rel (%p9236) target = $region56
    $region55: #{tpu_custom_call.1} parent=5 // pred_region
      %s9239 = ssub.s32 %s13, 2
      // Predicated region
      $region57: #{tpu_custom_call.1} parent=55 // pred_check
        %p9240 = pneg %p194
      $region58: #{tpu_custom_call.1} parent=55 // pred_check_branch
        %9242 = sbr.rel (%p9240) target = $region60
      $region59: #{tpu_custom_call.1} parent=55 // pred_region
        %p9243 = scmp.lt.s32.totalorder %s19, 1
        %s9244 = scalar_select %p9243, %s19, 1
        %s9245 = smul.addr %s9244, 32
        %s9246 = smul.addr %s9245, 8
        %s9247 = scalar_lea.vmem %s7, %s9246
      $region60: #{tpu_custom_call.1} parent=55 // pred_fallthru
        _
    $region56: #{tpu_custom_call.1} parent=5 // pred_fallthru
      _
  $region6: #{tpu_custom_call.1} parent=0 // loop_footer
    %s17 = sadd.s32 1, %s13
  $region7: #{tpu_custom_call.1} parent=0 // loop_footer_branch
    %12 = sbr.rel target = $region3
  $region8: #{tpu_custom_call.1} parent=0 // loop_exit
    _

</llo_original>
